<compile_context>
chip_gen: v6e
topology: v6e:2x2x1
jax: 0.10.0
libtpu: 0.0.40
codegen_flags: <defaults>
</compile_context>

<pallas_src>
import functools

import numpy as np
import jax
import jax.numpy as jnp
from jax import lax
from jax.experimental import pallas as pl
from jax.experimental.pallas import tpu as pltpu


# ------------------------------ Pallas kernel --------------------------------
def _agg0_kernel(x_ref, o_ref, *, patch_w, oh, ow, pixels_h, pixels_w):
    """fold -> per-pixel normalize -> unfold, in the native patch layout.

    x_ref / o_ref: (Bt, patches, hor_f * ver_f)
      patches axis p = ii*ow + jj   (sublanes)
      feature axis r; r mod patch_w**2 = patch_w*ki + kj   (lanes)

    The composite linear op factors into a column pass (dj) and a row pass
    (di):  out[p', r'] = inv_cnt(ii'+ki', jj'+kj') *
             sum_{di,dj valid} x[p' + di*ow + dj, r' - patch_w*di - dj]
    Every out-of-range source is masked, so shifts are implemented as static
    slices of a zero-padded (in-VMEM) copy.
    """
    pw = patch_w
    pad = pw - 1
    f32 = jnp.float32
    Bt, P, L = x_ref.shape

    x = x_ref[...].astype(f32)                                    # (Bt, P, L)

    # (P, L) coordinate planes, float32 (small integers -> exact; avoids
    # integer div/mod lowering entirely).
    p_f = lax.broadcasted_iota(jnp.int32, (P, L), 0).astype(f32)  # patch idx
    r_f = lax.broadcasted_iota(jnp.int32, (P, L), 1).astype(f32)  # feature idx
    ii = jnp.floor(p_f / ow)                                      # patch row
    jj = p_f - ii * ow                                            # patch col
    r9 = r_f - jnp.floor(r_f / (pw * pw)) * (pw * pw)             # r mod pw^2
    ki = jnp.floor(r9 / pw)                                       # kernel row
    kj = r9 - ki * pw                                             # kernel col

    # ---- pass 1: columns (dj). source = x[p + dj, r - dj] -------------------
    zp = jnp.zeros((Bt, pad, L), f32)
    xp = jnp.concatenate([zp, x, zp], axis=1)                     # pad sublanes
    zr = jnp.zeros((Bt, P + 2 * pad, pad), f32)
    xp = jnp.concatenate([zr, xp, zr], axis=2)                    # pad lanes
    u = jnp.zeros((Bt, P, L), f32)
    for dj in range(-pad, pad + 1):
        m = ((jj + dj >= 0) & (jj + dj < ow)
             & (kj - dj >= 0) & (kj - dj < pw)).astype(f32)
        src = xp[:, pad + dj:pad + dj + P, pad - dj:pad - dj + L]
        u = u + src * m

    # ---- pass 2: rows (di). source = u[p + di*ow, r - pw*di] ----------------
    pp = pad * ow
    pr = pad * pw
    zp2 = jnp.zeros((Bt, pp, L), f32)
    up = jnp.concatenate([zp2, u, zp2], axis=1)
    zr2 = jnp.zeros((Bt, P + 2 * pp, pr), f32)
    up = jnp.concatenate([zr2, up, zr2], axis=2)
    v = jnp.zeros((Bt, P, L), f32)
    for di in range(-pad, pad + 1):
        m = ((ii + di >= 0) & (ii + di < oh)
             & (ki - di >= 0) & (ki - di < pw)).astype(f32)
        src = up[:, pp + di * ow:pp + di * ow + P,
                 pr - pw * di:pr - pw * di + L]
        v = v + src * m

    # ---- per-pixel overlap normalization (exact counts, reciprocal once) ----
    pix_r = ii + ki                                               # image row
    pix_c = jj + kj                                               # image col
    cnt_r = jnp.minimum(pix_r, pw - 1) - jnp.maximum(pix_r - (pixels_h - pw), 0) + 1
    cnt_c = jnp.minimum(pix_c, pw - 1) - jnp.maximum(pix_c - (pixels_w - pw), 0) + 1
    inv_cnt = 1.0 / (cnt_r * cnt_c)                               # (P, L)

    o_ref[...] = (v * inv_cnt).astype(o_ref.dtype)


# ------------------------------ host wrapper ---------------------------------
def _pick_bt(images, slab_bytes, target_bytes=1 << 20):
    """Largest divisor of `images` whose block is ~target_bytes, keeping >=2 steps."""
    cap = max(1, min(images, target_bytes // max(slab_bytes, 1)))
    if images >= 2:
        cap = max(1, min(cap, images // 2))   # keep >=2 grid steps (v7x: 2 TCs)
    for bt in range(cap, 0, -1):
        if images % bt == 0:
            return bt
    return 1


def aggregation0_forward(x, *, pixels_h, pixels_w, patch_w=3):
    """JAX/Pallas equivalent of Aggregation0.forward(x, pixels_h, pixels_w)."""
    images, patches, hor_f, ver_f = x.shape
    k2 = patch_w * patch_w
    oh = pixels_h - patch_w + 1
    ow = pixels_w - patch_w + 1
    assert patches == oh * ow, "patches must match the unfold grid"
    assert ver_f % k2 == 0, "ver_f must be C * patch_w**2"
    L = hor_f * ver_f

    # Metadata-only reshape: merge the trailing (hor_f, ver_f) dims.  No HBM
    # transpose/pad anywhere on the host side.
    xv = x.reshape(images, patches, L)

    slab_bytes = patches * L * x.dtype.itemsize
    Bt = _pick_bt(images, slab_bytes)
    grid = (images // Bt,)

    kernel = functools.partial(_agg0_kernel, patch_w=patch_w, oh=oh, ow=ow,
                               pixels_h=pixels_h, pixels_w=pixels_w)

    out = pl.pallas_call(
        kernel,
        grid=grid,
        in_specs=[pl.BlockSpec((Bt, patches, L), lambda i: (i, 0, 0))],
        out_specs=pl.BlockSpec((Bt, patches, L), lambda i: (i, 0, 0)),
        out_shape=jax.ShapeDtypeStruct((images, patches, L), x.dtype),
        compiler_params=pltpu.CompilerParams(
            dimension_semantics=("parallel",)),
    )(xv)

    # Metadata-only reshape back to the module's native output layout.
    return out.reshape(images, patches, hor_f, ver_f)


# ------------------------------ pure-JAX reference ---------------------------
def _unfold_ref(img, patch_w):
    B, C, H, W = img.shape
    oh, ow = H - patch_w + 1, W - patch_w + 1
    cols = []
    for ki in range(patch_w):
        for kj in range(patch_w):
            cols.append(img[:, :, ki:ki + oh, kj:kj + ow])
    cols = jnp.stack(cols, axis=2)                       # (B, C, k2, oh, ow)
    return cols.reshape(B, C * patch_w * patch_w, oh * ow)


def _fold_ref(cols, out_hw, patch_w):
    B, CK, _ = cols.shape
    H, W = out_hw
    oh, ow = H - patch_w + 1, W - patch_w + 1
    C = CK // (patch_w * patch_w)
    cols = cols.reshape(B, C, patch_w, patch_w, oh, ow)
    out = jnp.zeros((B, C, H, W), cols.dtype)
    for ki in range(patch_w):
        for kj in range(patch_w):
            out = out.at[:, :, ki:ki + oh, kj:kj + ow].add(cols[:, :, ki, kj])
    return out


def ref_aggregation0(x, pixels_h, pixels_w, patch_w=3):
    images, patches, hor_f, ver_f = x.shape
    cols = jnp.transpose(x, (0, 2, 3, 1)).reshape(images * hor_f, ver_f, patches)
    cnt = _fold_ref(jnp.ones((1, ver_f, patches), x.dtype),
                    (pixels_h, pixels_w), patch_w)
    img = _fold_ref(cols, (pixels_h, pixels_w), patch_w) / cnt
    cols2 = _unfold_ref(img, patch_w)
    return cols2.reshape(images, hor_f, ver_f, patches).transpose(0, 3, 1, 2)


# ----------------------------------- main ------------------------------------
if __name__ == "__main__":
    IMAGES, HOR_F, PATCH_W = 2, 1, 3
    PIX_H = PIX_W = 18
    OH = PIX_H - PATCH_W + 1                  # 16
    PATCHES = OH * OH                         # 256
    VER_F = 3 * PATCH_W * PATCH_W             # 27   (RGB * 3x3 patch)

    key = jax.random.PRNGKey(0)
    x = jax.random.normal(key, (IMAGES, PATCHES, HOR_F, VER_F), jnp.float32)

    agg = jax.jit(functools.partial(aggregation0_forward,
                                    pixels_h=PIX_H, pixels_w=PIX_W,
                                    patch_w=PATCH_W))
    out = jax.block_until_ready(agg(x))

    ref = jax.block_until_ready(ref_aggregation0(x, PIX_H, PIX_W, PATCH_W))

    assert out.shape == x.shape
    err = float(jnp.max(jnp.abs(out - ref)))
    if not np.isfinite(err) or err > 1e-4:
        raise SystemExit(f"mismatch vs reference: max abs err {err}")
    print("KERNEL_OK")
</pallas_src>

<mosaic_0001>
module attributes {stable_mosaic.version = 11 : i64} {
  func.func @_agg0_kernel(%arg0: i32, %arg1: memref<1x256x27xf32, #tpu.memory_space<vmem>>, %arg2: memref<1x256x27xf32, #tpu.memory_space<vmem>>) attributes {dimension_semantics = [#tpu.dimension_semantics<parallel>], iteration_bounds = array<i64: 2>, scalar_prefetch = 0 : i64, scratch_operands = 0 : i64, tpu.core_type = #tpu.core_type<tc>, window_params = [{transform_indices = @transform_0, window_bounds = array<i64: 1, 256, 27>}, {transform_indices = @transform_1, window_bounds = array<i64: 1, 256, 27>}]} {
    %c0 = arith.constant 0 : index
    %c0_0 = arith.constant 0 : index
    %c0_1 = arith.constant 0 : index
    %0 = vector.load %arg1[%c0, %c0_0, %c0_1] : memref<1x256x27xf32, #tpu.memory_space<vmem>>, vector<1x256x27xf32>
    %1 = tpu.iota {dimensions = array<i32: 0>} : vector<256x27xi32>
    %2 = arith.sitofp %1 : vector<256x27xi32> to vector<256x27xf32>
    %3 = tpu.iota {dimensions = array<i32: 1>} : vector<256x27xi32>
    %4 = arith.sitofp %3 : vector<256x27xi32> to vector<256x27xf32>
    %cst = arith.constant 1.600000e+01 : f32
    %5 = vector.broadcast %cst : f32 to vector<256x27xf32>
    %6 = arith.divf %2, %5 : vector<256x27xf32>
    %7 = math.floor %6 : vector<256x27xf32>
    %cst_2 = arith.constant 1.600000e+01 : f32
    %8 = vector.broadcast %cst_2 : f32 to vector<256x27xf32>
    %9 = arith.mulf %7, %8 : vector<256x27xf32>
    %10 = arith.subf %2, %9 : vector<256x27xf32>
    %cst_3 = arith.constant 9.000000e+00 : f32
    %11 = vector.broadcast %cst_3 : f32 to vector<256x27xf32>
    %12 = arith.divf %4, %11 : vector<256x27xf32>
    %13 = math.floor %12 : vector<256x27xf32>
    %cst_4 = arith.constant 9.000000e+00 : f32
    %14 = vector.broadcast %cst_4 : f32 to vector<256x27xf32>
    %15 = arith.mulf %13, %14 : vector<256x27xf32>
    %16 = arith.subf %4, %15 : vector<256x27xf32>
    %cst_5 = arith.constant 3.000000e+00 : f32
    %17 = vector.broadcast %cst_5 : f32 to vector<256x27xf32>
    %18 = arith.divf %16, %17 : vector<256x27xf32>
    %19 = math.floor %18 : vector<256x27xf32>
    %cst_6 = arith.constant 3.000000e+00 : f32
    %20 = vector.broadcast %cst_6 : f32 to vector<256x27xf32>
    %21 = arith.mulf %19, %20 : vector<256x27xf32>
    %22 = arith.subf %16, %21 : vector<256x27xf32>
    %cst_7 = arith.constant 0.000000e+00 : f32
    %23 = vector.broadcast %cst_7 : f32 to vector<1x2x27xf32>
    %24 = tpu.concatenate %23, %0, %23 in 1 : vector<1x2x27xf32>, vector<1x256x27xf32>, vector<1x2x27xf32> -> vector<1x260x27xf32>
    %cst_8 = arith.constant 0.000000e+00 : f32
    %25 = vector.broadcast %cst_8 : f32 to vector<1x260x2xf32>
    %26 = tpu.concatenate %25, %24, %25 in 2 : vector<1x260x2xf32>, vector<1x260x27xf32>, vector<1x260x2xf32> -> vector<1x260x31xf32>
    %cst_9 = arith.constant 0.000000e+00 : f32
    %27 = vector.broadcast %cst_9 : f32 to vector<1x256x27xf32>
    %cst_10 = arith.constant -2.000000e+00 : f32
    %28 = vector.broadcast %cst_10 : f32 to vector<256x27xf32>
    %29 = arith.addf %10, %28 : vector<256x27xf32>
    %cst_11 = arith.constant 0.000000e+00 : f32
    %30 = vector.broadcast %cst_11 : f32 to vector<256x27xf32>
    %31 = arith.cmpf oge, %29, %30 : vector<256x27xf32>
    %cst_12 = arith.constant -2.000000e+00 : f32
    %32 = vector.broadcast %cst_12 : f32 to vector<256x27xf32>
    %33 = arith.addf %10, %32 : vector<256x27xf32>
    %cst_13 = arith.constant 1.600000e+01 : f32
    %34 = vector.broadcast %cst_13 : f32 to vector<256x27xf32>
    %35 = arith.cmpf olt, %33, %34 : vector<256x27xf32>
    %36 = arith.andi %31, %35 : vector<256x27xi1>
    %cst_14 = arith.constant -2.000000e+00 : f32
    %37 = vector.broadcast %cst_14 : f32 to vector<256x27xf32>
    %38 = arith.subf %22, %37 : vector<256x27xf32>
    %cst_15 = arith.constant 0.000000e+00 : f32
    %39 = vector.broadcast %cst_15 : f32 to vector<256x27xf32>
    %40 = arith.cmpf oge, %38, %39 : vector<256x27xf32>
    %41 = arith.andi %36, %40 : vector<256x27xi1>
    %cst_16 = arith.constant -2.000000e+00 : f32
    %42 = vector.broadcast %cst_16 : f32 to vector<256x27xf32>
    %43 = arith.subf %22, %42 : vector<256x27xf32>
    %cst_17 = arith.constant 3.000000e+00 : f32
    %44 = vector.broadcast %cst_17 : f32 to vector<256x27xf32>
    %45 = arith.cmpf olt, %43, %44 : vector<256x27xf32>
    %46 = arith.andi %41, %45 : vector<256x27xi1>
    %47 = arith.extui %46 : vector<256x27xi1> to vector<256x27xi32>
    %48 = arith.sitofp %47 : vector<256x27xi32> to vector<256x27xf32>
    %49 = vector.extract_strided_slice %26 {offsets = [0, 0, 4], sizes = [1, 256, 27], strides = [1, 1, 1]} : vector<1x260x31xf32> to vector<1x256x27xf32>
    %50 = vector.shape_cast %48 : vector<256x27xf32> to vector<1x256x27xf32>
    %51 = arith.mulf %49, %50 : vector<1x256x27xf32>
    %52 = arith.addf %27, %51 : vector<1x256x27xf32>
    %cst_18 = arith.constant -1.000000e+00 : f32
    %53 = vector.broadcast %cst_18 : f32 to vector<256x27xf32>
    %54 = arith.addf %10, %53 : vector<256x27xf32>
    %cst_19 = arith.constant 0.000000e+00 : f32
    %55 = vector.broadcast %cst_19 : f32 to vector<256x27xf32>
    %56 = arith.cmpf oge, %54, %55 : vector<256x27xf32>
    %cst_20 = arith.constant -1.000000e+00 : f32
    %57 = vector.broadcast %cst_20 : f32 to vector<256x27xf32>
    %58 = arith.addf %10, %57 : vector<256x27xf32>
    %cst_21 = arith.constant 1.600000e+01 : f32
    %59 = vector.broadcast %cst_21 : f32 to vector<256x27xf32>
    %60 = arith.cmpf olt, %58, %59 : vector<256x27xf32>
    %61 = arith.andi %56, %60 : vector<256x27xi1>
    %cst_22 = arith.constant -1.000000e+00 : f32
    %62 = vector.broadcast %cst_22 : f32 to vector<256x27xf32>
    %63 = arith.subf %22, %62 : vector<256x27xf32>
    %cst_23 = arith.constant 0.000000e+00 : f32
    %64 = vector.broadcast %cst_23 : f32 to vector<256x27xf32>
    %65 = arith.cmpf oge, %63, %64 : vector<256x27xf32>
    %66 = arith.andi %61, %65 : vector<256x27xi1>
    %cst_24 = arith.constant -1.000000e+00 : f32
    %67 = vector.broadcast %cst_24 : f32 to vector<256x27xf32>
    %68 = arith.subf %22, %67 : vector<256x27xf32>
    %cst_25 = arith.constant 3.000000e+00 : f32
    %69 = vector.broadcast %cst_25 : f32 to vector<256x27xf32>
    %70 = arith.cmpf olt, %68, %69 : vector<256x27xf32>
    %71 = arith.andi %66, %70 : vector<256x27xi1>
    %72 = arith.extui %71 : vector<256x27xi1> to vector<256x27xi32>
    %73 = arith.sitofp %72 : vector<256x27xi32> to vector<256x27xf32>
    %74 = vector.extract_strided_slice %26 {offsets = [0, 1, 3], sizes = [1, 256, 27], strides = [1, 1, 1]} : vector<1x260x31xf32> to vector<1x256x27xf32>
    %75 = vector.shape_cast %73 : vector<256x27xf32> to vector<1x256x27xf32>
    %76 = arith.mulf %74, %75 : vector<1x256x27xf32>
    %77 = arith.addf %52, %76 : vector<1x256x27xf32>
    %cst_26 = arith.constant 0.000000e+00 : f32
    %78 = vector.broadcast %cst_26 : f32 to vector<256x27xf32>
    %79 = arith.addf %10, %78 : vector<256x27xf32>
    %cst_27 = arith.constant 0.000000e+00 : f32
    %80 = vector.broadcast %cst_27 : f32 to vector<256x27xf32>
    %81 = arith.cmpf oge, %79, %80 : vector<256x27xf32>
    %cst_28 = arith.constant 0.000000e+00 : f32
    %82 = vector.broadcast %cst_28 : f32 to vector<256x27xf32>
    %83 = arith.addf %10, %82 : vector<256x27xf32>
    %cst_29 = arith.constant 1.600000e+01 : f32
    %84 = vector.broadcast %cst_29 : f32 to vector<256x27xf32>
    %85 = arith.cmpf olt, %83, %84 : vector<256x27xf32>
    %86 = arith.andi %81, %85 : vector<256x27xi1>
    %cst_30 = arith.constant 0.000000e+00 : f32
    %87 = vector.broadcast %cst_30 : f32 to vector<256x27xf32>
    %88 = arith.subf %22, %87 : vector<256x27xf32>
    %cst_31 = arith.constant 0.000000e+00 : f32
    %89 = vector.broadcast %cst_31 : f32 to vector<256x27xf32>
    %90 = arith.cmpf oge, %88, %89 : vector<256x27xf32>
    %91 = arith.andi %86, %90 : vector<256x27xi1>
    %cst_32 = arith.constant 0.000000e+00 : f32
    %92 = vector.broadcast %cst_32 : f32 to vector<256x27xf32>
    %93 = arith.subf %22, %92 : vector<256x27xf32>
    %cst_33 = arith.constant 3.000000e+00 : f32
    %94 = vector.broadcast %cst_33 : f32 to vector<256x27xf32>
    %95 = arith.cmpf olt, %93, %94 : vector<256x27xf32>
    %96 = arith.andi %91, %95 : vector<256x27xi1>
    %97 = arith.extui %96 : vector<256x27xi1> to vector<256x27xi32>
    %98 = arith.sitofp %97 : vector<256x27xi32> to vector<256x27xf32>
    %99 = vector.extract_strided_slice %26 {offsets = [0, 2, 2], sizes = [1, 256, 27], strides = [1, 1, 1]} : vector<1x260x31xf32> to vector<1x256x27xf32>
    %100 = vector.shape_cast %98 : vector<256x27xf32> to vector<1x256x27xf32>
    %101 = arith.mulf %99, %100 : vector<1x256x27xf32>
    %102 = arith.addf %77, %101 : vector<1x256x27xf32>
    %cst_34 = arith.constant 1.000000e+00 : f32
    %103 = vector.broadcast %cst_34 : f32 to vector<256x27xf32>
    %104 = arith.addf %10, %103 : vector<256x27xf32>
    %cst_35 = arith.constant 0.000000e+00 : f32
    %105 = vector.broadcast %cst_35 : f32 to vector<256x27xf32>
    %106 = arith.cmpf oge, %104, %105 : vector<256x27xf32>
    %cst_36 = arith.constant 1.000000e+00 : f32
    %107 = vector.broadcast %cst_36 : f32 to vector<256x27xf32>
    %108 = arith.addf %10, %107 : vector<256x27xf32>
    %cst_37 = arith.constant 1.600000e+01 : f32
    %109 = vector.broadcast %cst_37 : f32 to vector<256x27xf32>
    %110 = arith.cmpf olt, %108, %109 : vector<256x27xf32>
    %111 = arith.andi %106, %110 : vector<256x27xi1>
    %cst_38 = arith.constant 1.000000e+00 : f32
    %112 = vector.broadcast %cst_38 : f32 to vector<256x27xf32>
    %113 = arith.subf %22, %112 : vector<256x27xf32>
    %cst_39 = arith.constant 0.000000e+00 : f32
    %114 = vector.broadcast %cst_39 : f32 to vector<256x27xf32>
    %115 = arith.cmpf oge, %113, %114 : vector<256x27xf32>
    %116 = arith.andi %111, %115 : vector<256x27xi1>
    %cst_40 = arith.constant 1.000000e+00 : f32
    %117 = vector.broadcast %cst_40 : f32 to vector<256x27xf32>
    %118 = arith.subf %22, %117 : vector<256x27xf32>
    %cst_41 = arith.constant 3.000000e+00 : f32
    %119 = vector.broadcast %cst_41 : f32 to vector<256x27xf32>
    %120 = arith.cmpf olt, %118, %119 : vector<256x27xf32>
    %121 = arith.andi %116, %120 : vector<256x27xi1>
    %122 = arith.extui %121 : vector<256x27xi1> to vector<256x27xi32>
    %123 = arith.sitofp %122 : vector<256x27xi32> to vector<256x27xf32>
    %124 = vector.extract_strided_slice %26 {offsets = [0, 3, 1], sizes = [1, 256, 27], strides = [1, 1, 1]} : vector<1x260x31xf32> to vector<1x256x27xf32>
    %125 = vector.shape_cast %123 : vector<256x27xf32> to vector<1x256x27xf32>
    %126 = arith.mulf %124, %125 : vector<1x256x27xf32>
    %127 = arith.addf %102, %126 : vector<1x256x27xf32>
    %cst_42 = arith.constant 2.000000e+00 : f32
    %128 = vector.broadcast %cst_42 : f32 to vector<256x27xf32>
    %129 = arith.addf %10, %128 : vector<256x27xf32>
    %cst_43 = arith.constant 0.000000e+00 : f32
    %130 = vector.broadcast %cst_43 : f32 to vector<256x27xf32>
    %131 = arith.cmpf oge, %129, %130 : vector<256x27xf32>
    %cst_44 = arith.constant 2.000000e+00 : f32
    %132 = vector.broadcast %cst_44 : f32 to vector<256x27xf32>
    %133 = arith.addf %10, %132 : vector<256x27xf32>
    %cst_45 = arith.constant 1.600000e+01 : f32
    %134 = vector.broadcast %cst_45 : f32 to vector<256x27xf32>
    %135 = arith.cmpf olt, %133, %134 : vector<256x27xf32>
    %136 = arith.andi %131, %135 : vector<256x27xi1>
    %cst_46 = arith.constant 2.000000e+00 : f32
    %137 = vector.broadcast %cst_46 : f32 to vector<256x27xf32>
    %138 = arith.subf %22, %137 : vector<256x27xf32>
    %cst_47 = arith.constant 0.000000e+00 : f32
    %139 = vector.broadcast %cst_47 : f32 to vector<256x27xf32>
    %140 = arith.cmpf oge, %138, %139 : vector<256x27xf32>
    %141 = arith.andi %136, %140 : vector<256x27xi1>
    %cst_48 = arith.constant 2.000000e+00 : f32
    %142 = vector.broadcast %cst_48 : f32 to vector<256x27xf32>
    %143 = arith.subf %22, %142 : vector<256x27xf32>
    %cst_49 = arith.constant 3.000000e+00 : f32
    %144 = vector.broadcast %cst_49 : f32 to vector<256x27xf32>
    %145 = arith.cmpf olt, %143, %144 : vector<256x27xf32>
    %146 = arith.andi %141, %145 : vector<256x27xi1>
    %147 = arith.extui %146 : vector<256x27xi1> to vector<256x27xi32>
    %148 = arith.sitofp %147 : vector<256x27xi32> to vector<256x27xf32>
    %149 = vector.extract_strided_slice %26 {offsets = [0, 4, 0], sizes = [1, 256, 27], strides = [1, 1, 1]} : vector<1x260x31xf32> to vector<1x256x27xf32>
    %150 = vector.shape_cast %148 : vector<256x27xf32> to vector<1x256x27xf32>
    %151 = arith.mulf %149, %150 : vector<1x256x27xf32>
    %152 = arith.addf %127, %151 : vector<1x256x27xf32>
    %cst_50 = arith.constant 0.000000e+00 : f32
    %153 = vector.broadcast %cst_50 : f32 to vector<1x32x27xf32>
    %154 = tpu.concatenate %153, %152, %153 in 1 : vector<1x32x27xf32>, vector<1x256x27xf32>, vector<1x32x27xf32> -> vector<1x320x27xf32>
    %cst_51 = arith.constant 0.000000e+00 : f32
    %155 = vector.broadcast %cst_51 : f32 to vector<1x320x6xf32>
    %156 = tpu.concatenate %155, %154, %155 in 2 : vector<1x320x6xf32>, vector<1x320x27xf32>, vector<1x320x6xf32> -> vector<1x320x39xf32>
    %cst_52 = arith.constant 0.000000e+00 : f32
    %157 = vector.broadcast %cst_52 : f32 to vector<1x256x27xf32>
    %cst_53 = arith.constant -2.000000e+00 : f32
    %158 = vector.broadcast %cst_53 : f32 to vector<256x27xf32>
    %159 = arith.addf %7, %158 : vector<256x27xf32>
    %cst_54 = arith.constant 0.000000e+00 : f32
    %160 = vector.broadcast %cst_54 : f32 to vector<256x27xf32>
    %161 = arith.cmpf oge, %159, %160 : vector<256x27xf32>
    %cst_55 = arith.constant -2.000000e+00 : f32
    %162 = vector.broadcast %cst_55 : f32 to vector<256x27xf32>
    %163 = arith.addf %7, %162 : vector<256x27xf32>
    %cst_56 = arith.constant 1.600000e+01 : f32
    %164 = vector.broadcast %cst_56 : f32 to vector<256x27xf32>
    %165 = arith.cmpf olt, %163, %164 : vector<256x27xf32>
    %166 = arith.andi %161, %165 : vector<256x27xi1>
    %cst_57 = arith.constant -2.000000e+00 : f32
    %167 = vector.broadcast %cst_57 : f32 to vector<256x27xf32>
    %168 = arith.subf %19, %167 : vector<256x27xf32>
    %cst_58 = arith.constant 0.000000e+00 : f32
    %169 = vector.broadcast %cst_58 : f32 to vector<256x27xf32>
    %170 = arith.cmpf oge, %168, %169 : vector<256x27xf32>
    %171 = arith.andi %166, %170 : vector<256x27xi1>
    %cst_59 = arith.constant -2.000000e+00 : f32
    %172 = vector.broadcast %cst_59 : f32 to vector<256x27xf32>
    %173 = arith.subf %19, %172 : vector<256x27xf32>
    %cst_60 = arith.constant 3.000000e+00 : f32
    %174 = vector.broadcast %cst_60 : f32 to vector<256x27xf32>
    %175 = arith.cmpf olt, %173, %174 : vector<256x27xf32>
    %176 = arith.andi %171, %175 : vector<256x27xi1>
    %177 = arith.extui %176 : vector<256x27xi1> to vector<256x27xi32>
    %178 = arith.sitofp %177 : vector<256x27xi32> to vector<256x27xf32>
    %179 = vector.extract_strided_slice %156 {offsets = [0, 0, 12], sizes = [1, 256, 27], strides = [1, 1, 1]} : vector<1x320x39xf32> to vector<1x256x27xf32>
    %180 = vector.shape_cast %178 : vector<256x27xf32> to vector<1x256x27xf32>
    %181 = arith.mulf %179, %180 : vector<1x256x27xf32>
    %182 = arith.addf %157, %181 : vector<1x256x27xf32>
    %cst_61 = arith.constant -1.000000e+00 : f32
    %183 = vector.broadcast %cst_61 : f32 to vector<256x27xf32>
    %184 = arith.addf %7, %183 : vector<256x27xf32>
    %cst_62 = arith.constant 0.000000e+00 : f32
    %185 = vector.broadcast %cst_62 : f32 to vector<256x27xf32>
    %186 = arith.cmpf oge, %184, %185 : vector<256x27xf32>
    %cst_63 = arith.constant -1.000000e+00 : f32
    %187 = vector.broadcast %cst_63 : f32 to vector<256x27xf32>
    %188 = arith.addf %7, %187 : vector<256x27xf32>
    %cst_64 = arith.constant 1.600000e+01 : f32
    %189 = vector.broadcast %cst_64 : f32 to vector<256x27xf32>
    %190 = arith.cmpf olt, %188, %189 : vector<256x27xf32>
    %191 = arith.andi %186, %190 : vector<256x27xi1>
    %cst_65 = arith.constant -1.000000e+00 : f32
    %192 = vector.broadcast %cst_65 : f32 to vector<256x27xf32>
    %193 = arith.subf %19, %192 : vector<256x27xf32>
    %cst_66 = arith.constant 0.000000e+00 : f32
    %194 = vector.broadcast %cst_66 : f32 to vector<256x27xf32>
    %195 = arith.cmpf oge, %193, %194 : vector<256x27xf32>
    %196 = arith.andi %191, %195 : vector<256x27xi1>
    %cst_67 = arith.constant -1.000000e+00 : f32
    %197 = vector.broadcast %cst_67 : f32 to vector<256x27xf32>
    %198 = arith.subf %19, %197 : vector<256x27xf32>
    %cst_68 = arith.constant 3.000000e+00 : f32
    %199 = vector.broadcast %cst_68 : f32 to vector<256x27xf32>
    %200 = arith.cmpf olt, %198, %199 : vector<256x27xf32>
    %201 = arith.andi %196, %200 : vector<256x27xi1>
    %202 = arith.extui %201 : vector<256x27xi1> to vector<256x27xi32>
    %203 = arith.sitofp %202 : vector<256x27xi32> to vector<256x27xf32>
    %204 = vector.extract_strided_slice %156 {offsets = [0, 16, 9], sizes = [1, 256, 27], strides = [1, 1, 1]} : vector<1x320x39xf32> to vector<1x256x27xf32>
    %205 = vector.shape_cast %203 : vector<256x27xf32> to vector<1x256x27xf32>
    %206 = arith.mulf %204, %205 : vector<1x256x27xf32>
    %207 = arith.addf %182, %206 : vector<1x256x27xf32>
    %cst_69 = arith.constant 0.000000e+00 : f32
    %208 = vector.broadcast %cst_69 : f32 to vector<256x27xf32>
    %209 = arith.addf %7, %208 : vector<256x27xf32>
    %cst_70 = arith.constant 0.000000e+00 : f32
    %210 = vector.broadcast %cst_70 : f32 to vector<256x27xf32>
    %211 = arith.cmpf oge, %209, %210 : vector<256x27xf32>
    %cst_71 = arith.constant 0.000000e+00 : f32
    %212 = vector.broadcast %cst_71 : f32 to vector<256x27xf32>
    %213 = arith.addf %7, %212 : vector<256x27xf32>
    %cst_72 = arith.constant 1.600000e+01 : f32
    %214 = vector.broadcast %cst_72 : f32 to vector<256x27xf32>
    %215 = arith.cmpf olt, %213, %214 : vector<256x27xf32>
    %216 = arith.andi %211, %215 : vector<256x27xi1>
    %cst_73 = arith.constant 0.000000e+00 : f32
    %217 = vector.broadcast %cst_73 : f32 to vector<256x27xf32>
    %218 = arith.subf %19, %217 : vector<256x27xf32>
    %cst_74 = arith.constant 0.000000e+00 : f32
    %219 = vector.broadcast %cst_74 : f32 to vector<256x27xf32>
    %220 = arith.cmpf oge, %218, %219 : vector<256x27xf32>
    %221 = arith.andi %216, %220 : vector<256x27xi1>
    %cst_75 = arith.constant 0.000000e+00 : f32
    %222 = vector.broadcast %cst_75 : f32 to vector<256x27xf32>
    %223 = arith.subf %19, %222 : vector<256x27xf32>
    %cst_76 = arith.constant 3.000000e+00 : f32
    %224 = vector.broadcast %cst_76 : f32 to vector<256x27xf32>
    %225 = arith.cmpf olt, %223, %224 : vector<256x27xf32>
    %226 = arith.andi %221, %225 : vector<256x27xi1>
    %227 = arith.extui %226 : vector<256x27xi1> to vector<256x27xi32>
    %228 = arith.sitofp %227 : vector<256x27xi32> to vector<256x27xf32>
    %229 = vector.extract_strided_slice %156 {offsets = [0, 32, 6], sizes = [1, 256, 27], strides = [1, 1, 1]} : vector<1x320x39xf32> to vector<1x256x27xf32>
    %230 = vector.shape_cast %228 : vector<256x27xf32> to vector<1x256x27xf32>
    %231 = arith.mulf %229, %230 : vector<1x256x27xf32>
    %232 = arith.addf %207, %231 : vector<1x256x27xf32>
    %cst_77 = arith.constant 1.000000e+00 : f32
    %233 = vector.broadcast %cst_77 : f32 to vector<256x27xf32>
    %234 = arith.addf %7, %233 : vector<256x27xf32>
    %cst_78 = arith.constant 0.000000e+00 : f32
    %235 = vector.broadcast %cst_78 : f32 to vector<256x27xf32>
    %236 = arith.cmpf oge, %234, %235 : vector<256x27xf32>
    %cst_79 = arith.constant 1.000000e+00 : f32
    %237 = vector.broadcast %cst_79 : f32 to vector<256x27xf32>
    %238 = arith.addf %7, %237 : vector<256x27xf32>
    %cst_80 = arith.constant 1.600000e+01 : f32
    %239 = vector.broadcast %cst_80 : f32 to vector<256x27xf32>
    %240 = arith.cmpf olt, %238, %239 : vector<256x27xf32>
    %241 = arith.andi %236, %240 : vector<256x27xi1>
    %cst_81 = arith.constant 1.000000e+00 : f32
    %242 = vector.broadcast %cst_81 : f32 to vector<256x27xf32>
    %243 = arith.subf %19, %242 : vector<256x27xf32>
    %cst_82 = arith.constant 0.000000e+00 : f32
    %244 = vector.broadcast %cst_82 : f32 to vector<256x27xf32>
    %245 = arith.cmpf oge, %243, %244 : vector<256x27xf32>
    %246 = arith.andi %241, %245 : vector<256x27xi1>
    %cst_83 = arith.constant 1.000000e+00 : f32
    %247 = vector.broadcast %cst_83 : f32 to vector<256x27xf32>
    %248 = arith.subf %19, %247 : vector<256x27xf32>
    %cst_84 = arith.constant 3.000000e+00 : f32
    %249 = vector.broadcast %cst_84 : f32 to vector<256x27xf32>
    %250 = arith.cmpf olt, %248, %249 : vector<256x27xf32>
    %251 = arith.andi %246, %250 : vector<256x27xi1>
    %252 = arith.extui %251 : vector<256x27xi1> to vector<256x27xi32>
    %253 = arith.sitofp %252 : vector<256x27xi32> to vector<256x27xf32>
    %254 = vector.extract_strided_slice %156 {offsets = [0, 48, 3], sizes = [1, 256, 27], strides = [1, 1, 1]} : vector<1x320x39xf32> to vector<1x256x27xf32>
    %255 = vector.shape_cast %253 : vector<256x27xf32> to vector<1x256x27xf32>
    %256 = arith.mulf %254, %255 : vector<1x256x27xf32>
    %257 = arith.addf %232, %256 : vector<1x256x27xf32>
    %cst_85 = arith.constant 2.000000e+00 : f32
    %258 = vector.broadcast %cst_85 : f32 to vector<256x27xf32>
    %259 = arith.addf %7, %258 : vector<256x27xf32>
    %cst_86 = arith.constant 0.000000e+00 : f32
    %260 = vector.broadcast %cst_86 : f32 to vector<256x27xf32>
    %261 = arith.cmpf oge, %259, %260 : vector<256x27xf32>
    %cst_87 = arith.constant 2.000000e+00 : f32
    %262 = vector.broadcast %cst_87 : f32 to vector<256x27xf32>
    %263 = arith.addf %7, %262 : vector<256x27xf32>
    %cst_88 = arith.constant 1.600000e+01 : f32
    %264 = vector.broadcast %cst_88 : f32 to vector<256x27xf32>
    %265 = arith.cmpf olt, %263, %264 : vector<256x27xf32>
    %266 = arith.andi %261, %265 : vector<256x27xi1>
    %cst_89 = arith.constant 2.000000e+00 : f32
    %267 = vector.broadcast %cst_89 : f32 to vector<256x27xf32>
    %268 = arith.subf %19, %267 : vector<256x27xf32>
    %cst_90 = arith.constant 0.000000e+00 : f32
    %269 = vector.broadcast %cst_90 : f32 to vector<256x27xf32>
    %270 = arith.cmpf oge, %268, %269 : vector<256x27xf32>
    %271 = arith.andi %266, %270 : vector<256x27xi1>
    %cst_91 = arith.constant 2.000000e+00 : f32
    %272 = vector.broadcast %cst_91 : f32 to vector<256x27xf32>
    %273 = arith.subf %19, %272 : vector<256x27xf32>
    %cst_92 = arith.constant 3.000000e+00 : f32
    %274 = vector.broadcast %cst_92 : f32 to vector<256x27xf32>
    %275 = arith.cmpf olt, %273, %274 : vector<256x27xf32>
    %276 = arith.andi %271, %275 : vector<256x27xi1>
    %277 = arith.extui %276 : vector<256x27xi1> to vector<256x27xi32>
    %278 = arith.sitofp %277 : vector<256x27xi32> to vector<256x27xf32>
    %279 = vector.extract_strided_slice %156 {offsets = [0, 64, 0], sizes = [1, 256, 27], strides = [1, 1, 1]} : vector<1x320x39xf32> to vector<1x256x27xf32>
    %280 = vector.shape_cast %278 : vector<256x27xf32> to vector<1x256x27xf32>
    %281 = arith.mulf %279, %280 : vector<1x256x27xf32>
    %282 = arith.addf %257, %281 : vector<1x256x27xf32>
    %283 = arith.addf %7, %19 : vector<256x27xf32>
    %284 = arith.addf %10, %22 : vector<256x27xf32>
    %cst_93 = arith.constant 2.000000e+00 : f32
    %285 = vector.broadcast %cst_93 : f32 to vector<256x27xf32>
    %286 = arith.minimumf %283, %285 : vector<256x27xf32>
    %cst_94 = arith.constant 1.500000e+01 : f32
    %287 = vector.broadcast %cst_94 : f32 to vector<256x27xf32>
    %288 = arith.subf %283, %287 : vector<256x27xf32>
    %cst_95 = arith.constant 0.000000e+00 : f32
    %289 = vector.broadcast %cst_95 : f32 to vector<256x27xf32>
    %290 = arith.maximumf %288, %289 : vector<256x27xf32>
    %291 = arith.subf %286, %290 : vector<256x27xf32>
    %cst_96 = arith.constant 1.000000e+00 : f32
    %292 = vector.broadcast %cst_96 : f32 to vector<256x27xf32>
    %293 = arith.addf %291, %292 : vector<256x27xf32>
    %cst_97 = arith.constant 2.000000e+00 : f32
    %294 = vector.broadcast %cst_97 : f32 to vector<256x27xf32>
    %295 = arith.minimumf %284, %294 : vector<256x27xf32>
    %cst_98 = arith.constant 1.500000e+01 : f32
    %296 = vector.broadcast %cst_98 : f32 to vector<256x27xf32>
    %297 = arith.subf %284, %296 : vector<256x27xf32>
    %cst_99 = arith.constant 0.000000e+00 : f32
    %298 = vector.broadcast %cst_99 : f32 to vector<256x27xf32>
    %299 = arith.maximumf %297, %298 : vector<256x27xf32>
    %300 = arith.subf %295, %299 : vector<256x27xf32>
    %cst_100 = arith.constant 1.000000e+00 : f32
    %301 = vector.broadcast %cst_100 : f32 to vector<256x27xf32>
    %302 = arith.addf %300, %301 : vector<256x27xf32>
    %303 = arith.mulf %293, %302 : vector<256x27xf32>
    %cst_101 = arith.constant 1.000000e+00 : f32
    %304 = vector.broadcast %cst_101 : f32 to vector<256x27xf32>
    %305 = arith.divf %304, %303 : vector<256x27xf32>
    %306 = vector.shape_cast %305 : vector<256x27xf32> to vector<1x256x27xf32>
    %307 = arith.mulf %282, %306 : vector<1x256x27xf32>
    %c0_102 = arith.constant 0 : index
    %c0_103 = arith.constant 0 : index
    %c0_104 = arith.constant 0 : index
    %308 = vector.load %arg2[%c0_102, %c0_103, %c0_104] : memref<1x256x27xf32, #tpu.memory_space<vmem>>, vector<1x256x27xf32>
    tpu.vector_store %arg2[%c0_102, %c0_103, %c0_104], %307 {strides = array<i32>} : memref<1x256x27xf32, #tpu.memory_space<vmem>>, vector<1x256x27xf32>,
    return
  }
  func.func @transform_0(%arg0: i32) -> (i32, i32, i32) {
    %c0_i32 = arith.constant 0 : i32
    %c0_i32_0 = arith.constant 0 : i32
    %c0_i32_1 = arith.constant 0 : i32
    return %arg0, %c0_i32, %c0_i32_0 : i32, i32, i32
  }
  func.func @transform_1(%arg0: i32) -> (i32, i32, i32) {
    %c0_i32 = arith.constant 0 : i32
    %c0_i32_0 = arith.constant 0 : i32
    %c0_i32_1 = arith.constant 0 : i32
    return %arg0, %c0_i32, %c0_i32_0 : i32, i32, i32
  }
}

</mosaic_0001>

<llo_original>
// kernel: aggregation0_forward.1
$region0: #{aggregation0_forward.1}
  #allocation0 [shape = 'u32[]', space=smem, size = 0x4, offset = 0x4, fixed_abs, tag = 'smem constant byte address 0x4 - core index']
  #allocation1 [shape = 'u32[144,128]{1,0:T(1,128)}', space=vmem, size = 0x12000, scoped, tag = 'internal scratch']
  %s0 = inlined_call_operand.vmem [shape: f32[2,256,27], index: 0, kind: input, shape index: {}]
  %s1 = inlined_call_operand.vmem [shape: f32[2,256,27], index: 1, kind: output, shape index: {}]
  %s2 = sld [smem:[#allocation0]]
  $region37: #{aggregation0_forward.1} parent=0
    _
  %s4 = ssub.s32 1, %s2
  %s5 = scalar_select 0, %s4, %s2
  loop: start=0, step=1, limit=4
  $region2: #{aggregation0_forward.1} parent=0 // loop_pre_header
    _
  $region3: #{aggregation0_forward.1} parent=0 // loop_header
    %s7 = sphi 0, %s11
    %p8 = scmp.ge.s32.totalorder %s7, 4
    %s17 = sphi 0, %s19
    %s20 = sphi 0, %s17
    %s21 = sphi 0, %s20
    %s37 = sphi 0, %s21
    %s43 = sphi 0, %s45
    %s46 = sphi 0, %s43
    %s47 = sphi 0, %s46
    %s63 = sphi 0, %s47
  $region4: #{aggregation0_forward.1} parent=0 // loop_header_branch
    %10 = sbr.rel (%p8) target = $region8
  $region5: #{aggregation0_forward.1} parent=0 // loop_body
    %s12 = ssub.s32 %s7, 1
    %s13 = ssub.s32 %s7, 2
    %s14 = sadd.s32 %s7, 1
    %s15 = ssub.s32 %s7, %s14
    %p16 = scmp.eq.s32.totalorder %s15, 0
    %s18 = sadd.s32 %s17, 1
    %s19 = scalar_select %p16, %s17, %s18
    %p22 = pneg %p16
    %p23 = scmp.eq.s32.totalorder %s7, 1
    %p24 = por %p22, %p23
    %p25 = scmp.ne.s32.totalorder %s17, %s20
    %p26 = scmp.eq.s32.totalorder %s7, 0
    %p27 = por %p25, %p26
    %p28 = scmp.ne.s32.totalorder %s17, %s20
    %p29 = scmp.eq.s32.totalorder %s12, 1
    %p30 = por %p28, %p29
    %p31 = scmp.ne.s32.totalorder %s20, %s21
    %p32 = scmp.eq.s32.totalorder %s12, 0
    %p33 = por %p31, %p32
    %p34 = scmp.ne.s32.totalorder %s20, %s21
    %p35 = scmp.eq.s32.totalorder %s13, 1
    %p36 = por %p34, %p35
    %p38 = scmp.ne.s32.totalorder %s21, %s37
    %p39 = scmp.eq.s32.totalorder %s13, 0
    %p40 = por %p38, %p39
    %s41 = ssub.s32 %s7, %s14
    %p42 = scmp.eq.s32.totalorder %s41, 0
    %s44 = sadd.s32 %s43, 1
    %s45 = scalar_select %p42, %s43, %s44
    %p48 = pneg %p42
    %p49 = scmp.eq.s32.totalorder %s7, 1
    %p50 = por %p48, %p49
    %p51 = scmp.ne.s32.totalorder %s43, %s46
    %p52 = scmp.eq.s32.totalorder %s7, 0
    %p53 = por %p51, %p52
    %p54 = scmp.ne.s32.totalorder %s43, %s46
    %p55 = scmp.eq.s32.totalorder %s12, 1
    %p56 = por %p54, %p55
    %p57 = scmp.ne.s32.totalorder %s46, %s47
    %p58 = scmp.eq.s32.totalorder %s12, 0
    %p59 = por %p57, %p58
    %p60 = scmp.ne.s32.totalorder %s46, %s47
    %p61 = scmp.eq.s32.totalorder %s13, 1
    %p62 = por %p60, %p61
    %p64 = scmp.ne.s32.totalorder %s47, %s63
    %p65 = scmp.eq.s32.totalorder %s13, 0
    %p66 = por %p64, %p65
    %p67 = scmp.le.s32.totalorder 1, %s7
    %p68 = scmp.lt.s32.totalorder %s7, 3
    %p69 = pnand %p67, %p68
    %p70 = pneg %p69
    // Predicated region
    $region9: #{aggregation0_forward.1} parent=5 // pred_check
      _
    $region10: #{aggregation0_forward.1} parent=5 // pred_check_branch
      %72 = sbr.rel (%p69) target = $region12
    $region11: #{aggregation0_forward.1} parent=5 // pred_region
      %s73 = ssub.s32 %s7, 1
    $region12: #{aggregation0_forward.1} parent=5 // pred_fallthru
      _
    %p74 = scmp.lt.s32.totalorder %s7, 2
    // Predicated region
    $region13: #{aggregation0_forward.1} parent=5 // pred_check
      %p75 = pneg %p74
    $region14: #{aggregation0_forward.1} parent=5 // pred_check_branch
      %77 = sbr.rel (%p75) target = $region16
    $region15: #{aggregation0_forward.1} parent=5 // pred_region
      // Predicated region
      $region17: #{aggregation0_forward.1} parent=15 // pred_check
        %p78 = pneg %p27
      $region18: #{aggregation0_forward.1} parent=15 // pred_check_branch
        %80 = sbr.rel (%p78) target = $region20
      $region19: #{aggregation0_forward.1} parent=15 // pred_region
        %p81 = scmp.lt.s32.totalorder %s7, 1
        %s82 = scalar_select %p81, %s7, 1
        %s83 = smul.addr %s82, 32
        %s84 = smul.addr %s83, 8
        %s85 = scalar_lea.vmem %s0, %s84
      $region20: #{aggregation0_forward.1} parent=15 // pred_fallthru
        _
    $region16: #{aggregation0_forward.1} parent=5 // pred_fallthru
      _
    %p86 = scmp.le.s32.totalorder 1, %s7
    %p87 = scmp.lt.s32.totalorder %s7, 3
    %p88 = pnand %p86, %p87
    %p89 = pneg %p88
    // Predicated region
    $region21: #{aggregation0_forward.1} parent=5 // pred_check
      _
    $region22: #{aggregation0_forward.1} parent=5 // pred_check_branch
      %91 = sbr.rel (%p88) target = $region24
    $region23: #{aggregation0_forward.1} parent=5 // pred_region
      %s92 = ssub.s32 %s7, 1
      %p93 = scmp.lt.s32.totalorder %s12, 1
      %s94 = scalar_select %p93, %s12, 1
      %s95 = smul.addr %s94, 32
      %s96 = smul.addr %s95, 8
      %s97 = scalar_lea.vmem %s0, %s96
      %p98 = pneg %p33
      %p99 = pneg %p30
      %p100 = pneg %p59
      %p101 = pneg %p56
      %p102 = scmp.lt.s32.totalorder %s12, 1
      %s103 = scalar_select %p102, %s12, 1
      %s104 = smul.addr %s103, 32
      %s105 = smul.addr %s104, 8
      %s106 = scalar_lea.vmem %s1, %s105
      %p107 = scmp.lt.s32.totalorder %s12, 1
      %s108 = scalar_select %p107, %s12, 1
      %s109 = smul.addr %s108, 32
      %s110 = smul.addr %s109, 8
      %s111 = scalar_lea.vmem %s0, %s110
      %p112 = scmp.lt.s32.totalorder %s12, 1
      %s113 = scalar_select %p112, %s12, 1
      %s114 = smul.addr %s113, 32
      %s115 = smul.addr %s114, 8
      %s116 = scalar_lea.vmem %s1, %s115
      %v117 = vld [vmem:[%s111] sm:$0xff]
      %v118 = vld [vmem:[%s111 + $0x8] sm:$0xff]
      %v119 = vld [vmem:[%s111 + $0x10] sm:$0xff]
      %v120 = vld [vmem:[%s111 + $0x18] sm:$0xff]
      %v121 = vld [vmem:[%s111 + $0x20] sm:$0xff]
      %v122 = vld [vmem:[%s111 + $0x28] sm:$0xff]
      %v123 = vld [vmem:[%s111 + $0x30] sm:$0xff]
      %v124 = vld [vmem:[%s111 + $0x38] sm:$0xff]
      %v125 = vld [vmem:[%s111 + $0x40] sm:$0xff]
      %v126 = vld [vmem:[%s111 + $0x48] sm:$0xff]
      %v127 = vld [vmem:[%s111 + $0x50] sm:$0xff]
      %v128 = vld [vmem:[%s111 + $0x58] sm:$0xff]
      %v129 = vld [vmem:[%s111 + $0x60] sm:$0xff]
      %v130 = vld [vmem:[%s111 + $0x68] sm:$0xff]
      %v131 = vld [vmem:[%s111 + $0x70] sm:$0xff]
      %v132 = vld [vmem:[%s111 + $0x78] sm:$0xff]
      %v133 = vld [vmem:[%s111 + $0x80] sm:$0xff]
      %v134 = vld [vmem:[%s111 + $0x88] sm:$0xff]
      %v135 = vld [vmem:[%s111 + $0x90] sm:$0xff]
      %v136 = vld [vmem:[%s111 + $0x98] sm:$0xff]
      %v137 = vld [vmem:[%s111 + $0xa0] sm:$0xff]
      %v138 = vld [vmem:[%s111 + $0xa8] sm:$0xff]
      %v139 = vld [vmem:[%s111 + $0xb0] sm:$0xff]
      %v140 = vld [vmem:[%s111 + $0xb8] sm:$0xff]
      %v141 = vld [vmem:[%s111 + $0xc0] sm:$0xff]
      %v142 = vld [vmem:[%s111 + $0xc8] sm:$0xff]
      %v143 = vld [vmem:[%s111 + $0xd0] sm:$0xff]
      %v144 = vld [vmem:[%s111 + $0xd8] sm:$0xff]
      %v145 = vld [vmem:[%s111 + $0xe0] sm:$0xff]
      %v146 = vld [vmem:[%s111 + $0xe8] sm:$0xff]
      %v147 = vld [vmem:[%s111 + $0xf0] sm:$0xff]
      %v148 = vld [vmem:[%s111 + $0xf8] sm:$0xff]
      %v149 = vlaneseq
      %v150 = vshrl.u32 %v149, 7
      %v151 = vadd.s32 %v150, 8
      %v152 = vadd.s32 %v150, 16
      %v153 = vadd.s32 %v150, 24
      %v154 = vadd.s32 %v150, 32
      %v155 = vadd.s32 %v150, 40
      %v156 = vadd.s32 %v150, 48
      %v157 = vadd.s32 %v150, 56
      %v158 = vadd.s32 %v150, 64
      %v159 = vadd.s32 %v150, 72
      %v160 = vadd.s32 %v150, 80
      %v161 = vadd.s32 %v150, 88
      %v162 = vadd.s32 %v150, 96
      %v163 = vadd.s32 %v150, 104
      %v164 = vadd.s32 %v150, 112
      %v165 = vadd.s32 %v150, 120
      %v166 = vadd.s32 %v150, 128
      %v167 = vadd.s32 %v150, 136
      %v168 = vadd.s32 %v150, 144
      %v169 = vadd.s32 %v150, 152
      %v170 = vadd.s32 %v150, 160
      %v171 = vadd.s32 %v150, 168
      %v172 = vadd.s32 %v150, 176
      %v173 = vadd.s32 %v150, 184
      %v174 = vadd.s32 %v150, 192
      %v175 = vadd.s32 %v150, 200
      %v176 = vadd.s32 %v150, 208
      %v177 = vadd.s32 %v150, 216
      %v178 = vadd.s32 %v150, 224
      %v179 = vadd.s32 %v150, 232
      %v180 = vadd.s32 %v150, 240
      %v181 = vadd.s32 %v150, 248
      %v182 = vcvt.s32.f32 %v150
      %v183 = vcvt.s32.f32 %v151
      %v184 = vcvt.s32.f32 %v152
      %v185 = vcvt.s32.f32 %v153
      %v186 = vcvt.s32.f32 %v154
      %v187 = vcvt.s32.f32 %v155
      %v188 = vcvt.s32.f32 %v156
      %v189 = vcvt.s32.f32 %v157
      %v190 = vcvt.s32.f32 %v158
      %v191 = vcvt.s32.f32 %v159
      %v192 = vcvt.s32.f32 %v160
      %v193 = vcvt.s32.f32 %v161
      %v194 = vcvt.s32.f32 %v162
      %v195 = vcvt.s32.f32 %v163
      %v196 = vcvt.s32.f32 %v164
      %v197 = vcvt.s32.f32 %v165
      %v198 = vcvt.s32.f32 %v166
      %v199 = vcvt.s32.f32 %v167
      %v200 = vcvt.s32.f32 %v168
      %v201 = vcvt.s32.f32 %v169
      %v202 = vcvt.s32.f32 %v170
      %v203 = vcvt.s32.f32 %v171
      %v204 = vcvt.s32.f32 %v172
      %v205 = vcvt.s32.f32 %v173
      %v206 = vcvt.s32.f32 %v174
      %v207 = vcvt.s32.f32 %v175
      %v208 = vcvt.s32.f32 %v176
      %v209 = vcvt.s32.f32 %v177
      %v210 = vcvt.s32.f32 %v178
      %v211 = vcvt.s32.f32 %v179
      %v212 = vcvt.s32.f32 %v180
      %v213 = vcvt.s32.f32 %v181
      %v214 = vlaneseq
      %v215 = vand.u32 %v214, 127
      %v216 = vcvt.s32.f32 %v215
      %v217 = vrcp.pop 16.0
      %v218 = vmul.f32 %v182, %v217
      %v219 = vmul.f32 %v183, %v217
      %v220 = vmul.f32 %v184, %v217
      %v221 = vmul.f32 %v185, %v217
      %v222 = vmul.f32 %v186, %v217
      %v223 = vmul.f32 %v187, %v217
      %v224 = vmul.f32 %v188, %v217
      %v225 = vmul.f32 %v189, %v217
      %v226 = vmul.f32 %v190, %v217
      %v227 = vmul.f32 %v191, %v217
      %v228 = vmul.f32 %v192, %v217
      %v229 = vmul.f32 %v193, %v217
      %v230 = vmul.f32 %v194, %v217
      %v231 = vmul.f32 %v195, %v217
      %v232 = vmul.f32 %v196, %v217
      %v233 = vmul.f32 %v197, %v217
      %v234 = vmul.f32 %v198, %v217
      %v235 = vmul.f32 %v199, %v217
      %v236 = vmul.f32 %v200, %v217
      %v237 = vmul.f32 %v201, %v217
      %v238 = vmul.f32 %v202, %v217
      %v239 = vmul.f32 %v203, %v217
      %v240 = vmul.f32 %v204, %v217
      %v241 = vmul.f32 %v205, %v217
      %v242 = vmul.f32 %v206, %v217
      %v243 = vmul.f32 %v207, %v217
      %v244 = vmul.f32 %v208, %v217
      %v245 = vmul.f32 %v209, %v217
      %v246 = vmul.f32 %v210, %v217
      %v247 = vmul.f32 %v211, %v217
      %v248 = vmul.f32 %v212, %v217
      %v249 = vmul.f32 %v213, %v217
      %v250 = vfloor.f32 %v218
      %v251 = vfloor.f32 %v219
      %v252 = vfloor.f32 %v220
      %v253 = vfloor.f32 %v221
      %v254 = vfloor.f32 %v222
      %v255 = vfloor.f32 %v223
      %v256 = vfloor.f32 %v224
      %v257 = vfloor.f32 %v225
      %v258 = vfloor.f32 %v226
      %v259 = vfloor.f32 %v227
      %v260 = vfloor.f32 %v228
      %v261 = vfloor.f32 %v229
      %v262 = vfloor.f32 %v230
      %v263 = vfloor.f32 %v231
      %v264 = vfloor.f32 %v232
      %v265 = vfloor.f32 %v233
      %v266 = vfloor.f32 %v234
      %v267 = vfloor.f32 %v235
      %v268 = vfloor.f32 %v236
      %v269 = vfloor.f32 %v237
      %v270 = vfloor.f32 %v238
      %v271 = vfloor.f32 %v239
      %v272 = vfloor.f32 %v240
      %v273 = vfloor.f32 %v241
      %v274 = vfloor.f32 %v242
      %v275 = vfloor.f32 %v243
      %v276 = vfloor.f32 %v244
      %v277 = vfloor.f32 %v245
      %v278 = vfloor.f32 %v246
      %v279 = vfloor.f32 %v247
      %v280 = vfloor.f32 %v248
      %v281 = vfloor.f32 %v249
      %v282 = vmul.f32 %v250, 16.0
      %v283 = vmul.f32 %v251, 16.0
      %v284 = vmul.f32 %v252, 16.0
      %v285 = vmul.f32 %v253, 16.0
      %v286 = vmul.f32 %v254, 16.0
      %v287 = vmul.f32 %v255, 16.0
      %v288 = vmul.f32 %v256, 16.0
      %v289 = vmul.f32 %v257, 16.0
      %v290 = vmul.f32 %v258, 16.0
      %v291 = vmul.f32 %v259, 16.0
      %v292 = vmul.f32 %v260, 16.0
      %v293 = vmul.f32 %v261, 16.0
      %v294 = vmul.f32 %v262, 16.0
      %v295 = vmul.f32 %v263, 16.0
      %v296 = vmul.f32 %v264, 16.0
      %v297 = vmul.f32 %v265, 16.0
      %v298 = vmul.f32 %v266, 16.0
      %v299 = vmul.f32 %v267, 16.0
      %v300 = vmul.f32 %v268, 16.0
      %v301 = vmul.f32 %v269, 16.0
      %v302 = vmul.f32 %v270, 16.0
      %v303 = vmul.f32 %v271, 16.0
      %v304 = vmul.f32 %v272, 16.0
      %v305 = vmul.f32 %v273, 16.0
      %v306 = vmul.f32 %v274, 16.0
      %v307 = vmul.f32 %v275, 16.0
      %v308 = vmul.f32 %v276, 16.0
      %v309 = vmul.f32 %v277, 16.0
      %v310 = vmul.f32 %v278, 16.0
      %v311 = vmul.f32 %v279, 16.0
      %v312 = vmul.f32 %v280, 16.0
      %v313 = vmul.f32 %v281, 16.0
      %v314 = vsub.f32 %v182, %v282
      %v315 = vsub.f32 %v183, %v283
      %v316 = vsub.f32 %v184, %v284
      %v317 = vsub.f32 %v185, %v285
      %v318 = vsub.f32 %v186, %v286
      %v319 = vsub.f32 %v187, %v287
      %v320 = vsub.f32 %v188, %v288
      %v321 = vsub.f32 %v189, %v289
      %v322 = vsub.f32 %v190, %v290
      %v323 = vsub.f32 %v191, %v291
      %v324 = vsub.f32 %v192, %v292
      %v325 = vsub.f32 %v193, %v293
      %v326 = vsub.f32 %v194, %v294
      %v327 = vsub.f32 %v195, %v295
      %v328 = vsub.f32 %v196, %v296
      %v329 = vsub.f32 %v197, %v297
      %v330 = vsub.f32 %v198, %v298
      %v331 = vsub.f32 %v199, %v299
      %v332 = vsub.f32 %v200, %v300
      %v333 = vsub.f32 %v201, %v301
      %v334 = vsub.f32 %v202, %v302
      %v335 = vsub.f32 %v203, %v303
      %v336 = vsub.f32 %v204, %v304
      %v337 = vsub.f32 %v205, %v305
      %v338 = vsub.f32 %v206, %v306
      %v339 = vsub.f32 %v207, %v307
      %v340 = vsub.f32 %v208, %v308
      %v341 = vsub.f32 %v209, %v309
      %v342 = vsub.f32 %v210, %v310
      %v343 = vsub.f32 %v211, %v311
      %v344 = vsub.f32 %v212, %v312
      %v345 = vsub.f32 %v213, %v313
      %v346 = vrcp.pop 9.0
      %v347 = vmul.f32 %v216, %v346
      %v348 = vfloor.f32 %v347
      %v349 = vmul.f32 %v348, 9.0
      %v350 = vsub.f32 %v216, %v349
      %v351 = vrcp.pop 3.0
      %v352 = vmul.f32 %v350, %v351
      %v353 = vfloor.f32 %v352
      %v354 = vmul.f32 %v353, 3.0
      %v355 = vsub.f32 %v350, %v354
      %vm388 = vcmask 1041408
      %v389 = vrot.slane %v117, 6
      %v390 = vrot.slane %v118, 6
      %v391 = vsel %vm388, %v389, %v390
      %v392 = vrot.slane %v119, 6
      %v393 = vsel %vm388, %v390, %v392
      %v394 = vrot.slane %v120, 6
      %v395 = vsel %vm388, %v392, %v394
      %v396 = vrot.slane %v121, 6
      %v397 = vsel %vm388, %v394, %v396
      %v398 = vrot.slane %v122, 6
      %v399 = vsel %vm388, %v396, %v398
      %v400 = vrot.slane %v123, 6
      %v401 = vsel %vm388, %v398, %v400
      %v402 = vrot.slane %v124, 6
      %v403 = vsel %vm388, %v400, %v402
      %v404 = vrot.slane %v125, 6
      %v405 = vsel %vm388, %v402, %v404
      %v406 = vrot.slane %v126, 6
      %v407 = vsel %vm388, %v404, %v406
      %v408 = vrot.slane %v127, 6
      %v409 = vsel %vm388, %v406, %v408
      %v410 = vrot.slane %v128, 6
      %v411 = vsel %vm388, %v408, %v410
      %v412 = vrot.slane %v129, 6
      %v413 = vsel %vm388, %v410, %v412
      %v414 = vrot.slane %v130, 6
      %v415 = vsel %vm388, %v412, %v414
      %v416 = vrot.slane %v131, 6
      %v417 = vsel %vm388, %v414, %v416
      %v418 = vrot.slane %v132, 6
      %v419 = vsel %vm388, %v416, %v418
      %v420 = vrot.slane %v133, 6
      %v421 = vsel %vm388, %v418, %v420
      %v422 = vrot.slane %v134, 6
      %v423 = vsel %vm388, %v420, %v422
      %v424 = vrot.slane %v135, 6
      %v425 = vsel %vm388, %v422, %v424
      %v426 = vrot.slane %v136, 6
      %v427 = vsel %vm388, %v424, %v426
      %v428 = vrot.slane %v137, 6
      %v429 = vsel %vm388, %v426, %v428
      %v430 = vrot.slane %v138, 6
      %v431 = vsel %vm388, %v428, %v430
      %v432 = vrot.slane %v139, 6
      %v433 = vsel %vm388, %v430, %v432
      %v434 = vrot.slane %v140, 6
      %v435 = vsel %vm388, %v432, %v434
      %v436 = vrot.slane %v141, 6
      %v437 = vsel %vm388, %v434, %v436
      %v438 = vrot.slane %v142, 6
      %v439 = vsel %vm388, %v436, %v438
      %v440 = vrot.slane %v143, 6
      %v441 = vsel %vm388, %v438, %v440
      %v442 = vrot.slane %v144, 6
      %v443 = vsel %vm388, %v440, %v442
      %v444 = vrot.slane %v145, 6
      %v445 = vsel %vm388, %v442, %v444
      %v446 = vrot.slane %v146, 6
      %v447 = vsel %vm388, %v444, %v446
      %v448 = vrot.slane %v147, 6
      %v449 = vsel %vm388, %v446, %v448
      %v450 = vrot.slane %v148, 6
      %v451 = vsel %vm388, %v448, %v450
      %v454 = vsel %vm388, 0.0, %v389
      %v455 = vsel %vm388, %v450, 0.0
      %458 = vrot.lane.b32.xlu0 %v454, 2
      %v459 = vpop.permute.xlu0 %458
      %460 = vrot.lane.b32.xlu0 %v391, 2
      %v461 = vpop.permute.xlu0 %460
      %462 = vrot.lane.b32.xlu0 %v393, 2
      %v463 = vpop.permute.xlu0 %462
      %464 = vrot.lane.b32.xlu0 %v395, 2
      %v465 = vpop.permute.xlu0 %464
      %466 = vrot.lane.b32.xlu0 %v397, 2
      %v467 = vpop.permute.xlu0 %466
      %468 = vrot.lane.b32.xlu0 %v399, 2
      %v469 = vpop.permute.xlu0 %468
      %470 = vrot.lane.b32.xlu0 %v401, 2
      %v471 = vpop.permute.xlu0 %470
      %472 = vrot.lane.b32.xlu0 %v403, 2
      %v473 = vpop.permute.xlu0 %472
      %474 = vrot.lane.b32.xlu0 %v405, 2
      %v475 = vpop.permute.xlu0 %474
      %476 = vrot.lane.b32.xlu0 %v407, 2
      %v477 = vpop.permute.xlu0 %476
      %478 = vrot.lane.b32.xlu0 %v409, 2
      %v479 = vpop.permute.xlu0 %478
      %480 = vrot.lane.b32.xlu0 %v411, 2
      %v481 = vpop.permute.xlu0 %480
      %482 = vrot.lane.b32.xlu0 %v413, 2
      %v483 = vpop.permute.xlu0 %482
      %484 = vrot.lane.b32.xlu0 %v415, 2
      %v485 = vpop.permute.xlu0 %484
      %486 = vrot.lane.b32.xlu0 %v417, 2
      %v487 = vpop.permute.xlu0 %486
      %488 = vrot.lane.b32.xlu0 %v419, 2
      %v489 = vpop.permute.xlu0 %488
      %490 = vrot.lane.b32.xlu0 %v421, 2
      %v491 = vpop.permute.xlu0 %490
      %492 = vrot.lane.b32.xlu0 %v423, 2
      %v493 = vpop.permute.xlu0 %492
      %494 = vrot.lane.b32.xlu0 %v425, 2
      %v495 = vpop.permute.xlu0 %494
      %496 = vrot.lane.b32.xlu0 %v427, 2
      %v497 = vpop.permute.xlu0 %496
      %498 = vrot.lane.b32.xlu0 %v429, 2
      %v499 = vpop.permute.xlu0 %498
      %500 = vrot.lane.b32.xlu0 %v431, 2
      %v501 = vpop.permute.xlu0 %500
      %502 = vrot.lane.b32.xlu0 %v433, 2
      %v503 = vpop.permute.xlu0 %502
      %504 = vrot.lane.b32.xlu0 %v435, 2
      %v505 = vpop.permute.xlu0 %504
      %506 = vrot.lane.b32.xlu0 %v437, 2
      %v507 = vpop.permute.xlu0 %506
      %508 = vrot.lane.b32.xlu0 %v439, 2
      %v509 = vpop.permute.xlu0 %508
      %510 = vrot.lane.b32.xlu0 %v441, 2
      %v511 = vpop.permute.xlu0 %510
      %512 = vrot.lane.b32.xlu0 %v443, 2
      %v513 = vpop.permute.xlu0 %512
      %514 = vrot.lane.b32.xlu0 %v445, 2
      %v515 = vpop.permute.xlu0 %514
      %516 = vrot.lane.b32.xlu0 %v447, 2
      %v517 = vpop.permute.xlu0 %516
      %518 = vrot.lane.b32.xlu0 %v449, 2
      %v519 = vpop.permute.xlu0 %518
      %520 = vrot.lane.b32.xlu0 %v451, 2
      %v521 = vpop.permute.xlu0 %520
      %522 = vrot.lane.b32.xlu0 %v455, 2
      %v523 = vpop.permute.xlu0 %522
      %vm557 = vcmask 15360
      %v558 = vsel %vm557, 0.0, %v459
      %v559 = vsel %vm557, 0.0, %v461
      %v560 = vsel %vm557, 0.0, %v463
      %v561 = vsel %vm557, 0.0, %v465
      %v562 = vsel %vm557, 0.0, %v467
      %v563 = vsel %vm557, 0.0, %v469
      %v564 = vsel %vm557, 0.0, %v471
      %v565 = vsel %vm557, 0.0, %v473
      %v566 = vsel %vm557, 0.0, %v475
      %v567 = vsel %vm557, 0.0, %v477
      %v568 = vsel %vm557, 0.0, %v479
      %v569 = vsel %vm557, 0.0, %v481
      %v570 = vsel %vm557, 0.0, %v483
      %v571 = vsel %vm557, 0.0, %v485
      %v572 = vsel %vm557, 0.0, %v487
      %v573 = vsel %vm557, 0.0, %v489
      %v574 = vsel %vm557, 0.0, %v491
      %v575 = vsel %vm557, 0.0, %v493
      %v576 = vsel %vm557, 0.0, %v495
      %v577 = vsel %vm557, 0.0, %v497
      %v578 = vsel %vm557, 0.0, %v499
      %v579 = vsel %vm557, 0.0, %v501
      %v580 = vsel %vm557, 0.0, %v503
      %v581 = vsel %vm557, 0.0, %v505
      %v582 = vsel %vm557, 0.0, %v507
      %v583 = vsel %vm557, 0.0, %v509
      %v584 = vsel %vm557, 0.0, %v511
      %v585 = vsel %vm557, 0.0, %v513
      %v586 = vsel %vm557, 0.0, %v515
      %v587 = vsel %vm557, 0.0, %v517
      %v588 = vsel %vm557, 0.0, %v519
      %v589 = vsel %vm557, 0.0, %v521
      %v590 = vsel %vm557, 0.0, %v523
      %vm591 = vcmask 236544
      %v592 = vsel %vm591, %v558, 0.0
      %v593 = vsel %vm591, %v559, 0.0
      %v594 = vsel %vm591, %v560, 0.0
      %v595 = vsel %vm591, %v561, 0.0
      %v596 = vsel %vm591, %v562, 0.0
      %v597 = vsel %vm591, %v563, 0.0
      %v598 = vsel %vm591, %v564, 0.0
      %v599 = vsel %vm591, %v565, 0.0
      %v600 = vsel %vm591, %v566, 0.0
      %v601 = vsel %vm591, %v567, 0.0
      %v602 = vsel %vm591, %v568, 0.0
      %v603 = vsel %vm591, %v569, 0.0
      %v604 = vsel %vm591, %v570, 0.0
      %v605 = vsel %vm591, %v571, 0.0
      %v606 = vsel %vm591, %v572, 0.0
      %v607 = vsel %vm591, %v573, 0.0
      %v608 = vsel %vm591, %v574, 0.0
      %v609 = vsel %vm591, %v575, 0.0
      %v610 = vsel %vm591, %v576, 0.0
      %v611 = vsel %vm591, %v577, 0.0
      %v612 = vsel %vm591, %v578, 0.0
      %v613 = vsel %vm591, %v579, 0.0
      %v614 = vsel %vm591, %v580, 0.0
      %v615 = vsel %vm591, %v581, 0.0
      %v616 = vsel %vm591, %v582, 0.0
      %v617 = vsel %vm591, %v583, 0.0
      %v618 = vsel %vm591, %v584, 0.0
      %v619 = vsel %vm591, %v585, 0.0
      %v620 = vsel %vm591, %v586, 0.0
      %v621 = vsel %vm591, %v587, 0.0
      %v622 = vsel %vm591, %v588, 0.0
      %v623 = vsel %vm591, %v589, 0.0
      %v624 = vsel %vm591, %v590, 0.0
      %v625 = vadd.f32 %v314, -2.0
      %v626 = vadd.f32 %v315, -2.0
      %v627 = vadd.f32 %v316, -2.0
      %v628 = vadd.f32 %v317, -2.0
      %v629 = vadd.f32 %v318, -2.0
      %v630 = vadd.f32 %v319, -2.0
      %v631 = vadd.f32 %v320, -2.0
      %v632 = vadd.f32 %v321, -2.0
      %v633 = vadd.f32 %v322, -2.0
      %v634 = vadd.f32 %v323, -2.0
      %v635 = vadd.f32 %v324, -2.0
      %v636 = vadd.f32 %v325, -2.0
      %v637 = vadd.f32 %v326, -2.0
      %v638 = vadd.f32 %v327, -2.0
      %v639 = vadd.f32 %v328, -2.0
      %v640 = vadd.f32 %v329, -2.0
      %v641 = vadd.f32 %v330, -2.0
      %v642 = vadd.f32 %v331, -2.0
      %v643 = vadd.f32 %v332, -2.0
      %v644 = vadd.f32 %v333, -2.0
      %v645 = vadd.f32 %v334, -2.0
      %v646 = vadd.f32 %v335, -2.0
      %v647 = vadd.f32 %v336, -2.0
      %v648 = vadd.f32 %v337, -2.0
      %v649 = vadd.f32 %v338, -2.0
      %v650 = vadd.f32 %v339, -2.0
      %v651 = vadd.f32 %v340, -2.0
      %v652 = vadd.f32 %v341, -2.0
      %v653 = vadd.f32 %v342, -2.0
      %v654 = vadd.f32 %v343, -2.0
      %v655 = vadd.f32 %v344, -2.0
      %v656 = vadd.f32 %v345, -2.0
      %vm657 = vcmp.ge.f32.partialorder %v625, 0.0
      %vm658 = vcmp.ge.f32.partialorder %v626, 0.0
      %vm659 = vcmp.ge.f32.partialorder %v627, 0.0
      %vm660 = vcmp.ge.f32.partialorder %v628, 0.0
      %vm661 = vcmp.ge.f32.partialorder %v629, 0.0
      %vm662 = vcmp.ge.f32.partialorder %v630, 0.0
      %vm663 = vcmp.ge.f32.partialorder %v631, 0.0
      %vm664 = vcmp.ge.f32.partialorder %v632, 0.0
      %vm665 = vcmp.ge.f32.partialorder %v633, 0.0
      %vm666 = vcmp.ge.f32.partialorder %v634, 0.0
      %vm667 = vcmp.ge.f32.partialorder %v635, 0.0
      %vm668 = vcmp.ge.f32.partialorder %v636, 0.0
      %vm669 = vcmp.ge.f32.partialorder %v637, 0.0
      %vm670 = vcmp.ge.f32.partialorder %v638, 0.0
      %vm671 = vcmp.ge.f32.partialorder %v639, 0.0
      %vm672 = vcmp.ge.f32.partialorder %v640, 0.0
      %vm673 = vcmp.ge.f32.partialorder %v641, 0.0
      %vm674 = vcmp.ge.f32.partialorder %v642, 0.0
      %vm675 = vcmp.ge.f32.partialorder %v643, 0.0
      %vm676 = vcmp.ge.f32.partialorder %v644, 0.0
      %vm677 = vcmp.ge.f32.partialorder %v645, 0.0
      %vm678 = vcmp.ge.f32.partialorder %v646, 0.0
      %vm679 = vcmp.ge.f32.partialorder %v647, 0.0
      %vm680 = vcmp.ge.f32.partialorder %v648, 0.0
      %vm681 = vcmp.ge.f32.partialorder %v649, 0.0
      %vm682 = vcmp.ge.f32.partialorder %v650, 0.0
      %vm683 = vcmp.ge.f32.partialorder %v651, 0.0
      %vm684 = vcmp.ge.f32.partialorder %v652, 0.0
      %vm685 = vcmp.ge.f32.partialorder %v653, 0.0
      %vm686 = vcmp.ge.f32.partialorder %v654, 0.0
      %vm687 = vcmp.ge.f32.partialorder %v655, 0.0
      %vm688 = vcmp.ge.f32.partialorder %v656, 0.0
      %vm689 = vcmp.lt.f32.partialorder %v625, 16.0
      %vm690 = vcmp.lt.f32.partialorder %v626, 16.0
      %vm691 = vcmp.lt.f32.partialorder %v627, 16.0
      %vm692 = vcmp.lt.f32.partialorder %v628, 16.0
      %vm693 = vcmp.lt.f32.partialorder %v629, 16.0
      %vm694 = vcmp.lt.f32.partialorder %v630, 16.0
      %vm695 = vcmp.lt.f32.partialorder %v631, 16.0
      %vm696 = vcmp.lt.f32.partialorder %v632, 16.0
      %vm697 = vcmp.lt.f32.partialorder %v633, 16.0
      %vm698 = vcmp.lt.f32.partialorder %v634, 16.0
      %vm699 = vcmp.lt.f32.partialorder %v635, 16.0
      %vm700 = vcmp.lt.f32.partialorder %v636, 16.0
      %vm701 = vcmp.lt.f32.partialorder %v637, 16.0
      %vm702 = vcmp.lt.f32.partialorder %v638, 16.0
      %vm703 = vcmp.lt.f32.partialorder %v639, 16.0
      %vm704 = vcmp.lt.f32.partialorder %v640, 16.0
      %vm705 = vcmp.lt.f32.partialorder %v641, 16.0
      %vm706 = vcmp.lt.f32.partialorder %v642, 16.0
      %vm707 = vcmp.lt.f32.partialorder %v643, 16.0
      %vm708 = vcmp.lt.f32.partialorder %v644, 16.0
      %vm709 = vcmp.lt.f32.partialorder %v645, 16.0
      %vm710 = vcmp.lt.f32.partialorder %v646, 16.0
      %vm711 = vcmp.lt.f32.partialorder %v647, 16.0
      %vm712 = vcmp.lt.f32.partialorder %v648, 16.0
      %vm713 = vcmp.lt.f32.partialorder %v649, 16.0
      %vm714 = vcmp.lt.f32.partialorder %v650, 16.0
      %vm715 = vcmp.lt.f32.partialorder %v651, 16.0
      %vm716 = vcmp.lt.f32.partialorder %v652, 16.0
      %vm717 = vcmp.lt.f32.partialorder %v653, 16.0
      %vm718 = vcmp.lt.f32.partialorder %v654, 16.0
      %vm719 = vcmp.lt.f32.partialorder %v655, 16.0
      %vm720 = vcmp.lt.f32.partialorder %v656, 16.0
      %vm721 = vmand %vm657, %vm689
      %vm722 = vmand %vm658, %vm690
      %vm723 = vmand %vm659, %vm691
      %vm724 = vmand %vm660, %vm692
      %vm725 = vmand %vm661, %vm693
      %vm726 = vmand %vm662, %vm694
      %vm727 = vmand %vm663, %vm695
      %vm728 = vmand %vm664, %vm696
      %vm729 = vmand %vm665, %vm697
      %vm730 = vmand %vm666, %vm698
      %vm731 = vmand %vm667, %vm699
      %vm732 = vmand %vm668, %vm700
      %vm733 = vmand %vm669, %vm701
      %vm734 = vmand %vm670, %vm702
      %vm735 = vmand %vm671, %vm703
      %vm736 = vmand %vm672, %vm704
      %vm737 = vmand %vm673, %vm705
      %vm738 = vmand %vm674, %vm706
      %vm739 = vmand %vm675, %vm707
      %vm740 = vmand %vm676, %vm708
      %vm741 = vmand %vm677, %vm709
      %vm742 = vmand %vm678, %vm710
      %vm743 = vmand %vm679, %vm711
      %vm744 = vmand %vm680, %vm712
      %vm745 = vmand %vm681, %vm713
      %vm746 = vmand %vm682, %vm714
      %vm747 = vmand %vm683, %vm715
      %vm748 = vmand %vm684, %vm716
      %vm749 = vmand %vm685, %vm717
      %vm750 = vmand %vm686, %vm718
      %vm751 = vmand %vm687, %vm719
      %vm752 = vmand %vm688, %vm720
      %v753 = vsub.f32 %v355, -2.0
      %vm754 = vcmp.ge.f32.partialorder %v753, 0.0
      %vm755 = vmand %vm721, %vm754
      %vm756 = vmand %vm722, %vm754
      %vm757 = vmand %vm723, %vm754
      %vm758 = vmand %vm724, %vm754
      %vm759 = vmand %vm725, %vm754
      %vm760 = vmand %vm726, %vm754
      %vm761 = vmand %vm727, %vm754
      %vm762 = vmand %vm728, %vm754
      %vm763 = vmand %vm729, %vm754
      %vm764 = vmand %vm730, %vm754
      %vm765 = vmand %vm731, %vm754
      %vm766 = vmand %vm732, %vm754
      %vm767 = vmand %vm733, %vm754
      %vm768 = vmand %vm734, %vm754
      %vm769 = vmand %vm735, %vm754
      %vm770 = vmand %vm736, %vm754
      %vm771 = vmand %vm737, %vm754
      %vm772 = vmand %vm738, %vm754
      %vm773 = vmand %vm739, %vm754
      %vm774 = vmand %vm740, %vm754
      %vm775 = vmand %vm741, %vm754
      %vm776 = vmand %vm742, %vm754
      %vm777 = vmand %vm743, %vm754
      %vm778 = vmand %vm744, %vm754
      %vm779 = vmand %vm745, %vm754
      %vm780 = vmand %vm746, %vm754
      %vm781 = vmand %vm747, %vm754
      %vm782 = vmand %vm748, %vm754
      %vm783 = vmand %vm749, %vm754
      %vm784 = vmand %vm750, %vm754
      %vm785 = vmand %vm751, %vm754
      %vm786 = vmand %vm752, %vm754
      %vm787 = vcmp.lt.f32.partialorder %v753, 3.0
      %vm788 = vmand %vm755, %vm787
      %vm789 = vmand %vm756, %vm787
      %vm790 = vmand %vm757, %vm787
      %vm791 = vmand %vm758, %vm787
      %vm792 = vmand %vm759, %vm787
      %vm793 = vmand %vm760, %vm787
      %vm794 = vmand %vm761, %vm787
      %vm795 = vmand %vm762, %vm787
      %vm796 = vmand %vm763, %vm787
      %vm797 = vmand %vm764, %vm787
      %vm798 = vmand %vm765, %vm787
      %vm799 = vmand %vm766, %vm787
      %vm800 = vmand %vm767, %vm787
      %vm801 = vmand %vm768, %vm787
      %vm802 = vmand %vm769, %vm787
      %vm803 = vmand %vm770, %vm787
      %vm804 = vmand %vm771, %vm787
      %vm805 = vmand %vm772, %vm787
      %vm806 = vmand %vm773, %vm787
      %vm807 = vmand %vm774, %vm787
      %vm808 = vmand %vm775, %vm787
      %vm809 = vmand %vm776, %vm787
      %vm810 = vmand %vm777, %vm787
      %vm811 = vmand %vm778, %vm787
      %vm812 = vmand %vm779, %vm787
      %vm813 = vmand %vm780, %vm787
      %vm814 = vmand %vm781, %vm787
      %vm815 = vmand %vm782, %vm787
      %vm816 = vmand %vm783, %vm787
      %vm817 = vmand %vm784, %vm787
      %vm818 = vmand %vm785, %vm787
      %vm819 = vmand %vm786, %vm787
      %v820 = vsel %vm788, 1, 0
      %v821 = vsel %vm789, 1, 0
      %v822 = vsel %vm790, 1, 0
      %v823 = vsel %vm791, 1, 0
      %v824 = vsel %vm792, 1, 0
      %v825 = vsel %vm793, 1, 0
      %v826 = vsel %vm794, 1, 0
      %v827 = vsel %vm795, 1, 0
      %v828 = vsel %vm796, 1, 0
      %v829 = vsel %vm797, 1, 0
      %v830 = vsel %vm798, 1, 0
      %v831 = vsel %vm799, 1, 0
      %v832 = vsel %vm800, 1, 0
      %v833 = vsel %vm801, 1, 0
      %v834 = vsel %vm802, 1, 0
      %v835 = vsel %vm803, 1, 0
      %v836 = vsel %vm804, 1, 0
      %v837 = vsel %vm805, 1, 0
      %v838 = vsel %vm806, 1, 0
      %v839 = vsel %vm807, 1, 0
      %v840 = vsel %vm808, 1, 0
      %v841 = vsel %vm809, 1, 0
      %v842 = vsel %vm810, 1, 0
      %v843 = vsel %vm811, 1, 0
      %v844 = vsel %vm812, 1, 0
      %v845 = vsel %vm813, 1, 0
      %v846 = vsel %vm814, 1, 0
      %v847 = vsel %vm815, 1, 0
      %v848 = vsel %vm816, 1, 0
      %v849 = vsel %vm817, 1, 0
      %v850 = vsel %vm818, 1, 0
      %v851 = vsel %vm819, 1, 0
      %v852 = vcvt.s32.f32 %v820
      %v853 = vcvt.s32.f32 %v821
      %v854 = vcvt.s32.f32 %v822
      %v855 = vcvt.s32.f32 %v823
      %v856 = vcvt.s32.f32 %v824
      %v857 = vcvt.s32.f32 %v825
      %v858 = vcvt.s32.f32 %v826
      %v859 = vcvt.s32.f32 %v827
      %v860 = vcvt.s32.f32 %v828
      %v861 = vcvt.s32.f32 %v829
      %v862 = vcvt.s32.f32 %v830
      %v863 = vcvt.s32.f32 %v831
      %v864 = vcvt.s32.f32 %v832
      %v865 = vcvt.s32.f32 %v833
      %v866 = vcvt.s32.f32 %v834
      %v867 = vcvt.s32.f32 %v835
      %v868 = vcvt.s32.f32 %v836
      %v869 = vcvt.s32.f32 %v837
      %v870 = vcvt.s32.f32 %v838
      %v871 = vcvt.s32.f32 %v839
      %v872 = vcvt.s32.f32 %v840
      %v873 = vcvt.s32.f32 %v841
      %v874 = vcvt.s32.f32 %v842
      %v875 = vcvt.s32.f32 %v843
      %v876 = vcvt.s32.f32 %v844
      %v877 = vcvt.s32.f32 %v845
      %v878 = vcvt.s32.f32 %v846
      %v879 = vcvt.s32.f32 %v847
      %v880 = vcvt.s32.f32 %v848
      %v881 = vcvt.s32.f32 %v849
      %v882 = vcvt.s32.f32 %v850
      %v883 = vcvt.s32.f32 %v851
      %916 = vrot.lane.b32.xlu0 %v852, 4
      %v917 = vpop.permute.xlu0 %916
      %918 = vrot.lane.b32.xlu0 %v853, 4
      %v919 = vpop.permute.xlu0 %918
      %920 = vrot.lane.b32.xlu0 %v854, 4
      %v921 = vpop.permute.xlu0 %920
      %922 = vrot.lane.b32.xlu0 %v855, 4
      %v923 = vpop.permute.xlu0 %922
      %924 = vrot.lane.b32.xlu0 %v856, 4
      %v925 = vpop.permute.xlu0 %924
      %926 = vrot.lane.b32.xlu0 %v857, 4
      %v927 = vpop.permute.xlu0 %926
      %928 = vrot.lane.b32.xlu0 %v858, 4
      %v929 = vpop.permute.xlu0 %928
      %930 = vrot.lane.b32.xlu0 %v859, 4
      %v931 = vpop.permute.xlu0 %930
      %932 = vrot.lane.b32.xlu0 %v860, 4
      %v933 = vpop.permute.xlu0 %932
      %934 = vrot.lane.b32.xlu0 %v861, 4
      %v935 = vpop.permute.xlu0 %934
      %936 = vrot.lane.b32.xlu0 %v862, 4
      %v937 = vpop.permute.xlu0 %936
      %938 = vrot.lane.b32.xlu0 %v863, 4
      %v939 = vpop.permute.xlu0 %938
      %940 = vrot.lane.b32.xlu0 %v864, 4
      %v941 = vpop.permute.xlu0 %940
      %942 = vrot.lane.b32.xlu0 %v865, 4
      %v943 = vpop.permute.xlu0 %942
      %944 = vrot.lane.b32.xlu0 %v866, 4
      %v945 = vpop.permute.xlu0 %944
      %946 = vrot.lane.b32.xlu0 %v867, 4
      %v947 = vpop.permute.xlu0 %946
      %948 = vrot.lane.b32.xlu0 %v868, 4
      %v949 = vpop.permute.xlu0 %948
      %950 = vrot.lane.b32.xlu0 %v869, 4
      %v951 = vpop.permute.xlu0 %950
      %952 = vrot.lane.b32.xlu0 %v870, 4
      %v953 = vpop.permute.xlu0 %952
      %954 = vrot.lane.b32.xlu0 %v871, 4
      %v955 = vpop.permute.xlu0 %954
      %956 = vrot.lane.b32.xlu0 %v872, 4
      %v957 = vpop.permute.xlu0 %956
      %958 = vrot.lane.b32.xlu0 %v873, 4
      %v959 = vpop.permute.xlu0 %958
      %960 = vrot.lane.b32.xlu0 %v874, 4
      %v961 = vpop.permute.xlu0 %960
      %962 = vrot.lane.b32.xlu0 %v875, 4
      %v963 = vpop.permute.xlu0 %962
      %964 = vrot.lane.b32.xlu0 %v876, 4
      %v965 = vpop.permute.xlu0 %964
      %966 = vrot.lane.b32.xlu0 %v877, 4
      %v967 = vpop.permute.xlu0 %966
      %968 = vrot.lane.b32.xlu0 %v878, 4
      %v969 = vpop.permute.xlu0 %968
      %970 = vrot.lane.b32.xlu0 %v879, 4
      %v971 = vpop.permute.xlu0 %970
      %972 = vrot.lane.b32.xlu0 %v880, 4
      %v973 = vpop.permute.xlu0 %972
      %974 = vrot.lane.b32.xlu0 %v881, 4
      %v975 = vpop.permute.xlu0 %974
      %976 = vrot.lane.b32.xlu0 %v882, 4
      %v977 = vpop.permute.xlu0 %976
      %978 = vrot.lane.b32.xlu0 %v883, 4
      %v979 = vpop.permute.xlu0 %978
      %v1012 = vmul.f32 %v592, %v917
      %v1013 = vmul.f32 %v593, %v919
      %v1014 = vmul.f32 %v594, %v921
      %v1015 = vmul.f32 %v595, %v923
      %v1016 = vmul.f32 %v596, %v925
      %v1017 = vmul.f32 %v597, %v927
      %v1018 = vmul.f32 %v598, %v929
      %v1019 = vmul.f32 %v599, %v931
      %v1020 = vmul.f32 %v600, %v933
      %v1021 = vmul.f32 %v601, %v935
      %v1022 = vmul.f32 %v602, %v937
      %v1023 = vmul.f32 %v603, %v939
      %v1024 = vmul.f32 %v604, %v941
      %v1025 = vmul.f32 %v605, %v943
      %v1026 = vmul.f32 %v606, %v945
      %v1027 = vmul.f32 %v607, %v947
      %v1028 = vmul.f32 %v608, %v949
      %v1029 = vmul.f32 %v609, %v951
      %v1030 = vmul.f32 %v610, %v953
      %v1031 = vmul.f32 %v611, %v955
      %v1032 = vmul.f32 %v612, %v957
      %v1033 = vmul.f32 %v613, %v959
      %v1034 = vmul.f32 %v614, %v961
      %v1035 = vmul.f32 %v615, %v963
      %v1036 = vmul.f32 %v616, %v965
      %v1037 = vmul.f32 %v617, %v967
      %v1038 = vmul.f32 %v618, %v969
      %v1039 = vmul.f32 %v619, %v971
      %v1040 = vmul.f32 %v620, %v973
      %v1041 = vmul.f32 %v621, %v975
      %v1042 = vmul.f32 %v622, %v977
      %v1043 = vmul.f32 %v623, %v979
      %v1044 = vadd.f32 %v1012, 0.0
      %v1045 = vadd.f32 %v1013, 0.0
      %v1046 = vadd.f32 %v1014, 0.0
      %v1047 = vadd.f32 %v1015, 0.0
      %v1048 = vadd.f32 %v1016, 0.0
      %v1049 = vadd.f32 %v1017, 0.0
      %v1050 = vadd.f32 %v1018, 0.0
      %v1051 = vadd.f32 %v1019, 0.0
      %v1052 = vadd.f32 %v1020, 0.0
      %v1053 = vadd.f32 %v1021, 0.0
      %v1054 = vadd.f32 %v1022, 0.0
      %v1055 = vadd.f32 %v1023, 0.0
      %v1056 = vadd.f32 %v1024, 0.0
      %v1057 = vadd.f32 %v1025, 0.0
      %v1058 = vadd.f32 %v1026, 0.0
      %v1059 = vadd.f32 %v1027, 0.0
      %v1060 = vadd.f32 %v1028, 0.0
      %v1061 = vadd.f32 %v1029, 0.0
      %v1062 = vadd.f32 %v1030, 0.0
      %v1063 = vadd.f32 %v1031, 0.0
      %v1064 = vadd.f32 %v1032, 0.0
      %v1065 = vadd.f32 %v1033, 0.0
      %v1066 = vadd.f32 %v1034, 0.0
      %v1067 = vadd.f32 %v1035, 0.0
      %v1068 = vadd.f32 %v1036, 0.0
      %v1069 = vadd.f32 %v1037, 0.0
      %v1070 = vadd.f32 %v1038, 0.0
      %v1071 = vadd.f32 %v1039, 0.0
      %v1072 = vadd.f32 %v1040, 0.0
      %v1073 = vadd.f32 %v1041, 0.0
      %v1074 = vadd.f32 %v1042, 0.0
      %v1075 = vadd.f32 %v1043, 0.0
      %v1076 = vadd.f32 %v314, -1.0
      %v1077 = vadd.f32 %v315, -1.0
      %v1078 = vadd.f32 %v316, -1.0
      %v1079 = vadd.f32 %v317, -1.0
      %v1080 = vadd.f32 %v318, -1.0
      %v1081 = vadd.f32 %v319, -1.0
      %v1082 = vadd.f32 %v320, -1.0
      %v1083 = vadd.f32 %v321, -1.0
      %v1084 = vadd.f32 %v322, -1.0
      %v1085 = vadd.f32 %v323, -1.0
      %v1086 = vadd.f32 %v324, -1.0
      %v1087 = vadd.f32 %v325, -1.0
      %v1088 = vadd.f32 %v326, -1.0
      %v1089 = vadd.f32 %v327, -1.0
      %v1090 = vadd.f32 %v328, -1.0
      %v1091 = vadd.f32 %v329, -1.0
      %v1092 = vadd.f32 %v330, -1.0
      %v1093 = vadd.f32 %v331, -1.0
      %v1094 = vadd.f32 %v332, -1.0
      %v1095 = vadd.f32 %v333, -1.0
      %v1096 = vadd.f32 %v334, -1.0
      %v1097 = vadd.f32 %v335, -1.0
      %v1098 = vadd.f32 %v336, -1.0
      %v1099 = vadd.f32 %v337, -1.0
      %v1100 = vadd.f32 %v338, -1.0
      %v1101 = vadd.f32 %v339, -1.0
      %v1102 = vadd.f32 %v340, -1.0
      %v1103 = vadd.f32 %v341, -1.0
      %v1104 = vadd.f32 %v342, -1.0
      %v1105 = vadd.f32 %v343, -1.0
      %v1106 = vadd.f32 %v344, -1.0
      %v1107 = vadd.f32 %v345, -1.0
      %vm1108 = vcmp.ge.f32.partialorder %v1076, 0.0
      %vm1109 = vcmp.ge.f32.partialorder %v1077, 0.0
      %vm1110 = vcmp.ge.f32.partialorder %v1078, 0.0
      %vm1111 = vcmp.ge.f32.partialorder %v1079, 0.0
      %vm1112 = vcmp.ge.f32.partialorder %v1080, 0.0
      %vm1113 = vcmp.ge.f32.partialorder %v1081, 0.0
      %vm1114 = vcmp.ge.f32.partialorder %v1082, 0.0
      %vm1115 = vcmp.ge.f32.partialorder %v1083, 0.0
      %vm1116 = vcmp.ge.f32.partialorder %v1084, 0.0
      %vm1117 = vcmp.ge.f32.partialorder %v1085, 0.0
      %vm1118 = vcmp.ge.f32.partialorder %v1086, 0.0
      %vm1119 = vcmp.ge.f32.partialorder %v1087, 0.0
      %vm1120 = vcmp.ge.f32.partialorder %v1088, 0.0
      %vm1121 = vcmp.ge.f32.partialorder %v1089, 0.0
      %vm1122 = vcmp.ge.f32.partialorder %v1090, 0.0
      %vm1123 = vcmp.ge.f32.partialorder %v1091, 0.0
      %vm1124 = vcmp.ge.f32.partialorder %v1092, 0.0
      %vm1125 = vcmp.ge.f32.partialorder %v1093, 0.0
      %vm1126 = vcmp.ge.f32.partialorder %v1094, 0.0
      %vm1127 = vcmp.ge.f32.partialorder %v1095, 0.0
      %vm1128 = vcmp.ge.f32.partialorder %v1096, 0.0
      %vm1129 = vcmp.ge.f32.partialorder %v1097, 0.0
      %vm1130 = vcmp.ge.f32.partialorder %v1098, 0.0
      %vm1131 = vcmp.ge.f32.partialorder %v1099, 0.0
      %vm1132 = vcmp.ge.f32.partialorder %v1100, 0.0
      %vm1133 = vcmp.ge.f32.partialorder %v1101, 0.0
      %vm1134 = vcmp.ge.f32.partialorder %v1102, 0.0
      %vm1135 = vcmp.ge.f32.partialorder %v1103, 0.0
      %vm1136 = vcmp.ge.f32.partialorder %v1104, 0.0
      %vm1137 = vcmp.ge.f32.partialorder %v1105, 0.0
      %vm1138 = vcmp.ge.f32.partialorder %v1106, 0.0
      %vm1139 = vcmp.ge.f32.partialorder %v1107, 0.0
      %vm1140 = vcmp.lt.f32.partialorder %v1076, 16.0
      %vm1141 = vcmp.lt.f32.partialorder %v1077, 16.0
      %vm1142 = vcmp.lt.f32.partialorder %v1078, 16.0
      %vm1143 = vcmp.lt.f32.partialorder %v1079, 16.0
      %vm1144 = vcmp.lt.f32.partialorder %v1080, 16.0
      %vm1145 = vcmp.lt.f32.partialorder %v1081, 16.0
      %vm1146 = vcmp.lt.f32.partialorder %v1082, 16.0
      %vm1147 = vcmp.lt.f32.partialorder %v1083, 16.0
      %vm1148 = vcmp.lt.f32.partialorder %v1084, 16.0
      %vm1149 = vcmp.lt.f32.partialorder %v1085, 16.0
      %vm1150 = vcmp.lt.f32.partialorder %v1086, 16.0
      %vm1151 = vcmp.lt.f32.partialorder %v1087, 16.0
      %vm1152 = vcmp.lt.f32.partialorder %v1088, 16.0
      %vm1153 = vcmp.lt.f32.partialorder %v1089, 16.0
      %vm1154 = vcmp.lt.f32.partialorder %v1090, 16.0
      %vm1155 = vcmp.lt.f32.partialorder %v1091, 16.0
      %vm1156 = vcmp.lt.f32.partialorder %v1092, 16.0
      %vm1157 = vcmp.lt.f32.partialorder %v1093, 16.0
      %vm1158 = vcmp.lt.f32.partialorder %v1094, 16.0
      %vm1159 = vcmp.lt.f32.partialorder %v1095, 16.0
      %vm1160 = vcmp.lt.f32.partialorder %v1096, 16.0
      %vm1161 = vcmp.lt.f32.partialorder %v1097, 16.0
      %vm1162 = vcmp.lt.f32.partialorder %v1098, 16.0
      %vm1163 = vcmp.lt.f32.partialorder %v1099, 16.0
      %vm1164 = vcmp.lt.f32.partialorder %v1100, 16.0
      %vm1165 = vcmp.lt.f32.partialorder %v1101, 16.0
      %vm1166 = vcmp.lt.f32.partialorder %v1102, 16.0
      %vm1167 = vcmp.lt.f32.partialorder %v1103, 16.0
      %vm1168 = vcmp.lt.f32.partialorder %v1104, 16.0
      %vm1169 = vcmp.lt.f32.partialorder %v1105, 16.0
      %vm1170 = vcmp.lt.f32.partialorder %v1106, 16.0
      %vm1171 = vcmp.lt.f32.partialorder %v1107, 16.0
      %vm1172 = vmand %vm1108, %vm1140
      %vm1173 = vmand %vm1109, %vm1141
      %vm1174 = vmand %vm1110, %vm1142
      %vm1175 = vmand %vm1111, %vm1143
      %vm1176 = vmand %vm1112, %vm1144
      %vm1177 = vmand %vm1113, %vm1145
      %vm1178 = vmand %vm1114, %vm1146
      %vm1179 = vmand %vm1115, %vm1147
      %vm1180 = vmand %vm1116, %vm1148
      %vm1181 = vmand %vm1117, %vm1149
      %vm1182 = vmand %vm1118, %vm1150
      %vm1183 = vmand %vm1119, %vm1151
      %vm1184 = vmand %vm1120, %vm1152
      %vm1185 = vmand %vm1121, %vm1153
      %vm1186 = vmand %vm1122, %vm1154
      %vm1187 = vmand %vm1123, %vm1155
      %vm1188 = vmand %vm1124, %vm1156
      %vm1189 = vmand %vm1125, %vm1157
      %vm1190 = vmand %vm1126, %vm1158
      %vm1191 = vmand %vm1127, %vm1159
      %vm1192 = vmand %vm1128, %vm1160
      %vm1193 = vmand %vm1129, %vm1161
      %vm1194 = vmand %vm1130, %vm1162
      %vm1195 = vmand %vm1131, %vm1163
      %vm1196 = vmand %vm1132, %vm1164
      %vm1197 = vmand %vm1133, %vm1165
      %vm1198 = vmand %vm1134, %vm1166
      %vm1199 = vmand %vm1135, %vm1167
      %vm1200 = vmand %vm1136, %vm1168
      %vm1201 = vmand %vm1137, %vm1169
      %vm1202 = vmand %vm1138, %vm1170
      %vm1203 = vmand %vm1139, %vm1171
      %v1204 = vsub.f32 %v355, -1.0
      %vm1205 = vcmp.ge.f32.partialorder %v1204, 0.0
      %vm1206 = vmand %vm1172, %vm1205
      %vm1207 = vmand %vm1173, %vm1205
      %vm1208 = vmand %vm1174, %vm1205
      %vm1209 = vmand %vm1175, %vm1205
      %vm1210 = vmand %vm1176, %vm1205
      %vm1211 = vmand %vm1177, %vm1205
      %vm1212 = vmand %vm1178, %vm1205
      %vm1213 = vmand %vm1179, %vm1205
      %vm1214 = vmand %vm1180, %vm1205
      %vm1215 = vmand %vm1181, %vm1205
      %vm1216 = vmand %vm1182, %vm1205
      %vm1217 = vmand %vm1183, %vm1205
      %vm1218 = vmand %vm1184, %vm1205
      %vm1219 = vmand %vm1185, %vm1205
      %vm1220 = vmand %vm1186, %vm1205
      %vm1221 = vmand %vm1187, %vm1205
      %vm1222 = vmand %vm1188, %vm1205
      %vm1223 = vmand %vm1189, %vm1205
      %vm1224 = vmand %vm1190, %vm1205
      %vm1225 = vmand %vm1191, %vm1205
      %vm1226 = vmand %vm1192, %vm1205
      %vm1227 = vmand %vm1193, %vm1205
      %vm1228 = vmand %vm1194, %vm1205
      %vm1229 = vmand %vm1195, %vm1205
      %vm1230 = vmand %vm1196, %vm1205
      %vm1231 = vmand %vm1197, %vm1205
      %vm1232 = vmand %vm1198, %vm1205
      %vm1233 = vmand %vm1199, %vm1205
      %vm1234 = vmand %vm1200, %vm1205
      %vm1235 = vmand %vm1201, %vm1205
      %vm1236 = vmand %vm1202, %vm1205
      %vm1237 = vmand %vm1203, %vm1205
      %vm1238 = vcmp.lt.f32.partialorder %v1204, 3.0
      %vm1239 = vmand %vm1206, %vm1238
      %vm1240 = vmand %vm1207, %vm1238
      %vm1241 = vmand %vm1208, %vm1238
      %vm1242 = vmand %vm1209, %vm1238
      %vm1243 = vmand %vm1210, %vm1238
      %vm1244 = vmand %vm1211, %vm1238
      %vm1245 = vmand %vm1212, %vm1238
      %vm1246 = vmand %vm1213, %vm1238
      %vm1247 = vmand %vm1214, %vm1238
      %vm1248 = vmand %vm1215, %vm1238
      %vm1249 = vmand %vm1216, %vm1238
      %vm1250 = vmand %vm1217, %vm1238
      %vm1251 = vmand %vm1218, %vm1238
      %vm1252 = vmand %vm1219, %vm1238
      %vm1253 = vmand %vm1220, %vm1238
      %vm1254 = vmand %vm1221, %vm1238
      %vm1255 = vmand %vm1222, %vm1238
      %vm1256 = vmand %vm1223, %vm1238
      %vm1257 = vmand %vm1224, %vm1238
      %vm1258 = vmand %vm1225, %vm1238
      %vm1259 = vmand %vm1226, %vm1238
      %vm1260 = vmand %vm1227, %vm1238
      %vm1261 = vmand %vm1228, %vm1238
      %vm1262 = vmand %vm1229, %vm1238
      %vm1263 = vmand %vm1230, %vm1238
      %vm1264 = vmand %vm1231, %vm1238
      %vm1265 = vmand %vm1232, %vm1238
      %vm1266 = vmand %vm1233, %vm1238
      %vm1267 = vmand %vm1234, %vm1238
      %vm1268 = vmand %vm1235, %vm1238
      %vm1269 = vmand %vm1236, %vm1238
      %vm1270 = vmand %vm1237, %vm1238
      %v1271 = vsel %vm1239, 1, 0
      %v1272 = vsel %vm1240, 1, 0
      %v1273 = vsel %vm1241, 1, 0
      %v1274 = vsel %vm1242, 1, 0
      %v1275 = vsel %vm1243, 1, 0
      %v1276 = vsel %vm1244, 1, 0
      %v1277 = vsel %vm1245, 1, 0
      %v1278 = vsel %vm1246, 1, 0
      %v1279 = vsel %vm1247, 1, 0
      %v1280 = vsel %vm1248, 1, 0
      %v1281 = vsel %vm1249, 1, 0
      %v1282 = vsel %vm1250, 1, 0
      %v1283 = vsel %vm1251, 1, 0
      %v1284 = vsel %vm1252, 1, 0
      %v1285 = vsel %vm1253, 1, 0
      %v1286 = vsel %vm1254, 1, 0
      %v1287 = vsel %vm1255, 1, 0
      %v1288 = vsel %vm1256, 1, 0
      %v1289 = vsel %vm1257, 1, 0
      %v1290 = vsel %vm1258, 1, 0
      %v1291 = vsel %vm1259, 1, 0
      %v1292 = vsel %vm1260, 1, 0
      %v1293 = vsel %vm1261, 1, 0
      %v1294 = vsel %vm1262, 1, 0
      %v1295 = vsel %vm1263, 1, 0
      %v1296 = vsel %vm1264, 1, 0
      %v1297 = vsel %vm1265, 1, 0
      %v1298 = vsel %vm1266, 1, 0
      %v1299 = vsel %vm1267, 1, 0
      %v1300 = vsel %vm1268, 1, 0
      %v1301 = vsel %vm1269, 1, 0
      %v1302 = vsel %vm1270, 1, 0
      %v1303 = vcvt.s32.f32 %v1271
      %v1304 = vcvt.s32.f32 %v1272
      %v1305 = vcvt.s32.f32 %v1273
      %v1306 = vcvt.s32.f32 %v1274
      %v1307 = vcvt.s32.f32 %v1275
      %v1308 = vcvt.s32.f32 %v1276
      %v1309 = vcvt.s32.f32 %v1277
      %v1310 = vcvt.s32.f32 %v1278
      %v1311 = vcvt.s32.f32 %v1279
      %v1312 = vcvt.s32.f32 %v1280
      %v1313 = vcvt.s32.f32 %v1281
      %v1314 = vcvt.s32.f32 %v1282
      %v1315 = vcvt.s32.f32 %v1283
      %v1316 = vcvt.s32.f32 %v1284
      %v1317 = vcvt.s32.f32 %v1285
      %v1318 = vcvt.s32.f32 %v1286
      %v1319 = vcvt.s32.f32 %v1287
      %v1320 = vcvt.s32.f32 %v1288
      %v1321 = vcvt.s32.f32 %v1289
      %v1322 = vcvt.s32.f32 %v1290
      %v1323 = vcvt.s32.f32 %v1291
      %v1324 = vcvt.s32.f32 %v1292
      %v1325 = vcvt.s32.f32 %v1293
      %v1326 = vcvt.s32.f32 %v1294
      %v1327 = vcvt.s32.f32 %v1295
      %v1328 = vcvt.s32.f32 %v1296
      %v1329 = vcvt.s32.f32 %v1297
      %v1330 = vcvt.s32.f32 %v1298
      %v1331 = vcvt.s32.f32 %v1299
      %v1332 = vcvt.s32.f32 %v1300
      %v1333 = vcvt.s32.f32 %v1301
      %v1334 = vcvt.s32.f32 %v1302
      %vm1367 = vcmask 1040384
      %v1368 = vrot.slane %v1303, 7
      %v1369 = vrot.slane %v1304, 7
      %v1370 = vsel %vm1367, %v1368, %v1369
      %v1371 = vrot.slane %v1305, 7
      %v1372 = vsel %vm1367, %v1369, %v1371
      %v1373 = vrot.slane %v1306, 7
      %v1374 = vsel %vm1367, %v1371, %v1373
      %v1375 = vrot.slane %v1307, 7
      %v1376 = vsel %vm1367, %v1373, %v1375
      %v1377 = vrot.slane %v1308, 7
      %v1378 = vsel %vm1367, %v1375, %v1377
      %v1379 = vrot.slane %v1309, 7
      %v1380 = vsel %vm1367, %v1377, %v1379
      %v1381 = vrot.slane %v1310, 7
      %v1382 = vsel %vm1367, %v1379, %v1381
      %v1383 = vrot.slane %v1311, 7
      %v1384 = vsel %vm1367, %v1381, %v1383
      %v1385 = vrot.slane %v1312, 7
      %v1386 = vsel %vm1367, %v1383, %v1385
      %v1387 = vrot.slane %v1313, 7
      %v1388 = vsel %vm1367, %v1385, %v1387
      %v1389 = vrot.slane %v1314, 7
      %v1390 = vsel %vm1367, %v1387, %v1389
      %v1391 = vrot.slane %v1315, 7
      %v1392 = vsel %vm1367, %v1389, %v1391
      %v1393 = vrot.slane %v1316, 7
      %v1394 = vsel %vm1367, %v1391, %v1393
      %v1395 = vrot.slane %v1317, 7
      %v1396 = vsel %vm1367, %v1393, %v1395
      %v1397 = vrot.slane %v1318, 7
      %v1398 = vsel %vm1367, %v1395, %v1397
      %v1399 = vrot.slane %v1319, 7
      %v1400 = vsel %vm1367, %v1397, %v1399
      %v1401 = vrot.slane %v1320, 7
      %v1402 = vsel %vm1367, %v1399, %v1401
      %v1403 = vrot.slane %v1321, 7
      %v1404 = vsel %vm1367, %v1401, %v1403
      %v1405 = vrot.slane %v1322, 7
      %v1406 = vsel %vm1367, %v1403, %v1405
      %v1407 = vrot.slane %v1323, 7
      %v1408 = vsel %vm1367, %v1405, %v1407
      %v1409 = vrot.slane %v1324, 7
      %v1410 = vsel %vm1367, %v1407, %v1409
      %v1411 = vrot.slane %v1325, 7
      %v1412 = vsel %vm1367, %v1409, %v1411
      %v1413 = vrot.slane %v1326, 7
      %v1414 = vsel %vm1367, %v1411, %v1413
      %v1415 = vrot.slane %v1327, 7
      %v1416 = vsel %vm1367, %v1413, %v1415
      %v1417 = vrot.slane %v1328, 7
      %v1418 = vsel %vm1367, %v1415, %v1417
      %v1419 = vrot.slane %v1329, 7
      %v1420 = vsel %vm1367, %v1417, %v1419
      %v1421 = vrot.slane %v1330, 7
      %v1422 = vsel %vm1367, %v1419, %v1421
      %v1423 = vrot.slane %v1331, 7
      %v1424 = vsel %vm1367, %v1421, %v1423
      %v1425 = vrot.slane %v1332, 7
      %v1426 = vsel %vm1367, %v1423, %v1425
      %v1427 = vrot.slane %v1333, 7
      %v1428 = vsel %vm1367, %v1425, %v1427
      %v1429 = vrot.slane %v1334, 7
      %v1430 = vsel %vm1367, %v1427, %v1429
      %1431 = vrot.lane.b32.xlu0 %v1368, 3
      %v1432 = vpop.permute.xlu0 %1431
      %1433 = vrot.lane.b32.xlu0 %v1370, 3
      %v1434 = vpop.permute.xlu0 %1433
      %1435 = vrot.lane.b32.xlu0 %v1372, 3
      %v1436 = vpop.permute.xlu0 %1435
      %1437 = vrot.lane.b32.xlu0 %v1374, 3
      %v1438 = vpop.permute.xlu0 %1437
      %1439 = vrot.lane.b32.xlu0 %v1376, 3
      %v1440 = vpop.permute.xlu0 %1439
      %1441 = vrot.lane.b32.xlu0 %v1378, 3
      %v1442 = vpop.permute.xlu0 %1441
      %1443 = vrot.lane.b32.xlu0 %v1380, 3
      %v1444 = vpop.permute.xlu0 %1443
      %1445 = vrot.lane.b32.xlu0 %v1382, 3
      %v1446 = vpop.permute.xlu0 %1445
      %1447 = vrot.lane.b32.xlu0 %v1384, 3
      %v1448 = vpop.permute.xlu0 %1447
      %1449 = vrot.lane.b32.xlu0 %v1386, 3
      %v1450 = vpop.permute.xlu0 %1449
      %1451 = vrot.lane.b32.xlu0 %v1388, 3
      %v1452 = vpop.permute.xlu0 %1451
      %1453 = vrot.lane.b32.xlu0 %v1390, 3
      %v1454 = vpop.permute.xlu0 %1453
      %1455 = vrot.lane.b32.xlu0 %v1392, 3
      %v1456 = vpop.permute.xlu0 %1455
      %1457 = vrot.lane.b32.xlu0 %v1394, 3
      %v1458 = vpop.permute.xlu0 %1457
      %1459 = vrot.lane.b32.xlu0 %v1396, 3
      %v1460 = vpop.permute.xlu0 %1459
      %1461 = vrot.lane.b32.xlu0 %v1398, 3
      %v1462 = vpop.permute.xlu0 %1461
      %1463 = vrot.lane.b32.xlu0 %v1400, 3
      %v1464 = vpop.permute.xlu0 %1463
      %1465 = vrot.lane.b32.xlu0 %v1402, 3
      %v1466 = vpop.permute.xlu0 %1465
      %1467 = vrot.lane.b32.xlu0 %v1404, 3
      %v1468 = vpop.permute.xlu0 %1467
      %1469 = vrot.lane.b32.xlu0 %v1406, 3
      %v1470 = vpop.permute.xlu0 %1469
      %1471 = vrot.lane.b32.xlu0 %v1408, 3
      %v1472 = vpop.permute.xlu0 %1471
      %1473 = vrot.lane.b32.xlu0 %v1410, 3
      %v1474 = vpop.permute.xlu0 %1473
      %1475 = vrot.lane.b32.xlu0 %v1412, 3
      %v1476 = vpop.permute.xlu0 %1475
      %1477 = vrot.lane.b32.xlu0 %v1414, 3
      %v1478 = vpop.permute.xlu0 %1477
      %1479 = vrot.lane.b32.xlu0 %v1416, 3
      %v1480 = vpop.permute.xlu0 %1479
      %1481 = vrot.lane.b32.xlu0 %v1418, 3
      %v1482 = vpop.permute.xlu0 %1481
      %1483 = vrot.lane.b32.xlu0 %v1420, 3
      %v1484 = vpop.permute.xlu0 %1483
      %1485 = vrot.lane.b32.xlu0 %v1422, 3
      %v1486 = vpop.permute.xlu0 %1485
      %1487 = vrot.lane.b32.xlu0 %v1424, 3
      %v1488 = vpop.permute.xlu0 %1487
      %1489 = vrot.lane.b32.xlu0 %v1426, 3
      %v1490 = vpop.permute.xlu0 %1489
      %1491 = vrot.lane.b32.xlu0 %v1428, 3
      %v1492 = vpop.permute.xlu0 %1491
      %1493 = vrot.lane.b32.xlu0 %v1430, 3
      %v1494 = vpop.permute.xlu0 %1493
      %1495 = vrot.lane.b32.xlu0 %v1429, 3
      %v1496 = vpop.permute.xlu0 %1495
      %v1530 = vmul.f32 %v592, %v1432
      %v1531 = vmul.f32 %v593, %v1434
      %v1532 = vmul.f32 %v594, %v1436
      %v1533 = vmul.f32 %v595, %v1438
      %v1534 = vmul.f32 %v596, %v1440
      %v1535 = vmul.f32 %v597, %v1442
      %v1536 = vmul.f32 %v598, %v1444
      %v1537 = vmul.f32 %v599, %v1446
      %v1538 = vmul.f32 %v600, %v1448
      %v1539 = vmul.f32 %v601, %v1450
      %v1540 = vmul.f32 %v602, %v1452
      %v1541 = vmul.f32 %v603, %v1454
      %v1542 = vmul.f32 %v604, %v1456
      %v1543 = vmul.f32 %v605, %v1458
      %v1544 = vmul.f32 %v606, %v1460
      %v1545 = vmul.f32 %v607, %v1462
      %v1546 = vmul.f32 %v608, %v1464
      %v1547 = vmul.f32 %v609, %v1466
      %v1548 = vmul.f32 %v610, %v1468
      %v1549 = vmul.f32 %v611, %v1470
      %v1550 = vmul.f32 %v612, %v1472
      %v1551 = vmul.f32 %v613, %v1474
      %v1552 = vmul.f32 %v614, %v1476
      %v1553 = vmul.f32 %v615, %v1478
      %v1554 = vmul.f32 %v616, %v1480
      %v1555 = vmul.f32 %v617, %v1482
      %v1556 = vmul.f32 %v618, %v1484
      %v1557 = vmul.f32 %v619, %v1486
      %v1558 = vmul.f32 %v620, %v1488
      %v1559 = vmul.f32 %v621, %v1490
      %v1560 = vmul.f32 %v622, %v1492
      %v1561 = vmul.f32 %v623, %v1494
      %v1562 = vmul.f32 %v624, %v1496
      %vm1596 = vcmask 1046528
      %v1597 = vrot.slane %v1530, 1
      %v1598 = vrot.slane %v1531, 1
      %v1599 = vsel %vm1596, %v1597, %v1598
      %v1600 = vrot.slane %v1532, 1
      %v1601 = vsel %vm1596, %v1598, %v1600
      %v1602 = vrot.slane %v1533, 1
      %v1603 = vsel %vm1596, %v1600, %v1602
      %v1604 = vrot.slane %v1534, 1
      %v1605 = vsel %vm1596, %v1602, %v1604
      %v1606 = vrot.slane %v1535, 1
      %v1607 = vsel %vm1596, %v1604, %v1606
      %v1608 = vrot.slane %v1536, 1
      %v1609 = vsel %vm1596, %v1606, %v1608
      %v1610 = vrot.slane %v1537, 1
      %v1611 = vsel %vm1596, %v1608, %v1610
      %v1612 = vrot.slane %v1538, 1
      %v1613 = vsel %vm1596, %v1610, %v1612
      %v1614 = vrot.slane %v1539, 1
      %v1615 = vsel %vm1596, %v1612, %v1614
      %v1616 = vrot.slane %v1540, 1
      %v1617 = vsel %vm1596, %v1614, %v1616
      %v1618 = vrot.slane %v1541, 1
      %v1619 = vsel %vm1596, %v1616, %v1618
      %v1620 = vrot.slane %v1542, 1
      %v1621 = vsel %vm1596, %v1618, %v1620
      %v1622 = vrot.slane %v1543, 1
      %v1623 = vsel %vm1596, %v1620, %v1622
      %v1624 = vrot.slane %v1544, 1
      %v1625 = vsel %vm1596, %v1622, %v1624
      %v1626 = vrot.slane %v1545, 1
      %v1627 = vsel %vm1596, %v1624, %v1626
      %v1628 = vrot.slane %v1546, 1
      %v1629 = vsel %vm1596, %v1626, %v1628
      %v1630 = vrot.slane %v1547, 1
      %v1631 = vsel %vm1596, %v1628, %v1630
      %v1632 = vrot.slane %v1548, 1
      %v1633 = vsel %vm1596, %v1630, %v1632
      %v1634 = vrot.slane %v1549, 1
      %v1635 = vsel %vm1596, %v1632, %v1634
      %v1636 = vrot.slane %v1550, 1
      %v1637 = vsel %vm1596, %v1634, %v1636
      %v1638 = vrot.slane %v1551, 1
      %v1639 = vsel %vm1596, %v1636, %v1638
      %v1640 = vrot.slane %v1552, 1
      %v1641 = vsel %vm1596, %v1638, %v1640
      %v1642 = vrot.slane %v1553, 1
      %v1643 = vsel %vm1596, %v1640, %v1642
      %v1644 = vrot.slane %v1554, 1
      %v1645 = vsel %vm1596, %v1642, %v1644
      %v1646 = vrot.slane %v1555, 1
      %v1647 = vsel %vm1596, %v1644, %v1646
      %v1648 = vrot.slane %v1556, 1
      %v1649 = vsel %vm1596, %v1646, %v1648
      %v1650 = vrot.slane %v1557, 1
      %v1651 = vsel %vm1596, %v1648, %v1650
      %v1652 = vrot.slane %v1558, 1
      %v1653 = vsel %vm1596, %v1650, %v1652
      %v1654 = vrot.slane %v1559, 1
      %v1655 = vsel %vm1596, %v1652, %v1654
      %v1656 = vrot.slane %v1560, 1
      %v1657 = vsel %vm1596, %v1654, %v1656
      %v1658 = vrot.slane %v1561, 1
      %v1659 = vsel %vm1596, %v1656, %v1658
      %v1660 = vrot.slane %v1562, 1
      %v1661 = vsel %vm1596, %v1658, %v1660
      %1662 = vrot.lane.b32.xlu0 %v1599, 1
      %v1663 = vpop.permute.xlu0 %1662
      %1664 = vrot.lane.b32.xlu0 %v1601, 1
      %v1665 = vpop.permute.xlu0 %1664
      %1666 = vrot.lane.b32.xlu0 %v1603, 1
      %v1667 = vpop.permute.xlu0 %1666
      %1668 = vrot.lane.b32.xlu0 %v1605, 1
      %v1669 = vpop.permute.xlu0 %1668
      %1670 = vrot.lane.b32.xlu0 %v1607, 1
      %v1671 = vpop.permute.xlu0 %1670
      %1672 = vrot.lane.b32.xlu0 %v1609, 1
      %v1673 = vpop.permute.xlu0 %1672
      %1674 = vrot.lane.b32.xlu0 %v1611, 1
      %v1675 = vpop.permute.xlu0 %1674
      %1676 = vrot.lane.b32.xlu0 %v1613, 1
      %v1677 = vpop.permute.xlu0 %1676
      %1678 = vrot.lane.b32.xlu0 %v1615, 1
      %v1679 = vpop.permute.xlu0 %1678
      %1680 = vrot.lane.b32.xlu0 %v1617, 1
      %v1681 = vpop.permute.xlu0 %1680
      %1682 = vrot.lane.b32.xlu0 %v1619, 1
      %v1683 = vpop.permute.xlu0 %1682
      %1684 = vrot.lane.b32.xlu0 %v1621, 1
      %v1685 = vpop.permute.xlu0 %1684
      %1686 = vrot.lane.b32.xlu0 %v1623, 1
      %v1687 = vpop.permute.xlu0 %1686
      %1688 = vrot.lane.b32.xlu0 %v1625, 1
      %v1689 = vpop.permute.xlu0 %1688
      %1690 = vrot.lane.b32.xlu0 %v1627, 1
      %v1691 = vpop.permute.xlu0 %1690
      %1692 = vrot.lane.b32.xlu0 %v1629, 1
      %v1693 = vpop.permute.xlu0 %1692
      %1694 = vrot.lane.b32.xlu0 %v1631, 1
      %v1695 = vpop.permute.xlu0 %1694
      %1696 = vrot.lane.b32.xlu0 %v1633, 1
      %v1697 = vpop.permute.xlu0 %1696
      %1698 = vrot.lane.b32.xlu0 %v1635, 1
      %v1699 = vpop.permute.xlu0 %1698
      %1700 = vrot.lane.b32.xlu0 %v1637, 1
      %v1701 = vpop.permute.xlu0 %1700
      %1702 = vrot.lane.b32.xlu0 %v1639, 1
      %v1703 = vpop.permute.xlu0 %1702
      %1704 = vrot.lane.b32.xlu0 %v1641, 1
      %v1705 = vpop.permute.xlu0 %1704
      %1706 = vrot.lane.b32.xlu0 %v1643, 1
      %v1707 = vpop.permute.xlu0 %1706
      %1708 = vrot.lane.b32.xlu0 %v1645, 1
      %v1709 = vpop.permute.xlu0 %1708
      %1710 = vrot.lane.b32.xlu0 %v1647, 1
      %v1711 = vpop.permute.xlu0 %1710
      %1712 = vrot.lane.b32.xlu0 %v1649, 1
      %v1713 = vpop.permute.xlu0 %1712
      %1714 = vrot.lane.b32.xlu0 %v1651, 1
      %v1715 = vpop.permute.xlu0 %1714
      %1716 = vrot.lane.b32.xlu0 %v1653, 1
      %v1717 = vpop.permute.xlu0 %1716
      %1718 = vrot.lane.b32.xlu0 %v1655, 1
      %v1719 = vpop.permute.xlu0 %1718
      %1720 = vrot.lane.b32.xlu0 %v1657, 1
      %v1721 = vpop.permute.xlu0 %1720
      %1722 = vrot.lane.b32.xlu0 %v1659, 1
      %v1723 = vpop.permute.xlu0 %1722
      %1724 = vrot.lane.b32.xlu0 %v1661, 1
      %v1725 = vpop.permute.xlu0 %1724
      %v1758 = vadd.f32 %v1044, %v1663
      %v1759 = vadd.f32 %v1045, %v1665
      %v1760 = vadd.f32 %v1046, %v1667
      %v1761 = vadd.f32 %v1047, %v1669
      %v1762 = vadd.f32 %v1048, %v1671
      %v1763 = vadd.f32 %v1049, %v1673
      %v1764 = vadd.f32 %v1050, %v1675
      %v1765 = vadd.f32 %v1051, %v1677
      %v1766 = vadd.f32 %v1052, %v1679
      %v1767 = vadd.f32 %v1053, %v1681
      %v1768 = vadd.f32 %v1054, %v1683
      %v1769 = vadd.f32 %v1055, %v1685
      %v1770 = vadd.f32 %v1056, %v1687
      %v1771 = vadd.f32 %v1057, %v1689
      %v1772 = vadd.f32 %v1058, %v1691
      %v1773 = vadd.f32 %v1059, %v1693
      %v1774 = vadd.f32 %v1060, %v1695
      %v1775 = vadd.f32 %v1061, %v1697
      %v1776 = vadd.f32 %v1062, %v1699
      %v1777 = vadd.f32 %v1063, %v1701
      %v1778 = vadd.f32 %v1064, %v1703
      %v1779 = vadd.f32 %v1065, %v1705
      %v1780 = vadd.f32 %v1066, %v1707
      %v1781 = vadd.f32 %v1067, %v1709
      %v1782 = vadd.f32 %v1068, %v1711
      %v1783 = vadd.f32 %v1069, %v1713
      %v1784 = vadd.f32 %v1070, %v1715
      %v1785 = vadd.f32 %v1071, %v1717
      %v1786 = vadd.f32 %v1072, %v1719
      %v1787 = vadd.f32 %v1073, %v1721
      %v1788 = vadd.f32 %v1074, %v1723
      %v1789 = vadd.f32 %v1075, %v1725
      %v1790 = vadd.f32 %v314, 0.0
      %v1791 = vadd.f32 %v315, 0.0
      %v1792 = vadd.f32 %v316, 0.0
      %v1793 = vadd.f32 %v317, 0.0
      %v1794 = vadd.f32 %v318, 0.0
      %v1795 = vadd.f32 %v319, 0.0
      %v1796 = vadd.f32 %v320, 0.0
      %v1797 = vadd.f32 %v321, 0.0
      %v1798 = vadd.f32 %v322, 0.0
      %v1799 = vadd.f32 %v323, 0.0
      %v1800 = vadd.f32 %v324, 0.0
      %v1801 = vadd.f32 %v325, 0.0
      %v1802 = vadd.f32 %v326, 0.0
      %v1803 = vadd.f32 %v327, 0.0
      %v1804 = vadd.f32 %v328, 0.0
      %v1805 = vadd.f32 %v329, 0.0
      %v1806 = vadd.f32 %v330, 0.0
      %v1807 = vadd.f32 %v331, 0.0
      %v1808 = vadd.f32 %v332, 0.0
      %v1809 = vadd.f32 %v333, 0.0
      %v1810 = vadd.f32 %v334, 0.0
      %v1811 = vadd.f32 %v335, 0.0
      %v1812 = vadd.f32 %v336, 0.0
      %v1813 = vadd.f32 %v337, 0.0
      %v1814 = vadd.f32 %v338, 0.0
      %v1815 = vadd.f32 %v339, 0.0
      %v1816 = vadd.f32 %v340, 0.0
      %v1817 = vadd.f32 %v341, 0.0
      %v1818 = vadd.f32 %v342, 0.0
      %v1819 = vadd.f32 %v343, 0.0
      %v1820 = vadd.f32 %v344, 0.0
      %v1821 = vadd.f32 %v345, 0.0
      %vm1822 = vcmp.ge.f32.partialorder %v1790, 0.0
      %vm1823 = vcmp.ge.f32.partialorder %v1791, 0.0
      %vm1824 = vcmp.ge.f32.partialorder %v1792, 0.0
      %vm1825 = vcmp.ge.f32.partialorder %v1793, 0.0
      %vm1826 = vcmp.ge.f32.partialorder %v1794, 0.0
      %vm1827 = vcmp.ge.f32.partialorder %v1795, 0.0
      %vm1828 = vcmp.ge.f32.partialorder %v1796, 0.0
      %vm1829 = vcmp.ge.f32.partialorder %v1797, 0.0
      %vm1830 = vcmp.ge.f32.partialorder %v1798, 0.0
      %vm1831 = vcmp.ge.f32.partialorder %v1799, 0.0
      %vm1832 = vcmp.ge.f32.partialorder %v1800, 0.0
      %vm1833 = vcmp.ge.f32.partialorder %v1801, 0.0
      %vm1834 = vcmp.ge.f32.partialorder %v1802, 0.0
      %vm1835 = vcmp.ge.f32.partialorder %v1803, 0.0
      %vm1836 = vcmp.ge.f32.partialorder %v1804, 0.0
      %vm1837 = vcmp.ge.f32.partialorder %v1805, 0.0
      %vm1838 = vcmp.ge.f32.partialorder %v1806, 0.0
      %vm1839 = vcmp.ge.f32.partialorder %v1807, 0.0
      %vm1840 = vcmp.ge.f32.partialorder %v1808, 0.0
      %vm1841 = vcmp.ge.f32.partialorder %v1809, 0.0
      %vm1842 = vcmp.ge.f32.partialorder %v1810, 0.0
      %vm1843 = vcmp.ge.f32.partialorder %v1811, 0.0
      %vm1844 = vcmp.ge.f32.partialorder %v1812, 0.0
      %vm1845 = vcmp.ge.f32.partialorder %v1813, 0.0
      %vm1846 = vcmp.ge.f32.partialorder %v1814, 0.0
      %vm1847 = vcmp.ge.f32.partialorder %v1815, 0.0
      %vm1848 = vcmp.ge.f32.partialorder %v1816, 0.0
      %vm1849 = vcmp.ge.f32.partialorder %v1817, 0.0
      %vm1850 = vcmp.ge.f32.partialorder %v1818, 0.0
      %vm1851 = vcmp.ge.f32.partialorder %v1819, 0.0
      %vm1852 = vcmp.ge.f32.partialorder %v1820, 0.0
      %vm1853 = vcmp.ge.f32.partialorder %v1821, 0.0
      %vm1854 = vcmp.lt.f32.partialorder %v1790, 16.0
      %vm1855 = vcmp.lt.f32.partialorder %v1791, 16.0
      %vm1856 = vcmp.lt.f32.partialorder %v1792, 16.0
      %vm1857 = vcmp.lt.f32.partialorder %v1793, 16.0
      %vm1858 = vcmp.lt.f32.partialorder %v1794, 16.0
      %vm1859 = vcmp.lt.f32.partialorder %v1795, 16.0
      %vm1860 = vcmp.lt.f32.partialorder %v1796, 16.0
      %vm1861 = vcmp.lt.f32.partialorder %v1797, 16.0
      %vm1862 = vcmp.lt.f32.partialorder %v1798, 16.0
      %vm1863 = vcmp.lt.f32.partialorder %v1799, 16.0
      %vm1864 = vcmp.lt.f32.partialorder %v1800, 16.0
      %vm1865 = vcmp.lt.f32.partialorder %v1801, 16.0
      %vm1866 = vcmp.lt.f32.partialorder %v1802, 16.0
      %vm1867 = vcmp.lt.f32.partialorder %v1803, 16.0
      %vm1868 = vcmp.lt.f32.partialorder %v1804, 16.0
      %vm1869 = vcmp.lt.f32.partialorder %v1805, 16.0
      %vm1870 = vcmp.lt.f32.partialorder %v1806, 16.0
      %vm1871 = vcmp.lt.f32.partialorder %v1807, 16.0
      %vm1872 = vcmp.lt.f32.partialorder %v1808, 16.0
      %vm1873 = vcmp.lt.f32.partialorder %v1809, 16.0
      %vm1874 = vcmp.lt.f32.partialorder %v1810, 16.0
      %vm1875 = vcmp.lt.f32.partialorder %v1811, 16.0
      %vm1876 = vcmp.lt.f32.partialorder %v1812, 16.0
      %vm1877 = vcmp.lt.f32.partialorder %v1813, 16.0
      %vm1878 = vcmp.lt.f32.partialorder %v1814, 16.0
      %vm1879 = vcmp.lt.f32.partialorder %v1815, 16.0
      %vm1880 = vcmp.lt.f32.partialorder %v1816, 16.0
      %vm1881 = vcmp.lt.f32.partialorder %v1817, 16.0
      %vm1882 = vcmp.lt.f32.partialorder %v1818, 16.0
      %vm1883 = vcmp.lt.f32.partialorder %v1819, 16.0
      %vm1884 = vcmp.lt.f32.partialorder %v1820, 16.0
      %vm1885 = vcmp.lt.f32.partialorder %v1821, 16.0
      %vm1886 = vmand %vm1822, %vm1854
      %vm1887 = vmand %vm1823, %vm1855
      %vm1888 = vmand %vm1824, %vm1856
      %vm1889 = vmand %vm1825, %vm1857
      %vm1890 = vmand %vm1826, %vm1858
      %vm1891 = vmand %vm1827, %vm1859
      %vm1892 = vmand %vm1828, %vm1860
      %vm1893 = vmand %vm1829, %vm1861
      %vm1894 = vmand %vm1830, %vm1862
      %vm1895 = vmand %vm1831, %vm1863
      %vm1896 = vmand %vm1832, %vm1864
      %vm1897 = vmand %vm1833, %vm1865
      %vm1898 = vmand %vm1834, %vm1866
      %vm1899 = vmand %vm1835, %vm1867
      %vm1900 = vmand %vm1836, %vm1868
      %vm1901 = vmand %vm1837, %vm1869
      %vm1902 = vmand %vm1838, %vm1870
      %vm1903 = vmand %vm1839, %vm1871
      %vm1904 = vmand %vm1840, %vm1872
      %vm1905 = vmand %vm1841, %vm1873
      %vm1906 = vmand %vm1842, %vm1874
      %vm1907 = vmand %vm1843, %vm1875
      %vm1908 = vmand %vm1844, %vm1876
      %vm1909 = vmand %vm1845, %vm1877
      %vm1910 = vmand %vm1846, %vm1878
      %vm1911 = vmand %vm1847, %vm1879
      %vm1912 = vmand %vm1848, %vm1880
      %vm1913 = vmand %vm1849, %vm1881
      %vm1914 = vmand %vm1850, %vm1882
      %vm1915 = vmand %vm1851, %vm1883
      %vm1916 = vmand %vm1852, %vm1884
      %vm1917 = vmand %vm1853, %vm1885
      %vm1918 = vcmp.ge.f32.partialorder %v355, 0.0
      %vm1919 = vmand %vm1886, %vm1918
      %vm1920 = vmand %vm1887, %vm1918
      %vm1921 = vmand %vm1888, %vm1918
      %vm1922 = vmand %vm1889, %vm1918
      %vm1923 = vmand %vm1890, %vm1918
      %vm1924 = vmand %vm1891, %vm1918
      %vm1925 = vmand %vm1892, %vm1918
      %vm1926 = vmand %vm1893, %vm1918
      %vm1927 = vmand %vm1894, %vm1918
      %vm1928 = vmand %vm1895, %vm1918
      %vm1929 = vmand %vm1896, %vm1918
      %vm1930 = vmand %vm1897, %vm1918
      %vm1931 = vmand %vm1898, %vm1918
      %vm1932 = vmand %vm1899, %vm1918
      %vm1933 = vmand %vm1900, %vm1918
      %vm1934 = vmand %vm1901, %vm1918
      %vm1935 = vmand %vm1902, %vm1918
      %vm1936 = vmand %vm1903, %vm1918
      %vm1937 = vmand %vm1904, %vm1918
      %vm1938 = vmand %vm1905, %vm1918
      %vm1939 = vmand %vm1906, %vm1918
      %vm1940 = vmand %vm1907, %vm1918
      %vm1941 = vmand %vm1908, %vm1918
      %vm1942 = vmand %vm1909, %vm1918
      %vm1943 = vmand %vm1910, %vm1918
      %vm1944 = vmand %vm1911, %vm1918
      %vm1945 = vmand %vm1912, %vm1918
      %vm1946 = vmand %vm1913, %vm1918
      %vm1947 = vmand %vm1914, %vm1918
      %vm1948 = vmand %vm1915, %vm1918
      %vm1949 = vmand %vm1916, %vm1918
      %vm1950 = vmand %vm1917, %vm1918
      %vm1951 = vcmp.lt.f32.partialorder %v355, 3.0
      %vm1952 = vmand %vm1919, %vm1951
      %vm1953 = vmand %vm1920, %vm1951
      %vm1954 = vmand %vm1921, %vm1951
      %vm1955 = vmand %vm1922, %vm1951
      %vm1956 = vmand %vm1923, %vm1951
      %vm1957 = vmand %vm1924, %vm1951
      %vm1958 = vmand %vm1925, %vm1951
      %vm1959 = vmand %vm1926, %vm1951
      %vm1960 = vmand %vm1927, %vm1951
      %vm1961 = vmand %vm1928, %vm1951
      %vm1962 = vmand %vm1929, %vm1951
      %vm1963 = vmand %vm1930, %vm1951
      %vm1964 = vmand %vm1931, %vm1951
      %vm1965 = vmand %vm1932, %vm1951
      %vm1966 = vmand %vm1933, %vm1951
      %vm1967 = vmand %vm1934, %vm1951
      %vm1968 = vmand %vm1935, %vm1951
      %vm1969 = vmand %vm1936, %vm1951
      %vm1970 = vmand %vm1937, %vm1951
      %vm1971 = vmand %vm1938, %vm1951
      %vm1972 = vmand %vm1939, %vm1951
      %vm1973 = vmand %vm1940, %vm1951
      %vm1974 = vmand %vm1941, %vm1951
      %vm1975 = vmand %vm1942, %vm1951
      %vm1976 = vmand %vm1943, %vm1951
      %vm1977 = vmand %vm1944, %vm1951
      %vm1978 = vmand %vm1945, %vm1951
      %vm1979 = vmand %vm1946, %vm1951
      %vm1980 = vmand %vm1947, %vm1951
      %vm1981 = vmand %vm1948, %vm1951
      %vm1982 = vmand %vm1949, %vm1951
      %vm1983 = vmand %vm1950, %vm1951
      %v1984 = vsel %vm1952, 1, 0
      %v1985 = vsel %vm1953, 1, 0
      %v1986 = vsel %vm1954, 1, 0
      %v1987 = vsel %vm1955, 1, 0
      %v1988 = vsel %vm1956, 1, 0
      %v1989 = vsel %vm1957, 1, 0
      %v1990 = vsel %vm1958, 1, 0
      %v1991 = vsel %vm1959, 1, 0
      %v1992 = vsel %vm1960, 1, 0
      %v1993 = vsel %vm1961, 1, 0
      %v1994 = vsel %vm1962, 1, 0
      %v1995 = vsel %vm1963, 1, 0
      %v1996 = vsel %vm1964, 1, 0
      %v1997 = vsel %vm1965, 1, 0
      %v1998 = vsel %vm1966, 1, 0
      %v1999 = vsel %vm1967, 1, 0
      %v2000 = vsel %vm1968, 1, 0
      %v2001 = vsel %vm1969, 1, 0
      %v2002 = vsel %vm1970, 1, 0
      %v2003 = vsel %vm1971, 1, 0
      %v2004 = vsel %vm1972, 1, 0
      %v2005 = vsel %vm1973, 1, 0
      %v2006 = vsel %vm1974, 1, 0
      %v2007 = vsel %vm1975, 1, 0
      %v2008 = vsel %vm1976, 1, 0
      %v2009 = vsel %vm1977, 1, 0
      %v2010 = vsel %vm1978, 1, 0
      %v2011 = vsel %vm1979, 1, 0
      %v2012 = vsel %vm1980, 1, 0
      %v2013 = vsel %vm1981, 1, 0
      %v2014 = vsel %vm1982, 1, 0
      %v2015 = vsel %vm1983, 1, 0
      %v2016 = vcvt.s32.f32 %v1984
      %v2017 = vcvt.s32.f32 %v1985
      %v2018 = vcvt.s32.f32 %v1986
      %v2019 = vcvt.s32.f32 %v1987
      %v2020 = vcvt.s32.f32 %v1988
      %v2021 = vcvt.s32.f32 %v1989
      %v2022 = vcvt.s32.f32 %v1990
      %v2023 = vcvt.s32.f32 %v1991
      %v2024 = vcvt.s32.f32 %v1992
      %v2025 = vcvt.s32.f32 %v1993
      %v2026 = vcvt.s32.f32 %v1994
      %v2027 = vcvt.s32.f32 %v1995
      %v2028 = vcvt.s32.f32 %v1996
      %v2029 = vcvt.s32.f32 %v1997
      %v2030 = vcvt.s32.f32 %v1998
      %v2031 = vcvt.s32.f32 %v1999
      %v2032 = vcvt.s32.f32 %v2000
      %v2033 = vcvt.s32.f32 %v2001
      %v2034 = vcvt.s32.f32 %v2002
      %v2035 = vcvt.s32.f32 %v2003
      %v2036 = vcvt.s32.f32 %v2004
      %v2037 = vcvt.s32.f32 %v2005
      %v2038 = vcvt.s32.f32 %v2006
      %v2039 = vcvt.s32.f32 %v2007
      %v2040 = vcvt.s32.f32 %v2008
      %v2041 = vcvt.s32.f32 %v2009
      %v2042 = vcvt.s32.f32 %v2010
      %v2043 = vcvt.s32.f32 %v2011
      %v2044 = vcvt.s32.f32 %v2012
      %v2045 = vcvt.s32.f32 %v2013
      %v2046 = vcvt.s32.f32 %v2014
      %v2047 = vcvt.s32.f32 %v2015
      %v2080 = vrot.slane %v2016, 6
      %v2081 = vrot.slane %v2017, 6
      %v2082 = vsel %vm388, %v2080, %v2081
      %v2083 = vrot.slane %v2018, 6
      %v2084 = vsel %vm388, %v2081, %v2083
      %v2085 = vrot.slane %v2019, 6
      %v2086 = vsel %vm388, %v2083, %v2085
      %v2087 = vrot.slane %v2020, 6
      %v2088 = vsel %vm388, %v2085, %v2087
      %v2089 = vrot.slane %v2021, 6
      %v2090 = vsel %vm388, %v2087, %v2089
      %v2091 = vrot.slane %v2022, 6
      %v2092 = vsel %vm388, %v2089, %v2091
      %v2093 = vrot.slane %v2023, 6
      %v2094 = vsel %vm388, %v2091, %v2093
      %v2095 = vrot.slane %v2024, 6
      %v2096 = vsel %vm388, %v2093, %v2095
      %v2097 = vrot.slane %v2025, 6
      %v2098 = vsel %vm388, %v2095, %v2097
      %v2099 = vrot.slane %v2026, 6
      %v2100 = vsel %vm388, %v2097, %v2099
      %v2101 = vrot.slane %v2027, 6
      %v2102 = vsel %vm388, %v2099, %v2101
      %v2103 = vrot.slane %v2028, 6
      %v2104 = vsel %vm388, %v2101, %v2103
      %v2105 = vrot.slane %v2029, 6
      %v2106 = vsel %vm388, %v2103, %v2105
      %v2107 = vrot.slane %v2030, 6
      %v2108 = vsel %vm388, %v2105, %v2107
      %v2109 = vrot.slane %v2031, 6
      %v2110 = vsel %vm388, %v2107, %v2109
      %v2111 = vrot.slane %v2032, 6
      %v2112 = vsel %vm388, %v2109, %v2111
      %v2113 = vrot.slane %v2033, 6
      %v2114 = vsel %vm388, %v2111, %v2113
      %v2115 = vrot.slane %v2034, 6
      %v2116 = vsel %vm388, %v2113, %v2115
      %v2117 = vrot.slane %v2035, 6
      %v2118 = vsel %vm388, %v2115, %v2117
      %v2119 = vrot.slane %v2036, 6
      %v2120 = vsel %vm388, %v2117, %v2119
      %v2121 = vrot.slane %v2037, 6
      %v2122 = vsel %vm388, %v2119, %v2121
      %v2123 = vrot.slane %v2038, 6
      %v2124 = vsel %vm388, %v2121, %v2123
      %v2125 = vrot.slane %v2039, 6
      %v2126 = vsel %vm388, %v2123, %v2125
      %v2127 = vrot.slane %v2040, 6
      %v2128 = vsel %vm388, %v2125, %v2127
      %v2129 = vrot.slane %v2041, 6
      %v2130 = vsel %vm388, %v2127, %v2129
      %v2131 = vrot.slane %v2042, 6
      %v2132 = vsel %vm388, %v2129, %v2131
      %v2133 = vrot.slane %v2043, 6
      %v2134 = vsel %vm388, %v2131, %v2133
      %v2135 = vrot.slane %v2044, 6
      %v2136 = vsel %vm388, %v2133, %v2135
      %v2137 = vrot.slane %v2045, 6
      %v2138 = vsel %vm388, %v2135, %v2137
      %v2139 = vrot.slane %v2046, 6
      %v2140 = vsel %vm388, %v2137, %v2139
      %v2141 = vrot.slane %v2047, 6
      %v2142 = vsel %vm388, %v2139, %v2141
      %2143 = vrot.lane.b32.xlu0 %v2080, 2
      %v2144 = vpop.permute.xlu0 %2143
      %2145 = vrot.lane.b32.xlu0 %v2082, 2
      %v2146 = vpop.permute.xlu0 %2145
      %2147 = vrot.lane.b32.xlu0 %v2084, 2
      %v2148 = vpop.permute.xlu0 %2147
      %2149 = vrot.lane.b32.xlu0 %v2086, 2
      %v2150 = vpop.permute.xlu0 %2149
      %2151 = vrot.lane.b32.xlu0 %v2088, 2
      %v2152 = vpop.permute.xlu0 %2151
      %2153 = vrot.lane.b32.xlu0 %v2090, 2
      %v2154 = vpop.permute.xlu0 %2153
      %2155 = vrot.lane.b32.xlu0 %v2092, 2
      %v2156 = vpop.permute.xlu0 %2155
      %2157 = vrot.lane.b32.xlu0 %v2094, 2
      %v2158 = vpop.permute.xlu0 %2157
      %2159 = vrot.lane.b32.xlu0 %v2096, 2
      %v2160 = vpop.permute.xlu0 %2159
      %2161 = vrot.lane.b32.xlu0 %v2098, 2
      %v2162 = vpop.permute.xlu0 %2161
      %2163 = vrot.lane.b32.xlu0 %v2100, 2
      %v2164 = vpop.permute.xlu0 %2163
      %2165 = vrot.lane.b32.xlu0 %v2102, 2
      %v2166 = vpop.permute.xlu0 %2165
      %2167 = vrot.lane.b32.xlu0 %v2104, 2
      %v2168 = vpop.permute.xlu0 %2167
      %2169 = vrot.lane.b32.xlu0 %v2106, 2
      %v2170 = vpop.permute.xlu0 %2169
      %2171 = vrot.lane.b32.xlu0 %v2108, 2
      %v2172 = vpop.permute.xlu0 %2171
      %2173 = vrot.lane.b32.xlu0 %v2110, 2
      %v2174 = vpop.permute.xlu0 %2173
      %2175 = vrot.lane.b32.xlu0 %v2112, 2
      %v2176 = vpop.permute.xlu0 %2175
      %2177 = vrot.lane.b32.xlu0 %v2114, 2
      %v2178 = vpop.permute.xlu0 %2177
      %2179 = vrot.lane.b32.xlu0 %v2116, 2
      %v2180 = vpop.permute.xlu0 %2179
      %2181 = vrot.lane.b32.xlu0 %v2118, 2
      %v2182 = vpop.permute.xlu0 %2181
      %2183 = vrot.lane.b32.xlu0 %v2120, 2
      %v2184 = vpop.permute.xlu0 %2183
      %2185 = vrot.lane.b32.xlu0 %v2122, 2
      %v2186 = vpop.permute.xlu0 %2185
      %2187 = vrot.lane.b32.xlu0 %v2124, 2
      %v2188 = vpop.permute.xlu0 %2187
      %2189 = vrot.lane.b32.xlu0 %v2126, 2
      %v2190 = vpop.permute.xlu0 %2189
      %2191 = vrot.lane.b32.xlu0 %v2128, 2
      %v2192 = vpop.permute.xlu0 %2191
      %2193 = vrot.lane.b32.xlu0 %v2130, 2
      %v2194 = vpop.permute.xlu0 %2193
      %2195 = vrot.lane.b32.xlu0 %v2132, 2
      %v2196 = vpop.permute.xlu0 %2195
      %2197 = vrot.lane.b32.xlu0 %v2134, 2
      %v2198 = vpop.permute.xlu0 %2197
      %2199 = vrot.lane.b32.xlu0 %v2136, 2
      %v2200 = vpop.permute.xlu0 %2199
      %2201 = vrot.lane.b32.xlu0 %v2138, 2
      %v2202 = vpop.permute.xlu0 %2201
      %2203 = vrot.lane.b32.xlu0 %v2140, 2
      %v2204 = vpop.permute.xlu0 %2203
      %2205 = vrot.lane.b32.xlu0 %v2142, 2
      %v2206 = vpop.permute.xlu0 %2205
      %2207 = vrot.lane.b32.xlu0 %v2141, 2
      %v2208 = vpop.permute.xlu0 %2207
      %v2242 = vmul.f32 %v592, %v2144
      %v2243 = vmul.f32 %v593, %v2146
      %v2244 = vmul.f32 %v594, %v2148
      %v2245 = vmul.f32 %v595, %v2150
      %v2246 = vmul.f32 %v596, %v2152
      %v2247 = vmul.f32 %v597, %v2154
      %v2248 = vmul.f32 %v598, %v2156
      %v2249 = vmul.f32 %v599, %v2158
      %v2250 = vmul.f32 %v600, %v2160
      %v2251 = vmul.f32 %v601, %v2162
      %v2252 = vmul.f32 %v602, %v2164
      %v2253 = vmul.f32 %v603, %v2166
      %v2254 = vmul.f32 %v604, %v2168
      %v2255 = vmul.f32 %v605, %v2170
      %v2256 = vmul.f32 %v606, %v2172
      %v2257 = vmul.f32 %v607, %v2174
      %v2258 = vmul.f32 %v608, %v2176
      %v2259 = vmul.f32 %v609, %v2178
      %v2260 = vmul.f32 %v610, %v2180
      %v2261 = vmul.f32 %v611, %v2182
      %v2262 = vmul.f32 %v612, %v2184
      %v2263 = vmul.f32 %v613, %v2186
      %v2264 = vmul.f32 %v614, %v2188
      %v2265 = vmul.f32 %v615, %v2190
      %v2266 = vmul.f32 %v616, %v2192
      %v2267 = vmul.f32 %v617, %v2194
      %v2268 = vmul.f32 %v618, %v2196
      %v2269 = vmul.f32 %v619, %v2198
      %v2270 = vmul.f32 %v620, %v2200
      %v2271 = vmul.f32 %v621, %v2202
      %v2272 = vmul.f32 %v622, %v2204
      %v2273 = vmul.f32 %v623, %v2206
      %v2274 = vmul.f32 %v624, %v2208
      %vm2308 = vcmask 1045504
      %v2309 = vrot.slane %v2242, 2
      %v2310 = vrot.slane %v2243, 2
      %v2311 = vsel %vm2308, %v2309, %v2310
      %v2312 = vrot.slane %v2244, 2
      %v2313 = vsel %vm2308, %v2310, %v2312
      %v2314 = vrot.slane %v2245, 2
      %v2315 = vsel %vm2308, %v2312, %v2314
      %v2316 = vrot.slane %v2246, 2
      %v2317 = vsel %vm2308, %v2314, %v2316
      %v2318 = vrot.slane %v2247, 2
      %v2319 = vsel %vm2308, %v2316, %v2318
      %v2320 = vrot.slane %v2248, 2
      %v2321 = vsel %vm2308, %v2318, %v2320
      %v2322 = vrot.slane %v2249, 2
      %v2323 = vsel %vm2308, %v2320, %v2322
      %v2324 = vrot.slane %v2250, 2
      %v2325 = vsel %vm2308, %v2322, %v2324
      %v2326 = vrot.slane %v2251, 2
      %v2327 = vsel %vm2308, %v2324, %v2326
      %v2328 = vrot.slane %v2252, 2
      %v2329 = vsel %vm2308, %v2326, %v2328
      %v2330 = vrot.slane %v2253, 2
      %v2331 = vsel %vm2308, %v2328, %v2330
      %v2332 = vrot.slane %v2254, 2
      %v2333 = vsel %vm2308, %v2330, %v2332
      %v2334 = vrot.slane %v2255, 2
      %v2335 = vsel %vm2308, %v2332, %v2334
      %v2336 = vrot.slane %v2256, 2
      %v2337 = vsel %vm2308, %v2334, %v2336
      %v2338 = vrot.slane %v2257, 2
      %v2339 = vsel %vm2308, %v2336, %v2338
      %v2340 = vrot.slane %v2258, 2
      %v2341 = vsel %vm2308, %v2338, %v2340
      %v2342 = vrot.slane %v2259, 2
      %v2343 = vsel %vm2308, %v2340, %v2342
      %v2344 = vrot.slane %v2260, 2
      %v2345 = vsel %vm2308, %v2342, %v2344
      %v2346 = vrot.slane %v2261, 2
      %v2347 = vsel %vm2308, %v2344, %v2346
      %v2348 = vrot.slane %v2262, 2
      %v2349 = vsel %vm2308, %v2346, %v2348
      %v2350 = vrot.slane %v2263, 2
      %v2351 = vsel %vm2308, %v2348, %v2350
      %v2352 = vrot.slane %v2264, 2
      %v2353 = vsel %vm2308, %v2350, %v2352
      %v2354 = vrot.slane %v2265, 2
      %v2355 = vsel %vm2308, %v2352, %v2354
      %v2356 = vrot.slane %v2266, 2
      %v2357 = vsel %vm2308, %v2354, %v2356
      %v2358 = vrot.slane %v2267, 2
      %v2359 = vsel %vm2308, %v2356, %v2358
      %v2360 = vrot.slane %v2268, 2
      %v2361 = vsel %vm2308, %v2358, %v2360
      %v2362 = vrot.slane %v2269, 2
      %v2363 = vsel %vm2308, %v2360, %v2362
      %v2364 = vrot.slane %v2270, 2
      %v2365 = vsel %vm2308, %v2362, %v2364
      %v2366 = vrot.slane %v2271, 2
      %v2367 = vsel %vm2308, %v2364, %v2366
      %v2368 = vrot.slane %v2272, 2
      %v2369 = vsel %vm2308, %v2366, %v2368
      %v2370 = vrot.slane %v2273, 2
      %v2371 = vsel %vm2308, %v2368, %v2370
      %v2372 = vrot.slane %v2274, 2
      %v2373 = vsel %vm2308, %v2370, %v2372
      %2374 = vrot.lane.b32.xlu0 %v2311, 2
      %v2375 = vpop.permute.xlu0 %2374
      %2376 = vrot.lane.b32.xlu0 %v2313, 2
      %v2377 = vpop.permute.xlu0 %2376
      %2378 = vrot.lane.b32.xlu0 %v2315, 2
      %v2379 = vpop.permute.xlu0 %2378
      %2380 = vrot.lane.b32.xlu0 %v2317, 2
      %v2381 = vpop.permute.xlu0 %2380
      %2382 = vrot.lane.b32.xlu0 %v2319, 2
      %v2383 = vpop.permute.xlu0 %2382
      %2384 = vrot.lane.b32.xlu0 %v2321, 2
      %v2385 = vpop.permute.xlu0 %2384
      %2386 = vrot.lane.b32.xlu0 %v2323, 2
      %v2387 = vpop.permute.xlu0 %2386
      %2388 = vrot.lane.b32.xlu0 %v2325, 2
      %v2389 = vpop.permute.xlu0 %2388
      %2390 = vrot.lane.b32.xlu0 %v2327, 2
      %v2391 = vpop.permute.xlu0 %2390
      %2392 = vrot.lane.b32.xlu0 %v2329, 2
      %v2393 = vpop.permute.xlu0 %2392
      %2394 = vrot.lane.b32.xlu0 %v2331, 2
      %v2395 = vpop.permute.xlu0 %2394
      %2396 = vrot.lane.b32.xlu0 %v2333, 2
      %v2397 = vpop.permute.xlu0 %2396
      %2398 = vrot.lane.b32.xlu0 %v2335, 2
      %v2399 = vpop.permute.xlu0 %2398
      %2400 = vrot.lane.b32.xlu0 %v2337, 2
      %v2401 = vpop.permute.xlu0 %2400
      %2402 = vrot.lane.b32.xlu0 %v2339, 2
      %v2403 = vpop.permute.xlu0 %2402
      %2404 = vrot.lane.b32.xlu0 %v2341, 2
      %v2405 = vpop.permute.xlu0 %2404
      %2406 = vrot.lane.b32.xlu0 %v2343, 2
      %v2407 = vpop.permute.xlu0 %2406
      %2408 = vrot.lane.b32.xlu0 %v2345, 2
      %v2409 = vpop.permute.xlu0 %2408
      %2410 = vrot.lane.b32.xlu0 %v2347, 2
      %v2411 = vpop.permute.xlu0 %2410
      %2412 = vrot.lane.b32.xlu0 %v2349, 2
      %v2413 = vpop.permute.xlu0 %2412
      %2414 = vrot.lane.b32.xlu0 %v2351, 2
      %v2415 = vpop.permute.xlu0 %2414
      %2416 = vrot.lane.b32.xlu0 %v2353, 2
      %v2417 = vpop.permute.xlu0 %2416
      %2418 = vrot.lane.b32.xlu0 %v2355, 2
      %v2419 = vpop.permute.xlu0 %2418
      %2420 = vrot.lane.b32.xlu0 %v2357, 2
      %v2421 = vpop.permute.xlu0 %2420
      %2422 = vrot.lane.b32.xlu0 %v2359, 2
      %v2423 = vpop.permute.xlu0 %2422
      %2424 = vrot.lane.b32.xlu0 %v2361, 2
      %v2425 = vpop.permute.xlu0 %2424
      %2426 = vrot.lane.b32.xlu0 %v2363, 2
      %v2427 = vpop.permute.xlu0 %2426
      %2428 = vrot.lane.b32.xlu0 %v2365, 2
      %v2429 = vpop.permute.xlu0 %2428
      %2430 = vrot.lane.b32.xlu0 %v2367, 2
      %v2431 = vpop.permute.xlu0 %2430
      %2432 = vrot.lane.b32.xlu0 %v2369, 2
      %v2433 = vpop.permute.xlu0 %2432
      %2434 = vrot.lane.b32.xlu0 %v2371, 2
      %v2435 = vpop.permute.xlu0 %2434
      %2436 = vrot.lane.b32.xlu0 %v2373, 2
      %v2437 = vpop.permute.xlu0 %2436
      %v2470 = vadd.f32 %v1758, %v2375
      %v2471 = vadd.f32 %v1759, %v2377
      %v2472 = vadd.f32 %v1760, %v2379
      %v2473 = vadd.f32 %v1761, %v2381
      %v2474 = vadd.f32 %v1762, %v2383
      %v2475 = vadd.f32 %v1763, %v2385
      %v2476 = vadd.f32 %v1764, %v2387
      %v2477 = vadd.f32 %v1765, %v2389
      %v2478 = vadd.f32 %v1766, %v2391
      %v2479 = vadd.f32 %v1767, %v2393
      %v2480 = vadd.f32 %v1768, %v2395
      %v2481 = vadd.f32 %v1769, %v2397
      %v2482 = vadd.f32 %v1770, %v2399
      %v2483 = vadd.f32 %v1771, %v2401
      %v2484 = vadd.f32 %v1772, %v2403
      %v2485 = vadd.f32 %v1773, %v2405
      %v2486 = vadd.f32 %v1774, %v2407
      %v2487 = vadd.f32 %v1775, %v2409
      %v2488 = vadd.f32 %v1776, %v2411
      %v2489 = vadd.f32 %v1777, %v2413
      %v2490 = vadd.f32 %v1778, %v2415
      %v2491 = vadd.f32 %v1779, %v2417
      %v2492 = vadd.f32 %v1780, %v2419
      %v2493 = vadd.f32 %v1781, %v2421
      %v2494 = vadd.f32 %v1782, %v2423
      %v2495 = vadd.f32 %v1783, %v2425
      %v2496 = vadd.f32 %v1784, %v2427
      %v2497 = vadd.f32 %v1785, %v2429
      %v2498 = vadd.f32 %v1786, %v2431
      %v2499 = vadd.f32 %v1787, %v2433
      %v2500 = vadd.f32 %v1788, %v2435
      %v2501 = vadd.f32 %v1789, %v2437
      %v2502 = vadd.f32 %v314, 1.0
      %v2503 = vadd.f32 %v315, 1.0
      %v2504 = vadd.f32 %v316, 1.0
      %v2505 = vadd.f32 %v317, 1.0
      %v2506 = vadd.f32 %v318, 1.0
      %v2507 = vadd.f32 %v319, 1.0
      %v2508 = vadd.f32 %v320, 1.0
      %v2509 = vadd.f32 %v321, 1.0
      %v2510 = vadd.f32 %v322, 1.0
      %v2511 = vadd.f32 %v323, 1.0
      %v2512 = vadd.f32 %v324, 1.0
      %v2513 = vadd.f32 %v325, 1.0
      %v2514 = vadd.f32 %v326, 1.0
      %v2515 = vadd.f32 %v327, 1.0
      %v2516 = vadd.f32 %v328, 1.0
      %v2517 = vadd.f32 %v329, 1.0
      %v2518 = vadd.f32 %v330, 1.0
      %v2519 = vadd.f32 %v331, 1.0
      %v2520 = vadd.f32 %v332, 1.0
      %v2521 = vadd.f32 %v333, 1.0
      %v2522 = vadd.f32 %v334, 1.0
      %v2523 = vadd.f32 %v335, 1.0
      %v2524 = vadd.f32 %v336, 1.0
      %v2525 = vadd.f32 %v337, 1.0
      %v2526 = vadd.f32 %v338, 1.0
      %v2527 = vadd.f32 %v339, 1.0
      %v2528 = vadd.f32 %v340, 1.0
      %v2529 = vadd.f32 %v341, 1.0
      %v2530 = vadd.f32 %v342, 1.0
      %v2531 = vadd.f32 %v343, 1.0
      %v2532 = vadd.f32 %v344, 1.0
      %v2533 = vadd.f32 %v345, 1.0
      %vm2534 = vcmp.ge.f32.partialorder %v2502, 0.0
      %vm2535 = vcmp.ge.f32.partialorder %v2503, 0.0
      %vm2536 = vcmp.ge.f32.partialorder %v2504, 0.0
      %vm2537 = vcmp.ge.f32.partialorder %v2505, 0.0
      %vm2538 = vcmp.ge.f32.partialorder %v2506, 0.0
      %vm2539 = vcmp.ge.f32.partialorder %v2507, 0.0
      %vm2540 = vcmp.ge.f32.partialorder %v2508, 0.0
      %vm2541 = vcmp.ge.f32.partialorder %v2509, 0.0
      %vm2542 = vcmp.ge.f32.partialorder %v2510, 0.0
      %vm2543 = vcmp.ge.f32.partialorder %v2511, 0.0
      %vm2544 = vcmp.ge.f32.partialorder %v2512, 0.0
      %vm2545 = vcmp.ge.f32.partialorder %v2513, 0.0
      %vm2546 = vcmp.ge.f32.partialorder %v2514, 0.0
      %vm2547 = vcmp.ge.f32.partialorder %v2515, 0.0
      %vm2548 = vcmp.ge.f32.partialorder %v2516, 0.0
      %vm2549 = vcmp.ge.f32.partialorder %v2517, 0.0
      %vm2550 = vcmp.ge.f32.partialorder %v2518, 0.0
      %vm2551 = vcmp.ge.f32.partialorder %v2519, 0.0
      %vm2552 = vcmp.ge.f32.partialorder %v2520, 0.0
      %vm2553 = vcmp.ge.f32.partialorder %v2521, 0.0
      %vm2554 = vcmp.ge.f32.partialorder %v2522, 0.0
      %vm2555 = vcmp.ge.f32.partialorder %v2523, 0.0
      %vm2556 = vcmp.ge.f32.partialorder %v2524, 0.0
      %vm2557 = vcmp.ge.f32.partialorder %v2525, 0.0
      %vm2558 = vcmp.ge.f32.partialorder %v2526, 0.0
      %vm2559 = vcmp.ge.f32.partialorder %v2527, 0.0
      %vm2560 = vcmp.ge.f32.partialorder %v2528, 0.0
      %vm2561 = vcmp.ge.f32.partialorder %v2529, 0.0
      %vm2562 = vcmp.ge.f32.partialorder %v2530, 0.0
      %vm2563 = vcmp.ge.f32.partialorder %v2531, 0.0
      %vm2564 = vcmp.ge.f32.partialorder %v2532, 0.0
      %vm2565 = vcmp.ge.f32.partialorder %v2533, 0.0
      %vm2566 = vcmp.lt.f32.partialorder %v2502, 16.0
      %vm2567 = vcmp.lt.f32.partialorder %v2503, 16.0
      %vm2568 = vcmp.lt.f32.partialorder %v2504, 16.0
      %vm2569 = vcmp.lt.f32.partialorder %v2505, 16.0
      %vm2570 = vcmp.lt.f32.partialorder %v2506, 16.0
      %vm2571 = vcmp.lt.f32.partialorder %v2507, 16.0
      %vm2572 = vcmp.lt.f32.partialorder %v2508, 16.0
      %vm2573 = vcmp.lt.f32.partialorder %v2509, 16.0
      %vm2574 = vcmp.lt.f32.partialorder %v2510, 16.0
      %vm2575 = vcmp.lt.f32.partialorder %v2511, 16.0
      %vm2576 = vcmp.lt.f32.partialorder %v2512, 16.0
      %vm2577 = vcmp.lt.f32.partialorder %v2513, 16.0
      %vm2578 = vcmp.lt.f32.partialorder %v2514, 16.0
      %vm2579 = vcmp.lt.f32.partialorder %v2515, 16.0
      %vm2580 = vcmp.lt.f32.partialorder %v2516, 16.0
      %vm2581 = vcmp.lt.f32.partialorder %v2517, 16.0
      %vm2582 = vcmp.lt.f32.partialorder %v2518, 16.0
      %vm2583 = vcmp.lt.f32.partialorder %v2519, 16.0
      %vm2584 = vcmp.lt.f32.partialorder %v2520, 16.0
      %vm2585 = vcmp.lt.f32.partialorder %v2521, 16.0
      %vm2586 = vcmp.lt.f32.partialorder %v2522, 16.0
      %vm2587 = vcmp.lt.f32.partialorder %v2523, 16.0
      %vm2588 = vcmp.lt.f32.partialorder %v2524, 16.0
      %vm2589 = vcmp.lt.f32.partialorder %v2525, 16.0
      %vm2590 = vcmp.lt.f32.partialorder %v2526, 16.0
      %vm2591 = vcmp.lt.f32.partialorder %v2527, 16.0
      %vm2592 = vcmp.lt.f32.partialorder %v2528, 16.0
      %vm2593 = vcmp.lt.f32.partialorder %v2529, 16.0
      %vm2594 = vcmp.lt.f32.partialorder %v2530, 16.0
      %vm2595 = vcmp.lt.f32.partialorder %v2531, 16.0
      %vm2596 = vcmp.lt.f32.partialorder %v2532, 16.0
      %vm2597 = vcmp.lt.f32.partialorder %v2533, 16.0
      %vm2598 = vmand %vm2534, %vm2566
      %vm2599 = vmand %vm2535, %vm2567
      %vm2600 = vmand %vm2536, %vm2568
      %vm2601 = vmand %vm2537, %vm2569
      %vm2602 = vmand %vm2538, %vm2570
      %vm2603 = vmand %vm2539, %vm2571
      %vm2604 = vmand %vm2540, %vm2572
      %vm2605 = vmand %vm2541, %vm2573
      %vm2606 = vmand %vm2542, %vm2574
      %vm2607 = vmand %vm2543, %vm2575
      %vm2608 = vmand %vm2544, %vm2576
      %vm2609 = vmand %vm2545, %vm2577
      %vm2610 = vmand %vm2546, %vm2578
      %vm2611 = vmand %vm2547, %vm2579
      %vm2612 = vmand %vm2548, %vm2580
      %vm2613 = vmand %vm2549, %vm2581
      %vm2614 = vmand %vm2550, %vm2582
      %vm2615 = vmand %vm2551, %vm2583
      %vm2616 = vmand %vm2552, %vm2584
      %vm2617 = vmand %vm2553, %vm2585
      %vm2618 = vmand %vm2554, %vm2586
      %vm2619 = vmand %vm2555, %vm2587
      %vm2620 = vmand %vm2556, %vm2588
      %vm2621 = vmand %vm2557, %vm2589
      %vm2622 = vmand %vm2558, %vm2590
      %vm2623 = vmand %vm2559, %vm2591
      %vm2624 = vmand %vm2560, %vm2592
      %vm2625 = vmand %vm2561, %vm2593
      %vm2626 = vmand %vm2562, %vm2594
      %vm2627 = vmand %vm2563, %vm2595
      %vm2628 = vmand %vm2564, %vm2596
      %vm2629 = vmand %vm2565, %vm2597
      %v2630 = vsub.f32 %v355, 1.0
      %vm2631 = vcmp.ge.f32.partialorder %v2630, 0.0
      %vm2632 = vmand %vm2598, %vm2631
      %vm2633 = vmand %vm2599, %vm2631
      %vm2634 = vmand %vm2600, %vm2631
      %vm2635 = vmand %vm2601, %vm2631
      %vm2636 = vmand %vm2602, %vm2631
      %vm2637 = vmand %vm2603, %vm2631
      %vm2638 = vmand %vm2604, %vm2631
      %vm2639 = vmand %vm2605, %vm2631
      %vm2640 = vmand %vm2606, %vm2631
      %vm2641 = vmand %vm2607, %vm2631
      %vm2642 = vmand %vm2608, %vm2631
      %vm2643 = vmand %vm2609, %vm2631
      %vm2644 = vmand %vm2610, %vm2631
      %vm2645 = vmand %vm2611, %vm2631
      %vm2646 = vmand %vm2612, %vm2631
      %vm2647 = vmand %vm2613, %vm2631
      %vm2648 = vmand %vm2614, %vm2631
      %vm2649 = vmand %vm2615, %vm2631
      %vm2650 = vmand %vm2616, %vm2631
      %vm2651 = vmand %vm2617, %vm2631
      %vm2652 = vmand %vm2618, %vm2631
      %vm2653 = vmand %vm2619, %vm2631
      %vm2654 = vmand %vm2620, %vm2631
      %vm2655 = vmand %vm2621, %vm2631
      %vm2656 = vmand %vm2622, %vm2631
      %vm2657 = vmand %vm2623, %vm2631
      %vm2658 = vmand %vm2624, %vm2631
      %vm2659 = vmand %vm2625, %vm2631
      %vm2660 = vmand %vm2626, %vm2631
      %vm2661 = vmand %vm2627, %vm2631
      %vm2662 = vmand %vm2628, %vm2631
      %vm2663 = vmand %vm2629, %vm2631
      %vm2664 = vcmp.lt.f32.partialorder %v2630, 3.0
      %vm2665 = vmand %vm2632, %vm2664
      %vm2666 = vmand %vm2633, %vm2664
      %vm2667 = vmand %vm2634, %vm2664
      %vm2668 = vmand %vm2635, %vm2664
      %vm2669 = vmand %vm2636, %vm2664
      %vm2670 = vmand %vm2637, %vm2664
      %vm2671 = vmand %vm2638, %vm2664
      %vm2672 = vmand %vm2639, %vm2664
      %vm2673 = vmand %vm2640, %vm2664
      %vm2674 = vmand %vm2641, %vm2664
      %vm2675 = vmand %vm2642, %vm2664
      %vm2676 = vmand %vm2643, %vm2664
      %vm2677 = vmand %vm2644, %vm2664
      %vm2678 = vmand %vm2645, %vm2664
      %vm2679 = vmand %vm2646, %vm2664
      %vm2680 = vmand %vm2647, %vm2664
      %vm2681 = vmand %vm2648, %vm2664
      %vm2682 = vmand %vm2649, %vm2664
      %vm2683 = vmand %vm2650, %vm2664
      %vm2684 = vmand %vm2651, %vm2664
      %vm2685 = vmand %vm2652, %vm2664
      %vm2686 = vmand %vm2653, %vm2664
      %vm2687 = vmand %vm2654, %vm2664
      %vm2688 = vmand %vm2655, %vm2664
      %vm2689 = vmand %vm2656, %vm2664
      %vm2690 = vmand %vm2657, %vm2664
      %vm2691 = vmand %vm2658, %vm2664
      %vm2692 = vmand %vm2659, %vm2664
      %vm2693 = vmand %vm2660, %vm2664
      %vm2694 = vmand %vm2661, %vm2664
      %vm2695 = vmand %vm2662, %vm2664
      %vm2696 = vmand %vm2663, %vm2664
      %v2697 = vsel %vm2665, 1, 0
      %v2698 = vsel %vm2666, 1, 0
      %v2699 = vsel %vm2667, 1, 0
      %v2700 = vsel %vm2668, 1, 0
      %v2701 = vsel %vm2669, 1, 0
      %v2702 = vsel %vm2670, 1, 0
      %v2703 = vsel %vm2671, 1, 0
      %v2704 = vsel %vm2672, 1, 0
      %v2705 = vsel %vm2673, 1, 0
      %v2706 = vsel %vm2674, 1, 0
      %v2707 = vsel %vm2675, 1, 0
      %v2708 = vsel %vm2676, 1, 0
      %v2709 = vsel %vm2677, 1, 0
      %v2710 = vsel %vm2678, 1, 0
      %v2711 = vsel %vm2679, 1, 0
      %v2712 = vsel %vm2680, 1, 0
      %v2713 = vsel %vm2681, 1, 0
      %v2714 = vsel %vm2682, 1, 0
      %v2715 = vsel %vm2683, 1, 0
      %v2716 = vsel %vm2684, 1, 0
      %v2717 = vsel %vm2685, 1, 0
      %v2718 = vsel %vm2686, 1, 0
      %v2719 = vsel %vm2687, 1, 0
      %v2720 = vsel %vm2688, 1, 0
      %v2721 = vsel %vm2689, 1, 0
      %v2722 = vsel %vm2690, 1, 0
      %v2723 = vsel %vm2691, 1, 0
      %v2724 = vsel %vm2692, 1, 0
      %v2725 = vsel %vm2693, 1, 0
      %v2726 = vsel %vm2694, 1, 0
      %v2727 = vsel %vm2695, 1, 0
      %v2728 = vsel %vm2696, 1, 0
      %v2729 = vcvt.s32.f32 %v2697
      %v2730 = vcvt.s32.f32 %v2698
      %v2731 = vcvt.s32.f32 %v2699
      %v2732 = vcvt.s32.f32 %v2700
      %v2733 = vcvt.s32.f32 %v2701
      %v2734 = vcvt.s32.f32 %v2702
      %v2735 = vcvt.s32.f32 %v2703
      %v2736 = vcvt.s32.f32 %v2704
      %v2737 = vcvt.s32.f32 %v2705
      %v2738 = vcvt.s32.f32 %v2706
      %v2739 = vcvt.s32.f32 %v2707
      %v2740 = vcvt.s32.f32 %v2708
      %v2741 = vcvt.s32.f32 %v2709
      %v2742 = vcvt.s32.f32 %v2710
      %v2743 = vcvt.s32.f32 %v2711
      %v2744 = vcvt.s32.f32 %v2712
      %v2745 = vcvt.s32.f32 %v2713
      %v2746 = vcvt.s32.f32 %v2714
      %v2747 = vcvt.s32.f32 %v2715
      %v2748 = vcvt.s32.f32 %v2716
      %v2749 = vcvt.s32.f32 %v2717
      %v2750 = vcvt.s32.f32 %v2718
      %v2751 = vcvt.s32.f32 %v2719
      %v2752 = vcvt.s32.f32 %v2720
      %v2753 = vcvt.s32.f32 %v2721
      %v2754 = vcvt.s32.f32 %v2722
      %v2755 = vcvt.s32.f32 %v2723
      %v2756 = vcvt.s32.f32 %v2724
      %v2757 = vcvt.s32.f32 %v2725
      %v2758 = vcvt.s32.f32 %v2726
      %v2759 = vcvt.s32.f32 %v2727
      %v2760 = vcvt.s32.f32 %v2728
      %vm2793 = vcmask 1042432
      %v2794 = vrot.slane %v2729, 5
      %v2795 = vrot.slane %v2730, 5
      %v2796 = vsel %vm2793, %v2794, %v2795
      %v2797 = vrot.slane %v2731, 5
      %v2798 = vsel %vm2793, %v2795, %v2797
      %v2799 = vrot.slane %v2732, 5
      %v2800 = vsel %vm2793, %v2797, %v2799
      %v2801 = vrot.slane %v2733, 5
      %v2802 = vsel %vm2793, %v2799, %v2801
      %v2803 = vrot.slane %v2734, 5
      %v2804 = vsel %vm2793, %v2801, %v2803
      %v2805 = vrot.slane %v2735, 5
      %v2806 = vsel %vm2793, %v2803, %v2805
      %v2807 = vrot.slane %v2736, 5
      %v2808 = vsel %vm2793, %v2805, %v2807
      %v2809 = vrot.slane %v2737, 5
      %v2810 = vsel %vm2793, %v2807, %v2809
      %v2811 = vrot.slane %v2738, 5
      %v2812 = vsel %vm2793, %v2809, %v2811
      %v2813 = vrot.slane %v2739, 5
      %v2814 = vsel %vm2793, %v2811, %v2813
      %v2815 = vrot.slane %v2740, 5
      %v2816 = vsel %vm2793, %v2813, %v2815
      %v2817 = vrot.slane %v2741, 5
      %v2818 = vsel %vm2793, %v2815, %v2817
      %v2819 = vrot.slane %v2742, 5
      %v2820 = vsel %vm2793, %v2817, %v2819
      %v2821 = vrot.slane %v2743, 5
      %v2822 = vsel %vm2793, %v2819, %v2821
      %v2823 = vrot.slane %v2744, 5
      %v2824 = vsel %vm2793, %v2821, %v2823
      %v2825 = vrot.slane %v2745, 5
      %v2826 = vsel %vm2793, %v2823, %v2825
      %v2827 = vrot.slane %v2746, 5
      %v2828 = vsel %vm2793, %v2825, %v2827
      %v2829 = vrot.slane %v2747, 5
      %v2830 = vsel %vm2793, %v2827, %v2829
      %v2831 = vrot.slane %v2748, 5
      %v2832 = vsel %vm2793, %v2829, %v2831
      %v2833 = vrot.slane %v2749, 5
      %v2834 = vsel %vm2793, %v2831, %v2833
      %v2835 = vrot.slane %v2750, 5
      %v2836 = vsel %vm2793, %v2833, %v2835
      %v2837 = vrot.slane %v2751, 5
      %v2838 = vsel %vm2793, %v2835, %v2837
      %v2839 = vrot.slane %v2752, 5
      %v2840 = vsel %vm2793, %v2837, %v2839
      %v2841 = vrot.slane %v2753, 5
      %v2842 = vsel %vm2793, %v2839, %v2841
      %v2843 = vrot.slane %v2754, 5
      %v2844 = vsel %vm2793, %v2841, %v2843
      %v2845 = vrot.slane %v2755, 5
      %v2846 = vsel %vm2793, %v2843, %v2845
      %v2847 = vrot.slane %v2756, 5
      %v2848 = vsel %vm2793, %v2845, %v2847
      %v2849 = vrot.slane %v2757, 5
      %v2850 = vsel %vm2793, %v2847, %v2849
      %v2851 = vrot.slane %v2758, 5
      %v2852 = vsel %vm2793, %v2849, %v2851
      %v2853 = vrot.slane %v2759, 5
      %v2854 = vsel %vm2793, %v2851, %v2853
      %v2855 = vrot.slane %v2760, 5
      %v2856 = vsel %vm2793, %v2853, %v2855
      %2857 = vrot.lane.b32.xlu0 %v2794, 1
      %v2858 = vpop.permute.xlu0 %2857
      %2859 = vrot.lane.b32.xlu0 %v2796, 1
      %v2860 = vpop.permute.xlu0 %2859
      %2861 = vrot.lane.b32.xlu0 %v2798, 1
      %v2862 = vpop.permute.xlu0 %2861
      %2863 = vrot.lane.b32.xlu0 %v2800, 1
      %v2864 = vpop.permute.xlu0 %2863
      %2865 = vrot.lane.b32.xlu0 %v2802, 1
      %v2866 = vpop.permute.xlu0 %2865
      %2867 = vrot.lane.b32.xlu0 %v2804, 1
      %v2868 = vpop.permute.xlu0 %2867
      %2869 = vrot.lane.b32.xlu0 %v2806, 1
      %v2870 = vpop.permute.xlu0 %2869
      %2871 = vrot.lane.b32.xlu0 %v2808, 1
      %v2872 = vpop.permute.xlu0 %2871
      %2873 = vrot.lane.b32.xlu0 %v2810, 1
      %v2874 = vpop.permute.xlu0 %2873
      %2875 = vrot.lane.b32.xlu0 %v2812, 1
      %v2876 = vpop.permute.xlu0 %2875
      %2877 = vrot.lane.b32.xlu0 %v2814, 1
      %v2878 = vpop.permute.xlu0 %2877
      %2879 = vrot.lane.b32.xlu0 %v2816, 1
      %v2880 = vpop.permute.xlu0 %2879
      %2881 = vrot.lane.b32.xlu0 %v2818, 1
      %v2882 = vpop.permute.xlu0 %2881
      %2883 = vrot.lane.b32.xlu0 %v2820, 1
      %v2884 = vpop.permute.xlu0 %2883
      %2885 = vrot.lane.b32.xlu0 %v2822, 1
      %v2886 = vpop.permute.xlu0 %2885
      %2887 = vrot.lane.b32.xlu0 %v2824, 1
      %v2888 = vpop.permute.xlu0 %2887
      %2889 = vrot.lane.b32.xlu0 %v2826, 1
      %v2890 = vpop.permute.xlu0 %2889
      %2891 = vrot.lane.b32.xlu0 %v2828, 1
      %v2892 = vpop.permute.xlu0 %2891
      %2893 = vrot.lane.b32.xlu0 %v2830, 1
      %v2894 = vpop.permute.xlu0 %2893
      %2895 = vrot.lane.b32.xlu0 %v2832, 1
      %v2896 = vpop.permute.xlu0 %2895
      %2897 = vrot.lane.b32.xlu0 %v2834, 1
      %v2898 = vpop.permute.xlu0 %2897
      %2899 = vrot.lane.b32.xlu0 %v2836, 1
      %v2900 = vpop.permute.xlu0 %2899
      %2901 = vrot.lane.b32.xlu0 %v2838, 1
      %v2902 = vpop.permute.xlu0 %2901
      %2903 = vrot.lane.b32.xlu0 %v2840, 1
      %v2904 = vpop.permute.xlu0 %2903
      %2905 = vrot.lane.b32.xlu0 %v2842, 1
      %v2906 = vpop.permute.xlu0 %2905
      %2907 = vrot.lane.b32.xlu0 %v2844, 1
      %v2908 = vpop.permute.xlu0 %2907
      %2909 = vrot.lane.b32.xlu0 %v2846, 1
      %v2910 = vpop.permute.xlu0 %2909
      %2911 = vrot.lane.b32.xlu0 %v2848, 1
      %v2912 = vpop.permute.xlu0 %2911
      %2913 = vrot.lane.b32.xlu0 %v2850, 1
      %v2914 = vpop.permute.xlu0 %2913
      %2915 = vrot.lane.b32.xlu0 %v2852, 1
      %v2916 = vpop.permute.xlu0 %2915
      %2917 = vrot.lane.b32.xlu0 %v2854, 1
      %v2918 = vpop.permute.xlu0 %2917
      %2919 = vrot.lane.b32.xlu0 %v2856, 1
      %v2920 = vpop.permute.xlu0 %2919
      %2921 = vrot.lane.b32.xlu0 %v2855, 1
      %v2922 = vpop.permute.xlu0 %2921
      %v2956 = vmul.f32 %v592, %v2858
      %v2957 = vmul.f32 %v593, %v2860
      %v2958 = vmul.f32 %v594, %v2862
      %v2959 = vmul.f32 %v595, %v2864
      %v2960 = vmul.f32 %v596, %v2866
      %v2961 = vmul.f32 %v597, %v2868
      %v2962 = vmul.f32 %v598, %v2870
      %v2963 = vmul.f32 %v599, %v2872
      %v2964 = vmul.f32 %v600, %v2874
      %v2965 = vmul.f32 %v601, %v2876
      %v2966 = vmul.f32 %v602, %v2878
      %v2967 = vmul.f32 %v603, %v2880
      %v2968 = vmul.f32 %v604, %v2882
      %v2969 = vmul.f32 %v605, %v2884
      %v2970 = vmul.f32 %v606, %v2886
      %v2971 = vmul.f32 %v607, %v2888
      %v2972 = vmul.f32 %v608, %v2890
      %v2973 = vmul.f32 %v609, %v2892
      %v2974 = vmul.f32 %v610, %v2894
      %v2975 = vmul.f32 %v611, %v2896
      %v2976 = vmul.f32 %v612, %v2898
      %v2977 = vmul.f32 %v613, %v2900
      %v2978 = vmul.f32 %v614, %v2902
      %v2979 = vmul.f32 %v615, %v2904
      %v2980 = vmul.f32 %v616, %v2906
      %v2981 = vmul.f32 %v617, %v2908
      %v2982 = vmul.f32 %v618, %v2910
      %v2983 = vmul.f32 %v619, %v2912
      %v2984 = vmul.f32 %v620, %v2914
      %v2985 = vmul.f32 %v621, %v2916
      %v2986 = vmul.f32 %v622, %v2918
      %v2987 = vmul.f32 %v623, %v2920
      %v2988 = vmul.f32 %v624, %v2922
      %vm3022 = vcmask 1044480
      %v3023 = vrot.slane %v2956, 3
      %v3024 = vrot.slane %v2957, 3
      %v3025 = vsel %vm3022, %v3023, %v3024
      %v3026 = vrot.slane %v2958, 3
      %v3027 = vsel %vm3022, %v3024, %v3026
      %v3028 = vrot.slane %v2959, 3
      %v3029 = vsel %vm3022, %v3026, %v3028
      %v3030 = vrot.slane %v2960, 3
      %v3031 = vsel %vm3022, %v3028, %v3030
      %v3032 = vrot.slane %v2961, 3
      %v3033 = vsel %vm3022, %v3030, %v3032
      %v3034 = vrot.slane %v2962, 3
      %v3035 = vsel %vm3022, %v3032, %v3034
      %v3036 = vrot.slane %v2963, 3
      %v3037 = vsel %vm3022, %v3034, %v3036
      %v3038 = vrot.slane %v2964, 3
      %v3039 = vsel %vm3022, %v3036, %v3038
      %v3040 = vrot.slane %v2965, 3
      %v3041 = vsel %vm3022, %v3038, %v3040
      %v3042 = vrot.slane %v2966, 3
      %v3043 = vsel %vm3022, %v3040, %v3042
      %v3044 = vrot.slane %v2967, 3
      %v3045 = vsel %vm3022, %v3042, %v3044
      %v3046 = vrot.slane %v2968, 3
      %v3047 = vsel %vm3022, %v3044, %v3046
      %v3048 = vrot.slane %v2969, 3
      %v3049 = vsel %vm3022, %v3046, %v3048
      %v3050 = vrot.slane %v2970, 3
      %v3051 = vsel %vm3022, %v3048, %v3050
      %v3052 = vrot.slane %v2971, 3
      %v3053 = vsel %vm3022, %v3050, %v3052
      %v3054 = vrot.slane %v2972, 3
      %v3055 = vsel %vm3022, %v3052, %v3054
      %v3056 = vrot.slane %v2973, 3
      %v3057 = vsel %vm3022, %v3054, %v3056
      %v3058 = vrot.slane %v2974, 3
      %v3059 = vsel %vm3022, %v3056, %v3058
      %v3060 = vrot.slane %v2975, 3
      %v3061 = vsel %vm3022, %v3058, %v3060
      %v3062 = vrot.slane %v2976, 3
      %v3063 = vsel %vm3022, %v3060, %v3062
      %v3064 = vrot.slane %v2977, 3
      %v3065 = vsel %vm3022, %v3062, %v3064
      %v3066 = vrot.slane %v2978, 3
      %v3067 = vsel %vm3022, %v3064, %v3066
      %v3068 = vrot.slane %v2979, 3
      %v3069 = vsel %vm3022, %v3066, %v3068
      %v3070 = vrot.slane %v2980, 3
      %v3071 = vsel %vm3022, %v3068, %v3070
      %v3072 = vrot.slane %v2981, 3
      %v3073 = vsel %vm3022, %v3070, %v3072
      %v3074 = vrot.slane %v2982, 3
      %v3075 = vsel %vm3022, %v3072, %v3074
      %v3076 = vrot.slane %v2983, 3
      %v3077 = vsel %vm3022, %v3074, %v3076
      %v3078 = vrot.slane %v2984, 3
      %v3079 = vsel %vm3022, %v3076, %v3078
      %v3080 = vrot.slane %v2985, 3
      %v3081 = vsel %vm3022, %v3078, %v3080
      %v3082 = vrot.slane %v2986, 3
      %v3083 = vsel %vm3022, %v3080, %v3082
      %v3084 = vrot.slane %v2987, 3
      %v3085 = vsel %vm3022, %v3082, %v3084
      %v3086 = vrot.slane %v2988, 3
      %v3087 = vsel %vm3022, %v3084, %v3086
      %3088 = vrot.lane.b32.xlu0 %v3025, 3
      %v3089 = vpop.permute.xlu0 %3088
      %3090 = vrot.lane.b32.xlu0 %v3027, 3
      %v3091 = vpop.permute.xlu0 %3090
      %3092 = vrot.lane.b32.xlu0 %v3029, 3
      %v3093 = vpop.permute.xlu0 %3092
      %3094 = vrot.lane.b32.xlu0 %v3031, 3
      %v3095 = vpop.permute.xlu0 %3094
      %3096 = vrot.lane.b32.xlu0 %v3033, 3
      %v3097 = vpop.permute.xlu0 %3096
      %3098 = vrot.lane.b32.xlu0 %v3035, 3
      %v3099 = vpop.permute.xlu0 %3098
      %3100 = vrot.lane.b32.xlu0 %v3037, 3
      %v3101 = vpop.permute.xlu0 %3100
      %3102 = vrot.lane.b32.xlu0 %v3039, 3
      %v3103 = vpop.permute.xlu0 %3102
      %3104 = vrot.lane.b32.xlu0 %v3041, 3
      %v3105 = vpop.permute.xlu0 %3104
      %3106 = vrot.lane.b32.xlu0 %v3043, 3
      %v3107 = vpop.permute.xlu0 %3106
      %3108 = vrot.lane.b32.xlu0 %v3045, 3
      %v3109 = vpop.permute.xlu0 %3108
      %3110 = vrot.lane.b32.xlu0 %v3047, 3
      %v3111 = vpop.permute.xlu0 %3110
      %3112 = vrot.lane.b32.xlu0 %v3049, 3
      %v3113 = vpop.permute.xlu0 %3112
      %3114 = vrot.lane.b32.xlu0 %v3051, 3
      %v3115 = vpop.permute.xlu0 %3114
      %3116 = vrot.lane.b32.xlu0 %v3053, 3
      %v3117 = vpop.permute.xlu0 %3116
      %3118 = vrot.lane.b32.xlu0 %v3055, 3
      %v3119 = vpop.permute.xlu0 %3118
      %3120 = vrot.lane.b32.xlu0 %v3057, 3
      %v3121 = vpop.permute.xlu0 %3120
      %3122 = vrot.lane.b32.xlu0 %v3059, 3
      %v3123 = vpop.permute.xlu0 %3122
      %3124 = vrot.lane.b32.xlu0 %v3061, 3
      %v3125 = vpop.permute.xlu0 %3124
      %3126 = vrot.lane.b32.xlu0 %v3063, 3
      %v3127 = vpop.permute.xlu0 %3126
      %3128 = vrot.lane.b32.xlu0 %v3065, 3
      %v3129 = vpop.permute.xlu0 %3128
      %3130 = vrot.lane.b32.xlu0 %v3067, 3
      %v3131 = vpop.permute.xlu0 %3130
      %3132 = vrot.lane.b32.xlu0 %v3069, 3
      %v3133 = vpop.permute.xlu0 %3132
      %3134 = vrot.lane.b32.xlu0 %v3071, 3
      %v3135 = vpop.permute.xlu0 %3134
      %3136 = vrot.lane.b32.xlu0 %v3073, 3
      %v3137 = vpop.permute.xlu0 %3136
      %3138 = vrot.lane.b32.xlu0 %v3075, 3
      %v3139 = vpop.permute.xlu0 %3138
      %3140 = vrot.lane.b32.xlu0 %v3077, 3
      %v3141 = vpop.permute.xlu0 %3140
      %3142 = vrot.lane.b32.xlu0 %v3079, 3
      %v3143 = vpop.permute.xlu0 %3142
      %3144 = vrot.lane.b32.xlu0 %v3081, 3
      %v3145 = vpop.permute.xlu0 %3144
      %3146 = vrot.lane.b32.xlu0 %v3083, 3
      %v3147 = vpop.permute.xlu0 %3146
      %3148 = vrot.lane.b32.xlu0 %v3085, 3
      %v3149 = vpop.permute.xlu0 %3148
      %3150 = vrot.lane.b32.xlu0 %v3087, 3
      %v3151 = vpop.permute.xlu0 %3150
      %v3184 = vadd.f32 %v2470, %v3089
      %v3185 = vadd.f32 %v2471, %v3091
      %v3186 = vadd.f32 %v2472, %v3093
      %v3187 = vadd.f32 %v2473, %v3095
      %v3188 = vadd.f32 %v2474, %v3097
      %v3189 = vadd.f32 %v2475, %v3099
      %v3190 = vadd.f32 %v2476, %v3101
      %v3191 = vadd.f32 %v2477, %v3103
      %v3192 = vadd.f32 %v2478, %v3105
      %v3193 = vadd.f32 %v2479, %v3107
      %v3194 = vadd.f32 %v2480, %v3109
      %v3195 = vadd.f32 %v2481, %v3111
      %v3196 = vadd.f32 %v2482, %v3113
      %v3197 = vadd.f32 %v2483, %v3115
      %v3198 = vadd.f32 %v2484, %v3117
      %v3199 = vadd.f32 %v2485, %v3119
      %v3200 = vadd.f32 %v2486, %v3121
      %v3201 = vadd.f32 %v2487, %v3123
      %v3202 = vadd.f32 %v2488, %v3125
      %v3203 = vadd.f32 %v2489, %v3127
      %v3204 = vadd.f32 %v2490, %v3129
      %v3205 = vadd.f32 %v2491, %v3131
      %v3206 = vadd.f32 %v2492, %v3133
      %v3207 = vadd.f32 %v2493, %v3135
      %v3208 = vadd.f32 %v2494, %v3137
      %v3209 = vadd.f32 %v2495, %v3139
      %v3210 = vadd.f32 %v2496, %v3141
      %v3211 = vadd.f32 %v2497, %v3143
      %v3212 = vadd.f32 %v2498, %v3145
      %v3213 = vadd.f32 %v2499, %v3147
      %v3214 = vadd.f32 %v2500, %v3149
      %v3215 = vadd.f32 %v2501, %v3151
      %v3216 = vadd.f32 %v314, 2.0
      %v3217 = vadd.f32 %v315, 2.0
      %v3218 = vadd.f32 %v316, 2.0
      %v3219 = vadd.f32 %v317, 2.0
      %v3220 = vadd.f32 %v318, 2.0
      %v3221 = vadd.f32 %v319, 2.0
      %v3222 = vadd.f32 %v320, 2.0
      %v3223 = vadd.f32 %v321, 2.0
      %v3224 = vadd.f32 %v322, 2.0
      %v3225 = vadd.f32 %v323, 2.0
      %v3226 = vadd.f32 %v324, 2.0
      %v3227 = vadd.f32 %v325, 2.0
      %v3228 = vadd.f32 %v326, 2.0
      %v3229 = vadd.f32 %v327, 2.0
      %v3230 = vadd.f32 %v328, 2.0
      %v3231 = vadd.f32 %v329, 2.0
      %v3232 = vadd.f32 %v330, 2.0
      %v3233 = vadd.f32 %v331, 2.0
      %v3234 = vadd.f32 %v332, 2.0
      %v3235 = vadd.f32 %v333, 2.0
      %v3236 = vadd.f32 %v334, 2.0
      %v3237 = vadd.f32 %v335, 2.0
      %v3238 = vadd.f32 %v336, 2.0
      %v3239 = vadd.f32 %v337, 2.0
      %v3240 = vadd.f32 %v338, 2.0
      %v3241 = vadd.f32 %v339, 2.0
      %v3242 = vadd.f32 %v340, 2.0
      %v3243 = vadd.f32 %v341, 2.0
      %v3244 = vadd.f32 %v342, 2.0
      %v3245 = vadd.f32 %v343, 2.0
      %v3246 = vadd.f32 %v344, 2.0
      %v3247 = vadd.f32 %v345, 2.0
      %vm3248 = vcmp.ge.f32.partialorder %v3216, 0.0
      %vm3249 = vcmp.ge.f32.partialorder %v3217, 0.0
      %vm3250 = vcmp.ge.f32.partialorder %v3218, 0.0
      %vm3251 = vcmp.ge.f32.partialorder %v3219, 0.0
      %vm3252 = vcmp.ge.f32.partialorder %v3220, 0.0
      %vm3253 = vcmp.ge.f32.partialorder %v3221, 0.0
      %vm3254 = vcmp.ge.f32.partialorder %v3222, 0.0
      %vm3255 = vcmp.ge.f32.partialorder %v3223, 0.0
      %vm3256 = vcmp.ge.f32.partialorder %v3224, 0.0
      %vm3257 = vcmp.ge.f32.partialorder %v3225, 0.0
      %vm3258 = vcmp.ge.f32.partialorder %v3226, 0.0
      %vm3259 = vcmp.ge.f32.partialorder %v3227, 0.0
      %vm3260 = vcmp.ge.f32.partialorder %v3228, 0.0
      %vm3261 = vcmp.ge.f32.partialorder %v3229, 0.0
      %vm3262 = vcmp.ge.f32.partialorder %v3230, 0.0
      %vm3263 = vcmp.ge.f32.partialorder %v3231, 0.0
      %vm3264 = vcmp.ge.f32.partialorder %v3232, 0.0
      %vm3265 = vcmp.ge.f32.partialorder %v3233, 0.0
      %vm3266 = vcmp.ge.f32.partialorder %v3234, 0.0
      %vm3267 = vcmp.ge.f32.partialorder %v3235, 0.0
      %vm3268 = vcmp.ge.f32.partialorder %v3236, 0.0
      %vm3269 = vcmp.ge.f32.partialorder %v3237, 0.0
      %vm3270 = vcmp.ge.f32.partialorder %v3238, 0.0
      %vm3271 = vcmp.ge.f32.partialorder %v3239, 0.0
      %vm3272 = vcmp.ge.f32.partialorder %v3240, 0.0
      %vm3273 = vcmp.ge.f32.partialorder %v3241, 0.0
      %vm3274 = vcmp.ge.f32.partialorder %v3242, 0.0
      %vm3275 = vcmp.ge.f32.partialorder %v3243, 0.0
      %vm3276 = vcmp.ge.f32.partialorder %v3244, 0.0
      %vm3277 = vcmp.ge.f32.partialorder %v3245, 0.0
      %vm3278 = vcmp.ge.f32.partialorder %v3246, 0.0
      %vm3279 = vcmp.ge.f32.partialorder %v3247, 0.0
      %vm3280 = vcmp.lt.f32.partialorder %v3216, 16.0
      %vm3281 = vcmp.lt.f32.partialorder %v3217, 16.0
      %vm3282 = vcmp.lt.f32.partialorder %v3218, 16.0
      %vm3283 = vcmp.lt.f32.partialorder %v3219, 16.0
      %vm3284 = vcmp.lt.f32.partialorder %v3220, 16.0
      %vm3285 = vcmp.lt.f32.partialorder %v3221, 16.0
      %vm3286 = vcmp.lt.f32.partialorder %v3222, 16.0
      %vm3287 = vcmp.lt.f32.partialorder %v3223, 16.0
      %vm3288 = vcmp.lt.f32.partialorder %v3224, 16.0
      %vm3289 = vcmp.lt.f32.partialorder %v3225, 16.0
      %vm3290 = vcmp.lt.f32.partialorder %v3226, 16.0
      %vm3291 = vcmp.lt.f32.partialorder %v3227, 16.0
      %vm3292 = vcmp.lt.f32.partialorder %v3228, 16.0
      %vm3293 = vcmp.lt.f32.partialorder %v3229, 16.0
      %vm3294 = vcmp.lt.f32.partialorder %v3230, 16.0
      %vm3295 = vcmp.lt.f32.partialorder %v3231, 16.0
      %vm3296 = vcmp.lt.f32.partialorder %v3232, 16.0
      %vm3297 = vcmp.lt.f32.partialorder %v3233, 16.0
      %vm3298 = vcmp.lt.f32.partialorder %v3234, 16.0
      %vm3299 = vcmp.lt.f32.partialorder %v3235, 16.0
      %vm3300 = vcmp.lt.f32.partialorder %v3236, 16.0
      %vm3301 = vcmp.lt.f32.partialorder %v3237, 16.0
      %vm3302 = vcmp.lt.f32.partialorder %v3238, 16.0
      %vm3303 = vcmp.lt.f32.partialorder %v3239, 16.0
      %vm3304 = vcmp.lt.f32.partialorder %v3240, 16.0
      %vm3305 = vcmp.lt.f32.partialorder %v3241, 16.0
      %vm3306 = vcmp.lt.f32.partialorder %v3242, 16.0
      %vm3307 = vcmp.lt.f32.partialorder %v3243, 16.0
      %vm3308 = vcmp.lt.f32.partialorder %v3244, 16.0
      %vm3309 = vcmp.lt.f32.partialorder %v3245, 16.0
      %vm3310 = vcmp.lt.f32.partialorder %v3246, 16.0
      %vm3311 = vcmp.lt.f32.partialorder %v3247, 16.0
      %vm3312 = vmand %vm3248, %vm3280
      %vm3313 = vmand %vm3249, %vm3281
      %vm3314 = vmand %vm3250, %vm3282
      %vm3315 = vmand %vm3251, %vm3283
      %vm3316 = vmand %vm3252, %vm3284
      %vm3317 = vmand %vm3253, %vm3285
      %vm3318 = vmand %vm3254, %vm3286
      %vm3319 = vmand %vm3255, %vm3287
      %vm3320 = vmand %vm3256, %vm3288
      %vm3321 = vmand %vm3257, %vm3289
      %vm3322 = vmand %vm3258, %vm3290
      %vm3323 = vmand %vm3259, %vm3291
      %vm3324 = vmand %vm3260, %vm3292
      %vm3325 = vmand %vm3261, %vm3293
      %vm3326 = vmand %vm3262, %vm3294
      %vm3327 = vmand %vm3263, %vm3295
      %vm3328 = vmand %vm3264, %vm3296
      %vm3329 = vmand %vm3265, %vm3297
      %vm3330 = vmand %vm3266, %vm3298
      %vm3331 = vmand %vm3267, %vm3299
      %vm3332 = vmand %vm3268, %vm3300
      %vm3333 = vmand %vm3269, %vm3301
      %vm3334 = vmand %vm3270, %vm3302
      %vm3335 = vmand %vm3271, %vm3303
      %vm3336 = vmand %vm3272, %vm3304
      %vm3337 = vmand %vm3273, %vm3305
      %vm3338 = vmand %vm3274, %vm3306
      %vm3339 = vmand %vm3275, %vm3307
      %vm3340 = vmand %vm3276, %vm3308
      %vm3341 = vmand %vm3277, %vm3309
      %vm3342 = vmand %vm3278, %vm3310
      %vm3343 = vmand %vm3279, %vm3311
      %v3344 = vsub.f32 %v355, 2.0
      %vm3345 = vcmp.ge.f32.partialorder %v3344, 0.0
      %vm3346 = vmand %vm3312, %vm3345
      %vm3347 = vmand %vm3313, %vm3345
      %vm3348 = vmand %vm3314, %vm3345
      %vm3349 = vmand %vm3315, %vm3345
      %vm3350 = vmand %vm3316, %vm3345
      %vm3351 = vmand %vm3317, %vm3345
      %vm3352 = vmand %vm3318, %vm3345
      %vm3353 = vmand %vm3319, %vm3345
      %vm3354 = vmand %vm3320, %vm3345
      %vm3355 = vmand %vm3321, %vm3345
      %vm3356 = vmand %vm3322, %vm3345
      %vm3357 = vmand %vm3323, %vm3345
      %vm3358 = vmand %vm3324, %vm3345
      %vm3359 = vmand %vm3325, %vm3345
      %vm3360 = vmand %vm3326, %vm3345
      %vm3361 = vmand %vm3327, %vm3345
      %vm3362 = vmand %vm3328, %vm3345
      %vm3363 = vmand %vm3329, %vm3345
      %vm3364 = vmand %vm3330, %vm3345
      %vm3365 = vmand %vm3331, %vm3345
      %vm3366 = vmand %vm3332, %vm3345
      %vm3367 = vmand %vm3333, %vm3345
      %vm3368 = vmand %vm3334, %vm3345
      %vm3369 = vmand %vm3335, %vm3345
      %vm3370 = vmand %vm3336, %vm3345
      %vm3371 = vmand %vm3337, %vm3345
      %vm3372 = vmand %vm3338, %vm3345
      %vm3373 = vmand %vm3339, %vm3345
      %vm3374 = vmand %vm3340, %vm3345
      %vm3375 = vmand %vm3341, %vm3345
      %vm3376 = vmand %vm3342, %vm3345
      %vm3377 = vmand %vm3343, %vm3345
      %vm3378 = vcmp.lt.f32.partialorder %v3344, 3.0
      %vm3379 = vmand %vm3346, %vm3378
      %vm3380 = vmand %vm3347, %vm3378
      %vm3381 = vmand %vm3348, %vm3378
      %vm3382 = vmand %vm3349, %vm3378
      %vm3383 = vmand %vm3350, %vm3378
      %vm3384 = vmand %vm3351, %vm3378
      %vm3385 = vmand %vm3352, %vm3378
      %vm3386 = vmand %vm3353, %vm3378
      %vm3387 = vmand %vm3354, %vm3378
      %vm3388 = vmand %vm3355, %vm3378
      %vm3389 = vmand %vm3356, %vm3378
      %vm3390 = vmand %vm3357, %vm3378
      %vm3391 = vmand %vm3358, %vm3378
      %vm3392 = vmand %vm3359, %vm3378
      %vm3393 = vmand %vm3360, %vm3378
      %vm3394 = vmand %vm3361, %vm3378
      %vm3395 = vmand %vm3362, %vm3378
      %vm3396 = vmand %vm3363, %vm3378
      %vm3397 = vmand %vm3364, %vm3378
      %vm3398 = vmand %vm3365, %vm3378
      %vm3399 = vmand %vm3366, %vm3378
      %vm3400 = vmand %vm3367, %vm3378
      %vm3401 = vmand %vm3368, %vm3378
      %vm3402 = vmand %vm3369, %vm3378
      %vm3403 = vmand %vm3370, %vm3378
      %vm3404 = vmand %vm3371, %vm3378
      %vm3405 = vmand %vm3372, %vm3378
      %vm3406 = vmand %vm3373, %vm3378
      %vm3407 = vmand %vm3374, %vm3378
      %vm3408 = vmand %vm3375, %vm3378
      %vm3409 = vmand %vm3376, %vm3378
      %vm3410 = vmand %vm3377, %vm3378
      %v3411 = vsel %vm3379, 1, 0
      %v3412 = vsel %vm3380, 1, 0
      %v3413 = vsel %vm3381, 1, 0
      %v3414 = vsel %vm3382, 1, 0
      %v3415 = vsel %vm3383, 1, 0
      %v3416 = vsel %vm3384, 1, 0
      %v3417 = vsel %vm3385, 1, 0
      %v3418 = vsel %vm3386, 1, 0
      %v3419 = vsel %vm3387, 1, 0
      %v3420 = vsel %vm3388, 1, 0
      %v3421 = vsel %vm3389, 1, 0
      %v3422 = vsel %vm3390, 1, 0
      %v3423 = vsel %vm3391, 1, 0
      %v3424 = vsel %vm3392, 1, 0
      %v3425 = vsel %vm3393, 1, 0
      %v3426 = vsel %vm3394, 1, 0
      %v3427 = vsel %vm3395, 1, 0
      %v3428 = vsel %vm3396, 1, 0
      %v3429 = vsel %vm3397, 1, 0
      %v3430 = vsel %vm3398, 1, 0
      %v3431 = vsel %vm3399, 1, 0
      %v3432 = vsel %vm3400, 1, 0
      %v3433 = vsel %vm3401, 1, 0
      %v3434 = vsel %vm3402, 1, 0
      %v3435 = vsel %vm3403, 1, 0
      %v3436 = vsel %vm3404, 1, 0
      %v3437 = vsel %vm3405, 1, 0
      %v3438 = vsel %vm3406, 1, 0
      %v3439 = vsel %vm3407, 1, 0
      %v3440 = vsel %vm3408, 1, 0
      %v3441 = vsel %vm3409, 1, 0
      %v3442 = vsel %vm3410, 1, 0
      %v3443 = vcvt.s32.f32 %v3411
      %v3444 = vcvt.s32.f32 %v3412
      %v3445 = vcvt.s32.f32 %v3413
      %v3446 = vcvt.s32.f32 %v3414
      %v3447 = vcvt.s32.f32 %v3415
      %v3448 = vcvt.s32.f32 %v3416
      %v3449 = vcvt.s32.f32 %v3417
      %v3450 = vcvt.s32.f32 %v3418
      %v3451 = vcvt.s32.f32 %v3419
      %v3452 = vcvt.s32.f32 %v3420
      %v3453 = vcvt.s32.f32 %v3421
      %v3454 = vcvt.s32.f32 %v3422
      %v3455 = vcvt.s32.f32 %v3423
      %v3456 = vcvt.s32.f32 %v3424
      %v3457 = vcvt.s32.f32 %v3425
      %v3458 = vcvt.s32.f32 %v3426
      %v3459 = vcvt.s32.f32 %v3427
      %v3460 = vcvt.s32.f32 %v3428
      %v3461 = vcvt.s32.f32 %v3429
      %v3462 = vcvt.s32.f32 %v3430
      %v3463 = vcvt.s32.f32 %v3431
      %v3464 = vcvt.s32.f32 %v3432
      %v3465 = vcvt.s32.f32 %v3433
      %v3466 = vcvt.s32.f32 %v3434
      %v3467 = vcvt.s32.f32 %v3435
      %v3468 = vcvt.s32.f32 %v3436
      %v3469 = vcvt.s32.f32 %v3437
      %v3470 = vcvt.s32.f32 %v3438
      %v3471 = vcvt.s32.f32 %v3439
      %v3472 = vcvt.s32.f32 %v3440
      %v3473 = vcvt.s32.f32 %v3441
      %v3474 = vcvt.s32.f32 %v3442
      %vm3507 = vcmask 1043456
      %v3508 = vrot.slane %v3443, 4
      %v3509 = vrot.slane %v3444, 4
      %v3510 = vsel %vm3507, %v3508, %v3509
      %v3511 = vrot.slane %v3445, 4
      %v3512 = vsel %vm3507, %v3509, %v3511
      %v3513 = vrot.slane %v3446, 4
      %v3514 = vsel %vm3507, %v3511, %v3513
      %v3515 = vrot.slane %v3447, 4
      %v3516 = vsel %vm3507, %v3513, %v3515
      %v3517 = vrot.slane %v3448, 4
      %v3518 = vsel %vm3507, %v3515, %v3517
      %v3519 = vrot.slane %v3449, 4
      %v3520 = vsel %vm3507, %v3517, %v3519
      %v3521 = vrot.slane %v3450, 4
      %v3522 = vsel %vm3507, %v3519, %v3521
      %v3523 = vrot.slane %v3451, 4
      %v3524 = vsel %vm3507, %v3521, %v3523
      %v3525 = vrot.slane %v3452, 4
      %v3526 = vsel %vm3507, %v3523, %v3525
      %v3527 = vrot.slane %v3453, 4
      %v3528 = vsel %vm3507, %v3525, %v3527
      %v3529 = vrot.slane %v3454, 4
      %v3530 = vsel %vm3507, %v3527, %v3529
      %v3531 = vrot.slane %v3455, 4
      %v3532 = vsel %vm3507, %v3529, %v3531
      %v3533 = vrot.slane %v3456, 4
      %v3534 = vsel %vm3507, %v3531, %v3533
      %v3535 = vrot.slane %v3457, 4
      %v3536 = vsel %vm3507, %v3533, %v3535
      %v3537 = vrot.slane %v3458, 4
      %v3538 = vsel %vm3507, %v3535, %v3537
      %v3539 = vrot.slane %v3459, 4
      %v3540 = vsel %vm3507, %v3537, %v3539
      %v3541 = vrot.slane %v3460, 4
      %v3542 = vsel %vm3507, %v3539, %v3541
      %v3543 = vrot.slane %v3461, 4
      %v3544 = vsel %vm3507, %v3541, %v3543
      %v3545 = vrot.slane %v3462, 4
      %v3546 = vsel %vm3507, %v3543, %v3545
      %v3547 = vrot.slane %v3463, 4
      %v3548 = vsel %vm3507, %v3545, %v3547
      %v3549 = vrot.slane %v3464, 4
      %v3550 = vsel %vm3507, %v3547, %v3549
      %v3551 = vrot.slane %v3465, 4
      %v3552 = vsel %vm3507, %v3549, %v3551
      %v3553 = vrot.slane %v3466, 4
      %v3554 = vsel %vm3507, %v3551, %v3553
      %v3555 = vrot.slane %v3467, 4
      %v3556 = vsel %vm3507, %v3553, %v3555
      %v3557 = vrot.slane %v3468, 4
      %v3558 = vsel %vm3507, %v3555, %v3557
      %v3559 = vrot.slane %v3469, 4
      %v3560 = vsel %vm3507, %v3557, %v3559
      %v3561 = vrot.slane %v3470, 4
      %v3562 = vsel %vm3507, %v3559, %v3561
      %v3563 = vrot.slane %v3471, 4
      %v3564 = vsel %vm3507, %v3561, %v3563
      %v3565 = vrot.slane %v3472, 4
      %v3566 = vsel %vm3507, %v3563, %v3565
      %v3567 = vrot.slane %v3473, 4
      %v3568 = vsel %vm3507, %v3565, %v3567
      %v3569 = vrot.slane %v3474, 4
      %v3570 = vsel %vm3507, %v3567, %v3569
      %v3604 = vmul.f32 %v592, %v3508
      %v3605 = vmul.f32 %v593, %v3510
      %v3606 = vmul.f32 %v594, %v3512
      %v3607 = vmul.f32 %v595, %v3514
      %v3608 = vmul.f32 %v596, %v3516
      %v3609 = vmul.f32 %v597, %v3518
      %v3610 = vmul.f32 %v598, %v3520
      %v3611 = vmul.f32 %v599, %v3522
      %v3612 = vmul.f32 %v600, %v3524
      %v3613 = vmul.f32 %v601, %v3526
      %v3614 = vmul.f32 %v602, %v3528
      %v3615 = vmul.f32 %v603, %v3530
      %v3616 = vmul.f32 %v604, %v3532
      %v3617 = vmul.f32 %v605, %v3534
      %v3618 = vmul.f32 %v606, %v3536
      %v3619 = vmul.f32 %v607, %v3538
      %v3620 = vmul.f32 %v608, %v3540
      %v3621 = vmul.f32 %v609, %v3542
      %v3622 = vmul.f32 %v610, %v3544
      %v3623 = vmul.f32 %v611, %v3546
      %v3624 = vmul.f32 %v612, %v3548
      %v3625 = vmul.f32 %v613, %v3550
      %v3626 = vmul.f32 %v614, %v3552
      %v3627 = vmul.f32 %v615, %v3554
      %v3628 = vmul.f32 %v616, %v3556
      %v3629 = vmul.f32 %v617, %v3558
      %v3630 = vmul.f32 %v618, %v3560
      %v3631 = vmul.f32 %v619, %v3562
      %v3632 = vmul.f32 %v620, %v3564
      %v3633 = vmul.f32 %v621, %v3566
      %v3634 = vmul.f32 %v622, %v3568
      %v3635 = vmul.f32 %v623, %v3570
      %v3636 = vmul.f32 %v624, %v3569
      %v3670 = vrot.slane %v3604, 4
      %v3671 = vrot.slane %v3605, 4
      %v3672 = vsel %vm3507, %v3670, %v3671
      %v3673 = vrot.slane %v3606, 4
      %v3674 = vsel %vm3507, %v3671, %v3673
      %v3675 = vrot.slane %v3607, 4
      %v3676 = vsel %vm3507, %v3673, %v3675
      %v3677 = vrot.slane %v3608, 4
      %v3678 = vsel %vm3507, %v3675, %v3677
      %v3679 = vrot.slane %v3609, 4
      %v3680 = vsel %vm3507, %v3677, %v3679
      %v3681 = vrot.slane %v3610, 4
      %v3682 = vsel %vm3507, %v3679, %v3681
      %v3683 = vrot.slane %v3611, 4
      %v3684 = vsel %vm3507, %v3681, %v3683
      %v3685 = vrot.slane %v3612, 4
      %v3686 = vsel %vm3507, %v3683, %v3685
      %v3687 = vrot.slane %v3613, 4
      %v3688 = vsel %vm3507, %v3685, %v3687
      %v3689 = vrot.slane %v3614, 4
      %v3690 = vsel %vm3507, %v3687, %v3689
      %v3691 = vrot.slane %v3615, 4
      %v3692 = vsel %vm3507, %v3689, %v3691
      %v3693 = vrot.slane %v3616, 4
      %v3694 = vsel %vm3507, %v3691, %v3693
      %v3695 = vrot.slane %v3617, 4
      %v3696 = vsel %vm3507, %v3693, %v3695
      %v3697 = vrot.slane %v3618, 4
      %v3698 = vsel %vm3507, %v3695, %v3697
      %v3699 = vrot.slane %v3619, 4
      %v3700 = vsel %vm3507, %v3697, %v3699
      %v3701 = vrot.slane %v3620, 4
      %v3702 = vsel %vm3507, %v3699, %v3701
      %v3703 = vrot.slane %v3621, 4
      %v3704 = vsel %vm3507, %v3701, %v3703
      %v3705 = vrot.slane %v3622, 4
      %v3706 = vsel %vm3507, %v3703, %v3705
      %v3707 = vrot.slane %v3623, 4
      %v3708 = vsel %vm3507, %v3705, %v3707
      %v3709 = vrot.slane %v3624, 4
      %v3710 = vsel %vm3507, %v3707, %v3709
      %v3711 = vrot.slane %v3625, 4
      %v3712 = vsel %vm3507, %v3709, %v3711
      %v3713 = vrot.slane %v3626, 4
      %v3714 = vsel %vm3507, %v3711, %v3713
      %v3715 = vrot.slane %v3627, 4
      %v3716 = vsel %vm3507, %v3713, %v3715
      %v3717 = vrot.slane %v3628, 4
      %v3718 = vsel %vm3507, %v3715, %v3717
      %v3719 = vrot.slane %v3629, 4
      %v3720 = vsel %vm3507, %v3717, %v3719
      %v3721 = vrot.slane %v3630, 4
      %v3722 = vsel %vm3507, %v3719, %v3721
      %v3723 = vrot.slane %v3631, 4
      %v3724 = vsel %vm3507, %v3721, %v3723
      %v3725 = vrot.slane %v3632, 4
      %v3726 = vsel %vm3507, %v3723, %v3725
      %v3727 = vrot.slane %v3633, 4
      %v3728 = vsel %vm3507, %v3725, %v3727
      %v3729 = vrot.slane %v3634, 4
      %v3730 = vsel %vm3507, %v3727, %v3729
      %v3731 = vrot.slane %v3635, 4
      %v3732 = vsel %vm3507, %v3729, %v3731
      %v3733 = vrot.slane %v3636, 4
      %v3734 = vsel %vm3507, %v3731, %v3733
      %3735 = vrot.lane.b32.xlu0 %v3672, 4
      %v3736 = vpop.permute.xlu0 %3735
      %3737 = vrot.lane.b32.xlu0 %v3674, 4
      %v3738 = vpop.permute.xlu0 %3737
      %3739 = vrot.lane.b32.xlu0 %v3676, 4
      %v3740 = vpop.permute.xlu0 %3739
      %3741 = vrot.lane.b32.xlu0 %v3678, 4
      %v3742 = vpop.permute.xlu0 %3741
      %3743 = vrot.lane.b32.xlu0 %v3680, 4
      %v3744 = vpop.permute.xlu0 %3743
      %3745 = vrot.lane.b32.xlu0 %v3682, 4
      %v3746 = vpop.permute.xlu0 %3745
      %3747 = vrot.lane.b32.xlu0 %v3684, 4
      %v3748 = vpop.permute.xlu0 %3747
      %3749 = vrot.lane.b32.xlu0 %v3686, 4
      %v3750 = vpop.permute.xlu0 %3749
      %3751 = vrot.lane.b32.xlu0 %v3688, 4
      %v3752 = vpop.permute.xlu0 %3751
      %3753 = vrot.lane.b32.xlu0 %v3690, 4
      %v3754 = vpop.permute.xlu0 %3753
      %3755 = vrot.lane.b32.xlu0 %v3692, 4
      %v3756 = vpop.permute.xlu0 %3755
      %3757 = vrot.lane.b32.xlu0 %v3694, 4
      %v3758 = vpop.permute.xlu0 %3757
      %3759 = vrot.lane.b32.xlu0 %v3696, 4
      %v3760 = vpop.permute.xlu0 %3759
      %3761 = vrot.lane.b32.xlu0 %v3698, 4
      %v3762 = vpop.permute.xlu0 %3761
      %3763 = vrot.lane.b32.xlu0 %v3700, 4
      %v3764 = vpop.permute.xlu0 %3763
      %3765 = vrot.lane.b32.xlu0 %v3702, 4
      %v3766 = vpop.permute.xlu0 %3765
      %3767 = vrot.lane.b32.xlu0 %v3704, 4
      %v3768 = vpop.permute.xlu0 %3767
      %3769 = vrot.lane.b32.xlu0 %v3706, 4
      %v3770 = vpop.permute.xlu0 %3769
      %3771 = vrot.lane.b32.xlu0 %v3708, 4
      %v3772 = vpop.permute.xlu0 %3771
      %3773 = vrot.lane.b32.xlu0 %v3710, 4
      %v3774 = vpop.permute.xlu0 %3773
      %3775 = vrot.lane.b32.xlu0 %v3712, 4
      %v3776 = vpop.permute.xlu0 %3775
      %3777 = vrot.lane.b32.xlu0 %v3714, 4
      %v3778 = vpop.permute.xlu0 %3777
      %3779 = vrot.lane.b32.xlu0 %v3716, 4
      %v3780 = vpop.permute.xlu0 %3779
      %3781 = vrot.lane.b32.xlu0 %v3718, 4
      %v3782 = vpop.permute.xlu0 %3781
      %3783 = vrot.lane.b32.xlu0 %v3720, 4
      %v3784 = vpop.permute.xlu0 %3783
      %3785 = vrot.lane.b32.xlu0 %v3722, 4
      %v3786 = vpop.permute.xlu0 %3785
      %3787 = vrot.lane.b32.xlu0 %v3724, 4
      %v3788 = vpop.permute.xlu0 %3787
      %3789 = vrot.lane.b32.xlu0 %v3726, 4
      %v3790 = vpop.permute.xlu0 %3789
      %3791 = vrot.lane.b32.xlu0 %v3728, 4
      %v3792 = vpop.permute.xlu0 %3791
      %3793 = vrot.lane.b32.xlu0 %v3730, 4
      %v3794 = vpop.permute.xlu0 %3793
      %3795 = vrot.lane.b32.xlu0 %v3732, 4
      %v3796 = vpop.permute.xlu0 %3795
      %3797 = vrot.lane.b32.xlu0 %v3734, 4
      %v3798 = vpop.permute.xlu0 %3797
      %v3831 = vadd.f32 %v3184, %v3736
      %v3832 = vadd.f32 %v3185, %v3738
      %v3833 = vadd.f32 %v3186, %v3740
      %v3834 = vadd.f32 %v3187, %v3742
      %v3835 = vadd.f32 %v3188, %v3744
      %v3836 = vadd.f32 %v3189, %v3746
      %v3837 = vadd.f32 %v3190, %v3748
      %v3838 = vadd.f32 %v3191, %v3750
      %v3839 = vadd.f32 %v3192, %v3752
      %v3840 = vadd.f32 %v3193, %v3754
      %v3841 = vadd.f32 %v3194, %v3756
      %v3842 = vadd.f32 %v3195, %v3758
      %v3843 = vadd.f32 %v3196, %v3760
      %v3844 = vadd.f32 %v3197, %v3762
      %v3845 = vadd.f32 %v3198, %v3764
      %v3846 = vadd.f32 %v3199, %v3766
      %v3847 = vadd.f32 %v3200, %v3768
      %v3848 = vadd.f32 %v3201, %v3770
      %v3849 = vadd.f32 %v3202, %v3772
      %v3850 = vadd.f32 %v3203, %v3774
      %v3851 = vadd.f32 %v3204, %v3776
      %v3852 = vadd.f32 %v3205, %v3778
      %v3853 = vadd.f32 %v3206, %v3780
      %v3854 = vadd.f32 %v3207, %v3782
      %v3855 = vadd.f32 %v3208, %v3784
      %v3856 = vadd.f32 %v3209, %v3786
      %v3857 = vadd.f32 %v3210, %v3788
      %v3858 = vadd.f32 %v3211, %v3790
      %v3859 = vadd.f32 %v3212, %v3792
      %v3860 = vadd.f32 %v3213, %v3794
      %v3861 = vadd.f32 %v3214, %v3796
      %v3862 = vadd.f32 %v3215, %v3798
      %3895 = vrot.lane.b32.xlu0 %v3831, 124
      %v3896 = vpop.permute.xlu0 %3895
      %3897 = vrot.lane.b32.xlu0 %v3832, 124
      %v3898 = vpop.permute.xlu0 %3897
      %3899 = vrot.lane.b32.xlu0 %v3833, 124
      %v3900 = vpop.permute.xlu0 %3899
      %3901 = vrot.lane.b32.xlu0 %v3834, 124
      %v3902 = vpop.permute.xlu0 %3901
      %3903 = vrot.lane.b32.xlu0 %v3835, 124
      %v3904 = vpop.permute.xlu0 %3903
      %3905 = vrot.lane.b32.xlu0 %v3836, 124
      %v3906 = vpop.permute.xlu0 %3905
      %3907 = vrot.lane.b32.xlu0 %v3837, 124
      %v3908 = vpop.permute.xlu0 %3907
      %3909 = vrot.lane.b32.xlu0 %v3838, 124
      %v3910 = vpop.permute.xlu0 %3909
      %3911 = vrot.lane.b32.xlu0 %v3839, 124
      %v3912 = vpop.permute.xlu0 %3911
      %3913 = vrot.lane.b32.xlu0 %v3840, 124
      %v3914 = vpop.permute.xlu0 %3913
      %3915 = vrot.lane.b32.xlu0 %v3841, 124
      %v3916 = vpop.permute.xlu0 %3915
      %3917 = vrot.lane.b32.xlu0 %v3842, 124
      %v3918 = vpop.permute.xlu0 %3917
      %3919 = vrot.lane.b32.xlu0 %v3843, 124
      %v3920 = vpop.permute.xlu0 %3919
      %3921 = vrot.lane.b32.xlu0 %v3844, 124
      %v3922 = vpop.permute.xlu0 %3921
      %3923 = vrot.lane.b32.xlu0 %v3845, 124
      %v3924 = vpop.permute.xlu0 %3923
      %3925 = vrot.lane.b32.xlu0 %v3846, 124
      %v3926 = vpop.permute.xlu0 %3925
      %3927 = vrot.lane.b32.xlu0 %v3847, 124
      %v3928 = vpop.permute.xlu0 %3927
      %3929 = vrot.lane.b32.xlu0 %v3848, 124
      %v3930 = vpop.permute.xlu0 %3929
      %3931 = vrot.lane.b32.xlu0 %v3849, 124
      %v3932 = vpop.permute.xlu0 %3931
      %3933 = vrot.lane.b32.xlu0 %v3850, 124
      %v3934 = vpop.permute.xlu0 %3933
      %3935 = vrot.lane.b32.xlu0 %v3851, 124
      %v3936 = vpop.permute.xlu0 %3935
      %3937 = vrot.lane.b32.xlu0 %v3852, 124
      %v3938 = vpop.permute.xlu0 %3937
      %3939 = vrot.lane.b32.xlu0 %v3853, 124
      %v3940 = vpop.permute.xlu0 %3939
      %3941 = vrot.lane.b32.xlu0 %v3854, 124
      %v3942 = vpop.permute.xlu0 %3941
      %3943 = vrot.lane.b32.xlu0 %v3855, 124
      %v3944 = vpop.permute.xlu0 %3943
      %3945 = vrot.lane.b32.xlu0 %v3856, 124
      %v3946 = vpop.permute.xlu0 %3945
      %3947 = vrot.lane.b32.xlu0 %v3857, 124
      %v3948 = vpop.permute.xlu0 %3947
      %3949 = vrot.lane.b32.xlu0 %v3858, 124
      %v3950 = vpop.permute.xlu0 %3949
      %3951 = vrot.lane.b32.xlu0 %v3859, 124
      %v3952 = vpop.permute.xlu0 %3951
      %3953 = vrot.lane.b32.xlu0 %v3860, 124
      %v3954 = vpop.permute.xlu0 %3953
      %3955 = vrot.lane.b32.xlu0 %v3861, 124
      %v3956 = vpop.permute.xlu0 %3955
      %3957 = vrot.lane.b32.xlu0 %v3862, 124
      %v3958 = vpop.permute.xlu0 %3957
      %3960 = vrot.lane.b32.xlu0 0.0, 6
      %v3961 = vpop.permute.xlu0 %3960
      %3962 = vrot.lane.b32.xlu0 %v3896, 6
      %v3963 = vpop.permute.xlu0 %3962
      %3964 = vrot.lane.b32.xlu0 %v3898, 6
      %v3965 = vpop.permute.xlu0 %3964
      %3966 = vrot.lane.b32.xlu0 %v3900, 6
      %v3967 = vpop.permute.xlu0 %3966
      %3968 = vrot.lane.b32.xlu0 %v3902, 6
      %v3969 = vpop.permute.xlu0 %3968
      %3970 = vrot.lane.b32.xlu0 %v3904, 6
      %v3971 = vpop.permute.xlu0 %3970
      %3972 = vrot.lane.b32.xlu0 %v3906, 6
      %v3973 = vpop.permute.xlu0 %3972
      %3974 = vrot.lane.b32.xlu0 %v3908, 6
      %v3975 = vpop.permute.xlu0 %3974
      %3976 = vrot.lane.b32.xlu0 %v3910, 6
      %v3977 = vpop.permute.xlu0 %3976
      %3978 = vrot.lane.b32.xlu0 %v3912, 6
      %v3979 = vpop.permute.xlu0 %3978
      %3980 = vrot.lane.b32.xlu0 %v3914, 6
      %v3981 = vpop.permute.xlu0 %3980
      %3982 = vrot.lane.b32.xlu0 %v3916, 6
      %v3983 = vpop.permute.xlu0 %3982
      %3984 = vrot.lane.b32.xlu0 %v3918, 6
      %v3985 = vpop.permute.xlu0 %3984
      %3986 = vrot.lane.b32.xlu0 %v3920, 6
      %v3987 = vpop.permute.xlu0 %3986
      %3988 = vrot.lane.b32.xlu0 %v3922, 6
      %v3989 = vpop.permute.xlu0 %3988
      %3990 = vrot.lane.b32.xlu0 %v3924, 6
      %v3991 = vpop.permute.xlu0 %3990
      %3992 = vrot.lane.b32.xlu0 %v3926, 6
      %v3993 = vpop.permute.xlu0 %3992
      %3994 = vrot.lane.b32.xlu0 %v3928, 6
      %v3995 = vpop.permute.xlu0 %3994
      %3996 = vrot.lane.b32.xlu0 %v3930, 6
      %v3997 = vpop.permute.xlu0 %3996
      %3998 = vrot.lane.b32.xlu0 %v3932, 6
      %v3999 = vpop.permute.xlu0 %3998
      %4000 = vrot.lane.b32.xlu0 %v3934, 6
      %v4001 = vpop.permute.xlu0 %4000
      %4002 = vrot.lane.b32.xlu0 %v3936, 6
      %v4003 = vpop.permute.xlu0 %4002
      %4004 = vrot.lane.b32.xlu0 %v3938, 6
      %v4005 = vpop.permute.xlu0 %4004
      %4006 = vrot.lane.b32.xlu0 %v3940, 6
      %v4007 = vpop.permute.xlu0 %4006
      %4008 = vrot.lane.b32.xlu0 %v3942, 6
      %v4009 = vpop.permute.xlu0 %4008
      %4010 = vrot.lane.b32.xlu0 %v3944, 6
      %v4011 = vpop.permute.xlu0 %4010
      %4012 = vrot.lane.b32.xlu0 %v3946, 6
      %v4013 = vpop.permute.xlu0 %4012
      %4014 = vrot.lane.b32.xlu0 %v3948, 6
      %v4015 = vpop.permute.xlu0 %4014
      %4016 = vrot.lane.b32.xlu0 %v3950, 6
      %v4017 = vpop.permute.xlu0 %4016
      %4018 = vrot.lane.b32.xlu0 %v3952, 6
      %v4019 = vpop.permute.xlu0 %4018
      %4020 = vrot.lane.b32.xlu0 %v3954, 6
      %v4021 = vpop.permute.xlu0 %4020
      %4022 = vrot.lane.b32.xlu0 %v3956, 6
      %v4023 = vpop.permute.xlu0 %4022
      %4024 = vrot.lane.b32.xlu0 %v3958, 6
      %v4025 = vpop.permute.xlu0 %4024
      %vm4059 = vcmask 48128
      %v4060 = vsel %vm4059, 0.0, %v3961
      %v4061 = vsel %vm4059, 0.0, %v3963
      %v4062 = vsel %vm4059, 0.0, %v3965
      %v4063 = vsel %vm4059, 0.0, %v3967
      %v4064 = vsel %vm4059, 0.0, %v3969
      %v4065 = vsel %vm4059, 0.0, %v3971
      %v4066 = vsel %vm4059, 0.0, %v3973
      %v4067 = vsel %vm4059, 0.0, %v3975
      %v4068 = vsel %vm4059, 0.0, %v3977
      %v4069 = vsel %vm4059, 0.0, %v3979
      %v4070 = vsel %vm4059, 0.0, %v3981
      %v4071 = vsel %vm4059, 0.0, %v3983
      %v4072 = vsel %vm4059, 0.0, %v3985
      %v4073 = vsel %vm4059, 0.0, %v3987
      %v4074 = vsel %vm4059, 0.0, %v3989
      %v4075 = vsel %vm4059, 0.0, %v3991
      %v4076 = vsel %vm4059, 0.0, %v3993
      %v4077 = vsel %vm4059, 0.0, %v3995
      %v4078 = vsel %vm4059, 0.0, %v3997
      %v4079 = vsel %vm4059, 0.0, %v3999
      %v4080 = vsel %vm4059, 0.0, %v4001
      %v4081 = vsel %vm4059, 0.0, %v4003
      %v4082 = vsel %vm4059, 0.0, %v4005
      %v4083 = vsel %vm4059, 0.0, %v4007
      %v4084 = vsel %vm4059, 0.0, %v4009
      %v4085 = vsel %vm4059, 0.0, %v4011
      %v4086 = vsel %vm4059, 0.0, %v4013
      %v4087 = vsel %vm4059, 0.0, %v4015
      %v4088 = vsel %vm4059, 0.0, %v4017
      %v4089 = vsel %vm4059, 0.0, %v4019
      %v4090 = vsel %vm4059, 0.0, %v4021
      %v4091 = vsel %vm4059, 0.0, %v4023
      %v4092 = vsel %vm4059, 0.0, %v4025
      %vm4093 = vcmask 269312
      %v4094 = vsel %vm4093, %v4060, 0.0
      %v4095 = vsel %vm4093, %v4061, 0.0
      %v4096 = vsel %vm4093, %v4062, 0.0
      %v4097 = vsel %vm4093, %v4063, 0.0
      %v4098 = vsel %vm4093, %v4064, 0.0
      %v4099 = vsel %vm4093, %v4065, 0.0
      %v4100 = vsel %vm4093, %v4066, 0.0
      %v4101 = vsel %vm4093, %v4067, 0.0
      %v4102 = vsel %vm4093, %v4068, 0.0
      %v4103 = vsel %vm4093, %v4069, 0.0
      %v4104 = vsel %vm4093, %v4070, 0.0
      %v4105 = vsel %vm4093, %v4071, 0.0
      %v4106 = vsel %vm4093, %v4072, 0.0
      %v4107 = vsel %vm4093, %v4073, 0.0
      %v4108 = vsel %vm4093, %v4074, 0.0
      %v4109 = vsel %vm4093, %v4075, 0.0
      %v4110 = vsel %vm4093, %v4076, 0.0
      %v4111 = vsel %vm4093, %v4077, 0.0
      %v4112 = vsel %vm4093, %v4078, 0.0
      %v4113 = vsel %vm4093, %v4079, 0.0
      %v4114 = vsel %vm4093, %v4080, 0.0
      %v4115 = vsel %vm4093, %v4081, 0.0
      %v4116 = vsel %vm4093, %v4082, 0.0
      %v4117 = vsel %vm4093, %v4083, 0.0
      %v4118 = vsel %vm4093, %v4084, 0.0
      %v4119 = vsel %vm4093, %v4085, 0.0
      %v4120 = vsel %vm4093, %v4086, 0.0
      %v4121 = vsel %vm4093, %v4087, 0.0
      %v4122 = vsel %vm4093, %v4088, 0.0
      %v4123 = vsel %vm4093, %v4089, 0.0
      %v4124 = vsel %vm4093, %v4090, 0.0
      %v4125 = vsel %vm4093, %v4091, 0.0
      %v4126 = vsel %vm4093, %v4092, 0.0
      %v4127 = vadd.f32 %v250, -2.0
      %v4128 = vadd.f32 %v251, -2.0
      %v4129 = vadd.f32 %v252, -2.0
      %v4130 = vadd.f32 %v253, -2.0
      %v4131 = vadd.f32 %v254, -2.0
      %v4132 = vadd.f32 %v255, -2.0
      %v4133 = vadd.f32 %v256, -2.0
      %v4134 = vadd.f32 %v257, -2.0
      %v4135 = vadd.f32 %v258, -2.0
      %v4136 = vadd.f32 %v259, -2.0
      %v4137 = vadd.f32 %v260, -2.0
      %v4138 = vadd.f32 %v261, -2.0
      %v4139 = vadd.f32 %v262, -2.0
      %v4140 = vadd.f32 %v263, -2.0
      %v4141 = vadd.f32 %v264, -2.0
      %v4142 = vadd.f32 %v265, -2.0
      %v4143 = vadd.f32 %v266, -2.0
      %v4144 = vadd.f32 %v267, -2.0
      %v4145 = vadd.f32 %v268, -2.0
      %v4146 = vadd.f32 %v269, -2.0
      %v4147 = vadd.f32 %v270, -2.0
      %v4148 = vadd.f32 %v271, -2.0
      %v4149 = vadd.f32 %v272, -2.0
      %v4150 = vadd.f32 %v273, -2.0
      %v4151 = vadd.f32 %v274, -2.0
      %v4152 = vadd.f32 %v275, -2.0
      %v4153 = vadd.f32 %v276, -2.0
      %v4154 = vadd.f32 %v277, -2.0
      %v4155 = vadd.f32 %v278, -2.0
      %v4156 = vadd.f32 %v279, -2.0
      %v4157 = vadd.f32 %v280, -2.0
      %v4158 = vadd.f32 %v281, -2.0
      %vm4159 = vcmp.ge.f32.partialorder %v4127, 0.0
      %vm4160 = vcmp.ge.f32.partialorder %v4128, 0.0
      %vm4161 = vcmp.ge.f32.partialorder %v4129, 0.0
      %vm4162 = vcmp.ge.f32.partialorder %v4130, 0.0
      %vm4163 = vcmp.ge.f32.partialorder %v4131, 0.0
      %vm4164 = vcmp.ge.f32.partialorder %v4132, 0.0
      %vm4165 = vcmp.ge.f32.partialorder %v4133, 0.0
      %vm4166 = vcmp.ge.f32.partialorder %v4134, 0.0
      %vm4167 = vcmp.ge.f32.partialorder %v4135, 0.0
      %vm4168 = vcmp.ge.f32.partialorder %v4136, 0.0
      %vm4169 = vcmp.ge.f32.partialorder %v4137, 0.0
      %vm4170 = vcmp.ge.f32.partialorder %v4138, 0.0
      %vm4171 = vcmp.ge.f32.partialorder %v4139, 0.0
      %vm4172 = vcmp.ge.f32.partialorder %v4140, 0.0
      %vm4173 = vcmp.ge.f32.partialorder %v4141, 0.0
      %vm4174 = vcmp.ge.f32.partialorder %v4142, 0.0
      %vm4175 = vcmp.ge.f32.partialorder %v4143, 0.0
      %vm4176 = vcmp.ge.f32.partialorder %v4144, 0.0
      %vm4177 = vcmp.ge.f32.partialorder %v4145, 0.0
      %vm4178 = vcmp.ge.f32.partialorder %v4146, 0.0
      %vm4179 = vcmp.ge.f32.partialorder %v4147, 0.0
      %vm4180 = vcmp.ge.f32.partialorder %v4148, 0.0
      %vm4181 = vcmp.ge.f32.partialorder %v4149, 0.0
      %vm4182 = vcmp.ge.f32.partialorder %v4150, 0.0
      %vm4183 = vcmp.ge.f32.partialorder %v4151, 0.0
      %vm4184 = vcmp.ge.f32.partialorder %v4152, 0.0
      %vm4185 = vcmp.ge.f32.partialorder %v4153, 0.0
      %vm4186 = vcmp.ge.f32.partialorder %v4154, 0.0
      %vm4187 = vcmp.ge.f32.partialorder %v4155, 0.0
      %vm4188 = vcmp.ge.f32.partialorder %v4156, 0.0
      %vm4189 = vcmp.ge.f32.partialorder %v4157, 0.0
      %vm4190 = vcmp.ge.f32.partialorder %v4158, 0.0
      %vm4191 = vcmp.lt.f32.partialorder %v4127, 16.0
      %vm4192 = vcmp.lt.f32.partialorder %v4128, 16.0
      %vm4193 = vcmp.lt.f32.partialorder %v4129, 16.0
      %vm4194 = vcmp.lt.f32.partialorder %v4130, 16.0
      %vm4195 = vcmp.lt.f32.partialorder %v4131, 16.0
      %vm4196 = vcmp.lt.f32.partialorder %v4132, 16.0
      %vm4197 = vcmp.lt.f32.partialorder %v4133, 16.0
      %vm4198 = vcmp.lt.f32.partialorder %v4134, 16.0
      %vm4199 = vcmp.lt.f32.partialorder %v4135, 16.0
      %vm4200 = vcmp.lt.f32.partialorder %v4136, 16.0
      %vm4201 = vcmp.lt.f32.partialorder %v4137, 16.0
      %vm4202 = vcmp.lt.f32.partialorder %v4138, 16.0
      %vm4203 = vcmp.lt.f32.partialorder %v4139, 16.0
      %vm4204 = vcmp.lt.f32.partialorder %v4140, 16.0
      %vm4205 = vcmp.lt.f32.partialorder %v4141, 16.0
      %vm4206 = vcmp.lt.f32.partialorder %v4142, 16.0
      %vm4207 = vcmp.lt.f32.partialorder %v4143, 16.0
      %vm4208 = vcmp.lt.f32.partialorder %v4144, 16.0
      %vm4209 = vcmp.lt.f32.partialorder %v4145, 16.0
      %vm4210 = vcmp.lt.f32.partialorder %v4146, 16.0
      %vm4211 = vcmp.lt.f32.partialorder %v4147, 16.0
      %vm4212 = vcmp.lt.f32.partialorder %v4148, 16.0
      %vm4213 = vcmp.lt.f32.partialorder %v4149, 16.0
      %vm4214 = vcmp.lt.f32.partialorder %v4150, 16.0
      %vm4215 = vcmp.lt.f32.partialorder %v4151, 16.0
      %vm4216 = vcmp.lt.f32.partialorder %v4152, 16.0
      %vm4217 = vcmp.lt.f32.partialorder %v4153, 16.0
      %vm4218 = vcmp.lt.f32.partialorder %v4154, 16.0
      %vm4219 = vcmp.lt.f32.partialorder %v4155, 16.0
      %vm4220 = vcmp.lt.f32.partialorder %v4156, 16.0
      %vm4221 = vcmp.lt.f32.partialorder %v4157, 16.0
      %vm4222 = vcmp.lt.f32.partialorder %v4158, 16.0
      %vm4223 = vmand %vm4159, %vm4191
      %vm4224 = vmand %vm4160, %vm4192
      %vm4225 = vmand %vm4161, %vm4193
      %vm4226 = vmand %vm4162, %vm4194
      %vm4227 = vmand %vm4163, %vm4195
      %vm4228 = vmand %vm4164, %vm4196
      %vm4229 = vmand %vm4165, %vm4197
      %vm4230 = vmand %vm4166, %vm4198
      %vm4231 = vmand %vm4167, %vm4199
      %vm4232 = vmand %vm4168, %vm4200
      %vm4233 = vmand %vm4169, %vm4201
      %vm4234 = vmand %vm4170, %vm4202
      %vm4235 = vmand %vm4171, %vm4203
      %vm4236 = vmand %vm4172, %vm4204
      %vm4237 = vmand %vm4173, %vm4205
      %vm4238 = vmand %vm4174, %vm4206
      %vm4239 = vmand %vm4175, %vm4207
      %vm4240 = vmand %vm4176, %vm4208
      %vm4241 = vmand %vm4177, %vm4209
      %vm4242 = vmand %vm4178, %vm4210
      %vm4243 = vmand %vm4179, %vm4211
      %vm4244 = vmand %vm4180, %vm4212
      %vm4245 = vmand %vm4181, %vm4213
      %vm4246 = vmand %vm4182, %vm4214
      %vm4247 = vmand %vm4183, %vm4215
      %vm4248 = vmand %vm4184, %vm4216
      %vm4249 = vmand %vm4185, %vm4217
      %vm4250 = vmand %vm4186, %vm4218
      %vm4251 = vmand %vm4187, %vm4219
      %vm4252 = vmand %vm4188, %vm4220
      %vm4253 = vmand %vm4189, %vm4221
      %vm4254 = vmand %vm4190, %vm4222
      %v4255 = vsub.f32 %v353, -2.0
      %vm4256 = vcmp.ge.f32.partialorder %v4255, 0.0
      %vm4257 = vmand %vm4223, %vm4256
      %vm4258 = vmand %vm4224, %vm4256
      %vm4259 = vmand %vm4225, %vm4256
      %vm4260 = vmand %vm4226, %vm4256
      %vm4261 = vmand %vm4227, %vm4256
      %vm4262 = vmand %vm4228, %vm4256
      %vm4263 = vmand %vm4229, %vm4256
      %vm4264 = vmand %vm4230, %vm4256
      %vm4265 = vmand %vm4231, %vm4256
      %vm4266 = vmand %vm4232, %vm4256
      %vm4267 = vmand %vm4233, %vm4256
      %vm4268 = vmand %vm4234, %vm4256
      %vm4269 = vmand %vm4235, %vm4256
      %vm4270 = vmand %vm4236, %vm4256
      %vm4271 = vmand %vm4237, %vm4256
      %vm4272 = vmand %vm4238, %vm4256
      %vm4273 = vmand %vm4239, %vm4256
      %vm4274 = vmand %vm4240, %vm4256
      %vm4275 = vmand %vm4241, %vm4256
      %vm4276 = vmand %vm4242, %vm4256
      %vm4277 = vmand %vm4243, %vm4256
      %vm4278 = vmand %vm4244, %vm4256
      %vm4279 = vmand %vm4245, %vm4256
      %vm4280 = vmand %vm4246, %vm4256
      %vm4281 = vmand %vm4247, %vm4256
      %vm4282 = vmand %vm4248, %vm4256
      %vm4283 = vmand %vm4249, %vm4256
      %vm4284 = vmand %vm4250, %vm4256
      %vm4285 = vmand %vm4251, %vm4256
      %vm4286 = vmand %vm4252, %vm4256
      %vm4287 = vmand %vm4253, %vm4256
      %vm4288 = vmand %vm4254, %vm4256
      %vm4289 = vcmp.lt.f32.partialorder %v4255, 3.0
      %vm4290 = vmand %vm4257, %vm4289
      %vm4291 = vmand %vm4258, %vm4289
      %vm4292 = vmand %vm4259, %vm4289
      %vm4293 = vmand %vm4260, %vm4289
      %vm4294 = vmand %vm4261, %vm4289
      %vm4295 = vmand %vm4262, %vm4289
      %vm4296 = vmand %vm4263, %vm4289
      %vm4297 = vmand %vm4264, %vm4289
      %vm4298 = vmand %vm4265, %vm4289
      %vm4299 = vmand %vm4266, %vm4289
      %vm4300 = vmand %vm4267, %vm4289
      %vm4301 = vmand %vm4268, %vm4289
      %vm4302 = vmand %vm4269, %vm4289
      %vm4303 = vmand %vm4270, %vm4289
      %vm4304 = vmand %vm4271, %vm4289
      %vm4305 = vmand %vm4272, %vm4289
      %vm4306 = vmand %vm4273, %vm4289
      %vm4307 = vmand %vm4274, %vm4289
      %vm4308 = vmand %vm4275, %vm4289
      %vm4309 = vmand %vm4276, %vm4289
      %vm4310 = vmand %vm4277, %vm4289
      %vm4311 = vmand %vm4278, %vm4289
      %vm4312 = vmand %vm4279, %vm4289
      %vm4313 = vmand %vm4280, %vm4289
      %vm4314 = vmand %vm4281, %vm4289
      %vm4315 = vmand %vm4282, %vm4289
      %vm4316 = vmand %vm4283, %vm4289
      %vm4317 = vmand %vm4284, %vm4289
      %vm4318 = vmand %vm4285, %vm4289
      %vm4319 = vmand %vm4286, %vm4289
      %vm4320 = vmand %vm4287, %vm4289
      %vm4321 = vmand %vm4288, %vm4289
      %v4322 = vsel %vm4290, 1, 0
      %v4323 = vsel %vm4291, 1, 0
      %v4324 = vsel %vm4292, 1, 0
      %v4325 = vsel %vm4293, 1, 0
      %v4326 = vsel %vm4294, 1, 0
      %v4327 = vsel %vm4295, 1, 0
      %v4328 = vsel %vm4296, 1, 0
      %v4329 = vsel %vm4297, 1, 0
      %v4330 = vsel %vm4298, 1, 0
      %v4331 = vsel %vm4299, 1, 0
      %v4332 = vsel %vm4300, 1, 0
      %v4333 = vsel %vm4301, 1, 0
      %v4334 = vsel %vm4302, 1, 0
      %v4335 = vsel %vm4303, 1, 0
      %v4336 = vsel %vm4304, 1, 0
      %v4337 = vsel %vm4305, 1, 0
      %v4338 = vsel %vm4306, 1, 0
      %v4339 = vsel %vm4307, 1, 0
      %v4340 = vsel %vm4308, 1, 0
      %v4341 = vsel %vm4309, 1, 0
      %v4342 = vsel %vm4310, 1, 0
      %v4343 = vsel %vm4311, 1, 0
      %v4344 = vsel %vm4312, 1, 0
      %v4345 = vsel %vm4313, 1, 0
      %v4346 = vsel %vm4314, 1, 0
      %v4347 = vsel %vm4315, 1, 0
      %v4348 = vsel %vm4316, 1, 0
      %v4349 = vsel %vm4317, 1, 0
      %v4350 = vsel %vm4318, 1, 0
      %v4351 = vsel %vm4319, 1, 0
      %v4352 = vsel %vm4320, 1, 0
      %v4353 = vsel %vm4321, 1, 0
      %v4354 = vcvt.s32.f32 %v4322
      %v4355 = vcvt.s32.f32 %v4323
      %v4356 = vcvt.s32.f32 %v4324
      %v4357 = vcvt.s32.f32 %v4325
      %v4358 = vcvt.s32.f32 %v4326
      %v4359 = vcvt.s32.f32 %v4327
      %v4360 = vcvt.s32.f32 %v4328
      %v4361 = vcvt.s32.f32 %v4329
      %v4362 = vcvt.s32.f32 %v4330
      %v4363 = vcvt.s32.f32 %v4331
      %v4364 = vcvt.s32.f32 %v4332
      %v4365 = vcvt.s32.f32 %v4333
      %v4366 = vcvt.s32.f32 %v4334
      %v4367 = vcvt.s32.f32 %v4335
      %v4368 = vcvt.s32.f32 %v4336
      %v4369 = vcvt.s32.f32 %v4337
      %v4370 = vcvt.s32.f32 %v4338
      %v4371 = vcvt.s32.f32 %v4339
      %v4372 = vcvt.s32.f32 %v4340
      %v4373 = vcvt.s32.f32 %v4341
      %v4374 = vcvt.s32.f32 %v4342
      %v4375 = vcvt.s32.f32 %v4343
      %v4376 = vcvt.s32.f32 %v4344
      %v4377 = vcvt.s32.f32 %v4345
      %v4378 = vcvt.s32.f32 %v4346
      %v4379 = vcvt.s32.f32 %v4347
      %v4380 = vcvt.s32.f32 %v4348
      %v4381 = vcvt.s32.f32 %v4349
      %v4382 = vcvt.s32.f32 %v4350
      %v4383 = vcvt.s32.f32 %v4351
      %v4384 = vcvt.s32.f32 %v4352
      %v4385 = vcvt.s32.f32 %v4353
      %4418 = vrot.lane.b32.xlu0 %v4354, 12
      %v4419 = vpop.permute.xlu0 %4418
      %4420 = vrot.lane.b32.xlu0 %v4355, 12
      %v4421 = vpop.permute.xlu0 %4420
      %4422 = vrot.lane.b32.xlu0 %v4356, 12
      %v4423 = vpop.permute.xlu0 %4422
      %4424 = vrot.lane.b32.xlu0 %v4357, 12
      %v4425 = vpop.permute.xlu0 %4424
      %4426 = vrot.lane.b32.xlu0 %v4358, 12
      %v4427 = vpop.permute.xlu0 %4426
      %4428 = vrot.lane.b32.xlu0 %v4359, 12
      %v4429 = vpop.permute.xlu0 %4428
      %4430 = vrot.lane.b32.xlu0 %v4360, 12
      %v4431 = vpop.permute.xlu0 %4430
      %4432 = vrot.lane.b32.xlu0 %v4361, 12
      %v4433 = vpop.permute.xlu0 %4432
      %4434 = vrot.lane.b32.xlu0 %v4362, 12
      %v4435 = vpop.permute.xlu0 %4434
      %4436 = vrot.lane.b32.xlu0 %v4363, 12
      %v4437 = vpop.permute.xlu0 %4436
      %4438 = vrot.lane.b32.xlu0 %v4364, 12
      %v4439 = vpop.permute.xlu0 %4438
      %4440 = vrot.lane.b32.xlu0 %v4365, 12
      %v4441 = vpop.permute.xlu0 %4440
      %4442 = vrot.lane.b32.xlu0 %v4366, 12
      %v4443 = vpop.permute.xlu0 %4442
      %4444 = vrot.lane.b32.xlu0 %v4367, 12
      %v4445 = vpop.permute.xlu0 %4444
      %4446 = vrot.lane.b32.xlu0 %v4368, 12
      %v4447 = vpop.permute.xlu0 %4446
      %4448 = vrot.lane.b32.xlu0 %v4369, 12
      %v4449 = vpop.permute.xlu0 %4448
      %4450 = vrot.lane.b32.xlu0 %v4370, 12
      %v4451 = vpop.permute.xlu0 %4450
      %4452 = vrot.lane.b32.xlu0 %v4371, 12
      %v4453 = vpop.permute.xlu0 %4452
      %4454 = vrot.lane.b32.xlu0 %v4372, 12
      %v4455 = vpop.permute.xlu0 %4454
      %4456 = vrot.lane.b32.xlu0 %v4373, 12
      %v4457 = vpop.permute.xlu0 %4456
      %4458 = vrot.lane.b32.xlu0 %v4374, 12
      %v4459 = vpop.permute.xlu0 %4458
      %4460 = vrot.lane.b32.xlu0 %v4375, 12
      %v4461 = vpop.permute.xlu0 %4460
      %4462 = vrot.lane.b32.xlu0 %v4376, 12
      %v4463 = vpop.permute.xlu0 %4462
      %4464 = vrot.lane.b32.xlu0 %v4377, 12
      %v4465 = vpop.permute.xlu0 %4464
      %4466 = vrot.lane.b32.xlu0 %v4378, 12
      %v4467 = vpop.permute.xlu0 %4466
      %4468 = vrot.lane.b32.xlu0 %v4379, 12
      %v4469 = vpop.permute.xlu0 %4468
      %4470 = vrot.lane.b32.xlu0 %v4380, 12
      %v4471 = vpop.permute.xlu0 %4470
      %4472 = vrot.lane.b32.xlu0 %v4381, 12
      %v4473 = vpop.permute.xlu0 %4472
      %4474 = vrot.lane.b32.xlu0 %v4382, 12
      %v4475 = vpop.permute.xlu0 %4474
      %4476 = vrot.lane.b32.xlu0 %v4383, 12
      %v4477 = vpop.permute.xlu0 %4476
      %4478 = vrot.lane.b32.xlu0 %v4384, 12
      %v4479 = vpop.permute.xlu0 %4478
      %4480 = vrot.lane.b32.xlu0 %v4385, 12
      %v4481 = vpop.permute.xlu0 %4480
      %v4514 = vmul.f32 %v4094, %v4419
      %v4515 = vmul.f32 %v4094, %v4421
      %v4516 = vmul.f32 %v4094, %v4423
      %v4517 = vmul.f32 %v4094, %v4425
      %v4518 = vmul.f32 %v4095, %v4427
      %v4519 = vmul.f32 %v4096, %v4429
      %v4520 = vmul.f32 %v4097, %v4431
      %v4521 = vmul.f32 %v4098, %v4433
      %v4522 = vmul.f32 %v4099, %v4435
      %v4523 = vmul.f32 %v4100, %v4437
      %v4524 = vmul.f32 %v4101, %v4439
      %v4525 = vmul.f32 %v4102, %v4441
      %v4526 = vmul.f32 %v4103, %v4443
      %v4527 = vmul.f32 %v4104, %v4445
      %v4528 = vmul.f32 %v4105, %v4447
      %v4529 = vmul.f32 %v4106, %v4449
      %v4530 = vmul.f32 %v4107, %v4451
      %v4531 = vmul.f32 %v4108, %v4453
      %v4532 = vmul.f32 %v4109, %v4455
      %v4533 = vmul.f32 %v4110, %v4457
      %v4534 = vmul.f32 %v4111, %v4459
      %v4535 = vmul.f32 %v4112, %v4461
      %v4536 = vmul.f32 %v4113, %v4463
      %v4537 = vmul.f32 %v4114, %v4465
      %v4538 = vmul.f32 %v4115, %v4467
      %v4539 = vmul.f32 %v4116, %v4469
      %v4540 = vmul.f32 %v4117, %v4471
      %v4541 = vmul.f32 %v4118, %v4473
      %v4542 = vmul.f32 %v4119, %v4475
      %v4543 = vmul.f32 %v4120, %v4477
      %v4544 = vmul.f32 %v4121, %v4479
      %v4545 = vmul.f32 %v4122, %v4481
      %v4546 = vadd.f32 %v4514, 0.0
      %v4547 = vadd.f32 %v4515, 0.0
      %v4548 = vadd.f32 %v4516, 0.0
      %v4549 = vadd.f32 %v4517, 0.0
      %v4550 = vadd.f32 %v4518, 0.0
      %v4551 = vadd.f32 %v4519, 0.0
      %v4552 = vadd.f32 %v4520, 0.0
      %v4553 = vadd.f32 %v4521, 0.0
      %v4554 = vadd.f32 %v4522, 0.0
      %v4555 = vadd.f32 %v4523, 0.0
      %v4556 = vadd.f32 %v4524, 0.0
      %v4557 = vadd.f32 %v4525, 0.0
      %v4558 = vadd.f32 %v4526, 0.0
      %v4559 = vadd.f32 %v4527, 0.0
      %v4560 = vadd.f32 %v4528, 0.0
      %v4561 = vadd.f32 %v4529, 0.0
      %v4562 = vadd.f32 %v4530, 0.0
      %v4563 = vadd.f32 %v4531, 0.0
      %v4564 = vadd.f32 %v4532, 0.0
      %v4565 = vadd.f32 %v4533, 0.0
      %v4566 = vadd.f32 %v4534, 0.0
      %v4567 = vadd.f32 %v4535, 0.0
      %v4568 = vadd.f32 %v4536, 0.0
      %v4569 = vadd.f32 %v4537, 0.0
      %v4570 = vadd.f32 %v4538, 0.0
      %v4571 = vadd.f32 %v4539, 0.0
      %v4572 = vadd.f32 %v4540, 0.0
      %v4573 = vadd.f32 %v4541, 0.0
      %v4574 = vadd.f32 %v4542, 0.0
      %v4575 = vadd.f32 %v4543, 0.0
      %v4576 = vadd.f32 %v4544, 0.0
      %v4577 = vadd.f32 %v4545, 0.0
      %v4578 = vadd.f32 %v250, -1.0
      %v4579 = vadd.f32 %v251, -1.0
      %v4580 = vadd.f32 %v252, -1.0
      %v4581 = vadd.f32 %v253, -1.0
      %v4582 = vadd.f32 %v254, -1.0
      %v4583 = vadd.f32 %v255, -1.0
      %v4584 = vadd.f32 %v256, -1.0
      %v4585 = vadd.f32 %v257, -1.0
      %v4586 = vadd.f32 %v258, -1.0
      %v4587 = vadd.f32 %v259, -1.0
      %v4588 = vadd.f32 %v260, -1.0
      %v4589 = vadd.f32 %v261, -1.0
      %v4590 = vadd.f32 %v262, -1.0
      %v4591 = vadd.f32 %v263, -1.0
      %v4592 = vadd.f32 %v264, -1.0
      %v4593 = vadd.f32 %v265, -1.0
      %v4594 = vadd.f32 %v266, -1.0
      %v4595 = vadd.f32 %v267, -1.0
      %v4596 = vadd.f32 %v268, -1.0
      %v4597 = vadd.f32 %v269, -1.0
      %v4598 = vadd.f32 %v270, -1.0
      %v4599 = vadd.f32 %v271, -1.0
      %v4600 = vadd.f32 %v272, -1.0
      %v4601 = vadd.f32 %v273, -1.0
      %v4602 = vadd.f32 %v274, -1.0
      %v4603 = vadd.f32 %v275, -1.0
      %v4604 = vadd.f32 %v276, -1.0
      %v4605 = vadd.f32 %v277, -1.0
      %v4606 = vadd.f32 %v278, -1.0
      %v4607 = vadd.f32 %v279, -1.0
      %v4608 = vadd.f32 %v280, -1.0
      %v4609 = vadd.f32 %v281, -1.0
      %vm4610 = vcmp.ge.f32.partialorder %v4578, 0.0
      %vm4611 = vcmp.ge.f32.partialorder %v4579, 0.0
      %vm4612 = vcmp.ge.f32.partialorder %v4580, 0.0
      %vm4613 = vcmp.ge.f32.partialorder %v4581, 0.0
      %vm4614 = vcmp.ge.f32.partialorder %v4582, 0.0
      %vm4615 = vcmp.ge.f32.partialorder %v4583, 0.0
      %vm4616 = vcmp.ge.f32.partialorder %v4584, 0.0
      %vm4617 = vcmp.ge.f32.partialorder %v4585, 0.0
      %vm4618 = vcmp.ge.f32.partialorder %v4586, 0.0
      %vm4619 = vcmp.ge.f32.partialorder %v4587, 0.0
      %vm4620 = vcmp.ge.f32.partialorder %v4588, 0.0
      %vm4621 = vcmp.ge.f32.partialorder %v4589, 0.0
      %vm4622 = vcmp.ge.f32.partialorder %v4590, 0.0
      %vm4623 = vcmp.ge.f32.partialorder %v4591, 0.0
      %vm4624 = vcmp.ge.f32.partialorder %v4592, 0.0
      %vm4625 = vcmp.ge.f32.partialorder %v4593, 0.0
      %vm4626 = vcmp.ge.f32.partialorder %v4594, 0.0
      %vm4627 = vcmp.ge.f32.partialorder %v4595, 0.0
      %vm4628 = vcmp.ge.f32.partialorder %v4596, 0.0
      %vm4629 = vcmp.ge.f32.partialorder %v4597, 0.0
      %vm4630 = vcmp.ge.f32.partialorder %v4598, 0.0
      %vm4631 = vcmp.ge.f32.partialorder %v4599, 0.0
      %vm4632 = vcmp.ge.f32.partialorder %v4600, 0.0
      %vm4633 = vcmp.ge.f32.partialorder %v4601, 0.0
      %vm4634 = vcmp.ge.f32.partialorder %v4602, 0.0
      %vm4635 = vcmp.ge.f32.partialorder %v4603, 0.0
      %vm4636 = vcmp.ge.f32.partialorder %v4604, 0.0
      %vm4637 = vcmp.ge.f32.partialorder %v4605, 0.0
      %vm4638 = vcmp.ge.f32.partialorder %v4606, 0.0
      %vm4639 = vcmp.ge.f32.partialorder %v4607, 0.0
      %vm4640 = vcmp.ge.f32.partialorder %v4608, 0.0
      %vm4641 = vcmp.ge.f32.partialorder %v4609, 0.0
      %vm4642 = vcmp.lt.f32.partialorder %v4578, 16.0
      %vm4643 = vcmp.lt.f32.partialorder %v4579, 16.0
      %vm4644 = vcmp.lt.f32.partialorder %v4580, 16.0
      %vm4645 = vcmp.lt.f32.partialorder %v4581, 16.0
      %vm4646 = vcmp.lt.f32.partialorder %v4582, 16.0
      %vm4647 = vcmp.lt.f32.partialorder %v4583, 16.0
      %vm4648 = vcmp.lt.f32.partialorder %v4584, 16.0
      %vm4649 = vcmp.lt.f32.partialorder %v4585, 16.0
      %vm4650 = vcmp.lt.f32.partialorder %v4586, 16.0
      %vm4651 = vcmp.lt.f32.partialorder %v4587, 16.0
      %vm4652 = vcmp.lt.f32.partialorder %v4588, 16.0
      %vm4653 = vcmp.lt.f32.partialorder %v4589, 16.0
      %vm4654 = vcmp.lt.f32.partialorder %v4590, 16.0
      %vm4655 = vcmp.lt.f32.partialorder %v4591, 16.0
      %vm4656 = vcmp.lt.f32.partialorder %v4592, 16.0
      %vm4657 = vcmp.lt.f32.partialorder %v4593, 16.0
      %vm4658 = vcmp.lt.f32.partialorder %v4594, 16.0
      %vm4659 = vcmp.lt.f32.partialorder %v4595, 16.0
      %vm4660 = vcmp.lt.f32.partialorder %v4596, 16.0
      %vm4661 = vcmp.lt.f32.partialorder %v4597, 16.0
      %vm4662 = vcmp.lt.f32.partialorder %v4598, 16.0
      %vm4663 = vcmp.lt.f32.partialorder %v4599, 16.0
      %vm4664 = vcmp.lt.f32.partialorder %v4600, 16.0
      %vm4665 = vcmp.lt.f32.partialorder %v4601, 16.0
      %vm4666 = vcmp.lt.f32.partialorder %v4602, 16.0
      %vm4667 = vcmp.lt.f32.partialorder %v4603, 16.0
      %vm4668 = vcmp.lt.f32.partialorder %v4604, 16.0
      %vm4669 = vcmp.lt.f32.partialorder %v4605, 16.0
      %vm4670 = vcmp.lt.f32.partialorder %v4606, 16.0
      %vm4671 = vcmp.lt.f32.partialorder %v4607, 16.0
      %vm4672 = vcmp.lt.f32.partialorder %v4608, 16.0
      %vm4673 = vcmp.lt.f32.partialorder %v4609, 16.0
      %vm4674 = vmand %vm4610, %vm4642
      %vm4675 = vmand %vm4611, %vm4643
      %vm4676 = vmand %vm4612, %vm4644
      %vm4677 = vmand %vm4613, %vm4645
      %vm4678 = vmand %vm4614, %vm4646
      %vm4679 = vmand %vm4615, %vm4647
      %vm4680 = vmand %vm4616, %vm4648
      %vm4681 = vmand %vm4617, %vm4649
      %vm4682 = vmand %vm4618, %vm4650
      %vm4683 = vmand %vm4619, %vm4651
      %vm4684 = vmand %vm4620, %vm4652
      %vm4685 = vmand %vm4621, %vm4653
      %vm4686 = vmand %vm4622, %vm4654
      %vm4687 = vmand %vm4623, %vm4655
      %vm4688 = vmand %vm4624, %vm4656
      %vm4689 = vmand %vm4625, %vm4657
      %vm4690 = vmand %vm4626, %vm4658
      %vm4691 = vmand %vm4627, %vm4659
      %vm4692 = vmand %vm4628, %vm4660
      %vm4693 = vmand %vm4629, %vm4661
      %vm4694 = vmand %vm4630, %vm4662
      %vm4695 = vmand %vm4631, %vm4663
      %vm4696 = vmand %vm4632, %vm4664
      %vm4697 = vmand %vm4633, %vm4665
      %vm4698 = vmand %vm4634, %vm4666
      %vm4699 = vmand %vm4635, %vm4667
      %vm4700 = vmand %vm4636, %vm4668
      %vm4701 = vmand %vm4637, %vm4669
      %vm4702 = vmand %vm4638, %vm4670
      %vm4703 = vmand %vm4639, %vm4671
      %vm4704 = vmand %vm4640, %vm4672
      %vm4705 = vmand %vm4641, %vm4673
      %v4706 = vsub.f32 %v353, -1.0
      %vm4707 = vcmp.ge.f32.partialorder %v4706, 0.0
      %vm4708 = vmand %vm4674, %vm4707
      %vm4709 = vmand %vm4675, %vm4707
      %vm4710 = vmand %vm4676, %vm4707
      %vm4711 = vmand %vm4677, %vm4707
      %vm4712 = vmand %vm4678, %vm4707
      %vm4713 = vmand %vm4679, %vm4707
      %vm4714 = vmand %vm4680, %vm4707
      %vm4715 = vmand %vm4681, %vm4707
      %vm4716 = vmand %vm4682, %vm4707
      %vm4717 = vmand %vm4683, %vm4707
      %vm4718 = vmand %vm4684, %vm4707
      %vm4719 = vmand %vm4685, %vm4707
      %vm4720 = vmand %vm4686, %vm4707
      %vm4721 = vmand %vm4687, %vm4707
      %vm4722 = vmand %vm4688, %vm4707
      %vm4723 = vmand %vm4689, %vm4707
      %vm4724 = vmand %vm4690, %vm4707
      %vm4725 = vmand %vm4691, %vm4707
      %vm4726 = vmand %vm4692, %vm4707
      %vm4727 = vmand %vm4693, %vm4707
      %vm4728 = vmand %vm4694, %vm4707
      %vm4729 = vmand %vm4695, %vm4707
      %vm4730 = vmand %vm4696, %vm4707
      %vm4731 = vmand %vm4697, %vm4707
      %vm4732 = vmand %vm4698, %vm4707
      %vm4733 = vmand %vm4699, %vm4707
      %vm4734 = vmand %vm4700, %vm4707
      %vm4735 = vmand %vm4701, %vm4707
      %vm4736 = vmand %vm4702, %vm4707
      %vm4737 = vmand %vm4703, %vm4707
      %vm4738 = vmand %vm4704, %vm4707
      %vm4739 = vmand %vm4705, %vm4707
      %vm4740 = vcmp.lt.f32.partialorder %v4706, 3.0
      %vm4741 = vmand %vm4708, %vm4740
      %vm4742 = vmand %vm4709, %vm4740
      %vm4743 = vmand %vm4710, %vm4740
      %vm4744 = vmand %vm4711, %vm4740
      %vm4745 = vmand %vm4712, %vm4740
      %vm4746 = vmand %vm4713, %vm4740
      %vm4747 = vmand %vm4714, %vm4740
      %vm4748 = vmand %vm4715, %vm4740
      %vm4749 = vmand %vm4716, %vm4740
      %vm4750 = vmand %vm4717, %vm4740
      %vm4751 = vmand %vm4718, %vm4740
      %vm4752 = vmand %vm4719, %vm4740
      %vm4753 = vmand %vm4720, %vm4740
      %vm4754 = vmand %vm4721, %vm4740
      %vm4755 = vmand %vm4722, %vm4740
      %vm4756 = vmand %vm4723, %vm4740
      %vm4757 = vmand %vm4724, %vm4740
      %vm4758 = vmand %vm4725, %vm4740
      %vm4759 = vmand %vm4726, %vm4740
      %vm4760 = vmand %vm4727, %vm4740
      %vm4761 = vmand %vm4728, %vm4740
      %vm4762 = vmand %vm4729, %vm4740
      %vm4763 = vmand %vm4730, %vm4740
      %vm4764 = vmand %vm4731, %vm4740
      %vm4765 = vmand %vm4732, %vm4740
      %vm4766 = vmand %vm4733, %vm4740
      %vm4767 = vmand %vm4734, %vm4740
      %vm4768 = vmand %vm4735, %vm4740
      %vm4769 = vmand %vm4736, %vm4740
      %vm4770 = vmand %vm4737, %vm4740
      %vm4771 = vmand %vm4738, %vm4740
      %vm4772 = vmand %vm4739, %vm4740
      %v4773 = vsel %vm4741, 1, 0
      %v4774 = vsel %vm4742, 1, 0
      %v4775 = vsel %vm4743, 1, 0
      %v4776 = vsel %vm4744, 1, 0
      %v4777 = vsel %vm4745, 1, 0
      %v4778 = vsel %vm4746, 1, 0
      %v4779 = vsel %vm4747, 1, 0
      %v4780 = vsel %vm4748, 1, 0
      %v4781 = vsel %vm4749, 1, 0
      %v4782 = vsel %vm4750, 1, 0
      %v4783 = vsel %vm4751, 1, 0
      %v4784 = vsel %vm4752, 1, 0
      %v4785 = vsel %vm4753, 1, 0
      %v4786 = vsel %vm4754, 1, 0
      %v4787 = vsel %vm4755, 1, 0
      %v4788 = vsel %vm4756, 1, 0
      %v4789 = vsel %vm4757, 1, 0
      %v4790 = vsel %vm4758, 1, 0
      %v4791 = vsel %vm4759, 1, 0
      %v4792 = vsel %vm4760, 1, 0
      %v4793 = vsel %vm4761, 1, 0
      %v4794 = vsel %vm4762, 1, 0
      %v4795 = vsel %vm4763, 1, 0
      %v4796 = vsel %vm4764, 1, 0
      %v4797 = vsel %vm4765, 1, 0
      %v4798 = vsel %vm4766, 1, 0
      %v4799 = vsel %vm4767, 1, 0
      %v4800 = vsel %vm4768, 1, 0
      %v4801 = vsel %vm4769, 1, 0
      %v4802 = vsel %vm4770, 1, 0
      %v4803 = vsel %vm4771, 1, 0
      %v4804 = vsel %vm4772, 1, 0
      %v4805 = vcvt.s32.f32 %v4773
      %v4806 = vcvt.s32.f32 %v4774
      %v4807 = vcvt.s32.f32 %v4775
      %v4808 = vcvt.s32.f32 %v4776
      %v4809 = vcvt.s32.f32 %v4777
      %v4810 = vcvt.s32.f32 %v4778
      %v4811 = vcvt.s32.f32 %v4779
      %v4812 = vcvt.s32.f32 %v4780
      %v4813 = vcvt.s32.f32 %v4781
      %v4814 = vcvt.s32.f32 %v4782
      %v4815 = vcvt.s32.f32 %v4783
      %v4816 = vcvt.s32.f32 %v4784
      %v4817 = vcvt.s32.f32 %v4785
      %v4818 = vcvt.s32.f32 %v4786
      %v4819 = vcvt.s32.f32 %v4787
      %v4820 = vcvt.s32.f32 %v4788
      %v4821 = vcvt.s32.f32 %v4789
      %v4822 = vcvt.s32.f32 %v4790
      %v4823 = vcvt.s32.f32 %v4791
      %v4824 = vcvt.s32.f32 %v4792
      %v4825 = vcvt.s32.f32 %v4793
      %v4826 = vcvt.s32.f32 %v4794
      %v4827 = vcvt.s32.f32 %v4795
      %v4828 = vcvt.s32.f32 %v4796
      %v4829 = vcvt.s32.f32 %v4797
      %v4830 = vcvt.s32.f32 %v4798
      %v4831 = vcvt.s32.f32 %v4799
      %v4832 = vcvt.s32.f32 %v4800
      %v4833 = vcvt.s32.f32 %v4801
      %v4834 = vcvt.s32.f32 %v4802
      %v4835 = vcvt.s32.f32 %v4803
      %v4836 = vcvt.s32.f32 %v4804
      %4869 = vrot.lane.b32.xlu0 %v4805, 9
      %v4870 = vpop.permute.xlu0 %4869
      %4871 = vrot.lane.b32.xlu0 %v4806, 9
      %v4872 = vpop.permute.xlu0 %4871
      %4873 = vrot.lane.b32.xlu0 %v4807, 9
      %v4874 = vpop.permute.xlu0 %4873
      %4875 = vrot.lane.b32.xlu0 %v4808, 9
      %v4876 = vpop.permute.xlu0 %4875
      %4877 = vrot.lane.b32.xlu0 %v4809, 9
      %v4878 = vpop.permute.xlu0 %4877
      %4879 = vrot.lane.b32.xlu0 %v4810, 9
      %v4880 = vpop.permute.xlu0 %4879
      %4881 = vrot.lane.b32.xlu0 %v4811, 9
      %v4882 = vpop.permute.xlu0 %4881
      %4883 = vrot.lane.b32.xlu0 %v4812, 9
      %v4884 = vpop.permute.xlu0 %4883
      %4885 = vrot.lane.b32.xlu0 %v4813, 9
      %v4886 = vpop.permute.xlu0 %4885
      %4887 = vrot.lane.b32.xlu0 %v4814, 9
      %v4888 = vpop.permute.xlu0 %4887
      %4889 = vrot.lane.b32.xlu0 %v4815, 9
      %v4890 = vpop.permute.xlu0 %4889
      %4891 = vrot.lane.b32.xlu0 %v4816, 9
      %v4892 = vpop.permute.xlu0 %4891
      %4893 = vrot.lane.b32.xlu0 %v4817, 9
      %v4894 = vpop.permute.xlu0 %4893
      %4895 = vrot.lane.b32.xlu0 %v4818, 9
      %v4896 = vpop.permute.xlu0 %4895
      %4897 = vrot.lane.b32.xlu0 %v4819, 9
      %v4898 = vpop.permute.xlu0 %4897
      %4899 = vrot.lane.b32.xlu0 %v4820, 9
      %v4900 = vpop.permute.xlu0 %4899
      %4901 = vrot.lane.b32.xlu0 %v4821, 9
      %v4902 = vpop.permute.xlu0 %4901
      %4903 = vrot.lane.b32.xlu0 %v4822, 9
      %v4904 = vpop.permute.xlu0 %4903
      %4905 = vrot.lane.b32.xlu0 %v4823, 9
      %v4906 = vpop.permute.xlu0 %4905
      %4907 = vrot.lane.b32.xlu0 %v4824, 9
      %v4908 = vpop.permute.xlu0 %4907
      %4909 = vrot.lane.b32.xlu0 %v4825, 9
      %v4910 = vpop.permute.xlu0 %4909
      %4911 = vrot.lane.b32.xlu0 %v4826, 9
      %v4912 = vpop.permute.xlu0 %4911
      %4913 = vrot.lane.b32.xlu0 %v4827, 9
      %v4914 = vpop.permute.xlu0 %4913
      %4915 = vrot.lane.b32.xlu0 %v4828, 9
      %v4916 = vpop.permute.xlu0 %4915
      %4917 = vrot.lane.b32.xlu0 %v4829, 9
      %v4918 = vpop.permute.xlu0 %4917
      %4919 = vrot.lane.b32.xlu0 %v4830, 9
      %v4920 = vpop.permute.xlu0 %4919
      %4921 = vrot.lane.b32.xlu0 %v4831, 9
      %v4922 = vpop.permute.xlu0 %4921
      %4923 = vrot.lane.b32.xlu0 %v4832, 9
      %v4924 = vpop.permute.xlu0 %4923
      %4925 = vrot.lane.b32.xlu0 %v4833, 9
      %v4926 = vpop.permute.xlu0 %4925
      %4927 = vrot.lane.b32.xlu0 %v4834, 9
      %v4928 = vpop.permute.xlu0 %4927
      %4929 = vrot.lane.b32.xlu0 %v4835, 9
      %v4930 = vpop.permute.xlu0 %4929
      %4931 = vrot.lane.b32.xlu0 %v4836, 9
      %v4932 = vpop.permute.xlu0 %4931
      %v4965 = vmul.f32 %v4094, %v4870
      %v4966 = vmul.f32 %v4094, %v4872
      %v4967 = vmul.f32 %v4095, %v4874
      %v4968 = vmul.f32 %v4096, %v4876
      %v4969 = vmul.f32 %v4097, %v4878
      %v4970 = vmul.f32 %v4098, %v4880
      %v4971 = vmul.f32 %v4099, %v4882
      %v4972 = vmul.f32 %v4100, %v4884
      %v4973 = vmul.f32 %v4101, %v4886
      %v4974 = vmul.f32 %v4102, %v4888
      %v4975 = vmul.f32 %v4103, %v4890
      %v4976 = vmul.f32 %v4104, %v4892
      %v4977 = vmul.f32 %v4105, %v4894
      %v4978 = vmul.f32 %v4106, %v4896
      %v4979 = vmul.f32 %v4107, %v4898
      %v4980 = vmul.f32 %v4108, %v4900
      %v4981 = vmul.f32 %v4109, %v4902
      %v4982 = vmul.f32 %v4110, %v4904
      %v4983 = vmul.f32 %v4111, %v4906
      %v4984 = vmul.f32 %v4112, %v4908
      %v4985 = vmul.f32 %v4113, %v4910
      %v4986 = vmul.f32 %v4114, %v4912
      %v4987 = vmul.f32 %v4115, %v4914
      %v4988 = vmul.f32 %v4116, %v4916
      %v4989 = vmul.f32 %v4117, %v4918
      %v4990 = vmul.f32 %v4118, %v4920
      %v4991 = vmul.f32 %v4119, %v4922
      %v4992 = vmul.f32 %v4120, %v4924
      %v4993 = vmul.f32 %v4121, %v4926
      %v4994 = vmul.f32 %v4122, %v4928
      %v4995 = vmul.f32 %v4123, %v4930
      %v4996 = vmul.f32 %v4124, %v4932
      %5029 = vrot.lane.b32.xlu0 %v4965, 3
      %v5030 = vpop.permute.xlu0 %5029
      %5031 = vrot.lane.b32.xlu0 %v4966, 3
      %v5032 = vpop.permute.xlu0 %5031
      %5033 = vrot.lane.b32.xlu0 %v4967, 3
      %v5034 = vpop.permute.xlu0 %5033
      %5035 = vrot.lane.b32.xlu0 %v4968, 3
      %v5036 = vpop.permute.xlu0 %5035
      %5037 = vrot.lane.b32.xlu0 %v4969, 3
      %v5038 = vpop.permute.xlu0 %5037
      %5039 = vrot.lane.b32.xlu0 %v4970, 3
      %v5040 = vpop.permute.xlu0 %5039
      %5041 = vrot.lane.b32.xlu0 %v4971, 3
      %v5042 = vpop.permute.xlu0 %5041
      %5043 = vrot.lane.b32.xlu0 %v4972, 3
      %v5044 = vpop.permute.xlu0 %5043
      %5045 = vrot.lane.b32.xlu0 %v4973, 3
      %v5046 = vpop.permute.xlu0 %5045
      %5047 = vrot.lane.b32.xlu0 %v4974, 3
      %v5048 = vpop.permute.xlu0 %5047
      %5049 = vrot.lane.b32.xlu0 %v4975, 3
      %v5050 = vpop.permute.xlu0 %5049
      %5051 = vrot.lane.b32.xlu0 %v4976, 3
      %v5052 = vpop.permute.xlu0 %5051
      %5053 = vrot.lane.b32.xlu0 %v4977, 3
      %v5054 = vpop.permute.xlu0 %5053
      %5055 = vrot.lane.b32.xlu0 %v4978, 3
      %v5056 = vpop.permute.xlu0 %5055
      %5057 = vrot.lane.b32.xlu0 %v4979, 3
      %v5058 = vpop.permute.xlu0 %5057
      %5059 = vrot.lane.b32.xlu0 %v4980, 3
      %v5060 = vpop.permute.xlu0 %5059
      %5061 = vrot.lane.b32.xlu0 %v4981, 3
      %v5062 = vpop.permute.xlu0 %5061
      %5063 = vrot.lane.b32.xlu0 %v4982, 3
      %v5064 = vpop.permute.xlu0 %5063
      %5065 = vrot.lane.b32.xlu0 %v4983, 3
      %v5066 = vpop.permute.xlu0 %5065
      %5067 = vrot.lane.b32.xlu0 %v4984, 3
      %v5068 = vpop.permute.xlu0 %5067
      %5069 = vrot.lane.b32.xlu0 %v4985, 3
      %v5070 = vpop.permute.xlu0 %5069
      %5071 = vrot.lane.b32.xlu0 %v4986, 3
      %v5072 = vpop.permute.xlu0 %5071
      %5073 = vrot.lane.b32.xlu0 %v4987, 3
      %v5074 = vpop.permute.xlu0 %5073
      %5075 = vrot.lane.b32.xlu0 %v4988, 3
      %v5076 = vpop.permute.xlu0 %5075
      %5077 = vrot.lane.b32.xlu0 %v4989, 3
      %v5078 = vpop.permute.xlu0 %5077
      %5079 = vrot.lane.b32.xlu0 %v4990, 3
      %v5080 = vpop.permute.xlu0 %5079
      %5081 = vrot.lane.b32.xlu0 %v4991, 3
      %v5082 = vpop.permute.xlu0 %5081
      %5083 = vrot.lane.b32.xlu0 %v4992, 3
      %v5084 = vpop.permute.xlu0 %5083
      %5085 = vrot.lane.b32.xlu0 %v4993, 3
      %v5086 = vpop.permute.xlu0 %5085
      %5087 = vrot.lane.b32.xlu0 %v4994, 3
      %v5088 = vpop.permute.xlu0 %5087
      %5089 = vrot.lane.b32.xlu0 %v4995, 3
      %v5090 = vpop.permute.xlu0 %5089
      %5091 = vrot.lane.b32.xlu0 %v4996, 3
      %v5092 = vpop.permute.xlu0 %5091
      %v5125 = vadd.f32 %v4546, %v5030
      %v5126 = vadd.f32 %v4547, %v5032
      %v5127 = vadd.f32 %v4548, %v5034
      %v5128 = vadd.f32 %v4549, %v5036
      %v5129 = vadd.f32 %v4550, %v5038
      %v5130 = vadd.f32 %v4551, %v5040
      %v5131 = vadd.f32 %v4552, %v5042
      %v5132 = vadd.f32 %v4553, %v5044
      %v5133 = vadd.f32 %v4554, %v5046
      %v5134 = vadd.f32 %v4555, %v5048
      %v5135 = vadd.f32 %v4556, %v5050
      %v5136 = vadd.f32 %v4557, %v5052
      %v5137 = vadd.f32 %v4558, %v5054
      %v5138 = vadd.f32 %v4559, %v5056
      %v5139 = vadd.f32 %v4560, %v5058
      %v5140 = vadd.f32 %v4561, %v5060
      %v5141 = vadd.f32 %v4562, %v5062
      %v5142 = vadd.f32 %v4563, %v5064
      %v5143 = vadd.f32 %v4564, %v5066
      %v5144 = vadd.f32 %v4565, %v5068
      %v5145 = vadd.f32 %v4566, %v5070
      %v5146 = vadd.f32 %v4567, %v5072
      %v5147 = vadd.f32 %v4568, %v5074
      %v5148 = vadd.f32 %v4569, %v5076
      %v5149 = vadd.f32 %v4570, %v5078
      %v5150 = vadd.f32 %v4571, %v5080
      %v5151 = vadd.f32 %v4572, %v5082
      %v5152 = vadd.f32 %v4573, %v5084
      %v5153 = vadd.f32 %v4574, %v5086
      %v5154 = vadd.f32 %v4575, %v5088
      %v5155 = vadd.f32 %v4576, %v5090
      %v5156 = vadd.f32 %v4577, %v5092
      %v5157 = vadd.f32 %v250, 0.0
      %v5158 = vadd.f32 %v251, 0.0
      %v5159 = vadd.f32 %v252, 0.0
      %v5160 = vadd.f32 %v253, 0.0
      %v5161 = vadd.f32 %v254, 0.0
      %v5162 = vadd.f32 %v255, 0.0
      %v5163 = vadd.f32 %v256, 0.0
      %v5164 = vadd.f32 %v257, 0.0
      %v5165 = vadd.f32 %v258, 0.0
      %v5166 = vadd.f32 %v259, 0.0
      %v5167 = vadd.f32 %v260, 0.0
      %v5168 = vadd.f32 %v261, 0.0
      %v5169 = vadd.f32 %v262, 0.0
      %v5170 = vadd.f32 %v263, 0.0
      %v5171 = vadd.f32 %v264, 0.0
      %v5172 = vadd.f32 %v265, 0.0
      %v5173 = vadd.f32 %v266, 0.0
      %v5174 = vadd.f32 %v267, 0.0
      %v5175 = vadd.f32 %v268, 0.0
      %v5176 = vadd.f32 %v269, 0.0
      %v5177 = vadd.f32 %v270, 0.0
      %v5178 = vadd.f32 %v271, 0.0
      %v5179 = vadd.f32 %v272, 0.0
      %v5180 = vadd.f32 %v273, 0.0
      %v5181 = vadd.f32 %v274, 0.0
      %v5182 = vadd.f32 %v275, 0.0
      %v5183 = vadd.f32 %v276, 0.0
      %v5184 = vadd.f32 %v277, 0.0
      %v5185 = vadd.f32 %v278, 0.0
      %v5186 = vadd.f32 %v279, 0.0
      %v5187 = vadd.f32 %v280, 0.0
      %v5188 = vadd.f32 %v281, 0.0
      %vm5189 = vcmp.ge.f32.partialorder %v5157, 0.0
      %vm5190 = vcmp.ge.f32.partialorder %v5158, 0.0
      %vm5191 = vcmp.ge.f32.partialorder %v5159, 0.0
      %vm5192 = vcmp.ge.f32.partialorder %v5160, 0.0
      %vm5193 = vcmp.ge.f32.partialorder %v5161, 0.0
      %vm5194 = vcmp.ge.f32.partialorder %v5162, 0.0
      %vm5195 = vcmp.ge.f32.partialorder %v5163, 0.0
      %vm5196 = vcmp.ge.f32.partialorder %v5164, 0.0
      %vm5197 = vcmp.ge.f32.partialorder %v5165, 0.0
      %vm5198 = vcmp.ge.f32.partialorder %v5166, 0.0
      %vm5199 = vcmp.ge.f32.partialorder %v5167, 0.0
      %vm5200 = vcmp.ge.f32.partialorder %v5168, 0.0
      %vm5201 = vcmp.ge.f32.partialorder %v5169, 0.0
      %vm5202 = vcmp.ge.f32.partialorder %v5170, 0.0
      %vm5203 = vcmp.ge.f32.partialorder %v5171, 0.0
      %vm5204 = vcmp.ge.f32.partialorder %v5172, 0.0
      %vm5205 = vcmp.ge.f32.partialorder %v5173, 0.0
      %vm5206 = vcmp.ge.f32.partialorder %v5174, 0.0
      %vm5207 = vcmp.ge.f32.partialorder %v5175, 0.0
      %vm5208 = vcmp.ge.f32.partialorder %v5176, 0.0
      %vm5209 = vcmp.ge.f32.partialorder %v5177, 0.0
      %vm5210 = vcmp.ge.f32.partialorder %v5178, 0.0
      %vm5211 = vcmp.ge.f32.partialorder %v5179, 0.0
      %vm5212 = vcmp.ge.f32.partialorder %v5180, 0.0
      %vm5213 = vcmp.ge.f32.partialorder %v5181, 0.0
      %vm5214 = vcmp.ge.f32.partialorder %v5182, 0.0
      %vm5215 = vcmp.ge.f32.partialorder %v5183, 0.0
      %vm5216 = vcmp.ge.f32.partialorder %v5184, 0.0
      %vm5217 = vcmp.ge.f32.partialorder %v5185, 0.0
      %vm5218 = vcmp.ge.f32.partialorder %v5186, 0.0
      %vm5219 = vcmp.ge.f32.partialorder %v5187, 0.0
      %vm5220 = vcmp.ge.f32.partialorder %v5188, 0.0
      %vm5221 = vcmp.lt.f32.partialorder %v5157, 16.0
      %vm5222 = vcmp.lt.f32.partialorder %v5158, 16.0
      %vm5223 = vcmp.lt.f32.partialorder %v5159, 16.0
      %vm5224 = vcmp.lt.f32.partialorder %v5160, 16.0
      %vm5225 = vcmp.lt.f32.partialorder %v5161, 16.0
      %vm5226 = vcmp.lt.f32.partialorder %v5162, 16.0
      %vm5227 = vcmp.lt.f32.partialorder %v5163, 16.0
      %vm5228 = vcmp.lt.f32.partialorder %v5164, 16.0
      %vm5229 = vcmp.lt.f32.partialorder %v5165, 16.0
      %vm5230 = vcmp.lt.f32.partialorder %v5166, 16.0
      %vm5231 = vcmp.lt.f32.partialorder %v5167, 16.0
      %vm5232 = vcmp.lt.f32.partialorder %v5168, 16.0
      %vm5233 = vcmp.lt.f32.partialorder %v5169, 16.0
      %vm5234 = vcmp.lt.f32.partialorder %v5170, 16.0
      %vm5235 = vcmp.lt.f32.partialorder %v5171, 16.0
      %vm5236 = vcmp.lt.f32.partialorder %v5172, 16.0
      %vm5237 = vcmp.lt.f32.partialorder %v5173, 16.0
      %vm5238 = vcmp.lt.f32.partialorder %v5174, 16.0
      %vm5239 = vcmp.lt.f32.partialorder %v5175, 16.0
      %vm5240 = vcmp.lt.f32.partialorder %v5176, 16.0
      %vm5241 = vcmp.lt.f32.partialorder %v5177, 16.0
      %vm5242 = vcmp.lt.f32.partialorder %v5178, 16.0
      %vm5243 = vcmp.lt.f32.partialorder %v5179, 16.0
      %vm5244 = vcmp.lt.f32.partialorder %v5180, 16.0
      %vm5245 = vcmp.lt.f32.partialorder %v5181, 16.0
      %vm5246 = vcmp.lt.f32.partialorder %v5182, 16.0
      %vm5247 = vcmp.lt.f32.partialorder %v5183, 16.0
      %vm5248 = vcmp.lt.f32.partialorder %v5184, 16.0
      %vm5249 = vcmp.lt.f32.partialorder %v5185, 16.0
      %vm5250 = vcmp.lt.f32.partialorder %v5186, 16.0
      %vm5251 = vcmp.lt.f32.partialorder %v5187, 16.0
      %vm5252 = vcmp.lt.f32.partialorder %v5188, 16.0
      %vm5253 = vmand %vm5189, %vm5221
      %vm5254 = vmand %vm5190, %vm5222
      %vm5255 = vmand %vm5191, %vm5223
      %vm5256 = vmand %vm5192, %vm5224
      %vm5257 = vmand %vm5193, %vm5225
      %vm5258 = vmand %vm5194, %vm5226
      %vm5259 = vmand %vm5195, %vm5227
      %vm5260 = vmand %vm5196, %vm5228
      %vm5261 = vmand %vm5197, %vm5229
      %vm5262 = vmand %vm5198, %vm5230
      %vm5263 = vmand %vm5199, %vm5231
      %vm5264 = vmand %vm5200, %vm5232
      %vm5265 = vmand %vm5201, %vm5233
      %vm5266 = vmand %vm5202, %vm5234
      %vm5267 = vmand %vm5203, %vm5235
      %vm5268 = vmand %vm5204, %vm5236
      %vm5269 = vmand %vm5205, %vm5237
      %vm5270 = vmand %vm5206, %vm5238
      %vm5271 = vmand %vm5207, %vm5239
      %vm5272 = vmand %vm5208, %vm5240
      %vm5273 = vmand %vm5209, %vm5241
      %vm5274 = vmand %vm5210, %vm5242
      %vm5275 = vmand %vm5211, %vm5243
      %vm5276 = vmand %vm5212, %vm5244
      %vm5277 = vmand %vm5213, %vm5245
      %vm5278 = vmand %vm5214, %vm5246
      %vm5279 = vmand %vm5215, %vm5247
      %vm5280 = vmand %vm5216, %vm5248
      %vm5281 = vmand %vm5217, %vm5249
      %vm5282 = vmand %vm5218, %vm5250
      %vm5283 = vmand %vm5219, %vm5251
      %vm5284 = vmand %vm5220, %vm5252
      %vm5285 = vcmp.ge.f32.partialorder %v353, 0.0
      %vm5286 = vmand %vm5253, %vm5285
      %vm5287 = vmand %vm5254, %vm5285
      %vm5288 = vmand %vm5255, %vm5285
      %vm5289 = vmand %vm5256, %vm5285
      %vm5290 = vmand %vm5257, %vm5285
      %vm5291 = vmand %vm5258, %vm5285
      %vm5292 = vmand %vm5259, %vm5285
      %vm5293 = vmand %vm5260, %vm5285
      %vm5294 = vmand %vm5261, %vm5285
      %vm5295 = vmand %vm5262, %vm5285
      %vm5296 = vmand %vm5263, %vm5285
      %vm5297 = vmand %vm5264, %vm5285
      %vm5298 = vmand %vm5265, %vm5285
      %vm5299 = vmand %vm5266, %vm5285
      %vm5300 = vmand %vm5267, %vm5285
      %vm5301 = vmand %vm5268, %vm5285
      %vm5302 = vmand %vm5269, %vm5285
      %vm5303 = vmand %vm5270, %vm5285
      %vm5304 = vmand %vm5271, %vm5285
      %vm5305 = vmand %vm5272, %vm5285
      %vm5306 = vmand %vm5273, %vm5285
      %vm5307 = vmand %vm5274, %vm5285
      %vm5308 = vmand %vm5275, %vm5285
      %vm5309 = vmand %vm5276, %vm5285
      %vm5310 = vmand %vm5277, %vm5285
      %vm5311 = vmand %vm5278, %vm5285
      %vm5312 = vmand %vm5279, %vm5285
      %vm5313 = vmand %vm5280, %vm5285
      %vm5314 = vmand %vm5281, %vm5285
      %vm5315 = vmand %vm5282, %vm5285
      %vm5316 = vmand %vm5283, %vm5285
      %vm5317 = vmand %vm5284, %vm5285
      %vm5318 = vcmp.lt.f32.partialorder %v353, 3.0
      %vm5319 = vmand %vm5286, %vm5318
      %vm5320 = vmand %vm5287, %vm5318
      %vm5321 = vmand %vm5288, %vm5318
      %vm5322 = vmand %vm5289, %vm5318
      %vm5323 = vmand %vm5290, %vm5318
      %vm5324 = vmand %vm5291, %vm5318
      %vm5325 = vmand %vm5292, %vm5318
      %vm5326 = vmand %vm5293, %vm5318
      %vm5327 = vmand %vm5294, %vm5318
      %vm5328 = vmand %vm5295, %vm5318
      %vm5329 = vmand %vm5296, %vm5318
      %vm5330 = vmand %vm5297, %vm5318
      %vm5331 = vmand %vm5298, %vm5318
      %vm5332 = vmand %vm5299, %vm5318
      %vm5333 = vmand %vm5300, %vm5318
      %vm5334 = vmand %vm5301, %vm5318
      %vm5335 = vmand %vm5302, %vm5318
      %vm5336 = vmand %vm5303, %vm5318
      %vm5337 = vmand %vm5304, %vm5318
      %vm5338 = vmand %vm5305, %vm5318
      %vm5339 = vmand %vm5306, %vm5318
      %vm5340 = vmand %vm5307, %vm5318
      %vm5341 = vmand %vm5308, %vm5318
      %vm5342 = vmand %vm5309, %vm5318
      %vm5343 = vmand %vm5310, %vm5318
      %vm5344 = vmand %vm5311, %vm5318
      %vm5345 = vmand %vm5312, %vm5318
      %vm5346 = vmand %vm5313, %vm5318
      %vm5347 = vmand %vm5314, %vm5318
      %vm5348 = vmand %vm5315, %vm5318
      %vm5349 = vmand %vm5316, %vm5318
      %vm5350 = vmand %vm5317, %vm5318
      %v5351 = vsel %vm5319, 1, 0
      %v5352 = vsel %vm5320, 1, 0
      %v5353 = vsel %vm5321, 1, 0
      %v5354 = vsel %vm5322, 1, 0
      %v5355 = vsel %vm5323, 1, 0
      %v5356 = vsel %vm5324, 1, 0
      %v5357 = vsel %vm5325, 1, 0
      %v5358 = vsel %vm5326, 1, 0
      %v5359 = vsel %vm5327, 1, 0
      %v5360 = vsel %vm5328, 1, 0
      %v5361 = vsel %vm5329, 1, 0
      %v5362 = vsel %vm5330, 1, 0
      %v5363 = vsel %vm5331, 1, 0
      %v5364 = vsel %vm5332, 1, 0
      %v5365 = vsel %vm5333, 1, 0
      %v5366 = vsel %vm5334, 1, 0
      %v5367 = vsel %vm5335, 1, 0
      %v5368 = vsel %vm5336, 1, 0
      %v5369 = vsel %vm5337, 1, 0
      %v5370 = vsel %vm5338, 1, 0
      %v5371 = vsel %vm5339, 1, 0
      %v5372 = vsel %vm5340, 1, 0
      %v5373 = vsel %vm5341, 1, 0
      %v5374 = vsel %vm5342, 1, 0
      %v5375 = vsel %vm5343, 1, 0
      %v5376 = vsel %vm5344, 1, 0
      %v5377 = vsel %vm5345, 1, 0
      %v5378 = vsel %vm5346, 1, 0
      %v5379 = vsel %vm5347, 1, 0
      %v5380 = vsel %vm5348, 1, 0
      %v5381 = vsel %vm5349, 1, 0
      %v5382 = vsel %vm5350, 1, 0
      %v5383 = vcvt.s32.f32 %v5351
      %v5384 = vcvt.s32.f32 %v5352
      %v5385 = vcvt.s32.f32 %v5353
      %v5386 = vcvt.s32.f32 %v5354
      %v5387 = vcvt.s32.f32 %v5355
      %v5388 = vcvt.s32.f32 %v5356
      %v5389 = vcvt.s32.f32 %v5357
      %v5390 = vcvt.s32.f32 %v5358
      %v5391 = vcvt.s32.f32 %v5359
      %v5392 = vcvt.s32.f32 %v5360
      %v5393 = vcvt.s32.f32 %v5361
      %v5394 = vcvt.s32.f32 %v5362
      %v5395 = vcvt.s32.f32 %v5363
      %v5396 = vcvt.s32.f32 %v5364
      %v5397 = vcvt.s32.f32 %v5365
      %v5398 = vcvt.s32.f32 %v5366
      %v5399 = vcvt.s32.f32 %v5367
      %v5400 = vcvt.s32.f32 %v5368
      %v5401 = vcvt.s32.f32 %v5369
      %v5402 = vcvt.s32.f32 %v5370
      %v5403 = vcvt.s32.f32 %v5371
      %v5404 = vcvt.s32.f32 %v5372
      %v5405 = vcvt.s32.f32 %v5373
      %v5406 = vcvt.s32.f32 %v5374
      %v5407 = vcvt.s32.f32 %v5375
      %v5408 = vcvt.s32.f32 %v5376
      %v5409 = vcvt.s32.f32 %v5377
      %v5410 = vcvt.s32.f32 %v5378
      %v5411 = vcvt.s32.f32 %v5379
      %v5412 = vcvt.s32.f32 %v5380
      %v5413 = vcvt.s32.f32 %v5381
      %v5414 = vcvt.s32.f32 %v5382
      %5447 = vrot.lane.b32.xlu0 %v5383, 6
      %v5448 = vpop.permute.xlu0 %5447
      %5449 = vrot.lane.b32.xlu0 %v5384, 6
      %v5450 = vpop.permute.xlu0 %5449
      %5451 = vrot.lane.b32.xlu0 %v5385, 6
      %v5452 = vpop.permute.xlu0 %5451
      %5453 = vrot.lane.b32.xlu0 %v5386, 6
      %v5454 = vpop.permute.xlu0 %5453
      %5455 = vrot.lane.b32.xlu0 %v5387, 6
      %v5456 = vpop.permute.xlu0 %5455
      %5457 = vrot.lane.b32.xlu0 %v5388, 6
      %v5458 = vpop.permute.xlu0 %5457
      %5459 = vrot.lane.b32.xlu0 %v5389, 6
      %v5460 = vpop.permute.xlu0 %5459
      %5461 = vrot.lane.b32.xlu0 %v5390, 6
      %v5462 = vpop.permute.xlu0 %5461
      %5463 = vrot.lane.b32.xlu0 %v5391, 6
      %v5464 = vpop.permute.xlu0 %5463
      %5465 = vrot.lane.b32.xlu0 %v5392, 6
      %v5466 = vpop.permute.xlu0 %5465
      %5467 = vrot.lane.b32.xlu0 %v5393, 6
      %v5468 = vpop.permute.xlu0 %5467
      %5469 = vrot.lane.b32.xlu0 %v5394, 6
      %v5470 = vpop.permute.xlu0 %5469
      %5471 = vrot.lane.b32.xlu0 %v5395, 6
      %v5472 = vpop.permute.xlu0 %5471
      %5473 = vrot.lane.b32.xlu0 %v5396, 6
      %v5474 = vpop.permute.xlu0 %5473
      %5475 = vrot.lane.b32.xlu0 %v5397, 6
      %v5476 = vpop.permute.xlu0 %5475
      %5477 = vrot.lane.b32.xlu0 %v5398, 6
      %v5478 = vpop.permute.xlu0 %5477
      %5479 = vrot.lane.b32.xlu0 %v5399, 6
      %v5480 = vpop.permute.xlu0 %5479
      %5481 = vrot.lane.b32.xlu0 %v5400, 6
      %v5482 = vpop.permute.xlu0 %5481
      %5483 = vrot.lane.b32.xlu0 %v5401, 6
      %v5484 = vpop.permute.xlu0 %5483
      %5485 = vrot.lane.b32.xlu0 %v5402, 6
      %v5486 = vpop.permute.xlu0 %5485
      %5487 = vrot.lane.b32.xlu0 %v5403, 6
      %v5488 = vpop.permute.xlu0 %5487
      %5489 = vrot.lane.b32.xlu0 %v5404, 6
      %v5490 = vpop.permute.xlu0 %5489
      %5491 = vrot.lane.b32.xlu0 %v5405, 6
      %v5492 = vpop.permute.xlu0 %5491
      %5493 = vrot.lane.b32.xlu0 %v5406, 6
      %v5494 = vpop.permute.xlu0 %5493
      %5495 = vrot.lane.b32.xlu0 %v5407, 6
      %v5496 = vpop.permute.xlu0 %5495
      %5497 = vrot.lane.b32.xlu0 %v5408, 6
      %v5498 = vpop.permute.xlu0 %5497
      %5499 = vrot.lane.b32.xlu0 %v5409, 6
      %v5500 = vpop.permute.xlu0 %5499
      %5501 = vrot.lane.b32.xlu0 %v5410, 6
      %v5502 = vpop.permute.xlu0 %5501
      %5503 = vrot.lane.b32.xlu0 %v5411, 6
      %v5504 = vpop.permute.xlu0 %5503
      %5505 = vrot.lane.b32.xlu0 %v5412, 6
      %v5506 = vpop.permute.xlu0 %5505
      %5507 = vrot.lane.b32.xlu0 %v5413, 6
      %v5508 = vpop.permute.xlu0 %5507
      %5509 = vrot.lane.b32.xlu0 %v5414, 6
      %v5510 = vpop.permute.xlu0 %5509
      %v5543 = vmul.f32 %v4095, %v5448
      %v5544 = vmul.f32 %v4096, %v5450
      %v5545 = vmul.f32 %v4097, %v5452
      %v5546 = vmul.f32 %v4098, %v5454
      %v5547 = vmul.f32 %v4099, %v5456
      %v5548 = vmul.f32 %v4100, %v5458
      %v5549 = vmul.f32 %v4101, %v5460
      %v5550 = vmul.f32 %v4102, %v5462
      %v5551 = vmul.f32 %v4103, %v5464
      %v5552 = vmul.f32 %v4104, %v5466
      %v5553 = vmul.f32 %v4105, %v5468
      %v5554 = vmul.f32 %v4106, %v5470
      %v5555 = vmul.f32 %v4107, %v5472
      %v5556 = vmul.f32 %v4108, %v5474
      %v5557 = vmul.f32 %v4109, %v5476
      %v5558 = vmul.f32 %v4110, %v5478
      %v5559 = vmul.f32 %v4111, %v5480
      %v5560 = vmul.f32 %v4112, %v5482
      %v5561 = vmul.f32 %v4113, %v5484
      %v5562 = vmul.f32 %v4114, %v5486
      %v5563 = vmul.f32 %v4115, %v5488
      %v5564 = vmul.f32 %v4116, %v5490
      %v5565 = vmul.f32 %v4117, %v5492
      %v5566 = vmul.f32 %v4118, %v5494
      %v5567 = vmul.f32 %v4119, %v5496
      %v5568 = vmul.f32 %v4120, %v5498
      %v5569 = vmul.f32 %v4121, %v5500
      %v5570 = vmul.f32 %v4122, %v5502
      %v5571 = vmul.f32 %v4123, %v5504
      %v5572 = vmul.f32 %v4124, %v5506
      %v5573 = vmul.f32 %v4125, %v5508
      %v5574 = vmul.f32 %v4126, %v5510
      %5607 = vrot.lane.b32.xlu0 %v5543, 6
      %v5608 = vpop.permute.xlu0 %5607
      %5609 = vrot.lane.b32.xlu0 %v5544, 6
      %v5610 = vpop.permute.xlu0 %5609
      %5611 = vrot.lane.b32.xlu0 %v5545, 6
      %v5612 = vpop.permute.xlu0 %5611
      %5613 = vrot.lane.b32.xlu0 %v5546, 6
      %v5614 = vpop.permute.xlu0 %5613
      %5615 = vrot.lane.b32.xlu0 %v5547, 6
      %v5616 = vpop.permute.xlu0 %5615
      %5617 = vrot.lane.b32.xlu0 %v5548, 6
      %v5618 = vpop.permute.xlu0 %5617
      %5619 = vrot.lane.b32.xlu0 %v5549, 6
      %v5620 = vpop.permute.xlu0 %5619
      %5621 = vrot.lane.b32.xlu0 %v5550, 6
      %v5622 = vpop.permute.xlu0 %5621
      %5623 = vrot.lane.b32.xlu0 %v5551, 6
      %v5624 = vpop.permute.xlu0 %5623
      %5625 = vrot.lane.b32.xlu0 %v5552, 6
      %v5626 = vpop.permute.xlu0 %5625
      %5627 = vrot.lane.b32.xlu0 %v5553, 6
      %v5628 = vpop.permute.xlu0 %5627
      %5629 = vrot.lane.b32.xlu0 %v5554, 6
      %v5630 = vpop.permute.xlu0 %5629
      %5631 = vrot.lane.b32.xlu0 %v5555, 6
      %v5632 = vpop.permute.xlu0 %5631
      %5633 = vrot.lane.b32.xlu0 %v5556, 6
      %v5634 = vpop.permute.xlu0 %5633
      %5635 = vrot.lane.b32.xlu0 %v5557, 6
      %v5636 = vpop.permute.xlu0 %5635
      %5637 = vrot.lane.b32.xlu0 %v5558, 6
      %v5638 = vpop.permute.xlu0 %5637
      %5639 = vrot.lane.b32.xlu0 %v5559, 6
      %v5640 = vpop.permute.xlu0 %5639
      %5641 = vrot.lane.b32.xlu0 %v5560, 6
      %v5642 = vpop.permute.xlu0 %5641
      %5643 = vrot.lane.b32.xlu0 %v5561, 6
      %v5644 = vpop.permute.xlu0 %5643
      %5645 = vrot.lane.b32.xlu0 %v5562, 6
      %v5646 = vpop.permute.xlu0 %5645
      %5647 = vrot.lane.b32.xlu0 %v5563, 6
      %v5648 = vpop.permute.xlu0 %5647
      %5649 = vrot.lane.b32.xlu0 %v5564, 6
      %v5650 = vpop.permute.xlu0 %5649
      %5651 = vrot.lane.b32.xlu0 %v5565, 6
      %v5652 = vpop.permute.xlu0 %5651
      %5653 = vrot.lane.b32.xlu0 %v5566, 6
      %v5654 = vpop.permute.xlu0 %5653
      %5655 = vrot.lane.b32.xlu0 %v5567, 6
      %v5656 = vpop.permute.xlu0 %5655
      %5657 = vrot.lane.b32.xlu0 %v5568, 6
      %v5658 = vpop.permute.xlu0 %5657
      %5659 = vrot.lane.b32.xlu0 %v5569, 6
      %v5660 = vpop.permute.xlu0 %5659
      %5661 = vrot.lane.b32.xlu0 %v5570, 6
      %v5662 = vpop.permute.xlu0 %5661
      %5663 = vrot.lane.b32.xlu0 %v5571, 6
      %v5664 = vpop.permute.xlu0 %5663
      %5665 = vrot.lane.b32.xlu0 %v5572, 6
      %v5666 = vpop.permute.xlu0 %5665
      %5667 = vrot.lane.b32.xlu0 %v5573, 6
      %v5668 = vpop.permute.xlu0 %5667
      %5669 = vrot.lane.b32.xlu0 %v5574, 6
      %v5670 = vpop.permute.xlu0 %5669
      %v5703 = vadd.f32 %v5125, %v5608
      %v5704 = vadd.f32 %v5126, %v5610
      %v5705 = vadd.f32 %v5127, %v5612
      %v5706 = vadd.f32 %v5128, %v5614
      %v5707 = vadd.f32 %v5129, %v5616
      %v5708 = vadd.f32 %v5130, %v5618
      %v5709 = vadd.f32 %v5131, %v5620
      %v5710 = vadd.f32 %v5132, %v5622
      %v5711 = vadd.f32 %v5133, %v5624
      %v5712 = vadd.f32 %v5134, %v5626
      %v5713 = vadd.f32 %v5135, %v5628
      %v5714 = vadd.f32 %v5136, %v5630
      %v5715 = vadd.f32 %v5137, %v5632
      %v5716 = vadd.f32 %v5138, %v5634
      %v5717 = vadd.f32 %v5139, %v5636
      %v5718 = vadd.f32 %v5140, %v5638
      %v5719 = vadd.f32 %v5141, %v5640
      %v5720 = vadd.f32 %v5142, %v5642
      %v5721 = vadd.f32 %v5143, %v5644
      %v5722 = vadd.f32 %v5144, %v5646
      %v5723 = vadd.f32 %v5145, %v5648
      %v5724 = vadd.f32 %v5146, %v5650
      %v5725 = vadd.f32 %v5147, %v5652
      %v5726 = vadd.f32 %v5148, %v5654
      %v5727 = vadd.f32 %v5149, %v5656
      %v5728 = vadd.f32 %v5150, %v5658
      %v5729 = vadd.f32 %v5151, %v5660
      %v5730 = vadd.f32 %v5152, %v5662
      %v5731 = vadd.f32 %v5153, %v5664
      %v5732 = vadd.f32 %v5154, %v5666
      %v5733 = vadd.f32 %v5155, %v5668
      %v5734 = vadd.f32 %v5156, %v5670
      %v5735 = vadd.f32 %v250, 1.0
      %v5736 = vadd.f32 %v251, 1.0
      %v5737 = vadd.f32 %v252, 1.0
      %v5738 = vadd.f32 %v253, 1.0
      %v5739 = vadd.f32 %v254, 1.0
      %v5740 = vadd.f32 %v255, 1.0
      %v5741 = vadd.f32 %v256, 1.0
      %v5742 = vadd.f32 %v257, 1.0
      %v5743 = vadd.f32 %v258, 1.0
      %v5744 = vadd.f32 %v259, 1.0
      %v5745 = vadd.f32 %v260, 1.0
      %v5746 = vadd.f32 %v261, 1.0
      %v5747 = vadd.f32 %v262, 1.0
      %v5748 = vadd.f32 %v263, 1.0
      %v5749 = vadd.f32 %v264, 1.0
      %v5750 = vadd.f32 %v265, 1.0
      %v5751 = vadd.f32 %v266, 1.0
      %v5752 = vadd.f32 %v267, 1.0
      %v5753 = vadd.f32 %v268, 1.0
      %v5754 = vadd.f32 %v269, 1.0
      %v5755 = vadd.f32 %v270, 1.0
      %v5756 = vadd.f32 %v271, 1.0
      %v5757 = vadd.f32 %v272, 1.0
      %v5758 = vadd.f32 %v273, 1.0
      %v5759 = vadd.f32 %v274, 1.0
      %v5760 = vadd.f32 %v275, 1.0
      %v5761 = vadd.f32 %v276, 1.0
      %v5762 = vadd.f32 %v277, 1.0
      %v5763 = vadd.f32 %v278, 1.0
      %v5764 = vadd.f32 %v279, 1.0
      %v5765 = vadd.f32 %v280, 1.0
      %v5766 = vadd.f32 %v281, 1.0
      %vm5767 = vcmp.ge.f32.partialorder %v5735, 0.0
      %vm5768 = vcmp.ge.f32.partialorder %v5736, 0.0
      %vm5769 = vcmp.ge.f32.partialorder %v5737, 0.0
      %vm5770 = vcmp.ge.f32.partialorder %v5738, 0.0
      %vm5771 = vcmp.ge.f32.partialorder %v5739, 0.0
      %vm5772 = vcmp.ge.f32.partialorder %v5740, 0.0
      %vm5773 = vcmp.ge.f32.partialorder %v5741, 0.0
      %vm5774 = vcmp.ge.f32.partialorder %v5742, 0.0
      %vm5775 = vcmp.ge.f32.partialorder %v5743, 0.0
      %vm5776 = vcmp.ge.f32.partialorder %v5744, 0.0
      %vm5777 = vcmp.ge.f32.partialorder %v5745, 0.0
      %vm5778 = vcmp.ge.f32.partialorder %v5746, 0.0
      %vm5779 = vcmp.ge.f32.partialorder %v5747, 0.0
      %vm5780 = vcmp.ge.f32.partialorder %v5748, 0.0
      %vm5781 = vcmp.ge.f32.partialorder %v5749, 0.0
      %vm5782 = vcmp.ge.f32.partialorder %v5750, 0.0
      %vm5783 = vcmp.ge.f32.partialorder %v5751, 0.0
      %vm5784 = vcmp.ge.f32.partialorder %v5752, 0.0
      %vm5785 = vcmp.ge.f32.partialorder %v5753, 0.0
      %vm5786 = vcmp.ge.f32.partialorder %v5754, 0.0
      %vm5787 = vcmp.ge.f32.partialorder %v5755, 0.0
      %vm5788 = vcmp.ge.f32.partialorder %v5756, 0.0
      %vm5789 = vcmp.ge.f32.partialorder %v5757, 0.0
      %vm5790 = vcmp.ge.f32.partialorder %v5758, 0.0
      %vm5791 = vcmp.ge.f32.partialorder %v5759, 0.0
      %vm5792 = vcmp.ge.f32.partialorder %v5760, 0.0
      %vm5793 = vcmp.ge.f32.partialorder %v5761, 0.0
      %vm5794 = vcmp.ge.f32.partialorder %v5762, 0.0
      %vm5795 = vcmp.ge.f32.partialorder %v5763, 0.0
      %vm5796 = vcmp.ge.f32.partialorder %v5764, 0.0
      %vm5797 = vcmp.ge.f32.partialorder %v5765, 0.0
      %vm5798 = vcmp.ge.f32.partialorder %v5766, 0.0
      %vm5799 = vcmp.lt.f32.partialorder %v5735, 16.0
      %vm5800 = vcmp.lt.f32.partialorder %v5736, 16.0
      %vm5801 = vcmp.lt.f32.partialorder %v5737, 16.0
      %vm5802 = vcmp.lt.f32.partialorder %v5738, 16.0
      %vm5803 = vcmp.lt.f32.partialorder %v5739, 16.0
      %vm5804 = vcmp.lt.f32.partialorder %v5740, 16.0
      %vm5805 = vcmp.lt.f32.partialorder %v5741, 16.0
      %vm5806 = vcmp.lt.f32.partialorder %v5742, 16.0
      %vm5807 = vcmp.lt.f32.partialorder %v5743, 16.0
      %vm5808 = vcmp.lt.f32.partialorder %v5744, 16.0
      %vm5809 = vcmp.lt.f32.partialorder %v5745, 16.0
      %vm5810 = vcmp.lt.f32.partialorder %v5746, 16.0
      %vm5811 = vcmp.lt.f32.partialorder %v5747, 16.0
      %vm5812 = vcmp.lt.f32.partialorder %v5748, 16.0
      %vm5813 = vcmp.lt.f32.partialorder %v5749, 16.0
      %vm5814 = vcmp.lt.f32.partialorder %v5750, 16.0
      %vm5815 = vcmp.lt.f32.partialorder %v5751, 16.0
      %vm5816 = vcmp.lt.f32.partialorder %v5752, 16.0
      %vm5817 = vcmp.lt.f32.partialorder %v5753, 16.0
      %vm5818 = vcmp.lt.f32.partialorder %v5754, 16.0
      %vm5819 = vcmp.lt.f32.partialorder %v5755, 16.0
      %vm5820 = vcmp.lt.f32.partialorder %v5756, 16.0
      %vm5821 = vcmp.lt.f32.partialorder %v5757, 16.0
      %vm5822 = vcmp.lt.f32.partialorder %v5758, 16.0
      %vm5823 = vcmp.lt.f32.partialorder %v5759, 16.0
      %vm5824 = vcmp.lt.f32.partialorder %v5760, 16.0
      %vm5825 = vcmp.lt.f32.partialorder %v5761, 16.0
      %vm5826 = vcmp.lt.f32.partialorder %v5762, 16.0
      %vm5827 = vcmp.lt.f32.partialorder %v5763, 16.0
      %vm5828 = vcmp.lt.f32.partialorder %v5764, 16.0
      %vm5829 = vcmp.lt.f32.partialorder %v5765, 16.0
      %vm5830 = vcmp.lt.f32.partialorder %v5766, 16.0
      %vm5831 = vmand %vm5767, %vm5799
      %vm5832 = vmand %vm5768, %vm5800
      %vm5833 = vmand %vm5769, %vm5801
      %vm5834 = vmand %vm5770, %vm5802
      %vm5835 = vmand %vm5771, %vm5803
      %vm5836 = vmand %vm5772, %vm5804
      %vm5837 = vmand %vm5773, %vm5805
      %vm5838 = vmand %vm5774, %vm5806
      %vm5839 = vmand %vm5775, %vm5807
      %vm5840 = vmand %vm5776, %vm5808
      %vm5841 = vmand %vm5777, %vm5809
      %vm5842 = vmand %vm5778, %vm5810
      %vm5843 = vmand %vm5779, %vm5811
      %vm5844 = vmand %vm5780, %vm5812
      %vm5845 = vmand %vm5781, %vm5813
      %vm5846 = vmand %vm5782, %vm5814
      %vm5847 = vmand %vm5783, %vm5815
      %vm5848 = vmand %vm5784, %vm5816
      %vm5849 = vmand %vm5785, %vm5817
      %vm5850 = vmand %vm5786, %vm5818
      %vm5851 = vmand %vm5787, %vm5819
      %vm5852 = vmand %vm5788, %vm5820
      %vm5853 = vmand %vm5789, %vm5821
      %vm5854 = vmand %vm5790, %vm5822
      %vm5855 = vmand %vm5791, %vm5823
      %vm5856 = vmand %vm5792, %vm5824
      %vm5857 = vmand %vm5793, %vm5825
      %vm5858 = vmand %vm5794, %vm5826
      %vm5859 = vmand %vm5795, %vm5827
      %vm5860 = vmand %vm5796, %vm5828
      %vm5861 = vmand %vm5797, %vm5829
      %vm5862 = vmand %vm5798, %vm5830
      %v5863 = vsub.f32 %v353, 1.0
      %vm5864 = vcmp.ge.f32.partialorder %v5863, 0.0
      %vm5865 = vmand %vm5831, %vm5864
      %vm5866 = vmand %vm5832, %vm5864
      %vm5867 = vmand %vm5833, %vm5864
      %vm5868 = vmand %vm5834, %vm5864
      %vm5869 = vmand %vm5835, %vm5864
      %vm5870 = vmand %vm5836, %vm5864
      %vm5871 = vmand %vm5837, %vm5864
      %vm5872 = vmand %vm5838, %vm5864
      %vm5873 = vmand %vm5839, %vm5864
      %vm5874 = vmand %vm5840, %vm5864
      %vm5875 = vmand %vm5841, %vm5864
      %vm5876 = vmand %vm5842, %vm5864
      %vm5877 = vmand %vm5843, %vm5864
      %vm5878 = vmand %vm5844, %vm5864
      %vm5879 = vmand %vm5845, %vm5864
      %vm5880 = vmand %vm5846, %vm5864
      %vm5881 = vmand %vm5847, %vm5864
      %vm5882 = vmand %vm5848, %vm5864
      %vm5883 = vmand %vm5849, %vm5864
      %vm5884 = vmand %vm5850, %vm5864
      %vm5885 = vmand %vm5851, %vm5864
      %vm5886 = vmand %vm5852, %vm5864
      %vm5887 = vmand %vm5853, %vm5864
      %vm5888 = vmand %vm5854, %vm5864
      %vm5889 = vmand %vm5855, %vm5864
      %vm5890 = vmand %vm5856, %vm5864
      %vm5891 = vmand %vm5857, %vm5864
      %vm5892 = vmand %vm5858, %vm5864
      %vm5893 = vmand %vm5859, %vm5864
      %vm5894 = vmand %vm5860, %vm5864
      %vm5895 = vmand %vm5861, %vm5864
      %vm5896 = vmand %vm5862, %vm5864
      %vm5897 = vcmp.lt.f32.partialorder %v5863, 3.0
      %vm5898 = vmand %vm5865, %vm5897
      %vm5899 = vmand %vm5866, %vm5897
      %vm5900 = vmand %vm5867, %vm5897
      %vm5901 = vmand %vm5868, %vm5897
      %vm5902 = vmand %vm5869, %vm5897
      %vm5903 = vmand %vm5870, %vm5897
      %vm5904 = vmand %vm5871, %vm5897
      %vm5905 = vmand %vm5872, %vm5897
      %vm5906 = vmand %vm5873, %vm5897
      %vm5907 = vmand %vm5874, %vm5897
      %vm5908 = vmand %vm5875, %vm5897
      %vm5909 = vmand %vm5876, %vm5897
      %vm5910 = vmand %vm5877, %vm5897
      %vm5911 = vmand %vm5878, %vm5897
      %vm5912 = vmand %vm5879, %vm5897
      %vm5913 = vmand %vm5880, %vm5897
      %vm5914 = vmand %vm5881, %vm5897
      %vm5915 = vmand %vm5882, %vm5897
      %vm5916 = vmand %vm5883, %vm5897
      %vm5917 = vmand %vm5884, %vm5897
      %vm5918 = vmand %vm5885, %vm5897
      %vm5919 = vmand %vm5886, %vm5897
      %vm5920 = vmand %vm5887, %vm5897
      %vm5921 = vmand %vm5888, %vm5897
      %vm5922 = vmand %vm5889, %vm5897
      %vm5923 = vmand %vm5890, %vm5897
      %vm5924 = vmand %vm5891, %vm5897
      %vm5925 = vmand %vm5892, %vm5897
      %vm5926 = vmand %vm5893, %vm5897
      %vm5927 = vmand %vm5894, %vm5897
      %vm5928 = vmand %vm5895, %vm5897
      %vm5929 = vmand %vm5896, %vm5897
      %v5930 = vsel %vm5898, 1, 0
      %v5931 = vsel %vm5899, 1, 0
      %v5932 = vsel %vm5900, 1, 0
      %v5933 = vsel %vm5901, 1, 0
      %v5934 = vsel %vm5902, 1, 0
      %v5935 = vsel %vm5903, 1, 0
      %v5936 = vsel %vm5904, 1, 0
      %v5937 = vsel %vm5905, 1, 0
      %v5938 = vsel %vm5906, 1, 0
      %v5939 = vsel %vm5907, 1, 0
      %v5940 = vsel %vm5908, 1, 0
      %v5941 = vsel %vm5909, 1, 0
      %v5942 = vsel %vm5910, 1, 0
      %v5943 = vsel %vm5911, 1, 0
      %v5944 = vsel %vm5912, 1, 0
      %v5945 = vsel %vm5913, 1, 0
      %v5946 = vsel %vm5914, 1, 0
      %v5947 = vsel %vm5915, 1, 0
      %v5948 = vsel %vm5916, 1, 0
      %v5949 = vsel %vm5917, 1, 0
      %v5950 = vsel %vm5918, 1, 0
      %v5951 = vsel %vm5919, 1, 0
      %v5952 = vsel %vm5920, 1, 0
      %v5953 = vsel %vm5921, 1, 0
      %v5954 = vsel %vm5922, 1, 0
      %v5955 = vsel %vm5923, 1, 0
      %v5956 = vsel %vm5924, 1, 0
      %v5957 = vsel %vm5925, 1, 0
      %v5958 = vsel %vm5926, 1, 0
      %v5959 = vsel %vm5927, 1, 0
      %v5960 = vsel %vm5928, 1, 0
      %v5961 = vsel %vm5929, 1, 0
      %v5962 = vcvt.s32.f32 %v5930
      %v5963 = vcvt.s32.f32 %v5931
      %v5964 = vcvt.s32.f32 %v5932
      %v5965 = vcvt.s32.f32 %v5933
      %v5966 = vcvt.s32.f32 %v5934
      %v5967 = vcvt.s32.f32 %v5935
      %v5968 = vcvt.s32.f32 %v5936
      %v5969 = vcvt.s32.f32 %v5937
      %v5970 = vcvt.s32.f32 %v5938
      %v5971 = vcvt.s32.f32 %v5939
      %v5972 = vcvt.s32.f32 %v5940
      %v5973 = vcvt.s32.f32 %v5941
      %v5974 = vcvt.s32.f32 %v5942
      %v5975 = vcvt.s32.f32 %v5943
      %v5976 = vcvt.s32.f32 %v5944
      %v5977 = vcvt.s32.f32 %v5945
      %v5978 = vcvt.s32.f32 %v5946
      %v5979 = vcvt.s32.f32 %v5947
      %v5980 = vcvt.s32.f32 %v5948
      %v5981 = vcvt.s32.f32 %v5949
      %v5982 = vcvt.s32.f32 %v5950
      %v5983 = vcvt.s32.f32 %v5951
      %v5984 = vcvt.s32.f32 %v5952
      %v5985 = vcvt.s32.f32 %v5953
      %v5986 = vcvt.s32.f32 %v5954
      %v5987 = vcvt.s32.f32 %v5955
      %v5988 = vcvt.s32.f32 %v5956
      %v5989 = vcvt.s32.f32 %v5957
      %v5990 = vcvt.s32.f32 %v5958
      %v5991 = vcvt.s32.f32 %v5959
      %v5992 = vcvt.s32.f32 %v5960
      %v5993 = vcvt.s32.f32 %v5961
      %6026 = vrot.lane.b32.xlu0 %v5962, 3
      %v6027 = vpop.permute.xlu0 %6026
      %6028 = vrot.lane.b32.xlu0 %v5963, 3
      %v6029 = vpop.permute.xlu0 %6028
      %6030 = vrot.lane.b32.xlu0 %v5964, 3
      %v6031 = vpop.permute.xlu0 %6030
      %6032 = vrot.lane.b32.xlu0 %v5965, 3
      %v6033 = vpop.permute.xlu0 %6032
      %6034 = vrot.lane.b32.xlu0 %v5966, 3
      %v6035 = vpop.permute.xlu0 %6034
      %6036 = vrot.lane.b32.xlu0 %v5967, 3
      %v6037 = vpop.permute.xlu0 %6036
      %6038 = vrot.lane.b32.xlu0 %v5968, 3
      %v6039 = vpop.permute.xlu0 %6038
      %6040 = vrot.lane.b32.xlu0 %v5969, 3
      %v6041 = vpop.permute.xlu0 %6040
      %6042 = vrot.lane.b32.xlu0 %v5970, 3
      %v6043 = vpop.permute.xlu0 %6042
      %6044 = vrot.lane.b32.xlu0 %v5971, 3
      %v6045 = vpop.permute.xlu0 %6044
      %6046 = vrot.lane.b32.xlu0 %v5972, 3
      %v6047 = vpop.permute.xlu0 %6046
      %6048 = vrot.lane.b32.xlu0 %v5973, 3
      %v6049 = vpop.permute.xlu0 %6048
      %6050 = vrot.lane.b32.xlu0 %v5974, 3
      %v6051 = vpop.permute.xlu0 %6050
      %6052 = vrot.lane.b32.xlu0 %v5975, 3
      %v6053 = vpop.permute.xlu0 %6052
      %6054 = vrot.lane.b32.xlu0 %v5976, 3
      %v6055 = vpop.permute.xlu0 %6054
      %6056 = vrot.lane.b32.xlu0 %v5977, 3
      %v6057 = vpop.permute.xlu0 %6056
      %6058 = vrot.lane.b32.xlu0 %v5978, 3
      %v6059 = vpop.permute.xlu0 %6058
      %6060 = vrot.lane.b32.xlu0 %v5979, 3
      %v6061 = vpop.permute.xlu0 %6060
      %6062 = vrot.lane.b32.xlu0 %v5980, 3
      %v6063 = vpop.permute.xlu0 %6062
      %6064 = vrot.lane.b32.xlu0 %v5981, 3
      %v6065 = vpop.permute.xlu0 %6064
      %6066 = vrot.lane.b32.xlu0 %v5982, 3
      %v6067 = vpop.permute.xlu0 %6066
      %6068 = vrot.lane.b32.xlu0 %v5983, 3
      %v6069 = vpop.permute.xlu0 %6068
      %6070 = vrot.lane.b32.xlu0 %v5984, 3
      %v6071 = vpop.permute.xlu0 %6070
      %6072 = vrot.lane.b32.xlu0 %v5985, 3
      %v6073 = vpop.permute.xlu0 %6072
      %6074 = vrot.lane.b32.xlu0 %v5986, 3
      %v6075 = vpop.permute.xlu0 %6074
      %6076 = vrot.lane.b32.xlu0 %v5987, 3
      %v6077 = vpop.permute.xlu0 %6076
      %6078 = vrot.lane.b32.xlu0 %v5988, 3
      %v6079 = vpop.permute.xlu0 %6078
      %6080 = vrot.lane.b32.xlu0 %v5989, 3
      %v6081 = vpop.permute.xlu0 %6080
      %6082 = vrot.lane.b32.xlu0 %v5990, 3
      %v6083 = vpop.permute.xlu0 %6082
      %6084 = vrot.lane.b32.xlu0 %v5991, 3
      %v6085 = vpop.permute.xlu0 %6084
      %6086 = vrot.lane.b32.xlu0 %v5992, 3
      %v6087 = vpop.permute.xlu0 %6086
      %6088 = vrot.lane.b32.xlu0 %v5993, 3
      %v6089 = vpop.permute.xlu0 %6088
      %v6122 = vmul.f32 %v4097, %v6027
      %v6123 = vmul.f32 %v4098, %v6029
      %v6124 = vmul.f32 %v4099, %v6031
      %v6125 = vmul.f32 %v4100, %v6033
      %v6126 = vmul.f32 %v4101, %v6035
      %v6127 = vmul.f32 %v4102, %v6037
      %v6128 = vmul.f32 %v4103, %v6039
      %v6129 = vmul.f32 %v4104, %v6041
      %v6130 = vmul.f32 %v4105, %v6043
      %v6131 = vmul.f32 %v4106, %v6045
      %v6132 = vmul.f32 %v4107, %v6047
      %v6133 = vmul.f32 %v4108, %v6049
      %v6134 = vmul.f32 %v4109, %v6051
      %v6135 = vmul.f32 %v4110, %v6053
      %v6136 = vmul.f32 %v4111, %v6055
      %v6137 = vmul.f32 %v4112, %v6057
      %v6138 = vmul.f32 %v4113, %v6059
      %v6139 = vmul.f32 %v4114, %v6061
      %v6140 = vmul.f32 %v4115, %v6063
      %v6141 = vmul.f32 %v4116, %v6065
      %v6142 = vmul.f32 %v4117, %v6067
      %v6143 = vmul.f32 %v4118, %v6069
      %v6144 = vmul.f32 %v4119, %v6071
      %v6145 = vmul.f32 %v4120, %v6073
      %v6146 = vmul.f32 %v4121, %v6075
      %v6147 = vmul.f32 %v4122, %v6077
      %v6148 = vmul.f32 %v4123, %v6079
      %v6149 = vmul.f32 %v4124, %v6081
      %v6150 = vmul.f32 %v4125, %v6083
      %v6151 = vmul.f32 %v4126, %v6085
      %v6152 = vmul.f32 %v4094, %v6087
      %v6153 = vmul.f32 %v4094, %v6089
      %6186 = vrot.lane.b32.xlu0 %v6122, 9
      %v6187 = vpop.permute.xlu0 %6186
      %6188 = vrot.lane.b32.xlu0 %v6123, 9
      %v6189 = vpop.permute.xlu0 %6188
      %6190 = vrot.lane.b32.xlu0 %v6124, 9
      %v6191 = vpop.permute.xlu0 %6190
      %6192 = vrot.lane.b32.xlu0 %v6125, 9
      %v6193 = vpop.permute.xlu0 %6192
      %6194 = vrot.lane.b32.xlu0 %v6126, 9
      %v6195 = vpop.permute.xlu0 %6194
      %6196 = vrot.lane.b32.xlu0 %v6127, 9
      %v6197 = vpop.permute.xlu0 %6196
      %6198 = vrot.lane.b32.xlu0 %v6128, 9
      %v6199 = vpop.permute.xlu0 %6198
      %6200 = vrot.lane.b32.xlu0 %v6129, 9
      %v6201 = vpop.permute.xlu0 %6200
      %6202 = vrot.lane.b32.xlu0 %v6130, 9
      %v6203 = vpop.permute.xlu0 %6202
      %6204 = vrot.lane.b32.xlu0 %v6131, 9
      %v6205 = vpop.permute.xlu0 %6204
      %6206 = vrot.lane.b32.xlu0 %v6132, 9
      %v6207 = vpop.permute.xlu0 %6206
      %6208 = vrot.lane.b32.xlu0 %v6133, 9
      %v6209 = vpop.permute.xlu0 %6208
      %6210 = vrot.lane.b32.xlu0 %v6134, 9
      %v6211 = vpop.permute.xlu0 %6210
      %6212 = vrot.lane.b32.xlu0 %v6135, 9
      %v6213 = vpop.permute.xlu0 %6212
      %6214 = vrot.lane.b32.xlu0 %v6136, 9
      %v6215 = vpop.permute.xlu0 %6214
      %6216 = vrot.lane.b32.xlu0 %v6137, 9
      %v6217 = vpop.permute.xlu0 %6216
      %6218 = vrot.lane.b32.xlu0 %v6138, 9
      %v6219 = vpop.permute.xlu0 %6218
      %6220 = vrot.lane.b32.xlu0 %v6139, 9
      %v6221 = vpop.permute.xlu0 %6220
      %6222 = vrot.lane.b32.xlu0 %v6140, 9
      %v6223 = vpop.permute.xlu0 %6222
      %6224 = vrot.lane.b32.xlu0 %v6141, 9
      %v6225 = vpop.permute.xlu0 %6224
      %6226 = vrot.lane.b32.xlu0 %v6142, 9
      %v6227 = vpop.permute.xlu0 %6226
      %6228 = vrot.lane.b32.xlu0 %v6143, 9
      %v6229 = vpop.permute.xlu0 %6228
      %6230 = vrot.lane.b32.xlu0 %v6144, 9
      %v6231 = vpop.permute.xlu0 %6230
      %6232 = vrot.lane.b32.xlu0 %v6145, 9
      %v6233 = vpop.permute.xlu0 %6232
      %6234 = vrot.lane.b32.xlu0 %v6146, 9
      %v6235 = vpop.permute.xlu0 %6234
      %6236 = vrot.lane.b32.xlu0 %v6147, 9
      %v6237 = vpop.permute.xlu0 %6236
      %6238 = vrot.lane.b32.xlu0 %v6148, 9
      %v6239 = vpop.permute.xlu0 %6238
      %6240 = vrot.lane.b32.xlu0 %v6149, 9
      %v6241 = vpop.permute.xlu0 %6240
      %6242 = vrot.lane.b32.xlu0 %v6150, 9
      %v6243 = vpop.permute.xlu0 %6242
      %6244 = vrot.lane.b32.xlu0 %v6151, 9
      %v6245 = vpop.permute.xlu0 %6244
      %6246 = vrot.lane.b32.xlu0 %v6152, 9
      %v6247 = vpop.permute.xlu0 %6246
      %6248 = vrot.lane.b32.xlu0 %v6153, 9
      %v6249 = vpop.permute.xlu0 %6248
      %v6282 = vadd.f32 %v5703, %v6187
      %v6283 = vadd.f32 %v5704, %v6189
      %v6284 = vadd.f32 %v5705, %v6191
      %v6285 = vadd.f32 %v5706, %v6193
      %v6286 = vadd.f32 %v5707, %v6195
      %v6287 = vadd.f32 %v5708, %v6197
      %v6288 = vadd.f32 %v5709, %v6199
      %v6289 = vadd.f32 %v5710, %v6201
      %v6290 = vadd.f32 %v5711, %v6203
      %v6291 = vadd.f32 %v5712, %v6205
      %v6292 = vadd.f32 %v5713, %v6207
      %v6293 = vadd.f32 %v5714, %v6209
      %v6294 = vadd.f32 %v5715, %v6211
      %v6295 = vadd.f32 %v5716, %v6213
      %v6296 = vadd.f32 %v5717, %v6215
      %v6297 = vadd.f32 %v5718, %v6217
      %v6298 = vadd.f32 %v5719, %v6219
      %v6299 = vadd.f32 %v5720, %v6221
      %v6300 = vadd.f32 %v5721, %v6223
      %v6301 = vadd.f32 %v5722, %v6225
      %v6302 = vadd.f32 %v5723, %v6227
      %v6303 = vadd.f32 %v5724, %v6229
      %v6304 = vadd.f32 %v5725, %v6231
      %v6305 = vadd.f32 %v5726, %v6233
      %v6306 = vadd.f32 %v5727, %v6235
      %v6307 = vadd.f32 %v5728, %v6237
      %v6308 = vadd.f32 %v5729, %v6239
      %v6309 = vadd.f32 %v5730, %v6241
      %v6310 = vadd.f32 %v5731, %v6243
      %v6311 = vadd.f32 %v5732, %v6245
      %v6312 = vadd.f32 %v5733, %v6247
      %v6313 = vadd.f32 %v5734, %v6249
      %v6314 = vadd.f32 %v250, 2.0
      %v6315 = vadd.f32 %v251, 2.0
      %v6316 = vadd.f32 %v252, 2.0
      %v6317 = vadd.f32 %v253, 2.0
      %v6318 = vadd.f32 %v254, 2.0
      %v6319 = vadd.f32 %v255, 2.0
      %v6320 = vadd.f32 %v256, 2.0
      %v6321 = vadd.f32 %v257, 2.0
      %v6322 = vadd.f32 %v258, 2.0
      %v6323 = vadd.f32 %v259, 2.0
      %v6324 = vadd.f32 %v260, 2.0
      %v6325 = vadd.f32 %v261, 2.0
      %v6326 = vadd.f32 %v262, 2.0
      %v6327 = vadd.f32 %v263, 2.0
      %v6328 = vadd.f32 %v264, 2.0
      %v6329 = vadd.f32 %v265, 2.0
      %v6330 = vadd.f32 %v266, 2.0
      %v6331 = vadd.f32 %v267, 2.0
      %v6332 = vadd.f32 %v268, 2.0
      %v6333 = vadd.f32 %v269, 2.0
      %v6334 = vadd.f32 %v270, 2.0
      %v6335 = vadd.f32 %v271, 2.0
      %v6336 = vadd.f32 %v272, 2.0
      %v6337 = vadd.f32 %v273, 2.0
      %v6338 = vadd.f32 %v274, 2.0
      %v6339 = vadd.f32 %v275, 2.0
      %v6340 = vadd.f32 %v276, 2.0
      %v6341 = vadd.f32 %v277, 2.0
      %v6342 = vadd.f32 %v278, 2.0
      %v6343 = vadd.f32 %v279, 2.0
      %v6344 = vadd.f32 %v280, 2.0
      %v6345 = vadd.f32 %v281, 2.0
      %vm6346 = vcmp.ge.f32.partialorder %v6314, 0.0
      %vm6347 = vcmp.ge.f32.partialorder %v6315, 0.0
      %vm6348 = vcmp.ge.f32.partialorder %v6316, 0.0
      %vm6349 = vcmp.ge.f32.partialorder %v6317, 0.0
      %vm6350 = vcmp.ge.f32.partialorder %v6318, 0.0
      %vm6351 = vcmp.ge.f32.partialorder %v6319, 0.0
      %vm6352 = vcmp.ge.f32.partialorder %v6320, 0.0
      %vm6353 = vcmp.ge.f32.partialorder %v6321, 0.0
      %vm6354 = vcmp.ge.f32.partialorder %v6322, 0.0
      %vm6355 = vcmp.ge.f32.partialorder %v6323, 0.0
      %vm6356 = vcmp.ge.f32.partialorder %v6324, 0.0
      %vm6357 = vcmp.ge.f32.partialorder %v6325, 0.0
      %vm6358 = vcmp.ge.f32.partialorder %v6326, 0.0
      %vm6359 = vcmp.ge.f32.partialorder %v6327, 0.0
      %vm6360 = vcmp.ge.f32.partialorder %v6328, 0.0
      %vm6361 = vcmp.ge.f32.partialorder %v6329, 0.0
      %vm6362 = vcmp.ge.f32.partialorder %v6330, 0.0
      %vm6363 = vcmp.ge.f32.partialorder %v6331, 0.0
      %vm6364 = vcmp.ge.f32.partialorder %v6332, 0.0
      %vm6365 = vcmp.ge.f32.partialorder %v6333, 0.0
      %vm6366 = vcmp.ge.f32.partialorder %v6334, 0.0
      %vm6367 = vcmp.ge.f32.partialorder %v6335, 0.0
      %vm6368 = vcmp.ge.f32.partialorder %v6336, 0.0
      %vm6369 = vcmp.ge.f32.partialorder %v6337, 0.0
      %vm6370 = vcmp.ge.f32.partialorder %v6338, 0.0
      %vm6371 = vcmp.ge.f32.partialorder %v6339, 0.0
      %vm6372 = vcmp.ge.f32.partialorder %v6340, 0.0
      %vm6373 = vcmp.ge.f32.partialorder %v6341, 0.0
      %vm6374 = vcmp.ge.f32.partialorder %v6342, 0.0
      %vm6375 = vcmp.ge.f32.partialorder %v6343, 0.0
      %vm6376 = vcmp.ge.f32.partialorder %v6344, 0.0
      %vm6377 = vcmp.ge.f32.partialorder %v6345, 0.0
      %vm6378 = vcmp.lt.f32.partialorder %v6314, 16.0
      %vm6379 = vcmp.lt.f32.partialorder %v6315, 16.0
      %vm6380 = vcmp.lt.f32.partialorder %v6316, 16.0
      %vm6381 = vcmp.lt.f32.partialorder %v6317, 16.0
      %vm6382 = vcmp.lt.f32.partialorder %v6318, 16.0
      %vm6383 = vcmp.lt.f32.partialorder %v6319, 16.0
      %vm6384 = vcmp.lt.f32.partialorder %v6320, 16.0
      %vm6385 = vcmp.lt.f32.partialorder %v6321, 16.0
      %vm6386 = vcmp.lt.f32.partialorder %v6322, 16.0
      %vm6387 = vcmp.lt.f32.partialorder %v6323, 16.0
      %vm6388 = vcmp.lt.f32.partialorder %v6324, 16.0
      %vm6389 = vcmp.lt.f32.partialorder %v6325, 16.0
      %vm6390 = vcmp.lt.f32.partialorder %v6326, 16.0
      %vm6391 = vcmp.lt.f32.partialorder %v6327, 16.0
      %vm6392 = vcmp.lt.f32.partialorder %v6328, 16.0
      %vm6393 = vcmp.lt.f32.partialorder %v6329, 16.0
      %vm6394 = vcmp.lt.f32.partialorder %v6330, 16.0
      %vm6395 = vcmp.lt.f32.partialorder %v6331, 16.0
      %vm6396 = vcmp.lt.f32.partialorder %v6332, 16.0
      %vm6397 = vcmp.lt.f32.partialorder %v6333, 16.0
      %vm6398 = vcmp.lt.f32.partialorder %v6334, 16.0
      %vm6399 = vcmp.lt.f32.partialorder %v6335, 16.0
      %vm6400 = vcmp.lt.f32.partialorder %v6336, 16.0
      %vm6401 = vcmp.lt.f32.partialorder %v6337, 16.0
      %vm6402 = vcmp.lt.f32.partialorder %v6338, 16.0
      %vm6403 = vcmp.lt.f32.partialorder %v6339, 16.0
      %vm6404 = vcmp.lt.f32.partialorder %v6340, 16.0
      %vm6405 = vcmp.lt.f32.partialorder %v6341, 16.0
      %vm6406 = vcmp.lt.f32.partialorder %v6342, 16.0
      %vm6407 = vcmp.lt.f32.partialorder %v6343, 16.0
      %vm6408 = vcmp.lt.f32.partialorder %v6344, 16.0
      %vm6409 = vcmp.lt.f32.partialorder %v6345, 16.0
      %vm6410 = vmand %vm6346, %vm6378
      %vm6411 = vmand %vm6347, %vm6379
      %vm6412 = vmand %vm6348, %vm6380
      %vm6413 = vmand %vm6349, %vm6381
      %vm6414 = vmand %vm6350, %vm6382
      %vm6415 = vmand %vm6351, %vm6383
      %vm6416 = vmand %vm6352, %vm6384
      %vm6417 = vmand %vm6353, %vm6385
      %vm6418 = vmand %vm6354, %vm6386
      %vm6419 = vmand %vm6355, %vm6387
      %vm6420 = vmand %vm6356, %vm6388
      %vm6421 = vmand %vm6357, %vm6389
      %vm6422 = vmand %vm6358, %vm6390
      %vm6423 = vmand %vm6359, %vm6391
      %vm6424 = vmand %vm6360, %vm6392
      %vm6425 = vmand %vm6361, %vm6393
      %vm6426 = vmand %vm6362, %vm6394
      %vm6427 = vmand %vm6363, %vm6395
      %vm6428 = vmand %vm6364, %vm6396
      %vm6429 = vmand %vm6365, %vm6397
      %vm6430 = vmand %vm6366, %vm6398
      %vm6431 = vmand %vm6367, %vm6399
      %vm6432 = vmand %vm6368, %vm6400
      %vm6433 = vmand %vm6369, %vm6401
      %vm6434 = vmand %vm6370, %vm6402
      %vm6435 = vmand %vm6371, %vm6403
      %vm6436 = vmand %vm6372, %vm6404
      %vm6437 = vmand %vm6373, %vm6405
      %vm6438 = vmand %vm6374, %vm6406
      %vm6439 = vmand %vm6375, %vm6407
      %vm6440 = vmand %vm6376, %vm6408
      %vm6441 = vmand %vm6377, %vm6409
      %v6442 = vsub.f32 %v353, 2.0
      %vm6443 = vcmp.ge.f32.partialorder %v6442, 0.0
      %vm6444 = vmand %vm6410, %vm6443
      %vm6445 = vmand %vm6411, %vm6443
      %vm6446 = vmand %vm6412, %vm6443
      %vm6447 = vmand %vm6413, %vm6443
      %vm6448 = vmand %vm6414, %vm6443
      %vm6449 = vmand %vm6415, %vm6443
      %vm6450 = vmand %vm6416, %vm6443
      %vm6451 = vmand %vm6417, %vm6443
      %vm6452 = vmand %vm6418, %vm6443
      %vm6453 = vmand %vm6419, %vm6443
      %vm6454 = vmand %vm6420, %vm6443
      %vm6455 = vmand %vm6421, %vm6443
      %vm6456 = vmand %vm6422, %vm6443
      %vm6457 = vmand %vm6423, %vm6443
      %vm6458 = vmand %vm6424, %vm6443
      %vm6459 = vmand %vm6425, %vm6443
      %vm6460 = vmand %vm6426, %vm6443
      %vm6461 = vmand %vm6427, %vm6443
      %vm6462 = vmand %vm6428, %vm6443
      %vm6463 = vmand %vm6429, %vm6443
      %vm6464 = vmand %vm6430, %vm6443
      %vm6465 = vmand %vm6431, %vm6443
      %vm6466 = vmand %vm6432, %vm6443
      %vm6467 = vmand %vm6433, %vm6443
      %vm6468 = vmand %vm6434, %vm6443
      %vm6469 = vmand %vm6435, %vm6443
      %vm6470 = vmand %vm6436, %vm6443
      %vm6471 = vmand %vm6437, %vm6443
      %vm6472 = vmand %vm6438, %vm6443
      %vm6473 = vmand %vm6439, %vm6443
      %vm6474 = vmand %vm6440, %vm6443
      %vm6475 = vmand %vm6441, %vm6443
      %vm6476 = vcmp.lt.f32.partialorder %v6442, 3.0
      %vm6477 = vmand %vm6444, %vm6476
      %vm6478 = vmand %vm6445, %vm6476
      %vm6479 = vmand %vm6446, %vm6476
      %vm6480 = vmand %vm6447, %vm6476
      %vm6481 = vmand %vm6448, %vm6476
      %vm6482 = vmand %vm6449, %vm6476
      %vm6483 = vmand %vm6450, %vm6476
      %vm6484 = vmand %vm6451, %vm6476
      %vm6485 = vmand %vm6452, %vm6476
      %vm6486 = vmand %vm6453, %vm6476
      %vm6487 = vmand %vm6454, %vm6476
      %vm6488 = vmand %vm6455, %vm6476
      %vm6489 = vmand %vm6456, %vm6476
      %vm6490 = vmand %vm6457, %vm6476
      %vm6491 = vmand %vm6458, %vm6476
      %vm6492 = vmand %vm6459, %vm6476
      %vm6493 = vmand %vm6460, %vm6476
      %vm6494 = vmand %vm6461, %vm6476
      %vm6495 = vmand %vm6462, %vm6476
      %vm6496 = vmand %vm6463, %vm6476
      %vm6497 = vmand %vm6464, %vm6476
      %vm6498 = vmand %vm6465, %vm6476
      %vm6499 = vmand %vm6466, %vm6476
      %vm6500 = vmand %vm6467, %vm6476
      %vm6501 = vmand %vm6468, %vm6476
      %vm6502 = vmand %vm6469, %vm6476
      %vm6503 = vmand %vm6470, %vm6476
      %vm6504 = vmand %vm6471, %vm6476
      %vm6505 = vmand %vm6472, %vm6476
      %vm6506 = vmand %vm6473, %vm6476
      %vm6507 = vmand %vm6474, %vm6476
      %vm6508 = vmand %vm6475, %vm6476
      %v6509 = vsel %vm6477, 1, 0
      %v6510 = vsel %vm6478, 1, 0
      %v6511 = vsel %vm6479, 1, 0
      %v6512 = vsel %vm6480, 1, 0
      %v6513 = vsel %vm6481, 1, 0
      %v6514 = vsel %vm6482, 1, 0
      %v6515 = vsel %vm6483, 1, 0
      %v6516 = vsel %vm6484, 1, 0
      %v6517 = vsel %vm6485, 1, 0
      %v6518 = vsel %vm6486, 1, 0
      %v6519 = vsel %vm6487, 1, 0
      %v6520 = vsel %vm6488, 1, 0
      %v6521 = vsel %vm6489, 1, 0
      %v6522 = vsel %vm6490, 1, 0
      %v6523 = vsel %vm6491, 1, 0
      %v6524 = vsel %vm6492, 1, 0
      %v6525 = vsel %vm6493, 1, 0
      %v6526 = vsel %vm6494, 1, 0
      %v6527 = vsel %vm6495, 1, 0
      %v6528 = vsel %vm6496, 1, 0
      %v6529 = vsel %vm6497, 1, 0
      %v6530 = vsel %vm6498, 1, 0
      %v6531 = vsel %vm6499, 1, 0
      %v6532 = vsel %vm6500, 1, 0
      %v6533 = vsel %vm6501, 1, 0
      %v6534 = vsel %vm6502, 1, 0
      %v6535 = vsel %vm6503, 1, 0
      %v6536 = vsel %vm6504, 1, 0
      %v6537 = vsel %vm6505, 1, 0
      %v6538 = vsel %vm6506, 1, 0
      %v6539 = vsel %vm6507, 1, 0
      %v6540 = vsel %vm6508, 1, 0
      %v6541 = vcvt.s32.f32 %v6509
      %v6542 = vcvt.s32.f32 %v6510
      %v6543 = vcvt.s32.f32 %v6511
      %v6544 = vcvt.s32.f32 %v6512
      %v6545 = vcvt.s32.f32 %v6513
      %v6546 = vcvt.s32.f32 %v6514
      %v6547 = vcvt.s32.f32 %v6515
      %v6548 = vcvt.s32.f32 %v6516
      %v6549 = vcvt.s32.f32 %v6517
      %v6550 = vcvt.s32.f32 %v6518
      %v6551 = vcvt.s32.f32 %v6519
      %v6552 = vcvt.s32.f32 %v6520
      %v6553 = vcvt.s32.f32 %v6521
      %v6554 = vcvt.s32.f32 %v6522
      %v6555 = vcvt.s32.f32 %v6523
      %v6556 = vcvt.s32.f32 %v6524
      %v6557 = vcvt.s32.f32 %v6525
      %v6558 = vcvt.s32.f32 %v6526
      %v6559 = vcvt.s32.f32 %v6527
      %v6560 = vcvt.s32.f32 %v6528
      %v6561 = vcvt.s32.f32 %v6529
      %v6562 = vcvt.s32.f32 %v6530
      %v6563 = vcvt.s32.f32 %v6531
      %v6564 = vcvt.s32.f32 %v6532
      %v6565 = vcvt.s32.f32 %v6533
      %v6566 = vcvt.s32.f32 %v6534
      %v6567 = vcvt.s32.f32 %v6535
      %v6568 = vcvt.s32.f32 %v6536
      %v6569 = vcvt.s32.f32 %v6537
      %v6570 = vcvt.s32.f32 %v6538
      %v6571 = vcvt.s32.f32 %v6539
      %v6572 = vcvt.s32.f32 %v6540
      %v6573 = vmul.f32 %v4099, %v6541
      %v6574 = vmul.f32 %v4100, %v6542
      %v6575 = vmul.f32 %v4101, %v6543
      %v6576 = vmul.f32 %v4102, %v6544
      %v6577 = vmul.f32 %v4103, %v6545
      %v6578 = vmul.f32 %v4104, %v6546
      %v6579 = vmul.f32 %v4105, %v6547
      %v6580 = vmul.f32 %v4106, %v6548
      %v6581 = vmul.f32 %v4107, %v6549
      %v6582 = vmul.f32 %v4108, %v6550
      %v6583 = vmul.f32 %v4109, %v6551
      %v6584 = vmul.f32 %v4110, %v6552
      %v6585 = vmul.f32 %v4111, %v6553
      %v6586 = vmul.f32 %v4112, %v6554
      %v6587 = vmul.f32 %v4113, %v6555
      %v6588 = vmul.f32 %v4114, %v6556
      %v6589 = vmul.f32 %v4115, %v6557
      %v6590 = vmul.f32 %v4116, %v6558
      %v6591 = vmul.f32 %v4117, %v6559
      %v6592 = vmul.f32 %v4118, %v6560
      %v6593 = vmul.f32 %v4119, %v6561
      %v6594 = vmul.f32 %v4120, %v6562
      %v6595 = vmul.f32 %v4121, %v6563
      %v6596 = vmul.f32 %v4122, %v6564
      %v6597 = vmul.f32 %v4123, %v6565
      %v6598 = vmul.f32 %v4124, %v6566
      %v6599 = vmul.f32 %v4125, %v6567
      %v6600 = vmul.f32 %v4126, %v6568
      %v6601 = vmul.f32 %v4094, %v6569
      %v6602 = vmul.f32 %v4094, %v6570
      %v6603 = vmul.f32 %v4094, %v6571
      %v6604 = vmul.f32 %v4094, %v6572
      %6637 = vrot.lane.b32.xlu0 %v6573, 12
      %v6638 = vpop.permute.xlu0 %6637
      %6639 = vrot.lane.b32.xlu0 %v6574, 12
      %v6640 = vpop.permute.xlu0 %6639
      %6641 = vrot.lane.b32.xlu0 %v6575, 12
      %v6642 = vpop.permute.xlu0 %6641
      %6643 = vrot.lane.b32.xlu0 %v6576, 12
      %v6644 = vpop.permute.xlu0 %6643
      %6645 = vrot.lane.b32.xlu0 %v6577, 12
      %v6646 = vpop.permute.xlu0 %6645
      %6647 = vrot.lane.b32.xlu0 %v6578, 12
      %v6648 = vpop.permute.xlu0 %6647
      %6649 = vrot.lane.b32.xlu0 %v6579, 12
      %v6650 = vpop.permute.xlu0 %6649
      %6651 = vrot.lane.b32.xlu0 %v6580, 12
      %v6652 = vpop.permute.xlu0 %6651
      %6653 = vrot.lane.b32.xlu0 %v6581, 12
      %v6654 = vpop.permute.xlu0 %6653
      %6655 = vrot.lane.b32.xlu0 %v6582, 12
      %v6656 = vpop.permute.xlu0 %6655
      %6657 = vrot.lane.b32.xlu0 %v6583, 12
      %v6658 = vpop.permute.xlu0 %6657
      %6659 = vrot.lane.b32.xlu0 %v6584, 12
      %v6660 = vpop.permute.xlu0 %6659
      %6661 = vrot.lane.b32.xlu0 %v6585, 12
      %v6662 = vpop.permute.xlu0 %6661
      %6663 = vrot.lane.b32.xlu0 %v6586, 12
      %v6664 = vpop.permute.xlu0 %6663
      %6665 = vrot.lane.b32.xlu0 %v6587, 12
      %v6666 = vpop.permute.xlu0 %6665
      %6667 = vrot.lane.b32.xlu0 %v6588, 12
      %v6668 = vpop.permute.xlu0 %6667
      %6669 = vrot.lane.b32.xlu0 %v6589, 12
      %v6670 = vpop.permute.xlu0 %6669
      %6671 = vrot.lane.b32.xlu0 %v6590, 12
      %v6672 = vpop.permute.xlu0 %6671
      %6673 = vrot.lane.b32.xlu0 %v6591, 12
      %v6674 = vpop.permute.xlu0 %6673
      %6675 = vrot.lane.b32.xlu0 %v6592, 12
      %v6676 = vpop.permute.xlu0 %6675
      %6677 = vrot.lane.b32.xlu0 %v6593, 12
      %v6678 = vpop.permute.xlu0 %6677
      %6679 = vrot.lane.b32.xlu0 %v6594, 12
      %v6680 = vpop.permute.xlu0 %6679
      %6681 = vrot.lane.b32.xlu0 %v6595, 12
      %v6682 = vpop.permute.xlu0 %6681
      %6683 = vrot.lane.b32.xlu0 %v6596, 12
      %v6684 = vpop.permute.xlu0 %6683
      %6685 = vrot.lane.b32.xlu0 %v6597, 12
      %v6686 = vpop.permute.xlu0 %6685
      %6687 = vrot.lane.b32.xlu0 %v6598, 12
      %v6688 = vpop.permute.xlu0 %6687
      %6689 = vrot.lane.b32.xlu0 %v6599, 12
      %v6690 = vpop.permute.xlu0 %6689
      %6691 = vrot.lane.b32.xlu0 %v6600, 12
      %v6692 = vpop.permute.xlu0 %6691
      %6693 = vrot.lane.b32.xlu0 %v6601, 12
      %v6694 = vpop.permute.xlu0 %6693
      %6695 = vrot.lane.b32.xlu0 %v6602, 12
      %v6696 = vpop.permute.xlu0 %6695
      %6697 = vrot.lane.b32.xlu0 %v6603, 12
      %v6698 = vpop.permute.xlu0 %6697
      %6699 = vrot.lane.b32.xlu0 %v6604, 12
      %v6700 = vpop.permute.xlu0 %6699
      %v6733 = vadd.f32 %v6282, %v6638
      %v6734 = vadd.f32 %v6283, %v6640
      %v6735 = vadd.f32 %v6284, %v6642
      %v6736 = vadd.f32 %v6285, %v6644
      %v6737 = vadd.f32 %v6286, %v6646
      %v6738 = vadd.f32 %v6287, %v6648
      %v6739 = vadd.f32 %v6288, %v6650
      %v6740 = vadd.f32 %v6289, %v6652
      %v6741 = vadd.f32 %v6290, %v6654
      %v6742 = vadd.f32 %v6291, %v6656
      %v6743 = vadd.f32 %v6292, %v6658
      %v6744 = vadd.f32 %v6293, %v6660
      %v6745 = vadd.f32 %v6294, %v6662
      %v6746 = vadd.f32 %v6295, %v6664
      %v6747 = vadd.f32 %v6296, %v6666
      %v6748 = vadd.f32 %v6297, %v6668
      %v6749 = vadd.f32 %v6298, %v6670
      %v6750 = vadd.f32 %v6299, %v6672
      %v6751 = vadd.f32 %v6300, %v6674
      %v6752 = vadd.f32 %v6301, %v6676
      %v6753 = vadd.f32 %v6302, %v6678
      %v6754 = vadd.f32 %v6303, %v6680
      %v6755 = vadd.f32 %v6304, %v6682
      %v6756 = vadd.f32 %v6305, %v6684
      %v6757 = vadd.f32 %v6306, %v6686
      %v6758 = vadd.f32 %v6307, %v6688
      %v6759 = vadd.f32 %v6308, %v6690
      %v6760 = vadd.f32 %v6309, %v6692
      %v6761 = vadd.f32 %v6310, %v6694
      %v6762 = vadd.f32 %v6311, %v6696
      %v6763 = vadd.f32 %v6312, %v6698
      %v6764 = vadd.f32 %v6313, %v6700
      %v6765 = vadd.f32 %v250, %v353
      %v6766 = vadd.f32 %v251, %v353
      %v6767 = vadd.f32 %v252, %v353
      %v6768 = vadd.f32 %v253, %v353
      %v6769 = vadd.f32 %v254, %v353
      %v6770 = vadd.f32 %v255, %v353
      %v6771 = vadd.f32 %v256, %v353
      %v6772 = vadd.f32 %v257, %v353
      %v6773 = vadd.f32 %v258, %v353
      %v6774 = vadd.f32 %v259, %v353
      %v6775 = vadd.f32 %v260, %v353
      %v6776 = vadd.f32 %v261, %v353
      %v6777 = vadd.f32 %v262, %v353
      %v6778 = vadd.f32 %v263, %v353
      %v6779 = vadd.f32 %v264, %v353
      %v6780 = vadd.f32 %v265, %v353
      %v6781 = vadd.f32 %v266, %v353
      %v6782 = vadd.f32 %v267, %v353
      %v6783 = vadd.f32 %v268, %v353
      %v6784 = vadd.f32 %v269, %v353
      %v6785 = vadd.f32 %v270, %v353
      %v6786 = vadd.f32 %v271, %v353
      %v6787 = vadd.f32 %v272, %v353
      %v6788 = vadd.f32 %v273, %v353
      %v6789 = vadd.f32 %v274, %v353
      %v6790 = vadd.f32 %v275, %v353
      %v6791 = vadd.f32 %v276, %v353
      %v6792 = vadd.f32 %v277, %v353
      %v6793 = vadd.f32 %v278, %v353
      %v6794 = vadd.f32 %v279, %v353
      %v6795 = vadd.f32 %v280, %v353
      %v6796 = vadd.f32 %v281, %v353
      %v6797 = vadd.f32 %v314, %v355
      %v6798 = vadd.f32 %v315, %v355
      %v6799 = vadd.f32 %v316, %v355
      %v6800 = vadd.f32 %v317, %v355
      %v6801 = vadd.f32 %v318, %v355
      %v6802 = vadd.f32 %v319, %v355
      %v6803 = vadd.f32 %v320, %v355
      %v6804 = vadd.f32 %v321, %v355
      %v6805 = vadd.f32 %v322, %v355
      %v6806 = vadd.f32 %v323, %v355
      %v6807 = vadd.f32 %v324, %v355
      %v6808 = vadd.f32 %v325, %v355
      %v6809 = vadd.f32 %v326, %v355
      %v6810 = vadd.f32 %v327, %v355
      %v6811 = vadd.f32 %v328, %v355
      %v6812 = vadd.f32 %v329, %v355
      %v6813 = vadd.f32 %v330, %v355
      %v6814 = vadd.f32 %v331, %v355
      %v6815 = vadd.f32 %v332, %v355
      %v6816 = vadd.f32 %v333, %v355
      %v6817 = vadd.f32 %v334, %v355
      %v6818 = vadd.f32 %v335, %v355
      %v6819 = vadd.f32 %v336, %v355
      %v6820 = vadd.f32 %v337, %v355
      %v6821 = vadd.f32 %v338, %v355
      %v6822 = vadd.f32 %v339, %v355
      %v6823 = vadd.f32 %v340, %v355
      %v6824 = vadd.f32 %v341, %v355
      %v6825 = vadd.f32 %v342, %v355
      %v6826 = vadd.f32 %v343, %v355
      %v6827 = vadd.f32 %v344, %v355
      %v6828 = vadd.f32 %v345, %v355
      %v6829 = vmin.f32 %v6765, 2.0
      %v6830 = vmin.f32 %v6766, 2.0
      %v6831 = vmin.f32 %v6767, 2.0
      %v6832 = vmin.f32 %v6768, 2.0
      %v6833 = vmin.f32 %v6769, 2.0
      %v6834 = vmin.f32 %v6770, 2.0
      %v6835 = vmin.f32 %v6771, 2.0
      %v6836 = vmin.f32 %v6772, 2.0
      %v6837 = vmin.f32 %v6773, 2.0
      %v6838 = vmin.f32 %v6774, 2.0
      %v6839 = vmin.f32 %v6775, 2.0
      %v6840 = vmin.f32 %v6776, 2.0
      %v6841 = vmin.f32 %v6777, 2.0
      %v6842 = vmin.f32 %v6778, 2.0
      %v6843 = vmin.f32 %v6779, 2.0
      %v6844 = vmin.f32 %v6780, 2.0
      %v6845 = vmin.f32 %v6781, 2.0
      %v6846 = vmin.f32 %v6782, 2.0
      %v6847 = vmin.f32 %v6783, 2.0
      %v6848 = vmin.f32 %v6784, 2.0
      %v6849 = vmin.f32 %v6785, 2.0
      %v6850 = vmin.f32 %v6786, 2.0
      %v6851 = vmin.f32 %v6787, 2.0
      %v6852 = vmin.f32 %v6788, 2.0
      %v6853 = vmin.f32 %v6789, 2.0
      %v6854 = vmin.f32 %v6790, 2.0
      %v6855 = vmin.f32 %v6791, 2.0
      %v6856 = vmin.f32 %v6792, 2.0
      %v6857 = vmin.f32 %v6793, 2.0
      %v6858 = vmin.f32 %v6794, 2.0
      %v6859 = vmin.f32 %v6795, 2.0
      %v6860 = vmin.f32 %v6796, 2.0
      %v6861 = vsub.f32 %v6765, 15.0
      %v6862 = vsub.f32 %v6766, 15.0
      %v6863 = vsub.f32 %v6767, 15.0
      %v6864 = vsub.f32 %v6768, 15.0
      %v6865 = vsub.f32 %v6769, 15.0
      %v6866 = vsub.f32 %v6770, 15.0
      %v6867 = vsub.f32 %v6771, 15.0
      %v6868 = vsub.f32 %v6772, 15.0
      %v6869 = vsub.f32 %v6773, 15.0
      %v6870 = vsub.f32 %v6774, 15.0
      %v6871 = vsub.f32 %v6775, 15.0
      %v6872 = vsub.f32 %v6776, 15.0
      %v6873 = vsub.f32 %v6777, 15.0
      %v6874 = vsub.f32 %v6778, 15.0
      %v6875 = vsub.f32 %v6779, 15.0
      %v6876 = vsub.f32 %v6780, 15.0
      %v6877 = vsub.f32 %v6781, 15.0
      %v6878 = vsub.f32 %v6782, 15.0
      %v6879 = vsub.f32 %v6783, 15.0
      %v6880 = vsub.f32 %v6784, 15.0
      %v6881 = vsub.f32 %v6785, 15.0
      %v6882 = vsub.f32 %v6786, 15.0
      %v6883 = vsub.f32 %v6787, 15.0
      %v6884 = vsub.f32 %v6788, 15.0
      %v6885 = vsub.f32 %v6789, 15.0
      %v6886 = vsub.f32 %v6790, 15.0
      %v6887 = vsub.f32 %v6791, 15.0
      %v6888 = vsub.f32 %v6792, 15.0
      %v6889 = vsub.f32 %v6793, 15.0
      %v6890 = vsub.f32 %v6794, 15.0
      %v6891 = vsub.f32 %v6795, 15.0
      %v6892 = vsub.f32 %v6796, 15.0
      %v6893 = vmax.f32 %v6861, 0.0
      %v6894 = vmax.f32 %v6862, 0.0
      %v6895 = vmax.f32 %v6863, 0.0
      %v6896 = vmax.f32 %v6864, 0.0
      %v6897 = vmax.f32 %v6865, 0.0
      %v6898 = vmax.f32 %v6866, 0.0
      %v6899 = vmax.f32 %v6867, 0.0
      %v6900 = vmax.f32 %v6868, 0.0
      %v6901 = vmax.f32 %v6869, 0.0
      %v6902 = vmax.f32 %v6870, 0.0
      %v6903 = vmax.f32 %v6871, 0.0
      %v6904 = vmax.f32 %v6872, 0.0
      %v6905 = vmax.f32 %v6873, 0.0
      %v6906 = vmax.f32 %v6874, 0.0
      %v6907 = vmax.f32 %v6875, 0.0
      %v6908 = vmax.f32 %v6876, 0.0
      %v6909 = vmax.f32 %v6877, 0.0
      %v6910 = vmax.f32 %v6878, 0.0
      %v6911 = vmax.f32 %v6879, 0.0
      %v6912 = vmax.f32 %v6880, 0.0
      %v6913 = vmax.f32 %v6881, 0.0
      %v6914 = vmax.f32 %v6882, 0.0
      %v6915 = vmax.f32 %v6883, 0.0
      %v6916 = vmax.f32 %v6884, 0.0
      %v6917 = vmax.f32 %v6885, 0.0
      %v6918 = vmax.f32 %v6886, 0.0
      %v6919 = vmax.f32 %v6887, 0.0
      %v6920 = vmax.f32 %v6888, 0.0
      %v6921 = vmax.f32 %v6889, 0.0
      %v6922 = vmax.f32 %v6890, 0.0
      %v6923 = vmax.f32 %v6891, 0.0
      %v6924 = vmax.f32 %v6892, 0.0
      %v6925 = vsub.f32 %v6829, %v6893
      %v6926 = vsub.f32 %v6830, %v6894
      %v6927 = vsub.f32 %v6831, %v6895
      %v6928 = vsub.f32 %v6832, %v6896
      %v6929 = vsub.f32 %v6833, %v6897
      %v6930 = vsub.f32 %v6834, %v6898
      %v6931 = vsub.f32 %v6835, %v6899
      %v6932 = vsub.f32 %v6836, %v6900
      %v6933 = vsub.f32 %v6837, %v6901
      %v6934 = vsub.f32 %v6838, %v6902
      %v6935 = vsub.f32 %v6839, %v6903
      %v6936 = vsub.f32 %v6840, %v6904
      %v6937 = vsub.f32 %v6841, %v6905
      %v6938 = vsub.f32 %v6842, %v6906
      %v6939 = vsub.f32 %v6843, %v6907
      %v6940 = vsub.f32 %v6844, %v6908
      %v6941 = vsub.f32 %v6845, %v6909
      %v6942 = vsub.f32 %v6846, %v6910
      %v6943 = vsub.f32 %v6847, %v6911
      %v6944 = vsub.f32 %v6848, %v6912
      %v6945 = vsub.f32 %v6849, %v6913
      %v6946 = vsub.f32 %v6850, %v6914
      %v6947 = vsub.f32 %v6851, %v6915
      %v6948 = vsub.f32 %v6852, %v6916
      %v6949 = vsub.f32 %v6853, %v6917
      %v6950 = vsub.f32 %v6854, %v6918
      %v6951 = vsub.f32 %v6855, %v6919
      %v6952 = vsub.f32 %v6856, %v6920
      %v6953 = vsub.f32 %v6857, %v6921
      %v6954 = vsub.f32 %v6858, %v6922
      %v6955 = vsub.f32 %v6859, %v6923
      %v6956 = vsub.f32 %v6860, %v6924
      %v6957 = vadd.f32 %v6925, 1.0
      %v6958 = vadd.f32 %v6926, 1.0
      %v6959 = vadd.f32 %v6927, 1.0
      %v6960 = vadd.f32 %v6928, 1.0
      %v6961 = vadd.f32 %v6929, 1.0
      %v6962 = vadd.f32 %v6930, 1.0
      %v6963 = vadd.f32 %v6931, 1.0
      %v6964 = vadd.f32 %v6932, 1.0
      %v6965 = vadd.f32 %v6933, 1.0
      %v6966 = vadd.f32 %v6934, 1.0
      %v6967 = vadd.f32 %v6935, 1.0
      %v6968 = vadd.f32 %v6936, 1.0
      %v6969 = vadd.f32 %v6937, 1.0
      %v6970 = vadd.f32 %v6938, 1.0
      %v6971 = vadd.f32 %v6939, 1.0
      %v6972 = vadd.f32 %v6940, 1.0
      %v6973 = vadd.f32 %v6941, 1.0
      %v6974 = vadd.f32 %v6942, 1.0
      %v6975 = vadd.f32 %v6943, 1.0
      %v6976 = vadd.f32 %v6944, 1.0
      %v6977 = vadd.f32 %v6945, 1.0
      %v6978 = vadd.f32 %v6946, 1.0
      %v6979 = vadd.f32 %v6947, 1.0
      %v6980 = vadd.f32 %v6948, 1.0
      %v6981 = vadd.f32 %v6949, 1.0
      %v6982 = vadd.f32 %v6950, 1.0
      %v6983 = vadd.f32 %v6951, 1.0
      %v6984 = vadd.f32 %v6952, 1.0
      %v6985 = vadd.f32 %v6953, 1.0
      %v6986 = vadd.f32 %v6954, 1.0
      %v6987 = vadd.f32 %v6955, 1.0
      %v6988 = vadd.f32 %v6956, 1.0
      %v6989 = vmin.f32 %v6797, 2.0
      %v6990 = vmin.f32 %v6798, 2.0
      %v6991 = vmin.f32 %v6799, 2.0
      %v6992 = vmin.f32 %v6800, 2.0
      %v6993 = vmin.f32 %v6801, 2.0
      %v6994 = vmin.f32 %v6802, 2.0
      %v6995 = vmin.f32 %v6803, 2.0
      %v6996 = vmin.f32 %v6804, 2.0
      %v6997 = vmin.f32 %v6805, 2.0
      %v6998 = vmin.f32 %v6806, 2.0
      %v6999 = vmin.f32 %v6807, 2.0
      %v7000 = vmin.f32 %v6808, 2.0
      %v7001 = vmin.f32 %v6809, 2.0
      %v7002 = vmin.f32 %v6810, 2.0
      %v7003 = vmin.f32 %v6811, 2.0
      %v7004 = vmin.f32 %v6812, 2.0
      %v7005 = vmin.f32 %v6813, 2.0
      %v7006 = vmin.f32 %v6814, 2.0
      %v7007 = vmin.f32 %v6815, 2.0
      %v7008 = vmin.f32 %v6816, 2.0
      %v7009 = vmin.f32 %v6817, 2.0
      %v7010 = vmin.f32 %v6818, 2.0
      %v7011 = vmin.f32 %v6819, 2.0
      %v7012 = vmin.f32 %v6820, 2.0
      %v7013 = vmin.f32 %v6821, 2.0
      %v7014 = vmin.f32 %v6822, 2.0
      %v7015 = vmin.f32 %v6823, 2.0
      %v7016 = vmin.f32 %v6824, 2.0
      %v7017 = vmin.f32 %v6825, 2.0
      %v7018 = vmin.f32 %v6826, 2.0
      %v7019 = vmin.f32 %v6827, 2.0
      %v7020 = vmin.f32 %v6828, 2.0
      %v7021 = vsub.f32 %v6797, 15.0
      %v7022 = vsub.f32 %v6798, 15.0
      %v7023 = vsub.f32 %v6799, 15.0
      %v7024 = vsub.f32 %v6800, 15.0
      %v7025 = vsub.f32 %v6801, 15.0
      %v7026 = vsub.f32 %v6802, 15.0
      %v7027 = vsub.f32 %v6803, 15.0
      %v7028 = vsub.f32 %v6804, 15.0
      %v7029 = vsub.f32 %v6805, 15.0
      %v7030 = vsub.f32 %v6806, 15.0
      %v7031 = vsub.f32 %v6807, 15.0
      %v7032 = vsub.f32 %v6808, 15.0
      %v7033 = vsub.f32 %v6809, 15.0
      %v7034 = vsub.f32 %v6810, 15.0
      %v7035 = vsub.f32 %v6811, 15.0
      %v7036 = vsub.f32 %v6812, 15.0
      %v7037 = vsub.f32 %v6813, 15.0
      %v7038 = vsub.f32 %v6814, 15.0
      %v7039 = vsub.f32 %v6815, 15.0
      %v7040 = vsub.f32 %v6816, 15.0
      %v7041 = vsub.f32 %v6817, 15.0
      %v7042 = vsub.f32 %v6818, 15.0
      %v7043 = vsub.f32 %v6819, 15.0
      %v7044 = vsub.f32 %v6820, 15.0
      %v7045 = vsub.f32 %v6821, 15.0
      %v7046 = vsub.f32 %v6822, 15.0
      %v7047 = vsub.f32 %v6823, 15.0
      %v7048 = vsub.f32 %v6824, 15.0
      %v7049 = vsub.f32 %v6825, 15.0
      %v7050 = vsub.f32 %v6826, 15.0
      %v7051 = vsub.f32 %v6827, 15.0
      %v7052 = vsub.f32 %v6828, 15.0
      %v7053 = vmax.f32 %v7021, 0.0
      %v7054 = vmax.f32 %v7022, 0.0
      %v7055 = vmax.f32 %v7023, 0.0
      %v7056 = vmax.f32 %v7024, 0.0
      %v7057 = vmax.f32 %v7025, 0.0
      %v7058 = vmax.f32 %v7026, 0.0
      %v7059 = vmax.f32 %v7027, 0.0
      %v7060 = vmax.f32 %v7028, 0.0
      %v7061 = vmax.f32 %v7029, 0.0
      %v7062 = vmax.f32 %v7030, 0.0
      %v7063 = vmax.f32 %v7031, 0.0
      %v7064 = vmax.f32 %v7032, 0.0
      %v7065 = vmax.f32 %v7033, 0.0
      %v7066 = vmax.f32 %v7034, 0.0
      %v7067 = vmax.f32 %v7035, 0.0
      %v7068 = vmax.f32 %v7036, 0.0
      %v7069 = vmax.f32 %v7037, 0.0
      %v7070 = vmax.f32 %v7038, 0.0
      %v7071 = vmax.f32 %v7039, 0.0
      %v7072 = vmax.f32 %v7040, 0.0
      %v7073 = vmax.f32 %v7041, 0.0
      %v7074 = vmax.f32 %v7042, 0.0
      %v7075 = vmax.f32 %v7043, 0.0
      %v7076 = vmax.f32 %v7044, 0.0
      %v7077 = vmax.f32 %v7045, 0.0
      %v7078 = vmax.f32 %v7046, 0.0
      %v7079 = vmax.f32 %v7047, 0.0
      %v7080 = vmax.f32 %v7048, 0.0
      %v7081 = vmax.f32 %v7049, 0.0
      %v7082 = vmax.f32 %v7050, 0.0
      %v7083 = vmax.f32 %v7051, 0.0
      %v7084 = vmax.f32 %v7052, 0.0
      %v7085 = vsub.f32 %v6989, %v7053
      %v7086 = vsub.f32 %v6990, %v7054
      %v7087 = vsub.f32 %v6991, %v7055
      %v7088 = vsub.f32 %v6992, %v7056
      %v7089 = vsub.f32 %v6993, %v7057
      %v7090 = vsub.f32 %v6994, %v7058
      %v7091 = vsub.f32 %v6995, %v7059
      %v7092 = vsub.f32 %v6996, %v7060
      %v7093 = vsub.f32 %v6997, %v7061
      %v7094 = vsub.f32 %v6998, %v7062
      %v7095 = vsub.f32 %v6999, %v7063
      %v7096 = vsub.f32 %v7000, %v7064
      %v7097 = vsub.f32 %v7001, %v7065
      %v7098 = vsub.f32 %v7002, %v7066
      %v7099 = vsub.f32 %v7003, %v7067
      %v7100 = vsub.f32 %v7004, %v7068
      %v7101 = vsub.f32 %v7005, %v7069
      %v7102 = vsub.f32 %v7006, %v7070
      %v7103 = vsub.f32 %v7007, %v7071
      %v7104 = vsub.f32 %v7008, %v7072
      %v7105 = vsub.f32 %v7009, %v7073
      %v7106 = vsub.f32 %v7010, %v7074
      %v7107 = vsub.f32 %v7011, %v7075
      %v7108 = vsub.f32 %v7012, %v7076
      %v7109 = vsub.f32 %v7013, %v7077
      %v7110 = vsub.f32 %v7014, %v7078
      %v7111 = vsub.f32 %v7015, %v7079
      %v7112 = vsub.f32 %v7016, %v7080
      %v7113 = vsub.f32 %v7017, %v7081
      %v7114 = vsub.f32 %v7018, %v7082
      %v7115 = vsub.f32 %v7019, %v7083
      %v7116 = vsub.f32 %v7020, %v7084
      %v7117 = vadd.f32 %v7085, 1.0
      %v7118 = vadd.f32 %v7086, 1.0
      %v7119 = vadd.f32 %v7087, 1.0
      %v7120 = vadd.f32 %v7088, 1.0
      %v7121 = vadd.f32 %v7089, 1.0
      %v7122 = vadd.f32 %v7090, 1.0
      %v7123 = vadd.f32 %v7091, 1.0
      %v7124 = vadd.f32 %v7092, 1.0
      %v7125 = vadd.f32 %v7093, 1.0
      %v7126 = vadd.f32 %v7094, 1.0
      %v7127 = vadd.f32 %v7095, 1.0
      %v7128 = vadd.f32 %v7096, 1.0
      %v7129 = vadd.f32 %v7097, 1.0
      %v7130 = vadd.f32 %v7098, 1.0
      %v7131 = vadd.f32 %v7099, 1.0
      %v7132 = vadd.f32 %v7100, 1.0
      %v7133 = vadd.f32 %v7101, 1.0
      %v7134 = vadd.f32 %v7102, 1.0
      %v7135 = vadd.f32 %v7103, 1.0
      %v7136 = vadd.f32 %v7104, 1.0
      %v7137 = vadd.f32 %v7105, 1.0
      %v7138 = vadd.f32 %v7106, 1.0
      %v7139 = vadd.f32 %v7107, 1.0
      %v7140 = vadd.f32 %v7108, 1.0
      %v7141 = vadd.f32 %v7109, 1.0
      %v7142 = vadd.f32 %v7110, 1.0
      %v7143 = vadd.f32 %v7111, 1.0
      %v7144 = vadd.f32 %v7112, 1.0
      %v7145 = vadd.f32 %v7113, 1.0
      %v7146 = vadd.f32 %v7114, 1.0
      %v7147 = vadd.f32 %v7115, 1.0
      %v7148 = vadd.f32 %v7116, 1.0
      %v7149 = vmul.f32 %v6957, %v7117
      %v7150 = vmul.f32 %v6958, %v7118
      %v7151 = vmul.f32 %v6959, %v7119
      %v7152 = vmul.f32 %v6960, %v7120
      %v7153 = vmul.f32 %v6961, %v7121
      %v7154 = vmul.f32 %v6962, %v7122
      %v7155 = vmul.f32 %v6963, %v7123
      %v7156 = vmul.f32 %v6964, %v7124
      %v7157 = vmul.f32 %v6965, %v7125
      %v7158 = vmul.f32 %v6966, %v7126
      %v7159 = vmul.f32 %v6967, %v7127
      %v7160 = vmul.f32 %v6968, %v7128
      %v7161 = vmul.f32 %v6969, %v7129
      %v7162 = vmul.f32 %v6970, %v7130
      %v7163 = vmul.f32 %v6971, %v7131
      %v7164 = vmul.f32 %v6972, %v7132
      %v7165 = vmul.f32 %v6973, %v7133
      %v7166 = vmul.f32 %v6974, %v7134
      %v7167 = vmul.f32 %v6975, %v7135
      %v7168 = vmul.f32 %v6976, %v7136
      %v7169 = vmul.f32 %v6977, %v7137
      %v7170 = vmul.f32 %v6978, %v7138
      %v7171 = vmul.f32 %v6979, %v7139
      %v7172 = vmul.f32 %v6980, %v7140
      %v7173 = vmul.f32 %v6981, %v7141
      %v7174 = vmul.f32 %v6982, %v7142
      %v7175 = vmul.f32 %v6983, %v7143
      %v7176 = vmul.f32 %v6984, %v7144
      %v7177 = vmul.f32 %v6985, %v7145
      %v7178 = vmul.f32 %v6986, %v7146
      %v7179 = vmul.f32 %v6987, %v7147
      %v7180 = vmul.f32 %v6988, %v7148
      %v7181 = vrcp.pop %v7149
      %v7182 = vmul.f32 1.0, %v7181
      %v7183 = vrcp.pop %v7150
      %v7184 = vmul.f32 1.0, %v7183
      %v7185 = vrcp.pop %v7151
      %v7186 = vmul.f32 1.0, %v7185
      %v7187 = vrcp.pop %v7152
      %v7188 = vmul.f32 1.0, %v7187
      %v7189 = vrcp.pop %v7153
      %v7190 = vmul.f32 1.0, %v7189
      %v7191 = vrcp.pop %v7154
      %v7192 = vmul.f32 1.0, %v7191
      %v7193 = vrcp.pop %v7155
      %v7194 = vmul.f32 1.0, %v7193
      %v7195 = vrcp.pop %v7156
      %v7196 = vmul.f32 1.0, %v7195
      %v7197 = vrcp.pop %v7157
      %v7198 = vmul.f32 1.0, %v7197
      %v7199 = vrcp.pop %v7158
      %v7200 = vmul.f32 1.0, %v7199
      %v7201 = vrcp.pop %v7159
      %v7202 = vmul.f32 1.0, %v7201
      %v7203 = vrcp.pop %v7160
      %v7204 = vmul.f32 1.0, %v7203
      %v7205 = vrcp.pop %v7161
      %v7206 = vmul.f32 1.0, %v7205
      %v7207 = vrcp.pop %v7162
      %v7208 = vmul.f32 1.0, %v7207
      %v7209 = vrcp.pop %v7163
      %v7210 = vmul.f32 1.0, %v7209
      %v7211 = vrcp.pop %v7164
      %v7212 = vmul.f32 1.0, %v7211
      %v7213 = vrcp.pop %v7165
      %v7214 = vmul.f32 1.0, %v7213
      %v7215 = vrcp.pop %v7166
      %v7216 = vmul.f32 1.0, %v7215
      %v7217 = vrcp.pop %v7167
      %v7218 = vmul.f32 1.0, %v7217
      %v7219 = vrcp.pop %v7168
      %v7220 = vmul.f32 1.0, %v7219
      %v7221 = vrcp.pop %v7169
      %v7222 = vmul.f32 1.0, %v7221
      %v7223 = vrcp.pop %v7170
      %v7224 = vmul.f32 1.0, %v7223
      %v7225 = vrcp.pop %v7171
      %v7226 = vmul.f32 1.0, %v7225
      %v7227 = vrcp.pop %v7172
      %v7228 = vmul.f32 1.0, %v7227
      %v7229 = vrcp.pop %v7173
      %v7230 = vmul.f32 1.0, %v7229
      %v7231 = vrcp.pop %v7174
      %v7232 = vmul.f32 1.0, %v7231
      %v7233 = vrcp.pop %v7175
      %v7234 = vmul.f32 1.0, %v7233
      %v7235 = vrcp.pop %v7176
      %v7236 = vmul.f32 1.0, %v7235
      %v7237 = vrcp.pop %v7177
      %v7238 = vmul.f32 1.0, %v7237
      %v7239 = vrcp.pop %v7178
      %v7240 = vmul.f32 1.0, %v7239
      %v7241 = vrcp.pop %v7179
      %v7242 = vmul.f32 1.0, %v7241
      %v7243 = vrcp.pop %v7180
      %v7244 = vmul.f32 1.0, %v7243
      %7277 = vrot.lane.b32.xlu0 %v7182, 12
      %v7278 = vpop.permute.xlu0 %7277
      %7279 = vrot.lane.b32.xlu0 %v7184, 12
      %v7280 = vpop.permute.xlu0 %7279
      %7281 = vrot.lane.b32.xlu0 %v7186, 12
      %v7282 = vpop.permute.xlu0 %7281
      %7283 = vrot.lane.b32.xlu0 %v7188, 12
      %v7284 = vpop.permute.xlu0 %7283
      %7285 = vrot.lane.b32.xlu0 %v7190, 12
      %v7286 = vpop.permute.xlu0 %7285
      %7287 = vrot.lane.b32.xlu0 %v7192, 12
      %v7288 = vpop.permute.xlu0 %7287
      %7289 = vrot.lane.b32.xlu0 %v7194, 12
      %v7290 = vpop.permute.xlu0 %7289
      %7291 = vrot.lane.b32.xlu0 %v7196, 12
      %v7292 = vpop.permute.xlu0 %7291
      %7293 = vrot.lane.b32.xlu0 %v7198, 12
      %v7294 = vpop.permute.xlu0 %7293
      %7295 = vrot.lane.b32.xlu0 %v7200, 12
      %v7296 = vpop.permute.xlu0 %7295
      %7297 = vrot.lane.b32.xlu0 %v7202, 12
      %v7298 = vpop.permute.xlu0 %7297
      %7299 = vrot.lane.b32.xlu0 %v7204, 12
      %v7300 = vpop.permute.xlu0 %7299
      %7301 = vrot.lane.b32.xlu0 %v7206, 12
      %v7302 = vpop.permute.xlu0 %7301
      %7303 = vrot.lane.b32.xlu0 %v7208, 12
      %v7304 = vpop.permute.xlu0 %7303
      %7305 = vrot.lane.b32.xlu0 %v7210, 12
      %v7306 = vpop.permute.xlu0 %7305
      %7307 = vrot.lane.b32.xlu0 %v7212, 12
      %v7308 = vpop.permute.xlu0 %7307
      %7309 = vrot.lane.b32.xlu0 %v7214, 12
      %v7310 = vpop.permute.xlu0 %7309
      %7311 = vrot.lane.b32.xlu0 %v7216, 12
      %v7312 = vpop.permute.xlu0 %7311
      %7313 = vrot.lane.b32.xlu0 %v7218, 12
      %v7314 = vpop.permute.xlu0 %7313
      %7315 = vrot.lane.b32.xlu0 %v7220, 12
      %v7316 = vpop.permute.xlu0 %7315
      %7317 = vrot.lane.b32.xlu0 %v7222, 12
      %v7318 = vpop.permute.xlu0 %7317
      %7319 = vrot.lane.b32.xlu0 %v7224, 12
      %v7320 = vpop.permute.xlu0 %7319
      %7321 = vrot.lane.b32.xlu0 %v7226, 12
      %v7322 = vpop.permute.xlu0 %7321
      %7323 = vrot.lane.b32.xlu0 %v7228, 12
      %v7324 = vpop.permute.xlu0 %7323
      %7325 = vrot.lane.b32.xlu0 %v7230, 12
      %v7326 = vpop.permute.xlu0 %7325
      %7327 = vrot.lane.b32.xlu0 %v7232, 12
      %v7328 = vpop.permute.xlu0 %7327
      %7329 = vrot.lane.b32.xlu0 %v7234, 12
      %v7330 = vpop.permute.xlu0 %7329
      %7331 = vrot.lane.b32.xlu0 %v7236, 12
      %v7332 = vpop.permute.xlu0 %7331
      %7333 = vrot.lane.b32.xlu0 %v7238, 12
      %v7334 = vpop.permute.xlu0 %7333
      %7335 = vrot.lane.b32.xlu0 %v7240, 12
      %v7336 = vpop.permute.xlu0 %7335
      %7337 = vrot.lane.b32.xlu0 %v7242, 12
      %v7338 = vpop.permute.xlu0 %7337
      %7339 = vrot.lane.b32.xlu0 %v7244, 12
      %v7340 = vpop.permute.xlu0 %7339
      %v7373 = vmul.f32 %v6733, %v7278
      %v7374 = vmul.f32 %v6734, %v7280
      %v7375 = vmul.f32 %v6735, %v7282
      %v7376 = vmul.f32 %v6736, %v7284
      %v7377 = vmul.f32 %v6737, %v7286
      %v7378 = vmul.f32 %v6738, %v7288
      %v7379 = vmul.f32 %v6739, %v7290
      %v7380 = vmul.f32 %v6740, %v7292
      %v7381 = vmul.f32 %v6741, %v7294
      %v7382 = vmul.f32 %v6742, %v7296
      %v7383 = vmul.f32 %v6743, %v7298
      %v7384 = vmul.f32 %v6744, %v7300
      %v7385 = vmul.f32 %v6745, %v7302
      %v7386 = vmul.f32 %v6746, %v7304
      %v7387 = vmul.f32 %v6747, %v7306
      %v7388 = vmul.f32 %v6748, %v7308
      %v7389 = vmul.f32 %v6749, %v7310
      %v7390 = vmul.f32 %v6750, %v7312
      %v7391 = vmul.f32 %v6751, %v7314
      %v7392 = vmul.f32 %v6752, %v7316
      %v7393 = vmul.f32 %v6753, %v7318
      %v7394 = vmul.f32 %v6754, %v7320
      %v7395 = vmul.f32 %v6755, %v7322
      %v7396 = vmul.f32 %v6756, %v7324
      %v7397 = vmul.f32 %v6757, %v7326
      %v7398 = vmul.f32 %v6758, %v7328
      %v7399 = vmul.f32 %v6759, %v7330
      %v7400 = vmul.f32 %v6760, %v7332
      %v7401 = vmul.f32 %v6761, %v7334
      %v7402 = vmul.f32 %v6762, %v7336
      %v7403 = vmul.f32 %v6763, %v7338
      %v7404 = vmul.f32 %v6764, %v7340
      %7437 = vrot.lane.b32.xlu0 %v7373, 116
      %v7438 = vpop.permute.xlu0 %7437
      %7439 = vrot.lane.b32.xlu0 %v7374, 116
      %v7440 = vpop.permute.xlu0 %7439
      %7441 = vrot.lane.b32.xlu0 %v7375, 116
      %v7442 = vpop.permute.xlu0 %7441
      %7443 = vrot.lane.b32.xlu0 %v7376, 116
      %v7444 = vpop.permute.xlu0 %7443
      %7445 = vrot.lane.b32.xlu0 %v7377, 116
      %v7446 = vpop.permute.xlu0 %7445
      %7447 = vrot.lane.b32.xlu0 %v7378, 116
      %v7448 = vpop.permute.xlu0 %7447
      %7449 = vrot.lane.b32.xlu0 %v7379, 116
      %v7450 = vpop.permute.xlu0 %7449
      %7451 = vrot.lane.b32.xlu0 %v7380, 116
      %v7452 = vpop.permute.xlu0 %7451
      %7453 = vrot.lane.b32.xlu0 %v7381, 116
      %v7454 = vpop.permute.xlu0 %7453
      %7455 = vrot.lane.b32.xlu0 %v7382, 116
      %v7456 = vpop.permute.xlu0 %7455
      %7457 = vrot.lane.b32.xlu0 %v7383, 116
      %v7458 = vpop.permute.xlu0 %7457
      %7459 = vrot.lane.b32.xlu0 %v7384, 116
      %v7460 = vpop.permute.xlu0 %7459
      %7461 = vrot.lane.b32.xlu0 %v7385, 116
      %v7462 = vpop.permute.xlu0 %7461
      %7463 = vrot.lane.b32.xlu0 %v7386, 116
      %v7464 = vpop.permute.xlu0 %7463
      %7465 = vrot.lane.b32.xlu0 %v7387, 116
      %v7466 = vpop.permute.xlu0 %7465
      %7467 = vrot.lane.b32.xlu0 %v7388, 116
      %v7468 = vpop.permute.xlu0 %7467
      %7469 = vrot.lane.b32.xlu0 %v7389, 116
      %v7470 = vpop.permute.xlu0 %7469
      %7471 = vrot.lane.b32.xlu0 %v7390, 116
      %v7472 = vpop.permute.xlu0 %7471
      %7473 = vrot.lane.b32.xlu0 %v7391, 116
      %v7474 = vpop.permute.xlu0 %7473
      %7475 = vrot.lane.b32.xlu0 %v7392, 116
      %v7476 = vpop.permute.xlu0 %7475
      %7477 = vrot.lane.b32.xlu0 %v7393, 116
      %v7478 = vpop.permute.xlu0 %7477
      %7479 = vrot.lane.b32.xlu0 %v7394, 116
      %v7480 = vpop.permute.xlu0 %7479
      %7481 = vrot.lane.b32.xlu0 %v7395, 116
      %v7482 = vpop.permute.xlu0 %7481
      %7483 = vrot.lane.b32.xlu0 %v7396, 116
      %v7484 = vpop.permute.xlu0 %7483
      %7485 = vrot.lane.b32.xlu0 %v7397, 116
      %v7486 = vpop.permute.xlu0 %7485
      %7487 = vrot.lane.b32.xlu0 %v7398, 116
      %v7488 = vpop.permute.xlu0 %7487
      %7489 = vrot.lane.b32.xlu0 %v7399, 116
      %v7490 = vpop.permute.xlu0 %7489
      %7491 = vrot.lane.b32.xlu0 %v7400, 116
      %v7492 = vpop.permute.xlu0 %7491
      %7493 = vrot.lane.b32.xlu0 %v7401, 116
      %v7494 = vpop.permute.xlu0 %7493
      %7495 = vrot.lane.b32.xlu0 %v7402, 116
      %v7496 = vpop.permute.xlu0 %7495
      %7497 = vrot.lane.b32.xlu0 %v7403, 116
      %v7498 = vpop.permute.xlu0 %7497
      %7499 = vrot.lane.b32.xlu0 %v7404, 116
      %v7500 = vpop.permute.xlu0 %7499
      %vm7533 = vcmask 220160
      %7534 = vst.msk [vmem:[%s116] sm:$0xff] %vm7533, %v7438
      %7535 = vst.msk [vmem:[%s116 + $0x8] sm:$0xff] %vm7533, %v7440
      %7536 = vst.msk [vmem:[%s116 + $0x10] sm:$0xff] %vm7533, %v7442
      %7537 = vst.msk [vmem:[%s116 + $0x18] sm:$0xff] %vm7533, %v7444
      %7538 = vst.msk [vmem:[%s116 + $0x20] sm:$0xff] %vm7533, %v7446
      %7539 = vst.msk [vmem:[%s116 + $0x28] sm:$0xff] %vm7533, %v7448
      %7540 = vst.msk [vmem:[%s116 + $0x30] sm:$0xff] %vm7533, %v7450
      %7541 = vst.msk [vmem:[%s116 + $0x38] sm:$0xff] %vm7533, %v7452
      %7542 = vst.msk [vmem:[%s116 + $0x40] sm:$0xff] %vm7533, %v7454
      %7543 = vst.msk [vmem:[%s116 + $0x48] sm:$0xff] %vm7533, %v7456
      %7544 = vst.msk [vmem:[%s116 + $0x50] sm:$0xff] %vm7533, %v7458
      %7545 = vst.msk [vmem:[%s116 + $0x58] sm:$0xff] %vm7533, %v7460
      %7546 = vst.msk [vmem:[%s116 + $0x60] sm:$0xff] %vm7533, %v7462
      %7547 = vst.msk [vmem:[%s116 + $0x68] sm:$0xff] %vm7533, %v7464
      %7548 = vst.msk [vmem:[%s116 + $0x70] sm:$0xff] %vm7533, %v7466
      %7549 = vst.msk [vmem:[%s116 + $0x78] sm:$0xff] %vm7533, %v7468
      %7550 = vst.msk [vmem:[%s116 + $0x80] sm:$0xff] %vm7533, %v7470
      %7551 = vst.msk [vmem:[%s116 + $0x88] sm:$0xff] %vm7533, %v7472
      %7552 = vst.msk [vmem:[%s116 + $0x90] sm:$0xff] %vm7533, %v7474
      %7553 = vst.msk [vmem:[%s116 + $0x98] sm:$0xff] %vm7533, %v7476
      %7554 = vst.msk [vmem:[%s116 + $0xa0] sm:$0xff] %vm7533, %v7478
      %7555 = vst.msk [vmem:[%s116 + $0xa8] sm:$0xff] %vm7533, %v7480
      %7556 = vst.msk [vmem:[%s116 + $0xb0] sm:$0xff] %vm7533, %v7482
      %7557 = vst.msk [vmem:[%s116 + $0xb8] sm:$0xff] %vm7533, %v7484
      %7558 = vst.msk [vmem:[%s116 + $0xc0] sm:$0xff] %vm7533, %v7486
      %7559 = vst.msk [vmem:[%s116 + $0xc8] sm:$0xff] %vm7533, %v7488
      %7560 = vst.msk [vmem:[%s116 + $0xd0] sm:$0xff] %vm7533, %v7490
      %7561 = vst.msk [vmem:[%s116 + $0xd8] sm:$0xff] %vm7533, %v7492
      %7562 = vst.msk [vmem:[%s116 + $0xe0] sm:$0xff] %vm7533, %v7494
      %7563 = vst.msk [vmem:[%s116 + $0xe8] sm:$0xff] %vm7533, %v7496
      %7564 = vst.msk [vmem:[%s116 + $0xf0] sm:$0xff] %vm7533, %v7498
      %7565 = vst.msk [vmem:[%s116 + $0xf8] sm:$0xff] %vm7533, %v7500
      %p7566 = scmp.lt.s32.totalorder %s12, 1
      %s7567 = scalar_select %p7566, %s12, 1
      %s7568 = smul.addr %s7567, 32
      %s7569 = smul.addr %s7568, 8
      %s7570 = scalar_lea.vmem %s1, %s7569
      // Predicated region
      $region25: #{aggregation0_forward.1} parent=23 // pred_check
        %p7571 = pneg %p56
      $region26: #{aggregation0_forward.1} parent=23 // pred_check_branch
        %7573 = sbr.rel (%p7571) target = $region28
      $region27: #{aggregation0_forward.1} parent=23 // pred_region
        _
      $region28: #{aggregation0_forward.1} parent=23 // pred_fallthru
        _
    $region24: #{aggregation0_forward.1} parent=5 // pred_fallthru
      _
    %p7574 = scmp.le.s32.totalorder 2, %s7
    // Predicated region
    $region29: #{aggregation0_forward.1} parent=5 // pred_check
      %p7575 = pneg %p7574
    $region30: #{aggregation0_forward.1} parent=5 // pred_check_branch
      %7577 = sbr.rel (%p7575) target = $region32
    $region31: #{aggregation0_forward.1} parent=5 // pred_region
      %s7578 = ssub.s32 %s7, 2
      // Predicated region
      $region33: #{aggregation0_forward.1} parent=31 // pred_check
        %p7579 = pneg %p62
      $region34: #{aggregation0_forward.1} parent=31 // pred_check_branch
        %7581 = sbr.rel (%p7579) target = $region36
      $region35: #{aggregation0_forward.1} parent=31 // pred_region
        %p7582 = scmp.lt.s32.totalorder %s13, 1
        %s7583 = scalar_select %p7582, %s13, 1
        %s7584 = smul.addr %s7583, 32
        %s7585 = smul.addr %s7584, 8
        %s7586 = scalar_lea.vmem %s1, %s7585
      $region36: #{aggregation0_forward.1} parent=31 // pred_fallthru
        _
    $region32: #{aggregation0_forward.1} parent=5 // pred_fallthru
      _
  $region6: #{aggregation0_forward.1} parent=0 // loop_footer
    %s11 = sadd.s32 1, %s7
  $region7: #{aggregation0_forward.1} parent=0 // loop_footer_branch
    %6 = sbr.rel target = $region3
  $region8: #{aggregation0_forward.1} parent=0 // loop_exit
    _

</llo_original>
